<compile_context>
chip_gen: v6e
topology: v6e:2x2x1
jax: 0.10.0
libtpu: 0.0.40
codegen_flags: <defaults>
</compile_context>

<pallas_src>
import functools

import jax
import jax.numpy as jnp
from jax import lax
from jax.experimental import pallas as pl
from jax.experimental.pallas import tpu as pltpu


# Lane-dense tiling: last dim is a large multiple of 128 so loads/stores are
# full, unmasked vregs. Tile = 512 x 512 f32 = 1 MiB per input per pipeline
# buffer -> 4 MiB total with double buffering: fits every generation's default
# scoped VMEM (16 MiB v5e, 32 MiB v6e/v7x) with headroom.
_LANE = 512
_TILE_R = 512
_TILE_ELEMS = _TILE_R * _LANE


def _focal_loss_kernel(x_ref, t_ref, out_ref, acc_ref, *,
                       gamma, pos_weight, n_valid, needs_mask):
    i = pl.program_id(0)

    @pl.when(i == 0)
    def _():
        acc_ref[0] = jnp.float32(0.0)

    x = x_ref[...].astype(jnp.float32)
    t = t_ref[...].astype(jnp.float32)

    # Numerically stable softplus(-x) = max(-x, 0) + log1p(exp(-|x|))
    softplus_neg_x = jnp.maximum(-x, 0.0) + jnp.log1p(jnp.exp(-jnp.abs(x)))

    # BCE-with-logits, pos_weight==1.0 specialized away at trace time.
    if pos_weight == 1.0:
        bce = (1.0 - t) * x + softplus_neg_x
    else:
        bce = (1.0 - t) * x + (1.0 + (pos_weight - 1.0) * t) * softplus_neg_x

    pt = jnp.exp(-bce)
    q = 1.0 - pt

    # (1 - pt)**gamma: pow lowers to exp+log on the single EUP slot (already the
    # hot unit here), so use plain multiplies for small integer gamma.
    g = float(gamma)
    if g == float(int(g)) and 0 <= int(g) <= 4:
        gi = int(g)
        if gi == 0:
            w = jnp.ones_like(q)
        else:
            w = q
            for _ in range(gi - 1):
                w = w * q
    else:
        # fp error can push pt marginally above 1 -> clamp before non-integer pow.
        w = jnp.maximum(q, 0.0) ** g

    focal = w * bce  # `alpha` is applied to the final scalar in the wrapper.

    if needs_mask:
        rows = lax.broadcasted_iota(jnp.int32, focal.shape, 0) + i * _TILE_R
        cols = lax.broadcasted_iota(jnp.int32, focal.shape, 1)
        flat = rows * _LANE + cols
        focal = jnp.where(flat < n_valid, focal, 0.0)

    acc_ref[0] += jnp.sum(focal)
    # Unconditional cheap scalar store; the value after the last grid step is
    # the full sum, which is what gets written back.
    out_ref[0, 0] = acc_ref[0]


def focal_loss(inputs, targets, *, alpha=2.0, gamma=2.0, pos_weight=1.0):
    """Pallas TPU implementation of FocalLoss.forward (returns a scalar).

    Inputs of any shape/rank are accepted; bf16 inputs are supported (compute
    and accumulation stay in f32 inside the kernel).
    """
    assert inputs.shape == targets.shape
    n = int(inputs.size)

    x = inputs.reshape(-1)
    t = targets.reshape(-1)

    pad = (-n) % _TILE_ELEMS
    if pad:
        x = jnp.pad(x, (0, pad))
        t = jnp.pad(t, (0, pad))

    total_rows = (n + pad) // _LANE
    num_tiles = total_rows // _TILE_R

    x2d = x.reshape(total_rows, _LANE)
    t2d = t.reshape(total_rows, _LANE)

    kernel = functools.partial(
        _focal_loss_kernel,
        gamma=float(gamma),
        pos_weight=float(pos_weight),
        n_valid=n,
        needs_mask=bool(pad),
    )

    bytes_per_elem = x2d.dtype.itemsize + t2d.dtype.itemsize
    cost = pl.CostEstimate(
        flops=12 * n,
        transcendentals=3 * n,
        bytes_accessed=bytes_per_elem * (n + pad) + 4,
    )

    total = pl.pallas_call(
        kernel,
        out_shape=jax.ShapeDtypeStruct((1, 1), jnp.float32),
        grid_spec=pltpu.PrefetchScalarGridSpec(
            num_scalar_prefetch=0,
            grid=(num_tiles,),
            in_specs=[
                pl.BlockSpec((_TILE_R, _LANE), lambda i: (i, 0)),
                pl.BlockSpec((_TILE_R, _LANE), lambda i: (i, 0)),
            ],
            out_specs=pl.BlockSpec(memory_space=pltpu.SMEM),
            scratch_shapes=[pltpu.SMEM((1,), jnp.float32)],
        ),
        compiler_params=pltpu.CompilerParams(
            dimension_semantics=("arbitrary",),
        ),
        cost_estimate=cost,
    )(x2d, t2d)

    # TODO(synk): on v7x, add a leading "parallel" grid axis splitting the row
    # range across the 2 TensorCores (two partial sums combined here) for ~2x.
    return (jnp.float32(alpha) * total[0, 0] / jnp.float32(n)).astype(jnp.float32)


def _focal_loss_ref(inputs, targets, *, alpha=2.0, gamma=2.0, pos_weight=1.0):
    """Pure-JAX reference for verification."""
    x = inputs.astype(jnp.float32)
    t = targets.astype(jnp.float32)
    sp = jnp.maximum(-x, 0.0) + jnp.log1p(jnp.exp(-jnp.abs(x)))
    bce = (1.0 - t) * x + (1.0 + (pos_weight - 1.0) * t) * sp
    pt = jnp.exp(-bce)
    return jnp.mean(alpha * (1.0 - pt) ** gamma * bce)


if __name__ == "__main__":
    key = jax.random.PRNGKey(0)
    k1, k2, k3, k4 = jax.random.split(key, 4)

    # Test 1: small 4-D input (batch=2, channels=4, 16x16) — exercises the
    # flatten + pad + mask path (fits in a single tile).
    shape1 = (2, 4, 16, 16)
    logits1 = jax.random.normal(k1, shape1, dtype=jnp.float32) * 2.0
    targets1 = (jax.random.uniform(k2, shape1) > 0.5).astype(jnp.float32)

    out1 = focal_loss(logits1, targets1, alpha=2.0, gamma=2.0, pos_weight=1.0)
    out1 = jax.block_until_ready(out1)
    ref1 = _focal_loss_ref(logits1, targets1, alpha=2.0, gamma=2.0, pos_weight=1.0)
    assert jnp.allclose(out1, ref1, rtol=1e-4, atol=1e-6), (out1, ref1)

    # Test 2: spans multiple grid tiles + non-default pos_weight.
    shape2 = (600, 700)
    logits2 = jax.random.normal(k3, shape2, dtype=jnp.float32) * 2.0
    targets2 = (jax.random.uniform(k4, shape2) > 0.5).astype(jnp.float32)

    out2 = focal_loss(logits2, targets2, alpha=2.0, gamma=2.0, pos_weight=1.5)
    out2 = jax.block_until_ready(out2)
    ref2 = _focal_loss_ref(logits2, targets2, alpha=2.0, gamma=2.0, pos_weight=1.5)
    assert jnp.allclose(out2, ref2, rtol=1e-4, atol=1e-6), (out2, ref2)

    print("KERNEL_OK")
</pallas_src>

<mosaic_0001>
module attributes {stable_mosaic.version = 11 : i64} {
  func.func @_focal_loss_kernel(%arg0: i32, %arg1: memref<512x512xf32, #tpu.memory_space<vmem>>, %arg2: memref<512x512xf32, #tpu.memory_space<vmem>>, %arg3: memref<1x1xf32, #tpu.memory_space<smem>>, %arg4: memref<1xf32, #tpu.memory_space<smem>>) attributes {dimension_semantics = [#tpu.dimension_semantics<arbitrary>], iteration_bounds = array<i64: 1>, scalar_prefetch = 0 : i64, scratch_operands = 1 : i64, tpu.core_type = #tpu.core_type<tc>, window_params = [{transform_indices = @transform_0, window_bounds = array<i64: 512, 512>}, {transform_indices = @transform_1, window_bounds = array<i64: 512, 512>}, {transform_indices = @transform_2, window_bounds = array<i64: 1, 1>}]} {
    %c0_i32 = arith.constant 0 : i32
    %0 = arith.cmpi eq, %arg0, %c0_i32 : i32
    %1 = arith.extui %0 : i1 to i32
    %c0_i32_0 = arith.constant 0 : i32
    %2 = arith.cmpi ne, %1, %c0_i32_0 : i32
    scf.if %2 {
      %cst_17 = arith.constant 0.000000e+00 : f32
      %c0_18 = arith.constant 0 : index
      %47 = memref.load %arg4[%c0_18] : memref<1xf32, #tpu.memory_space<smem>>
      memref.store %cst_17, %arg4[%c0_18] : memref<1xf32, #tpu.memory_space<smem>>
    } else {
    }
    %c0 = arith.constant 0 : index
    %c0_1 = arith.constant 0 : index
    %3 = vector.load %arg1[%c0, %c0_1] : memref<512x512xf32, #tpu.memory_space<vmem>>, vector<512x512xf32>
    %c0_2 = arith.constant 0 : index
    %c0_3 = arith.constant 0 : index
    %4 = vector.load %arg2[%c0_2, %c0_3] : memref<512x512xf32, #tpu.memory_space<vmem>>, vector<512x512xf32>
    %cst = arith.constant 0.000000e+00 : f32
    %5 = vector.broadcast %cst : f32 to vector<512x512xf32>
    %6 = arith.subf %5, %3 : vector<512x512xf32>
    %cst_4 = arith.constant 0.000000e+00 : f32
    %7 = vector.broadcast %cst_4 : f32 to vector<512x512xf32>
    %8 = arith.maximumf %6, %7 : vector<512x512xf32>
    %9 = math.absf %3 : vector<512x512xf32>
    %cst_5 = arith.constant 0.000000e+00 : f32
    %10 = vector.broadcast %cst_5 : f32 to vector<512x512xf32>
    %11 = arith.subf %10, %9 : vector<512x512xf32>
    %12 = math.exp %11 : vector<512x512xf32>
    %13 = math.log1p %12 : vector<512x512xf32>
    %14 = arith.addf %8, %13 : vector<512x512xf32>
    %cst_6 = arith.constant 1.000000e+00 : f32
    %15 = vector.broadcast %cst_6 : f32 to vector<512x512xf32>
    %16 = arith.subf %15, %4 : vector<512x512xf32>
    %17 = arith.mulf %16, %3 : vector<512x512xf32>
    %18 = arith.addf %17, %14 : vector<512x512xf32>
    %cst_7 = arith.constant 0.000000e+00 : f32
    %19 = vector.broadcast %cst_7 : f32 to vector<512x512xf32>
    %20 = arith.subf %19, %18 : vector<512x512xf32>
    %21 = math.exp %20 : vector<512x512xf32>
    %cst_8 = arith.constant 1.000000e+00 : f32
    %22 = vector.broadcast %cst_8 : f32 to vector<512x512xf32>
    %23 = arith.subf %22, %21 : vector<512x512xf32>
    %24 = arith.mulf %23, %23 : vector<512x512xf32>
    %25 = arith.mulf %24, %18 : vector<512x512xf32>
    %26 = tpu.iota {dimensions = array<i32: 0>} : vector<512x512xi32>
    %c512_i32 = arith.constant 512 : i32
    %27 = arith.muli %arg0, %c512_i32 : i32
    %28 = vector.broadcast %27 : i32 to vector<512x512xi32>
    %29 = arith.addi %26, %28 : vector<512x512xi32>
    %30 = tpu.iota {dimensions = array<i32: 1>} : vector<512x512xi32>
    %c512_i32_9 = arith.constant 512 : i32
    %31 = vector.broadcast %c512_i32_9 : i32 to vector<512x512xi32>
    %32 = arith.muli %29, %31 : vector<512x512xi32>
    %33 = arith.addi %32, %30 : vector<512x512xi32>
    %c2048_i32 = arith.constant 2048 : i32
    %34 = vector.broadcast %c2048_i32 : i32 to vector<512x512xi32>
    %35 = arith.cmpi slt, %33, %34 : vector<512x512xi32>
    %cst_10 = arith.constant 0.000000e+00 : f32
    %36 = vector.broadcast %cst_10 : f32 to vector<512x512xf32>
    %37 = arith.select %35, %25, %36 : vector<512x512xi1>, vector<512x512xf32>
    %c0_11 = arith.constant 0 : index
    %38 = memref.load %arg4[%c0_11] : memref<1xf32, #tpu.memory_space<smem>>
    %39 = vector.shape_cast %37 : vector<512x512xf32> to vector<1x512x512xf32>
    %cst_12 = arith.constant dense<0.000000e+00> : vector<1xf32>
    %40 = vector.multi_reduction <add>, %39, %cst_12 [1, 2] : vector<1x512x512xf32> to vector<1xf32>
    %41 = vector.shape_cast %40 : vector<1xf32> to vector<1x1x1xf32>
    %42 = vector.extract %41[0, 0, 0] : f32 from vector<1x1x1xf32>
    %43 = arith.addf %38, %42 : f32
    %c0_13 = arith.constant 0 : index
    %44 = memref.load %arg4[%c0_13] : memref<1xf32, #tpu.memory_space<smem>>
    memref.store %43, %arg4[%c0_13] : memref<1xf32, #tpu.memory_space<smem>>
    %c0_14 = arith.constant 0 : index
    %45 = memref.load %arg4[%c0_14] : memref<1xf32, #tpu.memory_space<smem>>
    %c0_15 = arith.constant 0 : index
    %c0_16 = arith.constant 0 : index
    %46 = memref.load %arg3[%c0_15, %c0_16] : memref<1x1xf32, #tpu.memory_space<smem>>
    memref.store %45, %arg3[%c0_15, %c0_16] : memref<1x1xf32, #tpu.memory_space<smem>>
    return
  }
  func.func @transform_0(%arg0: i32) -> (i32, i32) {
    %c0_i32 = arith.constant 0 : i32
    %c0_i32_0 = arith.constant 0 : i32
    return %arg0, %c0_i32 : i32, i32
  }
  func.func @transform_1(%arg0: i32) -> (i32, i32) {
    %c0_i32 = arith.constant 0 : i32
    %c0_i32_0 = arith.constant 0 : i32
    return %arg0, %c0_i32 : i32, i32
  }
  func.func @transform_2(%arg0: i32) -> (i32, i32) {
    %c0_i32 = arith.constant 0 : i32
    %c0_i32_0 = arith.constant 0 : i32
    %c0_i32_1 = arith.constant 0 : i32
    return %c0_i32, %c0_i32_0 : i32, i32
  }
}

</mosaic_0001>

<llo_original>
// kernel: tpu_custom_call.1
$region0: #{tpu_custom_call.1}
  #allocation0 [shape = 'u32[]', space=smem, size = 0x4, offset = 0x4, fixed_abs, tag = 'smem constant byte address 0x4 - core index']
  #allocation1 [shape = 'u32[144,128]{1,0:T(1,128)}', space=vmem, size = 0x12000, scoped, tag = 'internal scratch']
  #allocation2 [shape = 'f32[1]{0:T(128)}', space=smem, size = 0x200, scoped, tag = 'scratch operand']
  %s0 = inlined_call_operand.hbm [shape: f32[512,512], index: 0, kind: input, shape index: {}]
  %s1 = inlined_call_operand.hbm [shape: f32[512,512], index: 1, kind: input, shape index: {}]
  %s2 = inlined_call_operand.hbm [shape: f32[1,1], index: 2, kind: output, shape index: {}]
  %s3 = sld [smem:[#allocation0]]
  $region30: #{tpu_custom_call.1} parent=0
    _
  %s5 = ssub.s32 1, %s3
  %s6 = scalar_select 0, %s5, %s3
  $region1: #{tpu_custom_call.1} parent=0
    #allocation3 [shape = 'u8[1048576]{0}', space=vmem, size = 0x100000, scoped, tag = 'input window, operand 0, single buffered']
    #allocation4 [shape = 's32[1]{0}', space=sflag, size = 0x4, scoped, tag = 'scoped memory for tpu_custom_call.1']
    #allocation5 [shape = 's32[1]{0}', space=sflag, size = 0x4, scoped, tag = 'scoped memory for tpu_custom_call.1']
    #allocation6 [shape = 'u8[1048576]{0}', space=vmem, size = 0x100000, scoped, tag = 'input window, operand 1, single buffered']
    #allocation7 [shape = 's32[1]{0}', space=sflag, size = 0x4, scoped, tag = 'scoped memory for tpu_custom_call.1']
    #allocation8 [shape = 'u8[512]{0}', space=smem, size = 0x200, scoped, tag = 'output window, operand 0, single buffered']
    %7 = vsyncpa [#allocation4], 0
    %8 = vsyncpa [#allocation7], 0
    %9 = vsyncpa [#allocation5], 0
    // Predicated region
    $region2: #{tpu_custom_call.1} parent=1 // pred_check
      _
    $region3: #{tpu_custom_call.1} parent=1 // pred_check_branch
      %11 = sbr.rel (0) target = $region5
    $region4: #{tpu_custom_call.1} parent=1 // pred_region
      %s13 = ssub.s32 32768, 32768
      %14 = vsyncadd [#allocation4], %s13
      %s15 = sshll.u32 [#allocation3], 4
      %s16 = int_to_ptr.vmem [resolvable:$true] %s15
      %21 = dma.hbm_to_vmem [thread:$0]  %s0, 32768, %s16, [#allocation4], 512, 512, 32
    $region5: #{tpu_custom_call.1} parent=1 // pred_fallthru
      _
    // Predicated region
    $region6: #{tpu_custom_call.1} parent=1 // pred_check
      _
    $region7: #{tpu_custom_call.1} parent=1 // pred_check_branch
      %23 = sbr.rel (0) target = $region9
    $region8: #{tpu_custom_call.1} parent=1 // pred_region
      %s25 = ssub.s32 32768, 32768
      %26 = vsyncadd [#allocation7], %s25
      %s27 = sshll.u32 [#allocation6], 4
      %s28 = int_to_ptr.vmem [resolvable:$true] %s27
      %33 = dma.hbm_to_vmem [thread:$0]  %s1, 32768, %s28, [#allocation7], 512, 512, 32
    $region9: #{tpu_custom_call.1} parent=1 // pred_fallthru
      _
    // Predicated region
    $region10: #{tpu_custom_call.1} parent=1 // pred_check
      _
    $region11: #{tpu_custom_call.1} parent=1 // pred_check_branch
      %35 = sbr.rel (0) target = $region13
    $region12: #{tpu_custom_call.1} parent=1 // pred_region
      %36 = dma.done [#allocation4], 32768
    $region13: #{tpu_custom_call.1} parent=1 // pred_fallthru
      _
    // Predicated region
    $region14: #{tpu_custom_call.1} parent=1 // pred_check
      _
    $region15: #{tpu_custom_call.1} parent=1 // pred_check_branch
      %38 = sbr.rel (0) target = $region17
    $region16: #{tpu_custom_call.1} parent=1 // pred_region
      %39 = dma.done [#allocation7], 32768
    $region17: #{tpu_custom_call.1} parent=1 // pred_fallthru
      _
    %p40 = scmp.eq.s32.totalorder 0, 0
    // Predicated region
    $region18: #{tpu_custom_call.1} parent=1 // pred_check
      %p41 = pneg %p40
    $region19: #{tpu_custom_call.1} parent=1 // pred_check_branch
      %43 = sbr.rel (%p41) target = $region21
    $region20: #{tpu_custom_call.1} parent=1 // pred_region
      %s44 = scalar_lea.smem [#allocation2], 0
      %45 = sst [smem:[%s44]] 0.0
    $region21: #{tpu_custom_call.1} parent=1 // pred_fallthru
      _
    %v46 = vld [vmem:[#allocation3] sm:$0xff]
    %v47 = vld [vmem:[#allocation3 + $0x8] sm:$0xff]
    %v48 = vld [vmem:[#allocation3 + $0x10] sm:$0xff]
    %v49 = vld [vmem:[#allocation3 + $0x18] sm:$0xff]
    %v50 = vld [vmem:[#allocation3 + $0x20] sm:$0xff]
    %v51 = vld [vmem:[#allocation3 + $0x28] sm:$0xff]
    %v52 = vld [vmem:[#allocation3 + $0x30] sm:$0xff]
    %v53 = vld [vmem:[#allocation3 + $0x38] sm:$0xff]
    %v54 = vld [vmem:[#allocation3 + $0x40] sm:$0xff]
    %v55 = vld [vmem:[#allocation3 + $0x48] sm:$0xff]
    %v56 = vld [vmem:[#allocation3 + $0x50] sm:$0xff]
    %v57 = vld [vmem:[#allocation3 + $0x58] sm:$0xff]
    %v58 = vld [vmem:[#allocation3 + $0x60] sm:$0xff]
    %v59 = vld [vmem:[#allocation3 + $0x68] sm:$0xff]
    %v60 = vld [vmem:[#allocation3 + $0x70] sm:$0xff]
    %v61 = vld [vmem:[#allocation3 + $0x78] sm:$0xff]
    %v62 = vld [vmem:[#allocation3 + $0x80] sm:$0xff]
    %v63 = vld [vmem:[#allocation3 + $0x88] sm:$0xff]
    %v64 = vld [vmem:[#allocation3 + $0x90] sm:$0xff]
    %v65 = vld [vmem:[#allocation3 + $0x98] sm:$0xff]
    %v66 = vld [vmem:[#allocation3 + $0xa0] sm:$0xff]
    %v67 = vld [vmem:[#allocation3 + $0xa8] sm:$0xff]
    %v68 = vld [vmem:[#allocation3 + $0xb0] sm:$0xff]
    %v69 = vld [vmem:[#allocation3 + $0xb8] sm:$0xff]
    %v70 = vld [vmem:[#allocation3 + $0xc0] sm:$0xff]
    %v71 = vld [vmem:[#allocation3 + $0xc8] sm:$0xff]
    %v72 = vld [vmem:[#allocation3 + $0xd0] sm:$0xff]
    %v73 = vld [vmem:[#allocation3 + $0xd8] sm:$0xff]
    %v74 = vld [vmem:[#allocation3 + $0xe0] sm:$0xff]
    %v75 = vld [vmem:[#allocation3 + $0xe8] sm:$0xff]
    %v76 = vld [vmem:[#allocation3 + $0xf0] sm:$0xff]
    %v77 = vld [vmem:[#allocation3 + $0xf8] sm:$0xff]
    %v78 = vld [vmem:[#allocation3 + $0x100] sm:$0xff]
    %v79 = vld [vmem:[#allocation3 + $0x108] sm:$0xff]
    %v80 = vld [vmem:[#allocation3 + $0x110] sm:$0xff]
    %v81 = vld [vmem:[#allocation3 + $0x118] sm:$0xff]
    %v82 = vld [vmem:[#allocation3 + $0x120] sm:$0xff]
    %v83 = vld [vmem:[#allocation3 + $0x128] sm:$0xff]
    %v84 = vld [vmem:[#allocation3 + $0x130] sm:$0xff]
    %v85 = vld [vmem:[#allocation3 + $0x138] sm:$0xff]
    %v86 = vld [vmem:[#allocation3 + $0x140] sm:$0xff]
    %v87 = vld [vmem:[#allocation3 + $0x148] sm:$0xff]
    %v88 = vld [vmem:[#allocation3 + $0x150] sm:$0xff]
    %v89 = vld [vmem:[#allocation3 + $0x158] sm:$0xff]
    %v90 = vld [vmem:[#allocation3 + $0x160] sm:$0xff]
    %v91 = vld [vmem:[#allocation3 + $0x168] sm:$0xff]
    %v92 = vld [vmem:[#allocation3 + $0x170] sm:$0xff]
    %v93 = vld [vmem:[#allocation3 + $0x178] sm:$0xff]
    %v94 = vld [vmem:[#allocation3 + $0x180] sm:$0xff]
    %v95 = vld [vmem:[#allocation3 + $0x188] sm:$0xff]
    %v96 = vld [vmem:[#allocation3 + $0x190] sm:$0xff]
    %v97 = vld [vmem:[#allocation3 + $0x198] sm:$0xff]
    %v98 = vld [vmem:[#allocation3 + $0x1a0] sm:$0xff]
    %v99 = vld [vmem:[#allocation3 + $0x1a8] sm:$0xff]
    %v100 = vld [vmem:[#allocation3 + $0x1b0] sm:$0xff]
    %v101 = vld [vmem:[#allocation3 + $0x1b8] sm:$0xff]
    %v102 = vld [vmem:[#allocation3 + $0x1c0] sm:$0xff]
    %v103 = vld [vmem:[#allocation3 + $0x1c8] sm:$0xff]
    %v104 = vld [vmem:[#allocation3 + $0x1d0] sm:$0xff]
    %v105 = vld [vmem:[#allocation3 + $0x1d8] sm:$0xff]
    %v106 = vld [vmem:[#allocation3 + $0x1e0] sm:$0xff]
    %v107 = vld [vmem:[#allocation3 + $0x1e8] sm:$0xff]
    %v108 = vld [vmem:[#allocation3 + $0x1f0] sm:$0xff]
    %v109 = vld [vmem:[#allocation3 + $0x1f8] sm:$0xff]
    %v110 = vld [vmem:[#allocation3 + $0x200] sm:$0xff]
    %v111 = vld [vmem:[#allocation3 + $0x208] sm:$0xff]
    %v112 = vld [vmem:[#allocation3 + $0x210] sm:$0xff]
    %v113 = vld [vmem:[#allocation3 + $0x218] sm:$0xff]
    %v114 = vld [vmem:[#allocation3 + $0x220] sm:$0xff]
    %v115 = vld [vmem:[#allocation3 + $0x228] sm:$0xff]
    %v116 = vld [vmem:[#allocation3 + $0x230] sm:$0xff]
    %v117 = vld [vmem:[#allocation3 + $0x238] sm:$0xff]
    %v118 = vld [vmem:[#allocation3 + $0x240] sm:$0xff]
    %v119 = vld [vmem:[#allocation3 + $0x248] sm:$0xff]
    %v120 = vld [vmem:[#allocation3 + $0x250] sm:$0xff]
    %v121 = vld [vmem:[#allocation3 + $0x258] sm:$0xff]
    %v122 = vld [vmem:[#allocation3 + $0x260] sm:$0xff]
    %v123 = vld [vmem:[#allocation3 + $0x268] sm:$0xff]
    %v124 = vld [vmem:[#allocation3 + $0x270] sm:$0xff]
    %v125 = vld [vmem:[#allocation3 + $0x278] sm:$0xff]
    %v126 = vld [vmem:[#allocation3 + $0x280] sm:$0xff]
    %v127 = vld [vmem:[#allocation3 + $0x288] sm:$0xff]
    %v128 = vld [vmem:[#allocation3 + $0x290] sm:$0xff]
    %v129 = vld [vmem:[#allocation3 + $0x298] sm:$0xff]
    %v130 = vld [vmem:[#allocation3 + $0x2a0] sm:$0xff]
    %v131 = vld [vmem:[#allocation3 + $0x2a8] sm:$0xff]
    %v132 = vld [vmem:[#allocation3 + $0x2b0] sm:$0xff]
    %v133 = vld [vmem:[#allocation3 + $0x2b8] sm:$0xff]
    %v134 = vld [vmem:[#allocation3 + $0x2c0] sm:$0xff]
    %v135 = vld [vmem:[#allocation3 + $0x2c8] sm:$0xff]
    %v136 = vld [vmem:[#allocation3 + $0x2d0] sm:$0xff]
    %v137 = vld [vmem:[#allocation3 + $0x2d8] sm:$0xff]
    %v138 = vld [vmem:[#allocation3 + $0x2e0] sm:$0xff]
    %v139 = vld [vmem:[#allocation3 + $0x2e8] sm:$0xff]
    %v140 = vld [vmem:[#allocation3 + $0x2f0] sm:$0xff]
    %v141 = vld [vmem:[#allocation3 + $0x2f8] sm:$0xff]
    %v142 = vld [vmem:[#allocation3 + $0x300] sm:$0xff]
    %v143 = vld [vmem:[#allocation3 + $0x308] sm:$0xff]
    %v144 = vld [vmem:[#allocation3 + $0x310] sm:$0xff]
    %v145 = vld [vmem:[#allocation3 + $0x318] sm:$0xff]
    %v146 = vld [vmem:[#allocation3 + $0x320] sm:$0xff]
    %v147 = vld [vmem:[#allocation3 + $0x328] sm:$0xff]
    %v148 = vld [vmem:[#allocation3 + $0x330] sm:$0xff]
    %v149 = vld [vmem:[#allocation3 + $0x338] sm:$0xff]
    %v150 = vld [vmem:[#allocation3 + $0x340] sm:$0xff]
    %v151 = vld [vmem:[#allocation3 + $0x348] sm:$0xff]
    %v152 = vld [vmem:[#allocation3 + $0x350] sm:$0xff]
    %v153 = vld [vmem:[#allocation3 + $0x358] sm:$0xff]
    %v154 = vld [vmem:[#allocation3 + $0x360] sm:$0xff]
    %v155 = vld [vmem:[#allocation3 + $0x368] sm:$0xff]
    %v156 = vld [vmem:[#allocation3 + $0x370] sm:$0xff]
    %v157 = vld [vmem:[#allocation3 + $0x378] sm:$0xff]
    %v158 = vld [vmem:[#allocation3 + $0x380] sm:$0xff]
    %v159 = vld [vmem:[#allocation3 + $0x388] sm:$0xff]
    %v160 = vld [vmem:[#allocation3 + $0x390] sm:$0xff]
    %v161 = vld [vmem:[#allocation3 + $0x398] sm:$0xff]
    %v162 = vld [vmem:[#allocation3 + $0x3a0] sm:$0xff]
    %v163 = vld [vmem:[#allocation3 + $0x3a8] sm:$0xff]
    %v164 = vld [vmem:[#allocation3 + $0x3b0] sm:$0xff]
    %v165 = vld [vmem:[#allocation3 + $0x3b8] sm:$0xff]
    %v166 = vld [vmem:[#allocation3 + $0x3c0] sm:$0xff]
    %v167 = vld [vmem:[#allocation3 + $0x3c8] sm:$0xff]
    %v168 = vld [vmem:[#allocation3 + $0x3d0] sm:$0xff]
    %v169 = vld [vmem:[#allocation3 + $0x3d8] sm:$0xff]
    %v170 = vld [vmem:[#allocation3 + $0x3e0] sm:$0xff]
    %v171 = vld [vmem:[#allocation3 + $0x3e8] sm:$0xff]
    %v172 = vld [vmem:[#allocation3 + $0x3f0] sm:$0xff]
    %v173 = vld [vmem:[#allocation3 + $0x3f8] sm:$0xff]
    %v174 = vld [vmem:[#allocation3 + $0x400] sm:$0xff]
    %v175 = vld [vmem:[#allocation3 + $0x408] sm:$0xff]
    %v176 = vld [vmem:[#allocation3 + $0x410] sm:$0xff]
    %v177 = vld [vmem:[#allocation3 + $0x418] sm:$0xff]
    %v178 = vld [vmem:[#allocation3 + $0x420] sm:$0xff]
    %v179 = vld [vmem:[#allocation3 + $0x428] sm:$0xff]
    %v180 = vld [vmem:[#allocation3 + $0x430] sm:$0xff]
    %v181 = vld [vmem:[#allocation3 + $0x438] sm:$0xff]
    %v182 = vld [vmem:[#allocation3 + $0x440] sm:$0xff]
    %v183 = vld [vmem:[#allocation3 + $0x448] sm:$0xff]
    %v184 = vld [vmem:[#allocation3 + $0x450] sm:$0xff]
    %v185 = vld [vmem:[#allocation3 + $0x458] sm:$0xff]
    %v186 = vld [vmem:[#allocation3 + $0x460] sm:$0xff]
    %v187 = vld [vmem:[#allocation3 + $0x468] sm:$0xff]
    %v188 = vld [vmem:[#allocation3 + $0x470] sm:$0xff]
    %v189 = vld [vmem:[#allocation3 + $0x478] sm:$0xff]
    %v190 = vld [vmem:[#allocation3 + $0x480] sm:$0xff]
    %v191 = vld [vmem:[#allocation3 + $0x488] sm:$0xff]
    %v192 = vld [vmem:[#allocation3 + $0x490] sm:$0xff]
    %v193 = vld [vmem:[#allocation3 + $0x498] sm:$0xff]
    %v194 = vld [vmem:[#allocation3 + $0x4a0] sm:$0xff]
    %v195 = vld [vmem:[#allocation3 + $0x4a8] sm:$0xff]
    %v196 = vld [vmem:[#allocation3 + $0x4b0] sm:$0xff]
    %v197 = vld [vmem:[#allocation3 + $0x4b8] sm:$0xff]
    %v198 = vld [vmem:[#allocation3 + $0x4c0] sm:$0xff]
    %v199 = vld [vmem:[#allocation3 + $0x4c8] sm:$0xff]
    %v200 = vld [vmem:[#allocation3 + $0x4d0] sm:$0xff]
    %v201 = vld [vmem:[#allocation3 + $0x4d8] sm:$0xff]
    %v202 = vld [vmem:[#allocation3 + $0x4e0] sm:$0xff]
    %v203 = vld [vmem:[#allocation3 + $0x4e8] sm:$0xff]
    %v204 = vld [vmem:[#allocation3 + $0x4f0] sm:$0xff]
    %v205 = vld [vmem:[#allocation3 + $0x4f8] sm:$0xff]
    %v206 = vld [vmem:[#allocation3 + $0x500] sm:$0xff]
    %v207 = vld [vmem:[#allocation3 + $0x508] sm:$0xff]
    %v208 = vld [vmem:[#allocation3 + $0x510] sm:$0xff]
    %v209 = vld [vmem:[#allocation3 + $0x518] sm:$0xff]
    %v210 = vld [vmem:[#allocation3 + $0x520] sm:$0xff]
    %v211 = vld [vmem:[#allocation3 + $0x528] sm:$0xff]
    %v212 = vld [vmem:[#allocation3 + $0x530] sm:$0xff]
    %v213 = vld [vmem:[#allocation3 + $0x538] sm:$0xff]
    %v214 = vld [vmem:[#allocation3 + $0x540] sm:$0xff]
    %v215 = vld [vmem:[#allocation3 + $0x548] sm:$0xff]
    %v216 = vld [vmem:[#allocation3 + $0x550] sm:$0xff]
    %v217 = vld [vmem:[#allocation3 + $0x558] sm:$0xff]
    %v218 = vld [vmem:[#allocation3 + $0x560] sm:$0xff]
    %v219 = vld [vmem:[#allocation3 + $0x568] sm:$0xff]
    %v220 = vld [vmem:[#allocation3 + $0x570] sm:$0xff]
    %v221 = vld [vmem:[#allocation3 + $0x578] sm:$0xff]
    %v222 = vld [vmem:[#allocation3 + $0x580] sm:$0xff]
    %v223 = vld [vmem:[#allocation3 + $0x588] sm:$0xff]
    %v224 = vld [vmem:[#allocation3 + $0x590] sm:$0xff]
    %v225 = vld [vmem:[#allocation3 + $0x598] sm:$0xff]
    %v226 = vld [vmem:[#allocation3 + $0x5a0] sm:$0xff]
    %v227 = vld [vmem:[#allocation3 + $0x5a8] sm:$0xff]
    %v228 = vld [vmem:[#allocation3 + $0x5b0] sm:$0xff]
    %v229 = vld [vmem:[#allocation3 + $0x5b8] sm:$0xff]
    %v230 = vld [vmem:[#allocation3 + $0x5c0] sm:$0xff]
    %v231 = vld [vmem:[#allocation3 + $0x5c8] sm:$0xff]
    %v232 = vld [vmem:[#allocation3 + $0x5d0] sm:$0xff]
    %v233 = vld [vmem:[#allocation3 + $0x5d8] sm:$0xff]
    %v234 = vld [vmem:[#allocation3 + $0x5e0] sm:$0xff]
    %v235 = vld [vmem:[#allocation3 + $0x5e8] sm:$0xff]
    %v236 = vld [vmem:[#allocation3 + $0x5f0] sm:$0xff]
    %v237 = vld [vmem:[#allocation3 + $0x5f8] sm:$0xff]
    %v238 = vld [vmem:[#allocation3 + $0x600] sm:$0xff]
    %v239 = vld [vmem:[#allocation3 + $0x608] sm:$0xff]
    %v240 = vld [vmem:[#allocation3 + $0x610] sm:$0xff]
    %v241 = vld [vmem:[#allocation3 + $0x618] sm:$0xff]
    %v242 = vld [vmem:[#allocation3 + $0x620] sm:$0xff]
    %v243 = vld [vmem:[#allocation3 + $0x628] sm:$0xff]
    %v244 = vld [vmem:[#allocation3 + $0x630] sm:$0xff]
    %v245 = vld [vmem:[#allocation3 + $0x638] sm:$0xff]
    %v246 = vld [vmem:[#allocation3 + $0x640] sm:$0xff]
    %v247 = vld [vmem:[#allocation3 + $0x648] sm:$0xff]
    %v248 = vld [vmem:[#allocation3 + $0x650] sm:$0xff]
    %v249 = vld [vmem:[#allocation3 + $0x658] sm:$0xff]
    %v250 = vld [vmem:[#allocation3 + $0x660] sm:$0xff]
    %v251 = vld [vmem:[#allocation3 + $0x668] sm:$0xff]
    %v252 = vld [vmem:[#allocation3 + $0x670] sm:$0xff]
    %v253 = vld [vmem:[#allocation3 + $0x678] sm:$0xff]
    %v254 = vld [vmem:[#allocation3 + $0x680] sm:$0xff]
    %v255 = vld [vmem:[#allocation3 + $0x688] sm:$0xff]
    %v256 = vld [vmem:[#allocation3 + $0x690] sm:$0xff]
    %v257 = vld [vmem:[#allocation3 + $0x698] sm:$0xff]
    %v258 = vld [vmem:[#allocation3 + $0x6a0] sm:$0xff]
    %v259 = vld [vmem:[#allocation3 + $0x6a8] sm:$0xff]
    %v260 = vld [vmem:[#allocation3 + $0x6b0] sm:$0xff]
    %v261 = vld [vmem:[#allocation3 + $0x6b8] sm:$0xff]
    %v262 = vld [vmem:[#allocation3 + $0x6c0] sm:$0xff]
    %v263 = vld [vmem:[#allocation3 + $0x6c8] sm:$0xff]
    %v264 = vld [vmem:[#allocation3 + $0x6d0] sm:$0xff]
    %v265 = vld [vmem:[#allocation3 + $0x6d8] sm:$0xff]
    %v266 = vld [vmem:[#allocation3 + $0x6e0] sm:$0xff]
    %v267 = vld [vmem:[#allocation3 + $0x6e8] sm:$0xff]
    %v268 = vld [vmem:[#allocation3 + $0x6f0] sm:$0xff]
    %v269 = vld [vmem:[#allocation3 + $0x6f8] sm:$0xff]
    %v270 = vld [vmem:[#allocation3 + $0x700] sm:$0xff]
    %v271 = vld [vmem:[#allocation3 + $0x708] sm:$0xff]
    %v272 = vld [vmem:[#allocation3 + $0x710] sm:$0xff]
    %v273 = vld [vmem:[#allocation3 + $0x718] sm:$0xff]
    %v274 = vld [vmem:[#allocation3 + $0x720] sm:$0xff]
    %v275 = vld [vmem:[#allocation3 + $0x728] sm:$0xff]
    %v276 = vld [vmem:[#allocation3 + $0x730] sm:$0xff]
    %v277 = vld [vmem:[#allocation3 + $0x738] sm:$0xff]
    %v278 = vld [vmem:[#allocation3 + $0x740] sm:$0xff]
    %v279 = vld [vmem:[#allocation3 + $0x748] sm:$0xff]
    %v280 = vld [vmem:[#allocation3 + $0x750] sm:$0xff]
    %v281 = vld [vmem:[#allocation3 + $0x758] sm:$0xff]
    %v282 = vld [vmem:[#allocation3 + $0x760] sm:$0xff]
    %v283 = vld [vmem:[#allocation3 + $0x768] sm:$0xff]
    %v284 = vld [vmem:[#allocation3 + $0x770] sm:$0xff]
    %v285 = vld [vmem:[#allocation3 + $0x778] sm:$0xff]
    %v286 = vld [vmem:[#allocation3 + $0x780] sm:$0xff]
    %v287 = vld [vmem:[#allocation3 + $0x788] sm:$0xff]
    %v288 = vld [vmem:[#allocation3 + $0x790] sm:$0xff]
    %v289 = vld [vmem:[#allocation3 + $0x798] sm:$0xff]
    %v290 = vld [vmem:[#allocation3 + $0x7a0] sm:$0xff]
    %v291 = vld [vmem:[#allocation3 + $0x7a8] sm:$0xff]
    %v292 = vld [vmem:[#allocation3 + $0x7b0] sm:$0xff]
    %v293 = vld [vmem:[#allocation3 + $0x7b8] sm:$0xff]
    %v294 = vld [vmem:[#allocation3 + $0x7c0] sm:$0xff]
    %v295 = vld [vmem:[#allocation3 + $0x7c8] sm:$0xff]
    %v296 = vld [vmem:[#allocation3 + $0x7d0] sm:$0xff]
    %v297 = vld [vmem:[#allocation3 + $0x7d8] sm:$0xff]
    %v298 = vld [vmem:[#allocation3 + $0x7e0] sm:$0xff]
    %v299 = vld [vmem:[#allocation3 + $0x7e8] sm:$0xff]
    %v300 = vld [vmem:[#allocation3 + $0x7f0] sm:$0xff]
    %v301 = vld [vmem:[#allocation3 + $0x7f8] sm:$0xff]
    %v302 = vld [vmem:[#allocation6] sm:$0xff]
    %v303 = vld [vmem:[#allocation6 + $0x8] sm:$0xff]
    %v304 = vld [vmem:[#allocation6 + $0x10] sm:$0xff]
    %v305 = vld [vmem:[#allocation6 + $0x18] sm:$0xff]
    %v306 = vld [vmem:[#allocation6 + $0x20] sm:$0xff]
    %v307 = vld [vmem:[#allocation6 + $0x28] sm:$0xff]
    %v308 = vld [vmem:[#allocation6 + $0x30] sm:$0xff]
    %v309 = vld [vmem:[#allocation6 + $0x38] sm:$0xff]
    %v310 = vld [vmem:[#allocation6 + $0x40] sm:$0xff]
    %v311 = vld [vmem:[#allocation6 + $0x48] sm:$0xff]
    %v312 = vld [vmem:[#allocation6 + $0x50] sm:$0xff]
    %v313 = vld [vmem:[#allocation6 + $0x58] sm:$0xff]
    %v314 = vld [vmem:[#allocation6 + $0x60] sm:$0xff]
    %v315 = vld [vmem:[#allocation6 + $0x68] sm:$0xff]
    %v316 = vld [vmem:[#allocation6 + $0x70] sm:$0xff]
    %v317 = vld [vmem:[#allocation6 + $0x78] sm:$0xff]
    %v318 = vld [vmem:[#allocation6 + $0x80] sm:$0xff]
    %v319 = vld [vmem:[#allocation6 + $0x88] sm:$0xff]
    %v320 = vld [vmem:[#allocation6 + $0x90] sm:$0xff]
    %v321 = vld [vmem:[#allocation6 + $0x98] sm:$0xff]
    %v322 = vld [vmem:[#allocation6 + $0xa0] sm:$0xff]
    %v323 = vld [vmem:[#allocation6 + $0xa8] sm:$0xff]
    %v324 = vld [vmem:[#allocation6 + $0xb0] sm:$0xff]
    %v325 = vld [vmem:[#allocation6 + $0xb8] sm:$0xff]
    %v326 = vld [vmem:[#allocation6 + $0xc0] sm:$0xff]
    %v327 = vld [vmem:[#allocation6 + $0xc8] sm:$0xff]
    %v328 = vld [vmem:[#allocation6 + $0xd0] sm:$0xff]
    %v329 = vld [vmem:[#allocation6 + $0xd8] sm:$0xff]
    %v330 = vld [vmem:[#allocation6 + $0xe0] sm:$0xff]
    %v331 = vld [vmem:[#allocation6 + $0xe8] sm:$0xff]
    %v332 = vld [vmem:[#allocation6 + $0xf0] sm:$0xff]
    %v333 = vld [vmem:[#allocation6 + $0xf8] sm:$0xff]
    %v334 = vld [vmem:[#allocation6 + $0x100] sm:$0xff]
    %v335 = vld [vmem:[#allocation6 + $0x108] sm:$0xff]
    %v336 = vld [vmem:[#allocation6 + $0x110] sm:$0xff]
    %v337 = vld [vmem:[#allocation6 + $0x118] sm:$0xff]
    %v338 = vld [vmem:[#allocation6 + $0x120] sm:$0xff]
    %v339 = vld [vmem:[#allocation6 + $0x128] sm:$0xff]
    %v340 = vld [vmem:[#allocation6 + $0x130] sm:$0xff]
    %v341 = vld [vmem:[#allocation6 + $0x138] sm:$0xff]
    %v342 = vld [vmem:[#allocation6 + $0x140] sm:$0xff]
    %v343 = vld [vmem:[#allocation6 + $0x148] sm:$0xff]
    %v344 = vld [vmem:[#allocation6 + $0x150] sm:$0xff]
    %v345 = vld [vmem:[#allocation6 + $0x158] sm:$0xff]
    %v346 = vld [vmem:[#allocation6 + $0x160] sm:$0xff]
    %v347 = vld [vmem:[#allocation6 + $0x168] sm:$0xff]
    %v348 = vld [vmem:[#allocation6 + $0x170] sm:$0xff]
    %v349 = vld [vmem:[#allocation6 + $0x178] sm:$0xff]
    %v350 = vld [vmem:[#allocation6 + $0x180] sm:$0xff]
    %v351 = vld [vmem:[#allocation6 + $0x188] sm:$0xff]
    %v352 = vld [vmem:[#allocation6 + $0x190] sm:$0xff]
    %v353 = vld [vmem:[#allocation6 + $0x198] sm:$0xff]
    %v354 = vld [vmem:[#allocation6 + $0x1a0] sm:$0xff]
    %v355 = vld [vmem:[#allocation6 + $0x1a8] sm:$0xff]
    %v356 = vld [vmem:[#allocation6 + $0x1b0] sm:$0xff]
    %v357 = vld [vmem:[#allocation6 + $0x1b8] sm:$0xff]
    %v358 = vld [vmem:[#allocation6 + $0x1c0] sm:$0xff]
    %v359 = vld [vmem:[#allocation6 + $0x1c8] sm:$0xff]
    %v360 = vld [vmem:[#allocation6 + $0x1d0] sm:$0xff]
    %v361 = vld [vmem:[#allocation6 + $0x1d8] sm:$0xff]
    %v362 = vld [vmem:[#allocation6 + $0x1e0] sm:$0xff]
    %v363 = vld [vmem:[#allocation6 + $0x1e8] sm:$0xff]
    %v364 = vld [vmem:[#allocation6 + $0x1f0] sm:$0xff]
    %v365 = vld [vmem:[#allocation6 + $0x1f8] sm:$0xff]
    %v366 = vld [vmem:[#allocation6 + $0x200] sm:$0xff]
    %v367 = vld [vmem:[#allocation6 + $0x208] sm:$0xff]
    %v368 = vld [vmem:[#allocation6 + $0x210] sm:$0xff]
    %v369 = vld [vmem:[#allocation6 + $0x218] sm:$0xff]
    %v370 = vld [vmem:[#allocation6 + $0x220] sm:$0xff]
    %v371 = vld [vmem:[#allocation6 + $0x228] sm:$0xff]
    %v372 = vld [vmem:[#allocation6 + $0x230] sm:$0xff]
    %v373 = vld [vmem:[#allocation6 + $0x238] sm:$0xff]
    %v374 = vld [vmem:[#allocation6 + $0x240] sm:$0xff]
    %v375 = vld [vmem:[#allocation6 + $0x248] sm:$0xff]
    %v376 = vld [vmem:[#allocation6 + $0x250] sm:$0xff]
    %v377 = vld [vmem:[#allocation6 + $0x258] sm:$0xff]
    %v378 = vld [vmem:[#allocation6 + $0x260] sm:$0xff]
    %v379 = vld [vmem:[#allocation6 + $0x268] sm:$0xff]
    %v380 = vld [vmem:[#allocation6 + $0x270] sm:$0xff]
    %v381 = vld [vmem:[#allocation6 + $0x278] sm:$0xff]
    %v382 = vld [vmem:[#allocation6 + $0x280] sm:$0xff]
    %v383 = vld [vmem:[#allocation6 + $0x288] sm:$0xff]
    %v384 = vld [vmem:[#allocation6 + $0x290] sm:$0xff]
    %v385 = vld [vmem:[#allocation6 + $0x298] sm:$0xff]
    %v386 = vld [vmem:[#allocation6 + $0x2a0] sm:$0xff]
    %v387 = vld [vmem:[#allocation6 + $0x2a8] sm:$0xff]
    %v388 = vld [vmem:[#allocation6 + $0x2b0] sm:$0xff]
    %v389 = vld [vmem:[#allocation6 + $0x2b8] sm:$0xff]
    %v390 = vld [vmem:[#allocation6 + $0x2c0] sm:$0xff]
    %v391 = vld [vmem:[#allocation6 + $0x2c8] sm:$0xff]
    %v392 = vld [vmem:[#allocation6 + $0x2d0] sm:$0xff]
    %v393 = vld [vmem:[#allocation6 + $0x2d8] sm:$0xff]
    %v394 = vld [vmem:[#allocation6 + $0x2e0] sm:$0xff]
    %v395 = vld [vmem:[#allocation6 + $0x2e8] sm:$0xff]
    %v396 = vld [vmem:[#allocation6 + $0x2f0] sm:$0xff]
    %v397 = vld [vmem:[#allocation6 + $0x2f8] sm:$0xff]
    %v398 = vld [vmem:[#allocation6 + $0x300] sm:$0xff]
    %v399 = vld [vmem:[#allocation6 + $0x308] sm:$0xff]
    %v400 = vld [vmem:[#allocation6 + $0x310] sm:$0xff]
    %v401 = vld [vmem:[#allocation6 + $0x318] sm:$0xff]
    %v402 = vld [vmem:[#allocation6 + $0x320] sm:$0xff]
    %v403 = vld [vmem:[#allocation6 + $0x328] sm:$0xff]
    %v404 = vld [vmem:[#allocation6 + $0x330] sm:$0xff]
    %v405 = vld [vmem:[#allocation6 + $0x338] sm:$0xff]
    %v406 = vld [vmem:[#allocation6 + $0x340] sm:$0xff]
    %v407 = vld [vmem:[#allocation6 + $0x348] sm:$0xff]
    %v408 = vld [vmem:[#allocation6 + $0x350] sm:$0xff]
    %v409 = vld [vmem:[#allocation6 + $0x358] sm:$0xff]
    %v410 = vld [vmem:[#allocation6 + $0x360] sm:$0xff]
    %v411 = vld [vmem:[#allocation6 + $0x368] sm:$0xff]
    %v412 = vld [vmem:[#allocation6 + $0x370] sm:$0xff]
    %v413 = vld [vmem:[#allocation6 + $0x378] sm:$0xff]
    %v414 = vld [vmem:[#allocation6 + $0x380] sm:$0xff]
    %v415 = vld [vmem:[#allocation6 + $0x388] sm:$0xff]
    %v416 = vld [vmem:[#allocation6 + $0x390] sm:$0xff]
    %v417 = vld [vmem:[#allocation6 + $0x398] sm:$0xff]
    %v418 = vld [vmem:[#allocation6 + $0x3a0] sm:$0xff]
    %v419 = vld [vmem:[#allocation6 + $0x3a8] sm:$0xff]
    %v420 = vld [vmem:[#allocation6 + $0x3b0] sm:$0xff]
    %v421 = vld [vmem:[#allocation6 + $0x3b8] sm:$0xff]
    %v422 = vld [vmem:[#allocation6 + $0x3c0] sm:$0xff]
    %v423 = vld [vmem:[#allocation6 + $0x3c8] sm:$0xff]
    %v424 = vld [vmem:[#allocation6 + $0x3d0] sm:$0xff]
    %v425 = vld [vmem:[#allocation6 + $0x3d8] sm:$0xff]
    %v426 = vld [vmem:[#allocation6 + $0x3e0] sm:$0xff]
    %v427 = vld [vmem:[#allocation6 + $0x3e8] sm:$0xff]
    %v428 = vld [vmem:[#allocation6 + $0x3f0] sm:$0xff]
    %v429 = vld [vmem:[#allocation6 + $0x3f8] sm:$0xff]
    %v430 = vld [vmem:[#allocation6 + $0x400] sm:$0xff]
    %v431 = vld [vmem:[#allocation6 + $0x408] sm:$0xff]
    %v432 = vld [vmem:[#allocation6 + $0x410] sm:$0xff]
    %v433 = vld [vmem:[#allocation6 + $0x418] sm:$0xff]
    %v434 = vld [vmem:[#allocation6 + $0x420] sm:$0xff]
    %v435 = vld [vmem:[#allocation6 + $0x428] sm:$0xff]
    %v436 = vld [vmem:[#allocation6 + $0x430] sm:$0xff]
    %v437 = vld [vmem:[#allocation6 + $0x438] sm:$0xff]
    %v438 = vld [vmem:[#allocation6 + $0x440] sm:$0xff]
    %v439 = vld [vmem:[#allocation6 + $0x448] sm:$0xff]
    %v440 = vld [vmem:[#allocation6 + $0x450] sm:$0xff]
    %v441 = vld [vmem:[#allocation6 + $0x458] sm:$0xff]
    %v442 = vld [vmem:[#allocation6 + $0x460] sm:$0xff]
    %v443 = vld [vmem:[#allocation6 + $0x468] sm:$0xff]
    %v444 = vld [vmem:[#allocation6 + $0x470] sm:$0xff]
    %v445 = vld [vmem:[#allocation6 + $0x478] sm:$0xff]
    %v446 = vld [vmem:[#allocation6 + $0x480] sm:$0xff]
    %v447 = vld [vmem:[#allocation6 + $0x488] sm:$0xff]
    %v448 = vld [vmem:[#allocation6 + $0x490] sm:$0xff]
    %v449 = vld [vmem:[#allocation6 + $0x498] sm:$0xff]
    %v450 = vld [vmem:[#allocation6 + $0x4a0] sm:$0xff]
    %v451 = vld [vmem:[#allocation6 + $0x4a8] sm:$0xff]
    %v452 = vld [vmem:[#allocation6 + $0x4b0] sm:$0xff]
    %v453 = vld [vmem:[#allocation6 + $0x4b8] sm:$0xff]
    %v454 = vld [vmem:[#allocation6 + $0x4c0] sm:$0xff]
    %v455 = vld [vmem:[#allocation6 + $0x4c8] sm:$0xff]
    %v456 = vld [vmem:[#allocation6 + $0x4d0] sm:$0xff]
    %v457 = vld [vmem:[#allocation6 + $0x4d8] sm:$0xff]
    %v458 = vld [vmem:[#allocation6 + $0x4e0] sm:$0xff]
    %v459 = vld [vmem:[#allocation6 + $0x4e8] sm:$0xff]
    %v460 = vld [vmem:[#allocation6 + $0x4f0] sm:$0xff]
    %v461 = vld [vmem:[#allocation6 + $0x4f8] sm:$0xff]
    %v462 = vld [vmem:[#allocation6 + $0x500] sm:$0xff]
    %v463 = vld [vmem:[#allocation6 + $0x508] sm:$0xff]
    %v464 = vld [vmem:[#allocation6 + $0x510] sm:$0xff]
    %v465 = vld [vmem:[#allocation6 + $0x518] sm:$0xff]
    %v466 = vld [vmem:[#allocation6 + $0x520] sm:$0xff]
    %v467 = vld [vmem:[#allocation6 + $0x528] sm:$0xff]
    %v468 = vld [vmem:[#allocation6 + $0x530] sm:$0xff]
    %v469 = vld [vmem:[#allocation6 + $0x538] sm:$0xff]
    %v470 = vld [vmem:[#allocation6 + $0x540] sm:$0xff]
    %v471 = vld [vmem:[#allocation6 + $0x548] sm:$0xff]
    %v472 = vld [vmem:[#allocation6 + $0x550] sm:$0xff]
    %v473 = vld [vmem:[#allocation6 + $0x558] sm:$0xff]
    %v474 = vld [vmem:[#allocation6 + $0x560] sm:$0xff]
    %v475 = vld [vmem:[#allocation6 + $0x568] sm:$0xff]
    %v476 = vld [vmem:[#allocation6 + $0x570] sm:$0xff]
    %v477 = vld [vmem:[#allocation6 + $0x578] sm:$0xff]
    %v478 = vld [vmem:[#allocation6 + $0x580] sm:$0xff]
    %v479 = vld [vmem:[#allocation6 + $0x588] sm:$0xff]
    %v480 = vld [vmem:[#allocation6 + $0x590] sm:$0xff]
    %v481 = vld [vmem:[#allocation6 + $0x598] sm:$0xff]
    %v482 = vld [vmem:[#allocation6 + $0x5a0] sm:$0xff]
    %v483 = vld [vmem:[#allocation6 + $0x5a8] sm:$0xff]
    %v484 = vld [vmem:[#allocation6 + $0x5b0] sm:$0xff]
    %v485 = vld [vmem:[#allocation6 + $0x5b8] sm:$0xff]
    %v486 = vld [vmem:[#allocation6 + $0x5c0] sm:$0xff]
    %v487 = vld [vmem:[#allocation6 + $0x5c8] sm:$0xff]
    %v488 = vld [vmem:[#allocation6 + $0x5d0] sm:$0xff]
    %v489 = vld [vmem:[#allocation6 + $0x5d8] sm:$0xff]
    %v490 = vld [vmem:[#allocation6 + $0x5e0] sm:$0xff]
    %v491 = vld [vmem:[#allocation6 + $0x5e8] sm:$0xff]
    %v492 = vld [vmem:[#allocation6 + $0x5f0] sm:$0xff]
    %v493 = vld [vmem:[#allocation6 + $0x5f8] sm:$0xff]
    %v494 = vld [vmem:[#allocation6 + $0x600] sm:$0xff]
    %v495 = vld [vmem:[#allocation6 + $0x608] sm:$0xff]
    %v496 = vld [vmem:[#allocation6 + $0x610] sm:$0xff]
    %v497 = vld [vmem:[#allocation6 + $0x618] sm:$0xff]
    %v498 = vld [vmem:[#allocation6 + $0x620] sm:$0xff]
    %v499 = vld [vmem:[#allocation6 + $0x628] sm:$0xff]
    %v500 = vld [vmem:[#allocation6 + $0x630] sm:$0xff]
    %v501 = vld [vmem:[#allocation6 + $0x638] sm:$0xff]
    %v502 = vld [vmem:[#allocation6 + $0x640] sm:$0xff]
    %v503 = vld [vmem:[#allocation6 + $0x648] sm:$0xff]
    %v504 = vld [vmem:[#allocation6 + $0x650] sm:$0xff]
    %v505 = vld [vmem:[#allocation6 + $0x658] sm:$0xff]
    %v506 = vld [vmem:[#allocation6 + $0x660] sm:$0xff]
    %v507 = vld [vmem:[#allocation6 + $0x668] sm:$0xff]
    %v508 = vld [vmem:[#allocation6 + $0x670] sm:$0xff]
    %v509 = vld [vmem:[#allocation6 + $0x678] sm:$0xff]
    %v510 = vld [vmem:[#allocation6 + $0x680] sm:$0xff]
    %v511 = vld [vmem:[#allocation6 + $0x688] sm:$0xff]
    %v512 = vld [vmem:[#allocation6 + $0x690] sm:$0xff]
    %v513 = vld [vmem:[#allocation6 + $0x698] sm:$0xff]
    %v514 = vld [vmem:[#allocation6 + $0x6a0] sm:$0xff]
    %v515 = vld [vmem:[#allocation6 + $0x6a8] sm:$0xff]
    %v516 = vld [vmem:[#allocation6 + $0x6b0] sm:$0xff]
    %v517 = vld [vmem:[#allocation6 + $0x6b8] sm:$0xff]
    %v518 = vld [vmem:[#allocation6 + $0x6c0] sm:$0xff]
    %v519 = vld [vmem:[#allocation6 + $0x6c8] sm:$0xff]
    %v520 = vld [vmem:[#allocation6 + $0x6d0] sm:$0xff]
    %v521 = vld [vmem:[#allocation6 + $0x6d8] sm:$0xff]
    %v522 = vld [vmem:[#allocation6 + $0x6e0] sm:$0xff]
    %v523 = vld [vmem:[#allocation6 + $0x6e8] sm:$0xff]
    %v524 = vld [vmem:[#allocation6 + $0x6f0] sm:$0xff]
    %v525 = vld [vmem:[#allocation6 + $0x6f8] sm:$0xff]
    %v526 = vld [vmem:[#allocation6 + $0x700] sm:$0xff]
    %v527 = vld [vmem:[#allocation6 + $0x708] sm:$0xff]
    %v528 = vld [vmem:[#allocation6 + $0x710] sm:$0xff]
    %v529 = vld [vmem:[#allocation6 + $0x718] sm:$0xff]
    %v530 = vld [vmem:[#allocation6 + $0x720] sm:$0xff]
    %v531 = vld [vmem:[#allocation6 + $0x728] sm:$0xff]
    %v532 = vld [vmem:[#allocation6 + $0x730] sm:$0xff]
    %v533 = vld [vmem:[#allocation6 + $0x738] sm:$0xff]
    %v534 = vld [vmem:[#allocation6 + $0x740] sm:$0xff]
    %v535 = vld [vmem:[#allocation6 + $0x748] sm:$0xff]
    %v536 = vld [vmem:[#allocation6 + $0x750] sm:$0xff]
    %v537 = vld [vmem:[#allocation6 + $0x758] sm:$0xff]
    %v538 = vld [vmem:[#allocation6 + $0x760] sm:$0xff]
    %v539 = vld [vmem:[#allocation6 + $0x768] sm:$0xff]
    %v540 = vld [vmem:[#allocation6 + $0x770] sm:$0xff]
    %v541 = vld [vmem:[#allocation6 + $0x778] sm:$0xff]
    %v542 = vld [vmem:[#allocation6 + $0x780] sm:$0xff]
    %v543 = vld [vmem:[#allocation6 + $0x788] sm:$0xff]
    %v544 = vld [vmem:[#allocation6 + $0x790] sm:$0xff]
    %v545 = vld [vmem:[#allocation6 + $0x798] sm:$0xff]
    %v546 = vld [vmem:[#allocation6 + $0x7a0] sm:$0xff]
    %v547 = vld [vmem:[#allocation6 + $0x7a8] sm:$0xff]
    %v548 = vld [vmem:[#allocation6 + $0x7b0] sm:$0xff]
    %v549 = vld [vmem:[#allocation6 + $0x7b8] sm:$0xff]
    %v550 = vld [vmem:[#allocation6 + $0x7c0] sm:$0xff]
    %v551 = vld [vmem:[#allocation6 + $0x7c8] sm:$0xff]
    %v552 = vld [vmem:[#allocation6 + $0x7d0] sm:$0xff]
    %v553 = vld [vmem:[#allocation6 + $0x7d8] sm:$0xff]
    %v554 = vld [vmem:[#allocation6 + $0x7e0] sm:$0xff]
    %v555 = vld [vmem:[#allocation6 + $0x7e8] sm:$0xff]
    %v556 = vld [vmem:[#allocation6 + $0x7f0] sm:$0xff]
    %v557 = vld [vmem:[#allocation6 + $0x7f8] sm:$0xff]
    %v558 = vsub.f32 0.0, %v46
    %v559 = vsub.f32 0.0, %v47
    %v560 = vsub.f32 0.0, %v48
    %v561 = vsub.f32 0.0, %v49
    %v562 = vsub.f32 0.0, %v50
    %v563 = vsub.f32 0.0, %v51
    %v564 = vsub.f32 0.0, %v52
    %v565 = vsub.f32 0.0, %v53
    %v566 = vsub.f32 0.0, %v54
    %v567 = vsub.f32 0.0, %v55
    %v568 = vsub.f32 0.0, %v56
    %v569 = vsub.f32 0.0, %v57
    %v570 = vsub.f32 0.0, %v58
    %v571 = vsub.f32 0.0, %v59
    %v572 = vsub.f32 0.0, %v60
    %v573 = vsub.f32 0.0, %v61
    %v574 = vsub.f32 0.0, %v62
    %v575 = vsub.f32 0.0, %v63
    %v576 = vsub.f32 0.0, %v64
    %v577 = vsub.f32 0.0, %v65
    %v578 = vsub.f32 0.0, %v66
    %v579 = vsub.f32 0.0, %v67
    %v580 = vsub.f32 0.0, %v68
    %v581 = vsub.f32 0.0, %v69
    %v582 = vsub.f32 0.0, %v70
    %v583 = vsub.f32 0.0, %v71
    %v584 = vsub.f32 0.0, %v72
    %v585 = vsub.f32 0.0, %v73
    %v586 = vsub.f32 0.0, %v74
    %v587 = vsub.f32 0.0, %v75
    %v588 = vsub.f32 0.0, %v76
    %v589 = vsub.f32 0.0, %v77
    %v590 = vsub.f32 0.0, %v78
    %v591 = vsub.f32 0.0, %v79
    %v592 = vsub.f32 0.0, %v80
    %v593 = vsub.f32 0.0, %v81
    %v594 = vsub.f32 0.0, %v82
    %v595 = vsub.f32 0.0, %v83
    %v596 = vsub.f32 0.0, %v84
    %v597 = vsub.f32 0.0, %v85
    %v598 = vsub.f32 0.0, %v86
    %v599 = vsub.f32 0.0, %v87
    %v600 = vsub.f32 0.0, %v88
    %v601 = vsub.f32 0.0, %v89
    %v602 = vsub.f32 0.0, %v90
    %v603 = vsub.f32 0.0, %v91
    %v604 = vsub.f32 0.0, %v92
    %v605 = vsub.f32 0.0, %v93
    %v606 = vsub.f32 0.0, %v94
    %v607 = vsub.f32 0.0, %v95
    %v608 = vsub.f32 0.0, %v96
    %v609 = vsub.f32 0.0, %v97
    %v610 = vsub.f32 0.0, %v98
    %v611 = vsub.f32 0.0, %v99
    %v612 = vsub.f32 0.0, %v100
    %v613 = vsub.f32 0.0, %v101
    %v614 = vsub.f32 0.0, %v102
    %v615 = vsub.f32 0.0, %v103
    %v616 = vsub.f32 0.0, %v104
    %v617 = vsub.f32 0.0, %v105
    %v618 = vsub.f32 0.0, %v106
    %v619 = vsub.f32 0.0, %v107
    %v620 = vsub.f32 0.0, %v108
    %v621 = vsub.f32 0.0, %v109
    %v622 = vsub.f32 0.0, %v110
    %v623 = vsub.f32 0.0, %v111
    %v624 = vsub.f32 0.0, %v112
    %v625 = vsub.f32 0.0, %v113
    %v626 = vsub.f32 0.0, %v114
    %v627 = vsub.f32 0.0, %v115
    %v628 = vsub.f32 0.0, %v116
    %v629 = vsub.f32 0.0, %v117
    %v630 = vsub.f32 0.0, %v118
    %v631 = vsub.f32 0.0, %v119
    %v632 = vsub.f32 0.0, %v120
    %v633 = vsub.f32 0.0, %v121
    %v634 = vsub.f32 0.0, %v122
    %v635 = vsub.f32 0.0, %v123
    %v636 = vsub.f32 0.0, %v124
    %v637 = vsub.f32 0.0, %v125
    %v638 = vsub.f32 0.0, %v126
    %v639 = vsub.f32 0.0, %v127
    %v640 = vsub.f32 0.0, %v128
    %v641 = vsub.f32 0.0, %v129
    %v642 = vsub.f32 0.0, %v130
    %v643 = vsub.f32 0.0, %v131
    %v644 = vsub.f32 0.0, %v132
    %v645 = vsub.f32 0.0, %v133
    %v646 = vsub.f32 0.0, %v134
    %v647 = vsub.f32 0.0, %v135
    %v648 = vsub.f32 0.0, %v136
    %v649 = vsub.f32 0.0, %v137
    %v650 = vsub.f32 0.0, %v138
    %v651 = vsub.f32 0.0, %v139
    %v652 = vsub.f32 0.0, %v140
    %v653 = vsub.f32 0.0, %v141
    %v654 = vsub.f32 0.0, %v142
    %v655 = vsub.f32 0.0, %v143
    %v656 = vsub.f32 0.0, %v144
    %v657 = vsub.f32 0.0, %v145
    %v658 = vsub.f32 0.0, %v146
    %v659 = vsub.f32 0.0, %v147
    %v660 = vsub.f32 0.0, %v148
    %v661 = vsub.f32 0.0, %v149
    %v662 = vsub.f32 0.0, %v150
    %v663 = vsub.f32 0.0, %v151
    %v664 = vsub.f32 0.0, %v152
    %v665 = vsub.f32 0.0, %v153
    %v666 = vsub.f32 0.0, %v154
    %v667 = vsub.f32 0.0, %v155
    %v668 = vsub.f32 0.0, %v156
    %v669 = vsub.f32 0.0, %v157
    %v670 = vsub.f32 0.0, %v158
    %v671 = vsub.f32 0.0, %v159
    %v672 = vsub.f32 0.0, %v160
    %v673 = vsub.f32 0.0, %v161
    %v674 = vsub.f32 0.0, %v162
    %v675 = vsub.f32 0.0, %v163
    %v676 = vsub.f32 0.0, %v164
    %v677 = vsub.f32 0.0, %v165
    %v678 = vsub.f32 0.0, %v166
    %v679 = vsub.f32 0.0, %v167
    %v680 = vsub.f32 0.0, %v168
    %v681 = vsub.f32 0.0, %v169
    %v682 = vsub.f32 0.0, %v170
    %v683 = vsub.f32 0.0, %v171
    %v684 = vsub.f32 0.0, %v172
    %v685 = vsub.f32 0.0, %v173
    %v686 = vsub.f32 0.0, %v174
    %v687 = vsub.f32 0.0, %v175
    %v688 = vsub.f32 0.0, %v176
    %v689 = vsub.f32 0.0, %v177
    %v690 = vsub.f32 0.0, %v178
    %v691 = vsub.f32 0.0, %v179
    %v692 = vsub.f32 0.0, %v180
    %v693 = vsub.f32 0.0, %v181
    %v694 = vsub.f32 0.0, %v182
    %v695 = vsub.f32 0.0, %v183
    %v696 = vsub.f32 0.0, %v184
    %v697 = vsub.f32 0.0, %v185
    %v698 = vsub.f32 0.0, %v186
    %v699 = vsub.f32 0.0, %v187
    %v700 = vsub.f32 0.0, %v188
    %v701 = vsub.f32 0.0, %v189
    %v702 = vsub.f32 0.0, %v190
    %v703 = vsub.f32 0.0, %v191
    %v704 = vsub.f32 0.0, %v192
    %v705 = vsub.f32 0.0, %v193
    %v706 = vsub.f32 0.0, %v194
    %v707 = vsub.f32 0.0, %v195
    %v708 = vsub.f32 0.0, %v196
    %v709 = vsub.f32 0.0, %v197
    %v710 = vsub.f32 0.0, %v198
    %v711 = vsub.f32 0.0, %v199
    %v712 = vsub.f32 0.0, %v200
    %v713 = vsub.f32 0.0, %v201
    %v714 = vsub.f32 0.0, %v202
    %v715 = vsub.f32 0.0, %v203
    %v716 = vsub.f32 0.0, %v204
    %v717 = vsub.f32 0.0, %v205
    %v718 = vsub.f32 0.0, %v206
    %v719 = vsub.f32 0.0, %v207
    %v720 = vsub.f32 0.0, %v208
    %v721 = vsub.f32 0.0, %v209
    %v722 = vsub.f32 0.0, %v210
    %v723 = vsub.f32 0.0, %v211
    %v724 = vsub.f32 0.0, %v212
    %v725 = vsub.f32 0.0, %v213
    %v726 = vsub.f32 0.0, %v214
    %v727 = vsub.f32 0.0, %v215
    %v728 = vsub.f32 0.0, %v216
    %v729 = vsub.f32 0.0, %v217
    %v730 = vsub.f32 0.0, %v218
    %v731 = vsub.f32 0.0, %v219
    %v732 = vsub.f32 0.0, %v220
    %v733 = vsub.f32 0.0, %v221
    %v734 = vsub.f32 0.0, %v222
    %v735 = vsub.f32 0.0, %v223
    %v736 = vsub.f32 0.0, %v224
    %v737 = vsub.f32 0.0, %v225
    %v738 = vsub.f32 0.0, %v226
    %v739 = vsub.f32 0.0, %v227
    %v740 = vsub.f32 0.0, %v228
    %v741 = vsub.f32 0.0, %v229
    %v742 = vsub.f32 0.0, %v230
    %v743 = vsub.f32 0.0, %v231
    %v744 = vsub.f32 0.0, %v232
    %v745 = vsub.f32 0.0, %v233
    %v746 = vsub.f32 0.0, %v234
    %v747 = vsub.f32 0.0, %v235
    %v748 = vsub.f32 0.0, %v236
    %v749 = vsub.f32 0.0, %v237
    %v750 = vsub.f32 0.0, %v238
    %v751 = vsub.f32 0.0, %v239
    %v752 = vsub.f32 0.0, %v240
    %v753 = vsub.f32 0.0, %v241
    %v754 = vsub.f32 0.0, %v242
    %v755 = vsub.f32 0.0, %v243
    %v756 = vsub.f32 0.0, %v244
    %v757 = vsub.f32 0.0, %v245
    %v758 = vsub.f32 0.0, %v246
    %v759 = vsub.f32 0.0, %v247
    %v760 = vsub.f32 0.0, %v248
    %v761 = vsub.f32 0.0, %v249
    %v762 = vsub.f32 0.0, %v250
    %v763 = vsub.f32 0.0, %v251
    %v764 = vsub.f32 0.0, %v252
    %v765 = vsub.f32 0.0, %v253
    %v766 = vsub.f32 0.0, %v254
    %v767 = vsub.f32 0.0, %v255
    %v768 = vsub.f32 0.0, %v256
    %v769 = vsub.f32 0.0, %v257
    %v770 = vsub.f32 0.0, %v258
    %v771 = vsub.f32 0.0, %v259
    %v772 = vsub.f32 0.0, %v260
    %v773 = vsub.f32 0.0, %v261
    %v774 = vsub.f32 0.0, %v262
    %v775 = vsub.f32 0.0, %v263
    %v776 = vsub.f32 0.0, %v264
    %v777 = vsub.f32 0.0, %v265
    %v778 = vsub.f32 0.0, %v266
    %v779 = vsub.f32 0.0, %v267
    %v780 = vsub.f32 0.0, %v268
    %v781 = vsub.f32 0.0, %v269
    %v782 = vsub.f32 0.0, %v270
    %v783 = vsub.f32 0.0, %v271
    %v784 = vsub.f32 0.0, %v272
    %v785 = vsub.f32 0.0, %v273
    %v786 = vsub.f32 0.0, %v274
    %v787 = vsub.f32 0.0, %v275
    %v788 = vsub.f32 0.0, %v276
    %v789 = vsub.f32 0.0, %v277
    %v790 = vsub.f32 0.0, %v278
    %v791 = vsub.f32 0.0, %v279
    %v792 = vsub.f32 0.0, %v280
    %v793 = vsub.f32 0.0, %v281
    %v794 = vsub.f32 0.0, %v282
    %v795 = vsub.f32 0.0, %v283
    %v796 = vsub.f32 0.0, %v284
    %v797 = vsub.f32 0.0, %v285
    %v798 = vsub.f32 0.0, %v286
    %v799 = vsub.f32 0.0, %v287
    %v800 = vsub.f32 0.0, %v288
    %v801 = vsub.f32 0.0, %v289
    %v802 = vsub.f32 0.0, %v290
    %v803 = vsub.f32 0.0, %v291
    %v804 = vsub.f32 0.0, %v292
    %v805 = vsub.f32 0.0, %v293
    %v806 = vsub.f32 0.0, %v294
    %v807 = vsub.f32 0.0, %v295
    %v808 = vsub.f32 0.0, %v296
    %v809 = vsub.f32 0.0, %v297
    %v810 = vsub.f32 0.0, %v298
    %v811 = vsub.f32 0.0, %v299
    %v812 = vsub.f32 0.0, %v300
    %v813 = vsub.f32 0.0, %v301
    %v814 = vmax.f32 %v558, 0.0
    %v815 = vmax.f32 %v559, 0.0
    %v816 = vmax.f32 %v560, 0.0
    %v817 = vmax.f32 %v561, 0.0
    %v818 = vmax.f32 %v562, 0.0
    %v819 = vmax.f32 %v563, 0.0
    %v820 = vmax.f32 %v564, 0.0
    %v821 = vmax.f32 %v565, 0.0
    %v822 = vmax.f32 %v566, 0.0
    %v823 = vmax.f32 %v567, 0.0
    %v824 = vmax.f32 %v568, 0.0
    %v825 = vmax.f32 %v569, 0.0
    %v826 = vmax.f32 %v570, 0.0
    %v827 = vmax.f32 %v571, 0.0
    %v828 = vmax.f32 %v572, 0.0
    %v829 = vmax.f32 %v573, 0.0
    %v830 = vmax.f32 %v574, 0.0
    %v831 = vmax.f32 %v575, 0.0
    %v832 = vmax.f32 %v576, 0.0
    %v833 = vmax.f32 %v577, 0.0
    %v834 = vmax.f32 %v578, 0.0
    %v835 = vmax.f32 %v579, 0.0
    %v836 = vmax.f32 %v580, 0.0
    %v837 = vmax.f32 %v581, 0.0
    %v838 = vmax.f32 %v582, 0.0
    %v839 = vmax.f32 %v583, 0.0
    %v840 = vmax.f32 %v584, 0.0
    %v841 = vmax.f32 %v585, 0.0
    %v842 = vmax.f32 %v586, 0.0
    %v843 = vmax.f32 %v587, 0.0
    %v844 = vmax.f32 %v588, 0.0
    %v845 = vmax.f32 %v589, 0.0
    %v846 = vmax.f32 %v590, 0.0
    %v847 = vmax.f32 %v591, 0.0
    %v848 = vmax.f32 %v592, 0.0
    %v849 = vmax.f32 %v593, 0.0
    %v850 = vmax.f32 %v594, 0.0
    %v851 = vmax.f32 %v595, 0.0
    %v852 = vmax.f32 %v596, 0.0
    %v853 = vmax.f32 %v597, 0.0
    %v854 = vmax.f32 %v598, 0.0
    %v855 = vmax.f32 %v599, 0.0
    %v856 = vmax.f32 %v600, 0.0
    %v857 = vmax.f32 %v601, 0.0
    %v858 = vmax.f32 %v602, 0.0
    %v859 = vmax.f32 %v603, 0.0
    %v860 = vmax.f32 %v604, 0.0
    %v861 = vmax.f32 %v605, 0.0
    %v862 = vmax.f32 %v606, 0.0
    %v863 = vmax.f32 %v607, 0.0
    %v864 = vmax.f32 %v608, 0.0
    %v865 = vmax.f32 %v609, 0.0
    %v866 = vmax.f32 %v610, 0.0
    %v867 = vmax.f32 %v611, 0.0
    %v868 = vmax.f32 %v612, 0.0
    %v869 = vmax.f32 %v613, 0.0
    %v870 = vmax.f32 %v614, 0.0
    %v871 = vmax.f32 %v615, 0.0
    %v872 = vmax.f32 %v616, 0.0
    %v873 = vmax.f32 %v617, 0.0
    %v874 = vmax.f32 %v618, 0.0
    %v875 = vmax.f32 %v619, 0.0
    %v876 = vmax.f32 %v620, 0.0
    %v877 = vmax.f32 %v621, 0.0
    %v878 = vmax.f32 %v622, 0.0
    %v879 = vmax.f32 %v623, 0.0
    %v880 = vmax.f32 %v624, 0.0
    %v881 = vmax.f32 %v625, 0.0
    %v882 = vmax.f32 %v626, 0.0
    %v883 = vmax.f32 %v627, 0.0
    %v884 = vmax.f32 %v628, 0.0
    %v885 = vmax.f32 %v629, 0.0
    %v886 = vmax.f32 %v630, 0.0
    %v887 = vmax.f32 %v631, 0.0
    %v888 = vmax.f32 %v632, 0.0
    %v889 = vmax.f32 %v633, 0.0
    %v890 = vmax.f32 %v634, 0.0
    %v891 = vmax.f32 %v635, 0.0
    %v892 = vmax.f32 %v636, 0.0
    %v893 = vmax.f32 %v637, 0.0
    %v894 = vmax.f32 %v638, 0.0
    %v895 = vmax.f32 %v639, 0.0
    %v896 = vmax.f32 %v640, 0.0
    %v897 = vmax.f32 %v641, 0.0
    %v898 = vmax.f32 %v642, 0.0
    %v899 = vmax.f32 %v643, 0.0
    %v900 = vmax.f32 %v644, 0.0
    %v901 = vmax.f32 %v645, 0.0
    %v902 = vmax.f32 %v646, 0.0
    %v903 = vmax.f32 %v647, 0.0
    %v904 = vmax.f32 %v648, 0.0
    %v905 = vmax.f32 %v649, 0.0
    %v906 = vmax.f32 %v650, 0.0
    %v907 = vmax.f32 %v651, 0.0
    %v908 = vmax.f32 %v652, 0.0
    %v909 = vmax.f32 %v653, 0.0
    %v910 = vmax.f32 %v654, 0.0
    %v911 = vmax.f32 %v655, 0.0
    %v912 = vmax.f32 %v656, 0.0
    %v913 = vmax.f32 %v657, 0.0
    %v914 = vmax.f32 %v658, 0.0
    %v915 = vmax.f32 %v659, 0.0
    %v916 = vmax.f32 %v660, 0.0
    %v917 = vmax.f32 %v661, 0.0
    %v918 = vmax.f32 %v662, 0.0
    %v919 = vmax.f32 %v663, 0.0
    %v920 = vmax.f32 %v664, 0.0
    %v921 = vmax.f32 %v665, 0.0
    %v922 = vmax.f32 %v666, 0.0
    %v923 = vmax.f32 %v667, 0.0
    %v924 = vmax.f32 %v668, 0.0
    %v925 = vmax.f32 %v669, 0.0
    %v926 = vmax.f32 %v670, 0.0
    %v927 = vmax.f32 %v671, 0.0
    %v928 = vmax.f32 %v672, 0.0
    %v929 = vmax.f32 %v673, 0.0
    %v930 = vmax.f32 %v674, 0.0
    %v931 = vmax.f32 %v675, 0.0
    %v932 = vmax.f32 %v676, 0.0
    %v933 = vmax.f32 %v677, 0.0
    %v934 = vmax.f32 %v678, 0.0
    %v935 = vmax.f32 %v679, 0.0
    %v936 = vmax.f32 %v680, 0.0
    %v937 = vmax.f32 %v681, 0.0
    %v938 = vmax.f32 %v682, 0.0
    %v939 = vmax.f32 %v683, 0.0
    %v940 = vmax.f32 %v684, 0.0
    %v941 = vmax.f32 %v685, 0.0
    %v942 = vmax.f32 %v686, 0.0
    %v943 = vmax.f32 %v687, 0.0
    %v944 = vmax.f32 %v688, 0.0
    %v945 = vmax.f32 %v689, 0.0
    %v946 = vmax.f32 %v690, 0.0
    %v947 = vmax.f32 %v691, 0.0
    %v948 = vmax.f32 %v692, 0.0
    %v949 = vmax.f32 %v693, 0.0
    %v950 = vmax.f32 %v694, 0.0
    %v951 = vmax.f32 %v695, 0.0
    %v952 = vmax.f32 %v696, 0.0
    %v953 = vmax.f32 %v697, 0.0
    %v954 = vmax.f32 %v698, 0.0
    %v955 = vmax.f32 %v699, 0.0
    %v956 = vmax.f32 %v700, 0.0
    %v957 = vmax.f32 %v701, 0.0
    %v958 = vmax.f32 %v702, 0.0
    %v959 = vmax.f32 %v703, 0.0
    %v960 = vmax.f32 %v704, 0.0
    %v961 = vmax.f32 %v705, 0.0
    %v962 = vmax.f32 %v706, 0.0
    %v963 = vmax.f32 %v707, 0.0
    %v964 = vmax.f32 %v708, 0.0
    %v965 = vmax.f32 %v709, 0.0
    %v966 = vmax.f32 %v710, 0.0
    %v967 = vmax.f32 %v711, 0.0
    %v968 = vmax.f32 %v712, 0.0
    %v969 = vmax.f32 %v713, 0.0
    %v970 = vmax.f32 %v714, 0.0
    %v971 = vmax.f32 %v715, 0.0
    %v972 = vmax.f32 %v716, 0.0
    %v973 = vmax.f32 %v717, 0.0
    %v974 = vmax.f32 %v718, 0.0
    %v975 = vmax.f32 %v719, 0.0
    %v976 = vmax.f32 %v720, 0.0
    %v977 = vmax.f32 %v721, 0.0
    %v978 = vmax.f32 %v722, 0.0
    %v979 = vmax.f32 %v723, 0.0
    %v980 = vmax.f32 %v724, 0.0
    %v981 = vmax.f32 %v725, 0.0
    %v982 = vmax.f32 %v726, 0.0
    %v983 = vmax.f32 %v727, 0.0
    %v984 = vmax.f32 %v728, 0.0
    %v985 = vmax.f32 %v729, 0.0
    %v986 = vmax.f32 %v730, 0.0
    %v987 = vmax.f32 %v731, 0.0
    %v988 = vmax.f32 %v732, 0.0
    %v989 = vmax.f32 %v733, 0.0
    %v990 = vmax.f32 %v734, 0.0
    %v991 = vmax.f32 %v735, 0.0
    %v992 = vmax.f32 %v736, 0.0
    %v993 = vmax.f32 %v737, 0.0
    %v994 = vmax.f32 %v738, 0.0
    %v995 = vmax.f32 %v739, 0.0
    %v996 = vmax.f32 %v740, 0.0
    %v997 = vmax.f32 %v741, 0.0
    %v998 = vmax.f32 %v742, 0.0
    %v999 = vmax.f32 %v743, 0.0
    %v1000 = vmax.f32 %v744, 0.0
    %v1001 = vmax.f32 %v745, 0.0
    %v1002 = vmax.f32 %v746, 0.0
    %v1003 = vmax.f32 %v747, 0.0
    %v1004 = vmax.f32 %v748, 0.0
    %v1005 = vmax.f32 %v749, 0.0
    %v1006 = vmax.f32 %v750, 0.0
    %v1007 = vmax.f32 %v751, 0.0
    %v1008 = vmax.f32 %v752, 0.0
    %v1009 = vmax.f32 %v753, 0.0
    %v1010 = vmax.f32 %v754, 0.0
    %v1011 = vmax.f32 %v755, 0.0
    %v1012 = vmax.f32 %v756, 0.0
    %v1013 = vmax.f32 %v757, 0.0
    %v1014 = vmax.f32 %v758, 0.0
    %v1015 = vmax.f32 %v759, 0.0
    %v1016 = vmax.f32 %v760, 0.0
    %v1017 = vmax.f32 %v761, 0.0
    %v1018 = vmax.f32 %v762, 0.0
    %v1019 = vmax.f32 %v763, 0.0
    %v1020 = vmax.f32 %v764, 0.0
    %v1021 = vmax.f32 %v765, 0.0
    %v1022 = vmax.f32 %v766, 0.0
    %v1023 = vmax.f32 %v767, 0.0
    %v1024 = vmax.f32 %v768, 0.0
    %v1025 = vmax.f32 %v769, 0.0
    %v1026 = vmax.f32 %v770, 0.0
    %v1027 = vmax.f32 %v771, 0.0
    %v1028 = vmax.f32 %v772, 0.0
    %v1029 = vmax.f32 %v773, 0.0
    %v1030 = vmax.f32 %v774, 0.0
    %v1031 = vmax.f32 %v775, 0.0
    %v1032 = vmax.f32 %v776, 0.0
    %v1033 = vmax.f32 %v777, 0.0
    %v1034 = vmax.f32 %v778, 0.0
    %v1035 = vmax.f32 %v779, 0.0
    %v1036 = vmax.f32 %v780, 0.0
    %v1037 = vmax.f32 %v781, 0.0
    %v1038 = vmax.f32 %v782, 0.0
    %v1039 = vmax.f32 %v783, 0.0
    %v1040 = vmax.f32 %v784, 0.0
    %v1041 = vmax.f32 %v785, 0.0
    %v1042 = vmax.f32 %v786, 0.0
    %v1043 = vmax.f32 %v787, 0.0
    %v1044 = vmax.f32 %v788, 0.0
    %v1045 = vmax.f32 %v789, 0.0
    %v1046 = vmax.f32 %v790, 0.0
    %v1047 = vmax.f32 %v791, 0.0
    %v1048 = vmax.f32 %v792, 0.0
    %v1049 = vmax.f32 %v793, 0.0
    %v1050 = vmax.f32 %v794, 0.0
    %v1051 = vmax.f32 %v795, 0.0
    %v1052 = vmax.f32 %v796, 0.0
    %v1053 = vmax.f32 %v797, 0.0
    %v1054 = vmax.f32 %v798, 0.0
    %v1055 = vmax.f32 %v799, 0.0
    %v1056 = vmax.f32 %v800, 0.0
    %v1057 = vmax.f32 %v801, 0.0
    %v1058 = vmax.f32 %v802, 0.0
    %v1059 = vmax.f32 %v803, 0.0
    %v1060 = vmax.f32 %v804, 0.0
    %v1061 = vmax.f32 %v805, 0.0
    %v1062 = vmax.f32 %v806, 0.0
    %v1063 = vmax.f32 %v807, 0.0
    %v1064 = vmax.f32 %v808, 0.0
    %v1065 = vmax.f32 %v809, 0.0
    %v1066 = vmax.f32 %v810, 0.0
    %v1067 = vmax.f32 %v811, 0.0
    %v1068 = vmax.f32 %v812, 0.0
    %v1069 = vmax.f32 %v813, 0.0
    %v1070 = vand.u32 2147483647, %v46
    %v1071 = vand.u32 2147483647, %v47
    %v1072 = vand.u32 2147483647, %v48
    %v1073 = vand.u32 2147483647, %v49
    %v1074 = vand.u32 2147483647, %v50
    %v1075 = vand.u32 2147483647, %v51
    %v1076 = vand.u32 2147483647, %v52
    %v1077 = vand.u32 2147483647, %v53
    %v1078 = vand.u32 2147483647, %v54
    %v1079 = vand.u32 2147483647, %v55
    %v1080 = vand.u32 2147483647, %v56
    %v1081 = vand.u32 2147483647, %v57
    %v1082 = vand.u32 2147483647, %v58
    %v1083 = vand.u32 2147483647, %v59
    %v1084 = vand.u32 2147483647, %v60
    %v1085 = vand.u32 2147483647, %v61
    %v1086 = vand.u32 2147483647, %v62
    %v1087 = vand.u32 2147483647, %v63
    %v1088 = vand.u32 2147483647, %v64
    %v1089 = vand.u32 2147483647, %v65
    %v1090 = vand.u32 2147483647, %v66
    %v1091 = vand.u32 2147483647, %v67
    %v1092 = vand.u32 2147483647, %v68
    %v1093 = vand.u32 2147483647, %v69
    %v1094 = vand.u32 2147483647, %v70
    %v1095 = vand.u32 2147483647, %v71
    %v1096 = vand.u32 2147483647, %v72
    %v1097 = vand.u32 2147483647, %v73
    %v1098 = vand.u32 2147483647, %v74
    %v1099 = vand.u32 2147483647, %v75
    %v1100 = vand.u32 2147483647, %v76
    %v1101 = vand.u32 2147483647, %v77
    %v1102 = vand.u32 2147483647, %v78
    %v1103 = vand.u32 2147483647, %v79
    %v1104 = vand.u32 2147483647, %v80
    %v1105 = vand.u32 2147483647, %v81
    %v1106 = vand.u32 2147483647, %v82
    %v1107 = vand.u32 2147483647, %v83
    %v1108 = vand.u32 2147483647, %v84
    %v1109 = vand.u32 2147483647, %v85
    %v1110 = vand.u32 2147483647, %v86
    %v1111 = vand.u32 2147483647, %v87
    %v1112 = vand.u32 2147483647, %v88
    %v1113 = vand.u32 2147483647, %v89
    %v1114 = vand.u32 2147483647, %v90
    %v1115 = vand.u32 2147483647, %v91
    %v1116 = vand.u32 2147483647, %v92
    %v1117 = vand.u32 2147483647, %v93
    %v1118 = vand.u32 2147483647, %v94
    %v1119 = vand.u32 2147483647, %v95
    %v1120 = vand.u32 2147483647, %v96
    %v1121 = vand.u32 2147483647, %v97
    %v1122 = vand.u32 2147483647, %v98
    %v1123 = vand.u32 2147483647, %v99
    %v1124 = vand.u32 2147483647, %v100
    %v1125 = vand.u32 2147483647, %v101
    %v1126 = vand.u32 2147483647, %v102
    %v1127 = vand.u32 2147483647, %v103
    %v1128 = vand.u32 2147483647, %v104
    %v1129 = vand.u32 2147483647, %v105
    %v1130 = vand.u32 2147483647, %v106
    %v1131 = vand.u32 2147483647, %v107
    %v1132 = vand.u32 2147483647, %v108
    %v1133 = vand.u32 2147483647, %v109
    %v1134 = vand.u32 2147483647, %v110
    %v1135 = vand.u32 2147483647, %v111
    %v1136 = vand.u32 2147483647, %v112
    %v1137 = vand.u32 2147483647, %v113
    %v1138 = vand.u32 2147483647, %v114
    %v1139 = vand.u32 2147483647, %v115
    %v1140 = vand.u32 2147483647, %v116
    %v1141 = vand.u32 2147483647, %v117
    %v1142 = vand.u32 2147483647, %v118
    %v1143 = vand.u32 2147483647, %v119
    %v1144 = vand.u32 2147483647, %v120
    %v1145 = vand.u32 2147483647, %v121
    %v1146 = vand.u32 2147483647, %v122
    %v1147 = vand.u32 2147483647, %v123
    %v1148 = vand.u32 2147483647, %v124
    %v1149 = vand.u32 2147483647, %v125
    %v1150 = vand.u32 2147483647, %v126
    %v1151 = vand.u32 2147483647, %v127
    %v1152 = vand.u32 2147483647, %v128
    %v1153 = vand.u32 2147483647, %v129
    %v1154 = vand.u32 2147483647, %v130
    %v1155 = vand.u32 2147483647, %v131
    %v1156 = vand.u32 2147483647, %v132
    %v1157 = vand.u32 2147483647, %v133
    %v1158 = vand.u32 2147483647, %v134
    %v1159 = vand.u32 2147483647, %v135
    %v1160 = vand.u32 2147483647, %v136
    %v1161 = vand.u32 2147483647, %v137
    %v1162 = vand.u32 2147483647, %v138
    %v1163 = vand.u32 2147483647, %v139
    %v1164 = vand.u32 2147483647, %v140
    %v1165 = vand.u32 2147483647, %v141
    %v1166 = vand.u32 2147483647, %v142
    %v1167 = vand.u32 2147483647, %v143
    %v1168 = vand.u32 2147483647, %v144
    %v1169 = vand.u32 2147483647, %v145
    %v1170 = vand.u32 2147483647, %v146
    %v1171 = vand.u32 2147483647, %v147
    %v1172 = vand.u32 2147483647, %v148
    %v1173 = vand.u32 2147483647, %v149
    %v1174 = vand.u32 2147483647, %v150
    %v1175 = vand.u32 2147483647, %v151
    %v1176 = vand.u32 2147483647, %v152
    %v1177 = vand.u32 2147483647, %v153
    %v1178 = vand.u32 2147483647, %v154
    %v1179 = vand.u32 2147483647, %v155
    %v1180 = vand.u32 2147483647, %v156
    %v1181 = vand.u32 2147483647, %v157
    %v1182 = vand.u32 2147483647, %v158
    %v1183 = vand.u32 2147483647, %v159
    %v1184 = vand.u32 2147483647, %v160
    %v1185 = vand.u32 2147483647, %v161
    %v1186 = vand.u32 2147483647, %v162
    %v1187 = vand.u32 2147483647, %v163
    %v1188 = vand.u32 2147483647, %v164
    %v1189 = vand.u32 2147483647, %v165
    %v1190 = vand.u32 2147483647, %v166
    %v1191 = vand.u32 2147483647, %v167
    %v1192 = vand.u32 2147483647, %v168
    %v1193 = vand.u32 2147483647, %v169
    %v1194 = vand.u32 2147483647, %v170
    %v1195 = vand.u32 2147483647, %v171
    %v1196 = vand.u32 2147483647, %v172
    %v1197 = vand.u32 2147483647, %v173
    %v1198 = vand.u32 2147483647, %v174
    %v1199 = vand.u32 2147483647, %v175
    %v1200 = vand.u32 2147483647, %v176
    %v1201 = vand.u32 2147483647, %v177
    %v1202 = vand.u32 2147483647, %v178
    %v1203 = vand.u32 2147483647, %v179
    %v1204 = vand.u32 2147483647, %v180
    %v1205 = vand.u32 2147483647, %v181
    %v1206 = vand.u32 2147483647, %v182
    %v1207 = vand.u32 2147483647, %v183
    %v1208 = vand.u32 2147483647, %v184
    %v1209 = vand.u32 2147483647, %v185
    %v1210 = vand.u32 2147483647, %v186
    %v1211 = vand.u32 2147483647, %v187
    %v1212 = vand.u32 2147483647, %v188
    %v1213 = vand.u32 2147483647, %v189
    %v1214 = vand.u32 2147483647, %v190
    %v1215 = vand.u32 2147483647, %v191
    %v1216 = vand.u32 2147483647, %v192
    %v1217 = vand.u32 2147483647, %v193
    %v1218 = vand.u32 2147483647, %v194
    %v1219 = vand.u32 2147483647, %v195
    %v1220 = vand.u32 2147483647, %v196
    %v1221 = vand.u32 2147483647, %v197
    %v1222 = vand.u32 2147483647, %v198
    %v1223 = vand.u32 2147483647, %v199
    %v1224 = vand.u32 2147483647, %v200
    %v1225 = vand.u32 2147483647, %v201
    %v1226 = vand.u32 2147483647, %v202
    %v1227 = vand.u32 2147483647, %v203
    %v1228 = vand.u32 2147483647, %v204
    %v1229 = vand.u32 2147483647, %v205
    %v1230 = vand.u32 2147483647, %v206
    %v1231 = vand.u32 2147483647, %v207
    %v1232 = vand.u32 2147483647, %v208
    %v1233 = vand.u32 2147483647, %v209
    %v1234 = vand.u32 2147483647, %v210
    %v1235 = vand.u32 2147483647, %v211
    %v1236 = vand.u32 2147483647, %v212
    %v1237 = vand.u32 2147483647, %v213
    %v1238 = vand.u32 2147483647, %v214
    %v1239 = vand.u32 2147483647, %v215
    %v1240 = vand.u32 2147483647, %v216
    %v1241 = vand.u32 2147483647, %v217
    %v1242 = vand.u32 2147483647, %v218
    %v1243 = vand.u32 2147483647, %v219
    %v1244 = vand.u32 2147483647, %v220
    %v1245 = vand.u32 2147483647, %v221
    %v1246 = vand.u32 2147483647, %v222
    %v1247 = vand.u32 2147483647, %v223
    %v1248 = vand.u32 2147483647, %v224
    %v1249 = vand.u32 2147483647, %v225
    %v1250 = vand.u32 2147483647, %v226
    %v1251 = vand.u32 2147483647, %v227
    %v1252 = vand.u32 2147483647, %v228
    %v1253 = vand.u32 2147483647, %v229
    %v1254 = vand.u32 2147483647, %v230
    %v1255 = vand.u32 2147483647, %v231
    %v1256 = vand.u32 2147483647, %v232
    %v1257 = vand.u32 2147483647, %v233
    %v1258 = vand.u32 2147483647, %v234
    %v1259 = vand.u32 2147483647, %v235
    %v1260 = vand.u32 2147483647, %v236
    %v1261 = vand.u32 2147483647, %v237
    %v1262 = vand.u32 2147483647, %v238
    %v1263 = vand.u32 2147483647, %v239
    %v1264 = vand.u32 2147483647, %v240
    %v1265 = vand.u32 2147483647, %v241
    %v1266 = vand.u32 2147483647, %v242
    %v1267 = vand.u32 2147483647, %v243
    %v1268 = vand.u32 2147483647, %v244
    %v1269 = vand.u32 2147483647, %v245
    %v1270 = vand.u32 2147483647, %v246
    %v1271 = vand.u32 2147483647, %v247
    %v1272 = vand.u32 2147483647, %v248
    %v1273 = vand.u32 2147483647, %v249
    %v1274 = vand.u32 2147483647, %v250
    %v1275 = vand.u32 2147483647, %v251
    %v1276 = vand.u32 2147483647, %v252
    %v1277 = vand.u32 2147483647, %v253
    %v1278 = vand.u32 2147483647, %v254
    %v1279 = vand.u32 2147483647, %v255
    %v1280 = vand.u32 2147483647, %v256
    %v1281 = vand.u32 2147483647, %v257
    %v1282 = vand.u32 2147483647, %v258
    %v1283 = vand.u32 2147483647, %v259
    %v1284 = vand.u32 2147483647, %v260
    %v1285 = vand.u32 2147483647, %v261
    %v1286 = vand.u32 2147483647, %v262
    %v1287 = vand.u32 2147483647, %v263
    %v1288 = vand.u32 2147483647, %v264
    %v1289 = vand.u32 2147483647, %v265
    %v1290 = vand.u32 2147483647, %v266
    %v1291 = vand.u32 2147483647, %v267
    %v1292 = vand.u32 2147483647, %v268
    %v1293 = vand.u32 2147483647, %v269
    %v1294 = vand.u32 2147483647, %v270
    %v1295 = vand.u32 2147483647, %v271
    %v1296 = vand.u32 2147483647, %v272
    %v1297 = vand.u32 2147483647, %v273
    %v1298 = vand.u32 2147483647, %v274
    %v1299 = vand.u32 2147483647, %v275
    %v1300 = vand.u32 2147483647, %v276
    %v1301 = vand.u32 2147483647, %v277
    %v1302 = vand.u32 2147483647, %v278
    %v1303 = vand.u32 2147483647, %v279
    %v1304 = vand.u32 2147483647, %v280
    %v1305 = vand.u32 2147483647, %v281
    %v1306 = vand.u32 2147483647, %v282
    %v1307 = vand.u32 2147483647, %v283
    %v1308 = vand.u32 2147483647, %v284
    %v1309 = vand.u32 2147483647, %v285
    %v1310 = vand.u32 2147483647, %v286
    %v1311 = vand.u32 2147483647, %v287
    %v1312 = vand.u32 2147483647, %v288
    %v1313 = vand.u32 2147483647, %v289
    %v1314 = vand.u32 2147483647, %v290
    %v1315 = vand.u32 2147483647, %v291
    %v1316 = vand.u32 2147483647, %v292
    %v1317 = vand.u32 2147483647, %v293
    %v1318 = vand.u32 2147483647, %v294
    %v1319 = vand.u32 2147483647, %v295
    %v1320 = vand.u32 2147483647, %v296
    %v1321 = vand.u32 2147483647, %v297
    %v1322 = vand.u32 2147483647, %v298
    %v1323 = vand.u32 2147483647, %v299
    %v1324 = vand.u32 2147483647, %v300
    %v1325 = vand.u32 2147483647, %v301
    %v1326 = vsub.f32 0.0, %v1070
    %v1327 = vsub.f32 0.0, %v1071
    %v1328 = vsub.f32 0.0, %v1072
    %v1329 = vsub.f32 0.0, %v1073
    %v1330 = vsub.f32 0.0, %v1074
    %v1331 = vsub.f32 0.0, %v1075
    %v1332 = vsub.f32 0.0, %v1076
    %v1333 = vsub.f32 0.0, %v1077
    %v1334 = vsub.f32 0.0, %v1078
    %v1335 = vsub.f32 0.0, %v1079
    %v1336 = vsub.f32 0.0, %v1080
    %v1337 = vsub.f32 0.0, %v1081
    %v1338 = vsub.f32 0.0, %v1082
    %v1339 = vsub.f32 0.0, %v1083
    %v1340 = vsub.f32 0.0, %v1084
    %v1341 = vsub.f32 0.0, %v1085
    %v1342 = vsub.f32 0.0, %v1086
    %v1343 = vsub.f32 0.0, %v1087
    %v1344 = vsub.f32 0.0, %v1088
    %v1345 = vsub.f32 0.0, %v1089
    %v1346 = vsub.f32 0.0, %v1090
    %v1347 = vsub.f32 0.0, %v1091
    %v1348 = vsub.f32 0.0, %v1092
    %v1349 = vsub.f32 0.0, %v1093
    %v1350 = vsub.f32 0.0, %v1094
    %v1351 = vsub.f32 0.0, %v1095
    %v1352 = vsub.f32 0.0, %v1096
    %v1353 = vsub.f32 0.0, %v1097
    %v1354 = vsub.f32 0.0, %v1098
    %v1355 = vsub.f32 0.0, %v1099
    %v1356 = vsub.f32 0.0, %v1100
    %v1357 = vsub.f32 0.0, %v1101
    %v1358 = vsub.f32 0.0, %v1102
    %v1359 = vsub.f32 0.0, %v1103
    %v1360 = vsub.f32 0.0, %v1104
    %v1361 = vsub.f32 0.0, %v1105
    %v1362 = vsub.f32 0.0, %v1106
    %v1363 = vsub.f32 0.0, %v1107
    %v1364 = vsub.f32 0.0, %v1108
    %v1365 = vsub.f32 0.0, %v1109
    %v1366 = vsub.f32 0.0, %v1110
    %v1367 = vsub.f32 0.0, %v1111
    %v1368 = vsub.f32 0.0, %v1112
    %v1369 = vsub.f32 0.0, %v1113
    %v1370 = vsub.f32 0.0, %v1114
    %v1371 = vsub.f32 0.0, %v1115
    %v1372 = vsub.f32 0.0, %v1116
    %v1373 = vsub.f32 0.0, %v1117
    %v1374 = vsub.f32 0.0, %v1118
    %v1375 = vsub.f32 0.0, %v1119
    %v1376 = vsub.f32 0.0, %v1120
    %v1377 = vsub.f32 0.0, %v1121
    %v1378 = vsub.f32 0.0, %v1122
    %v1379 = vsub.f32 0.0, %v1123
    %v1380 = vsub.f32 0.0, %v1124
    %v1381 = vsub.f32 0.0, %v1125
    %v1382 = vsub.f32 0.0, %v1126
    %v1383 = vsub.f32 0.0, %v1127
    %v1384 = vsub.f32 0.0, %v1128
    %v1385 = vsub.f32 0.0, %v1129
    %v1386 = vsub.f32 0.0, %v1130
    %v1387 = vsub.f32 0.0, %v1131
    %v1388 = vsub.f32 0.0, %v1132
    %v1389 = vsub.f32 0.0, %v1133
    %v1390 = vsub.f32 0.0, %v1134
    %v1391 = vsub.f32 0.0, %v1135
    %v1392 = vsub.f32 0.0, %v1136
    %v1393 = vsub.f32 0.0, %v1137
    %v1394 = vsub.f32 0.0, %v1138
    %v1395 = vsub.f32 0.0, %v1139
    %v1396 = vsub.f32 0.0, %v1140
    %v1397 = vsub.f32 0.0, %v1141
    %v1398 = vsub.f32 0.0, %v1142
    %v1399 = vsub.f32 0.0, %v1143
    %v1400 = vsub.f32 0.0, %v1144
    %v1401 = vsub.f32 0.0, %v1145
    %v1402 = vsub.f32 0.0, %v1146
    %v1403 = vsub.f32 0.0, %v1147
    %v1404 = vsub.f32 0.0, %v1148
    %v1405 = vsub.f32 0.0, %v1149
    %v1406 = vsub.f32 0.0, %v1150
    %v1407 = vsub.f32 0.0, %v1151
    %v1408 = vsub.f32 0.0, %v1152
    %v1409 = vsub.f32 0.0, %v1153
    %v1410 = vsub.f32 0.0, %v1154
    %v1411 = vsub.f32 0.0, %v1155
    %v1412 = vsub.f32 0.0, %v1156
    %v1413 = vsub.f32 0.0, %v1157
    %v1414 = vsub.f32 0.0, %v1158
    %v1415 = vsub.f32 0.0, %v1159
    %v1416 = vsub.f32 0.0, %v1160
    %v1417 = vsub.f32 0.0, %v1161
    %v1418 = vsub.f32 0.0, %v1162
    %v1419 = vsub.f32 0.0, %v1163
    %v1420 = vsub.f32 0.0, %v1164
    %v1421 = vsub.f32 0.0, %v1165
    %v1422 = vsub.f32 0.0, %v1166
    %v1423 = vsub.f32 0.0, %v1167
    %v1424 = vsub.f32 0.0, %v1168
    %v1425 = vsub.f32 0.0, %v1169
    %v1426 = vsub.f32 0.0, %v1170
    %v1427 = vsub.f32 0.0, %v1171
    %v1428 = vsub.f32 0.0, %v1172
    %v1429 = vsub.f32 0.0, %v1173
    %v1430 = vsub.f32 0.0, %v1174
    %v1431 = vsub.f32 0.0, %v1175
    %v1432 = vsub.f32 0.0, %v1176
    %v1433 = vsub.f32 0.0, %v1177
    %v1434 = vsub.f32 0.0, %v1178
    %v1435 = vsub.f32 0.0, %v1179
    %v1436 = vsub.f32 0.0, %v1180
    %v1437 = vsub.f32 0.0, %v1181
    %v1438 = vsub.f32 0.0, %v1182
    %v1439 = vsub.f32 0.0, %v1183
    %v1440 = vsub.f32 0.0, %v1184
    %v1441 = vsub.f32 0.0, %v1185
    %v1442 = vsub.f32 0.0, %v1186
    %v1443 = vsub.f32 0.0, %v1187
    %v1444 = vsub.f32 0.0, %v1188
    %v1445 = vsub.f32 0.0, %v1189
    %v1446 = vsub.f32 0.0, %v1190
    %v1447 = vsub.f32 0.0, %v1191
    %v1448 = vsub.f32 0.0, %v1192
    %v1449 = vsub.f32 0.0, %v1193
    %v1450 = vsub.f32 0.0, %v1194
    %v1451 = vsub.f32 0.0, %v1195
    %v1452 = vsub.f32 0.0, %v1196
    %v1453 = vsub.f32 0.0, %v1197
    %v1454 = vsub.f32 0.0, %v1198
    %v1455 = vsub.f32 0.0, %v1199
    %v1456 = vsub.f32 0.0, %v1200
    %v1457 = vsub.f32 0.0, %v1201
    %v1458 = vsub.f32 0.0, %v1202
    %v1459 = vsub.f32 0.0, %v1203
    %v1460 = vsub.f32 0.0, %v1204
    %v1461 = vsub.f32 0.0, %v1205
    %v1462 = vsub.f32 0.0, %v1206
    %v1463 = vsub.f32 0.0, %v1207
    %v1464 = vsub.f32 0.0, %v1208
    %v1465 = vsub.f32 0.0, %v1209
    %v1466 = vsub.f32 0.0, %v1210
    %v1467 = vsub.f32 0.0, %v1211
    %v1468 = vsub.f32 0.0, %v1212
    %v1469 = vsub.f32 0.0, %v1213
    %v1470 = vsub.f32 0.0, %v1214
    %v1471 = vsub.f32 0.0, %v1215
    %v1472 = vsub.f32 0.0, %v1216
    %v1473 = vsub.f32 0.0, %v1217
    %v1474 = vsub.f32 0.0, %v1218
    %v1475 = vsub.f32 0.0, %v1219
    %v1476 = vsub.f32 0.0, %v1220
    %v1477 = vsub.f32 0.0, %v1221
    %v1478 = vsub.f32 0.0, %v1222
    %v1479 = vsub.f32 0.0, %v1223
    %v1480 = vsub.f32 0.0, %v1224
    %v1481 = vsub.f32 0.0, %v1225
    %v1482 = vsub.f32 0.0, %v1226
    %v1483 = vsub.f32 0.0, %v1227
    %v1484 = vsub.f32 0.0, %v1228
    %v1485 = vsub.f32 0.0, %v1229
    %v1486 = vsub.f32 0.0, %v1230
    %v1487 = vsub.f32 0.0, %v1231
    %v1488 = vsub.f32 0.0, %v1232
    %v1489 = vsub.f32 0.0, %v1233
    %v1490 = vsub.f32 0.0, %v1234
    %v1491 = vsub.f32 0.0, %v1235
    %v1492 = vsub.f32 0.0, %v1236
    %v1493 = vsub.f32 0.0, %v1237
    %v1494 = vsub.f32 0.0, %v1238
    %v1495 = vsub.f32 0.0, %v1239
    %v1496 = vsub.f32 0.0, %v1240
    %v1497 = vsub.f32 0.0, %v1241
    %v1498 = vsub.f32 0.0, %v1242
    %v1499 = vsub.f32 0.0, %v1243
    %v1500 = vsub.f32 0.0, %v1244
    %v1501 = vsub.f32 0.0, %v1245
    %v1502 = vsub.f32 0.0, %v1246
    %v1503 = vsub.f32 0.0, %v1247
    %v1504 = vsub.f32 0.0, %v1248
    %v1505 = vsub.f32 0.0, %v1249
    %v1506 = vsub.f32 0.0, %v1250
    %v1507 = vsub.f32 0.0, %v1251
    %v1508 = vsub.f32 0.0, %v1252
    %v1509 = vsub.f32 0.0, %v1253
    %v1510 = vsub.f32 0.0, %v1254
    %v1511 = vsub.f32 0.0, %v1255
    %v1512 = vsub.f32 0.0, %v1256
    %v1513 = vsub.f32 0.0, %v1257
    %v1514 = vsub.f32 0.0, %v1258
    %v1515 = vsub.f32 0.0, %v1259
    %v1516 = vsub.f32 0.0, %v1260
    %v1517 = vsub.f32 0.0, %v1261
    %v1518 = vsub.f32 0.0, %v1262
    %v1519 = vsub.f32 0.0, %v1263
    %v1520 = vsub.f32 0.0, %v1264
    %v1521 = vsub.f32 0.0, %v1265
    %v1522 = vsub.f32 0.0, %v1266
    %v1523 = vsub.f32 0.0, %v1267
    %v1524 = vsub.f32 0.0, %v1268
    %v1525 = vsub.f32 0.0, %v1269
    %v1526 = vsub.f32 0.0, %v1270
    %v1527 = vsub.f32 0.0, %v1271
    %v1528 = vsub.f32 0.0, %v1272
    %v1529 = vsub.f32 0.0, %v1273
    %v1530 = vsub.f32 0.0, %v1274
    %v1531 = vsub.f32 0.0, %v1275
    %v1532 = vsub.f32 0.0, %v1276
    %v1533 = vsub.f32 0.0, %v1277
    %v1534 = vsub.f32 0.0, %v1278
    %v1535 = vsub.f32 0.0, %v1279
    %v1536 = vsub.f32 0.0, %v1280
    %v1537 = vsub.f32 0.0, %v1281
    %v1538 = vsub.f32 0.0, %v1282
    %v1539 = vsub.f32 0.0, %v1283
    %v1540 = vsub.f32 0.0, %v1284
    %v1541 = vsub.f32 0.0, %v1285
    %v1542 = vsub.f32 0.0, %v1286
    %v1543 = vsub.f32 0.0, %v1287
    %v1544 = vsub.f32 0.0, %v1288
    %v1545 = vsub.f32 0.0, %v1289
    %v1546 = vsub.f32 0.0, %v1290
    %v1547 = vsub.f32 0.0, %v1291
    %v1548 = vsub.f32 0.0, %v1292
    %v1549 = vsub.f32 0.0, %v1293
    %v1550 = vsub.f32 0.0, %v1294
    %v1551 = vsub.f32 0.0, %v1295
    %v1552 = vsub.f32 0.0, %v1296
    %v1553 = vsub.f32 0.0, %v1297
    %v1554 = vsub.f32 0.0, %v1298
    %v1555 = vsub.f32 0.0, %v1299
    %v1556 = vsub.f32 0.0, %v1300
    %v1557 = vsub.f32 0.0, %v1301
    %v1558 = vsub.f32 0.0, %v1302
    %v1559 = vsub.f32 0.0, %v1303
    %v1560 = vsub.f32 0.0, %v1304
    %v1561 = vsub.f32 0.0, %v1305
    %v1562 = vsub.f32 0.0, %v1306
    %v1563 = vsub.f32 0.0, %v1307
    %v1564 = vsub.f32 0.0, %v1308
    %v1565 = vsub.f32 0.0, %v1309
    %v1566 = vsub.f32 0.0, %v1310
    %v1567 = vsub.f32 0.0, %v1311
    %v1568 = vsub.f32 0.0, %v1312
    %v1569 = vsub.f32 0.0, %v1313
    %v1570 = vsub.f32 0.0, %v1314
    %v1571 = vsub.f32 0.0, %v1315
    %v1572 = vsub.f32 0.0, %v1316
    %v1573 = vsub.f32 0.0, %v1317
    %v1574 = vsub.f32 0.0, %v1318
    %v1575 = vsub.f32 0.0, %v1319
    %v1576 = vsub.f32 0.0, %v1320
    %v1577 = vsub.f32 0.0, %v1321
    %v1578 = vsub.f32 0.0, %v1322
    %v1579 = vsub.f32 0.0, %v1323
    %v1580 = vsub.f32 0.0, %v1324
    %v1581 = vsub.f32 0.0, %v1325
    %v1582 = vmul.f32 %v1326, 1.442695
    %v1583 = vpow.pop %v1582
    %v1584 = vmul.f32 %v1327, 1.442695
    %v1585 = vpow.pop %v1584
    %v1586 = vmul.f32 %v1328, 1.442695
    %v1587 = vpow.pop %v1586
    %v1588 = vmul.f32 %v1329, 1.442695
    %v1589 = vpow.pop %v1588
    %v1590 = vmul.f32 %v1330, 1.442695
    %v1591 = vpow.pop %v1590
    %v1592 = vmul.f32 %v1331, 1.442695
    %v1593 = vpow.pop %v1592
    %v1594 = vmul.f32 %v1332, 1.442695
    %v1595 = vpow.pop %v1594
    %v1596 = vmul.f32 %v1333, 1.442695
    %v1597 = vpow.pop %v1596
    %v1598 = vmul.f32 %v1334, 1.442695
    %v1599 = vpow.pop %v1598
    %v1600 = vmul.f32 %v1335, 1.442695
    %v1601 = vpow.pop %v1600
    %v1602 = vmul.f32 %v1336, 1.442695
    %v1603 = vpow.pop %v1602
    %v1604 = vmul.f32 %v1337, 1.442695
    %v1605 = vpow.pop %v1604
    %v1606 = vmul.f32 %v1338, 1.442695
    %v1607 = vpow.pop %v1606
    %v1608 = vmul.f32 %v1339, 1.442695
    %v1609 = vpow.pop %v1608
    %v1610 = vmul.f32 %v1340, 1.442695
    %v1611 = vpow.pop %v1610
    %v1612 = vmul.f32 %v1341, 1.442695
    %v1613 = vpow.pop %v1612
    %v1614 = vmul.f32 %v1342, 1.442695
    %v1615 = vpow.pop %v1614
    %v1616 = vmul.f32 %v1343, 1.442695
    %v1617 = vpow.pop %v1616
    %v1618 = vmul.f32 %v1344, 1.442695
    %v1619 = vpow.pop %v1618
    %v1620 = vmul.f32 %v1345, 1.442695
    %v1621 = vpow.pop %v1620
    %v1622 = vmul.f32 %v1346, 1.442695
    %v1623 = vpow.pop %v1622
    %v1624 = vmul.f32 %v1347, 1.442695
    %v1625 = vpow.pop %v1624
    %v1626 = vmul.f32 %v1348, 1.442695
    %v1627 = vpow.pop %v1626
    %v1628 = vmul.f32 %v1349, 1.442695
    %v1629 = vpow.pop %v1628
    %v1630 = vmul.f32 %v1350, 1.442695
    %v1631 = vpow.pop %v1630
    %v1632 = vmul.f32 %v1351, 1.442695
    %v1633 = vpow.pop %v1632
    %v1634 = vmul.f32 %v1352, 1.442695
    %v1635 = vpow.pop %v1634
    %v1636 = vmul.f32 %v1353, 1.442695
    %v1637 = vpow.pop %v1636
    %v1638 = vmul.f32 %v1354, 1.442695
    %v1639 = vpow.pop %v1638
    %v1640 = vmul.f32 %v1355, 1.442695
    %v1641 = vpow.pop %v1640
    %v1642 = vmul.f32 %v1356, 1.442695
    %v1643 = vpow.pop %v1642
    %v1644 = vmul.f32 %v1357, 1.442695
    %v1645 = vpow.pop %v1644
    %v1646 = vmul.f32 %v1358, 1.442695
    %v1647 = vpow.pop %v1646
    %v1648 = vmul.f32 %v1359, 1.442695
    %v1649 = vpow.pop %v1648
    %v1650 = vmul.f32 %v1360, 1.442695
    %v1651 = vpow.pop %v1650
    %v1652 = vmul.f32 %v1361, 1.442695
    %v1653 = vpow.pop %v1652
    %v1654 = vmul.f32 %v1362, 1.442695
    %v1655 = vpow.pop %v1654
    %v1656 = vmul.f32 %v1363, 1.442695
    %v1657 = vpow.pop %v1656
    %v1658 = vmul.f32 %v1364, 1.442695
    %v1659 = vpow.pop %v1658
    %v1660 = vmul.f32 %v1365, 1.442695
    %v1661 = vpow.pop %v1660
    %v1662 = vmul.f32 %v1366, 1.442695
    %v1663 = vpow.pop %v1662
    %v1664 = vmul.f32 %v1367, 1.442695
    %v1665 = vpow.pop %v1664
    %v1666 = vmul.f32 %v1368, 1.442695
    %v1667 = vpow.pop %v1666
    %v1668 = vmul.f32 %v1369, 1.442695
    %v1669 = vpow.pop %v1668
    %v1670 = vmul.f32 %v1370, 1.442695
    %v1671 = vpow.pop %v1670
    %v1672 = vmul.f32 %v1371, 1.442695
    %v1673 = vpow.pop %v1672
    %v1674 = vmul.f32 %v1372, 1.442695
    %v1675 = vpow.pop %v1674
    %v1676 = vmul.f32 %v1373, 1.442695
    %v1677 = vpow.pop %v1676
    %v1678 = vmul.f32 %v1374, 1.442695
    %v1679 = vpow.pop %v1678
    %v1680 = vmul.f32 %v1375, 1.442695
    %v1681 = vpow.pop %v1680
    %v1682 = vmul.f32 %v1376, 1.442695
    %v1683 = vpow.pop %v1682
    %v1684 = vmul.f32 %v1377, 1.442695
    %v1685 = vpow.pop %v1684
    %v1686 = vmul.f32 %v1378, 1.442695
    %v1687 = vpow.pop %v1686
    %v1688 = vmul.f32 %v1379, 1.442695
    %v1689 = vpow.pop %v1688
    %v1690 = vmul.f32 %v1380, 1.442695
    %v1691 = vpow.pop %v1690
    %v1692 = vmul.f32 %v1381, 1.442695
    %v1693 = vpow.pop %v1692
    %v1694 = vmul.f32 %v1382, 1.442695
    %v1695 = vpow.pop %v1694
    %v1696 = vmul.f32 %v1383, 1.442695
    %v1697 = vpow.pop %v1696
    %v1698 = vmul.f32 %v1384, 1.442695
    %v1699 = vpow.pop %v1698
    %v1700 = vmul.f32 %v1385, 1.442695
    %v1701 = vpow.pop %v1700
    %v1702 = vmul.f32 %v1386, 1.442695
    %v1703 = vpow.pop %v1702
    %v1704 = vmul.f32 %v1387, 1.442695
    %v1705 = vpow.pop %v1704
    %v1706 = vmul.f32 %v1388, 1.442695
    %v1707 = vpow.pop %v1706
    %v1708 = vmul.f32 %v1389, 1.442695
    %v1709 = vpow.pop %v1708
    %v1710 = vmul.f32 %v1390, 1.442695
    %v1711 = vpow.pop %v1710
    %v1712 = vmul.f32 %v1391, 1.442695
    %v1713 = vpow.pop %v1712
    %v1714 = vmul.f32 %v1392, 1.442695
    %v1715 = vpow.pop %v1714
    %v1716 = vmul.f32 %v1393, 1.442695
    %v1717 = vpow.pop %v1716
    %v1718 = vmul.f32 %v1394, 1.442695
    %v1719 = vpow.pop %v1718
    %v1720 = vmul.f32 %v1395, 1.442695
    %v1721 = vpow.pop %v1720
    %v1722 = vmul.f32 %v1396, 1.442695
    %v1723 = vpow.pop %v1722
    %v1724 = vmul.f32 %v1397, 1.442695
    %v1725 = vpow.pop %v1724
    %v1726 = vmul.f32 %v1398, 1.442695
    %v1727 = vpow.pop %v1726
    %v1728 = vmul.f32 %v1399, 1.442695
    %v1729 = vpow.pop %v1728
    %v1730 = vmul.f32 %v1400, 1.442695
    %v1731 = vpow.pop %v1730
    %v1732 = vmul.f32 %v1401, 1.442695
    %v1733 = vpow.pop %v1732
    %v1734 = vmul.f32 %v1402, 1.442695
    %v1735 = vpow.pop %v1734
    %v1736 = vmul.f32 %v1403, 1.442695
    %v1737 = vpow.pop %v1736
    %v1738 = vmul.f32 %v1404, 1.442695
    %v1739 = vpow.pop %v1738
    %v1740 = vmul.f32 %v1405, 1.442695
    %v1741 = vpow.pop %v1740
    %v1742 = vmul.f32 %v1406, 1.442695
    %v1743 = vpow.pop %v1742
    %v1744 = vmul.f32 %v1407, 1.442695
    %v1745 = vpow.pop %v1744
    %v1746 = vmul.f32 %v1408, 1.442695
    %v1747 = vpow.pop %v1746
    %v1748 = vmul.f32 %v1409, 1.442695
    %v1749 = vpow.pop %v1748
    %v1750 = vmul.f32 %v1410, 1.442695
    %v1751 = vpow.pop %v1750
    %v1752 = vmul.f32 %v1411, 1.442695
    %v1753 = vpow.pop %v1752
    %v1754 = vmul.f32 %v1412, 1.442695
    %v1755 = vpow.pop %v1754
    %v1756 = vmul.f32 %v1413, 1.442695
    %v1757 = vpow.pop %v1756
    %v1758 = vmul.f32 %v1414, 1.442695
    %v1759 = vpow.pop %v1758
    %v1760 = vmul.f32 %v1415, 1.442695
    %v1761 = vpow.pop %v1760
    %v1762 = vmul.f32 %v1416, 1.442695
    %v1763 = vpow.pop %v1762
    %v1764 = vmul.f32 %v1417, 1.442695
    %v1765 = vpow.pop %v1764
    %v1766 = vmul.f32 %v1418, 1.442695
    %v1767 = vpow.pop %v1766
    %v1768 = vmul.f32 %v1419, 1.442695
    %v1769 = vpow.pop %v1768
    %v1770 = vmul.f32 %v1420, 1.442695
    %v1771 = vpow.pop %v1770
    %v1772 = vmul.f32 %v1421, 1.442695
    %v1773 = vpow.pop %v1772
    %v1774 = vmul.f32 %v1422, 1.442695
    %v1775 = vpow.pop %v1774
    %v1776 = vmul.f32 %v1423, 1.442695
    %v1777 = vpow.pop %v1776
    %v1778 = vmul.f32 %v1424, 1.442695
    %v1779 = vpow.pop %v1778
    %v1780 = vmul.f32 %v1425, 1.442695
    %v1781 = vpow.pop %v1780
    %v1782 = vmul.f32 %v1426, 1.442695
    %v1783 = vpow.pop %v1782
    %v1784 = vmul.f32 %v1427, 1.442695
    %v1785 = vpow.pop %v1784
    %v1786 = vmul.f32 %v1428, 1.442695
    %v1787 = vpow.pop %v1786
    %v1788 = vmul.f32 %v1429, 1.442695
    %v1789 = vpow.pop %v1788
    %v1790 = vmul.f32 %v1430, 1.442695
    %v1791 = vpow.pop %v1790
    %v1792 = vmul.f32 %v1431, 1.442695
    %v1793 = vpow.pop %v1792
    %v1794 = vmul.f32 %v1432, 1.442695
    %v1795 = vpow.pop %v1794
    %v1796 = vmul.f32 %v1433, 1.442695
    %v1797 = vpow.pop %v1796
    %v1798 = vmul.f32 %v1434, 1.442695
    %v1799 = vpow.pop %v1798
    %v1800 = vmul.f32 %v1435, 1.442695
    %v1801 = vpow.pop %v1800
    %v1802 = vmul.f32 %v1436, 1.442695
    %v1803 = vpow.pop %v1802
    %v1804 = vmul.f32 %v1437, 1.442695
    %v1805 = vpow.pop %v1804
    %v1806 = vmul.f32 %v1438, 1.442695
    %v1807 = vpow.pop %v1806
    %v1808 = vmul.f32 %v1439, 1.442695
    %v1809 = vpow.pop %v1808
    %v1810 = vmul.f32 %v1440, 1.442695
    %v1811 = vpow.pop %v1810
    %v1812 = vmul.f32 %v1441, 1.442695
    %v1813 = vpow.pop %v1812
    %v1814 = vmul.f32 %v1442, 1.442695
    %v1815 = vpow.pop %v1814
    %v1816 = vmul.f32 %v1443, 1.442695
    %v1817 = vpow.pop %v1816
    %v1818 = vmul.f32 %v1444, 1.442695
    %v1819 = vpow.pop %v1818
    %v1820 = vmul.f32 %v1445, 1.442695
    %v1821 = vpow.pop %v1820
    %v1822 = vmul.f32 %v1446, 1.442695
    %v1823 = vpow.pop %v1822
    %v1824 = vmul.f32 %v1447, 1.442695
    %v1825 = vpow.pop %v1824
    %v1826 = vmul.f32 %v1448, 1.442695
    %v1827 = vpow.pop %v1826
    %v1828 = vmul.f32 %v1449, 1.442695
    %v1829 = vpow.pop %v1828
    %v1830 = vmul.f32 %v1450, 1.442695
    %v1831 = vpow.pop %v1830
    %v1832 = vmul.f32 %v1451, 1.442695
    %v1833 = vpow.pop %v1832
    %v1834 = vmul.f32 %v1452, 1.442695
    %v1835 = vpow.pop %v1834
    %v1836 = vmul.f32 %v1453, 1.442695
    %v1837 = vpow.pop %v1836
    %v1838 = vmul.f32 %v1454, 1.442695
    %v1839 = vpow.pop %v1838
    %v1840 = vmul.f32 %v1455, 1.442695
    %v1841 = vpow.pop %v1840
    %v1842 = vmul.f32 %v1456, 1.442695
    %v1843 = vpow.pop %v1842
    %v1844 = vmul.f32 %v1457, 1.442695
    %v1845 = vpow.pop %v1844
    %v1846 = vmul.f32 %v1458, 1.442695
    %v1847 = vpow.pop %v1846
    %v1848 = vmul.f32 %v1459, 1.442695
    %v1849 = vpow.pop %v1848
    %v1850 = vmul.f32 %v1460, 1.442695
    %v1851 = vpow.pop %v1850
    %v1852 = vmul.f32 %v1461, 1.442695
    %v1853 = vpow.pop %v1852
    %v1854 = vmul.f32 %v1462, 1.442695
    %v1855 = vpow.pop %v1854
    %v1856 = vmul.f32 %v1463, 1.442695
    %v1857 = vpow.pop %v1856
    %v1858 = vmul.f32 %v1464, 1.442695
    %v1859 = vpow.pop %v1858
    %v1860 = vmul.f32 %v1465, 1.442695
    %v1861 = vpow.pop %v1860
    %v1862 = vmul.f32 %v1466, 1.442695
    %v1863 = vpow.pop %v1862
    %v1864 = vmul.f32 %v1467, 1.442695
    %v1865 = vpow.pop %v1864
    %v1866 = vmul.f32 %v1468, 1.442695
    %v1867 = vpow.pop %v1866
    %v1868 = vmul.f32 %v1469, 1.442695
    %v1869 = vpow.pop %v1868
    %v1870 = vmul.f32 %v1470, 1.442695
    %v1871 = vpow.pop %v1870
    %v1872 = vmul.f32 %v1471, 1.442695
    %v1873 = vpow.pop %v1872
    %v1874 = vmul.f32 %v1472, 1.442695
    %v1875 = vpow.pop %v1874
    %v1876 = vmul.f32 %v1473, 1.442695
    %v1877 = vpow.pop %v1876
    %v1878 = vmul.f32 %v1474, 1.442695
    %v1879 = vpow.pop %v1878
    %v1880 = vmul.f32 %v1475, 1.442695
    %v1881 = vpow.pop %v1880
    %v1882 = vmul.f32 %v1476, 1.442695
    %v1883 = vpow.pop %v1882
    %v1884 = vmul.f32 %v1477, 1.442695
    %v1885 = vpow.pop %v1884
    %v1886 = vmul.f32 %v1478, 1.442695
    %v1887 = vpow.pop %v1886
    %v1888 = vmul.f32 %v1479, 1.442695
    %v1889 = vpow.pop %v1888
    %v1890 = vmul.f32 %v1480, 1.442695
    %v1891 = vpow.pop %v1890
    %v1892 = vmul.f32 %v1481, 1.442695
    %v1893 = vpow.pop %v1892
    %v1894 = vmul.f32 %v1482, 1.442695
    %v1895 = vpow.pop %v1894
    %v1896 = vmul.f32 %v1483, 1.442695
    %v1897 = vpow.pop %v1896
    %v1898 = vmul.f32 %v1484, 1.442695
    %v1899 = vpow.pop %v1898
    %v1900 = vmul.f32 %v1485, 1.442695
    %v1901 = vpow.pop %v1900
    %v1902 = vmul.f32 %v1486, 1.442695
    %v1903 = vpow.pop %v1902
    %v1904 = vmul.f32 %v1487, 1.442695
    %v1905 = vpow.pop %v1904
    %v1906 = vmul.f32 %v1488, 1.442695
    %v1907 = vpow.pop %v1906
    %v1908 = vmul.f32 %v1489, 1.442695
    %v1909 = vpow.pop %v1908
    %v1910 = vmul.f32 %v1490, 1.442695
    %v1911 = vpow.pop %v1910
    %v1912 = vmul.f32 %v1491, 1.442695
    %v1913 = vpow.pop %v1912
    %v1914 = vmul.f32 %v1492, 1.442695
    %v1915 = vpow.pop %v1914
    %v1916 = vmul.f32 %v1493, 1.442695
    %v1917 = vpow.pop %v1916
    %v1918 = vmul.f32 %v1494, 1.442695
    %v1919 = vpow.pop %v1918
    %v1920 = vmul.f32 %v1495, 1.442695
    %v1921 = vpow.pop %v1920
    %v1922 = vmul.f32 %v1496, 1.442695
    %v1923 = vpow.pop %v1922
    %v1924 = vmul.f32 %v1497, 1.442695
    %v1925 = vpow.pop %v1924
    %v1926 = vmul.f32 %v1498, 1.442695
    %v1927 = vpow.pop %v1926
    %v1928 = vmul.f32 %v1499, 1.442695
    %v1929 = vpow.pop %v1928
    %v1930 = vmul.f32 %v1500, 1.442695
    %v1931 = vpow.pop %v1930
    %v1932 = vmul.f32 %v1501, 1.442695
    %v1933 = vpow.pop %v1932
    %v1934 = vmul.f32 %v1502, 1.442695
    %v1935 = vpow.pop %v1934
    %v1936 = vmul.f32 %v1503, 1.442695
    %v1937 = vpow.pop %v1936
    %v1938 = vmul.f32 %v1504, 1.442695
    %v1939 = vpow.pop %v1938
    %v1940 = vmul.f32 %v1505, 1.442695
    %v1941 = vpow.pop %v1940
    %v1942 = vmul.f32 %v1506, 1.442695
    %v1943 = vpow.pop %v1942
    %v1944 = vmul.f32 %v1507, 1.442695
    %v1945 = vpow.pop %v1944
    %v1946 = vmul.f32 %v1508, 1.442695
    %v1947 = vpow.pop %v1946
    %v1948 = vmul.f32 %v1509, 1.442695
    %v1949 = vpow.pop %v1948
    %v1950 = vmul.f32 %v1510, 1.442695
    %v1951 = vpow.pop %v1950
    %v1952 = vmul.f32 %v1511, 1.442695
    %v1953 = vpow.pop %v1952
    %v1954 = vmul.f32 %v1512, 1.442695
    %v1955 = vpow.pop %v1954
    %v1956 = vmul.f32 %v1513, 1.442695
    %v1957 = vpow.pop %v1956
    %v1958 = vmul.f32 %v1514, 1.442695
    %v1959 = vpow.pop %v1958
    %v1960 = vmul.f32 %v1515, 1.442695
    %v1961 = vpow.pop %v1960
    %v1962 = vmul.f32 %v1516, 1.442695
    %v1963 = vpow.pop %v1962
    %v1964 = vmul.f32 %v1517, 1.442695
    %v1965 = vpow.pop %v1964
    %v1966 = vmul.f32 %v1518, 1.442695
    %v1967 = vpow.pop %v1966
    %v1968 = vmul.f32 %v1519, 1.442695
    %v1969 = vpow.pop %v1968
    %v1970 = vmul.f32 %v1520, 1.442695
    %v1971 = vpow.pop %v1970
    %v1972 = vmul.f32 %v1521, 1.442695
    %v1973 = vpow.pop %v1972
    %v1974 = vmul.f32 %v1522, 1.442695
    %v1975 = vpow.pop %v1974
    %v1976 = vmul.f32 %v1523, 1.442695
    %v1977 = vpow.pop %v1976
    %v1978 = vmul.f32 %v1524, 1.442695
    %v1979 = vpow.pop %v1978
    %v1980 = vmul.f32 %v1525, 1.442695
    %v1981 = vpow.pop %v1980
    %v1982 = vmul.f32 %v1526, 1.442695
    %v1983 = vpow.pop %v1982
    %v1984 = vmul.f32 %v1527, 1.442695
    %v1985 = vpow.pop %v1984
    %v1986 = vmul.f32 %v1528, 1.442695
    %v1987 = vpow.pop %v1986
    %v1988 = vmul.f32 %v1529, 1.442695
    %v1989 = vpow.pop %v1988
    %v1990 = vmul.f32 %v1530, 1.442695
    %v1991 = vpow.pop %v1990
    %v1992 = vmul.f32 %v1531, 1.442695
    %v1993 = vpow.pop %v1992
    %v1994 = vmul.f32 %v1532, 1.442695
    %v1995 = vpow.pop %v1994
    %v1996 = vmul.f32 %v1533, 1.442695
    %v1997 = vpow.pop %v1996
    %v1998 = vmul.f32 %v1534, 1.442695
    %v1999 = vpow.pop %v1998
    %v2000 = vmul.f32 %v1535, 1.442695
    %v2001 = vpow.pop %v2000
    %v2002 = vmul.f32 %v1536, 1.442695
    %v2003 = vpow.pop %v2002
    %v2004 = vmul.f32 %v1537, 1.442695
    %v2005 = vpow.pop %v2004
    %v2006 = vmul.f32 %v1538, 1.442695
    %v2007 = vpow.pop %v2006
    %v2008 = vmul.f32 %v1539, 1.442695
    %v2009 = vpow.pop %v2008
    %v2010 = vmul.f32 %v1540, 1.442695
    %v2011 = vpow.pop %v2010
    %v2012 = vmul.f32 %v1541, 1.442695
    %v2013 = vpow.pop %v2012
    %v2014 = vmul.f32 %v1542, 1.442695
    %v2015 = vpow.pop %v2014
    %v2016 = vmul.f32 %v1543, 1.442695
    %v2017 = vpow.pop %v2016
    %v2018 = vmul.f32 %v1544, 1.442695
    %v2019 = vpow.pop %v2018
    %v2020 = vmul.f32 %v1545, 1.442695
    %v2021 = vpow.pop %v2020
    %v2022 = vmul.f32 %v1546, 1.442695
    %v2023 = vpow.pop %v2022
    %v2024 = vmul.f32 %v1547, 1.442695
    %v2025 = vpow.pop %v2024
    %v2026 = vmul.f32 %v1548, 1.442695
    %v2027 = vpow.pop %v2026
    %v2028 = vmul.f32 %v1549, 1.442695
    %v2029 = vpow.pop %v2028
    %v2030 = vmul.f32 %v1550, 1.442695
    %v2031 = vpow.pop %v2030
    %v2032 = vmul.f32 %v1551, 1.442695
    %v2033 = vpow.pop %v2032
    %v2034 = vmul.f32 %v1552, 1.442695
    %v2035 = vpow.pop %v2034
    %v2036 = vmul.f32 %v1553, 1.442695
    %v2037 = vpow.pop %v2036
    %v2038 = vmul.f32 %v1554, 1.442695
    %v2039 = vpow.pop %v2038
    %v2040 = vmul.f32 %v1555, 1.442695
    %v2041 = vpow.pop %v2040
    %v2042 = vmul.f32 %v1556, 1.442695
    %v2043 = vpow.pop %v2042
    %v2044 = vmul.f32 %v1557, 1.442695
    %v2045 = vpow.pop %v2044
    %v2046 = vmul.f32 %v1558, 1.442695
    %v2047 = vpow.pop %v2046
    %v2048 = vmul.f32 %v1559, 1.442695
    %v2049 = vpow.pop %v2048
    %v2050 = vmul.f32 %v1560, 1.442695
    %v2051 = vpow.pop %v2050
    %v2052 = vmul.f32 %v1561, 1.442695
    %v2053 = vpow.pop %v2052
    %v2054 = vmul.f32 %v1562, 1.442695
    %v2055 = vpow.pop %v2054
    %v2056 = vmul.f32 %v1563, 1.442695
    %v2057 = vpow.pop %v2056
    %v2058 = vmul.f32 %v1564, 1.442695
    %v2059 = vpow.pop %v2058
    %v2060 = vmul.f32 %v1565, 1.442695
    %v2061 = vpow.pop %v2060
    %v2062 = vmul.f32 %v1566, 1.442695
    %v2063 = vpow.pop %v2062
    %v2064 = vmul.f32 %v1567, 1.442695
    %v2065 = vpow.pop %v2064
    %v2066 = vmul.f32 %v1568, 1.442695
    %v2067 = vpow.pop %v2066
    %v2068 = vmul.f32 %v1569, 1.442695
    %v2069 = vpow.pop %v2068
    %v2070 = vmul.f32 %v1570, 1.442695
    %v2071 = vpow.pop %v2070
    %v2072 = vmul.f32 %v1571, 1.442695
    %v2073 = vpow.pop %v2072
    %v2074 = vmul.f32 %v1572, 1.442695
    %v2075 = vpow.pop %v2074
    %v2076 = vmul.f32 %v1573, 1.442695
    %v2077 = vpow.pop %v2076
    %v2078 = vmul.f32 %v1574, 1.442695
    %v2079 = vpow.pop %v2078
    %v2080 = vmul.f32 %v1575, 1.442695
    %v2081 = vpow.pop %v2080
    %v2082 = vmul.f32 %v1576, 1.442695
    %v2083 = vpow.pop %v2082
    %v2084 = vmul.f32 %v1577, 1.442695
    %v2085 = vpow.pop %v2084
    %v2086 = vmul.f32 %v1578, 1.442695
    %v2087 = vpow.pop %v2086
    %v2088 = vmul.f32 %v1579, 1.442695
    %v2089 = vpow.pop %v2088
    %v2090 = vmul.f32 %v1580, 1.442695
    %v2091 = vpow.pop %v2090
    %v2092 = vmul.f32 %v1581, 1.442695
    %v2093 = vpow.pop %v2092
    %v2094 = vadd.f32 %v1583, 1.0
    %v2095 = vlog2.pop %v2094
    %v2096 = vmul.f32 %v2095, 0.6931472
    %v2097 = vmul.f32 -0.5, %v1583
    %v2098 = vadd.f32 %v2097, 1.0
    %v2099 = vmul.f32 %v2098, %v1583
    %v2100 = vand.u32 2147483647, %v1583
    %vm2101 = vcmp.lt.f32.partialorder %v2100, 0.0004427343
    %v2102 = vsel %vm2101, %v2099, %v2096
    %v2103 = vadd.f32 %v1585, 1.0
    %v2104 = vlog2.pop %v2103
    %v2105 = vmul.f32 %v2104, 0.6931472
    %v2106 = vmul.f32 -0.5, %v1585
    %v2107 = vadd.f32 %v2106, 1.0
    %v2108 = vmul.f32 %v2107, %v1585
    %v2109 = vand.u32 2147483647, %v1585
    %vm2110 = vcmp.lt.f32.partialorder %v2109, 0.0004427343
    %v2111 = vsel %vm2110, %v2108, %v2105
    %v2112 = vadd.f32 %v1587, 1.0
    %v2113 = vlog2.pop %v2112
    %v2114 = vmul.f32 %v2113, 0.6931472
    %v2115 = vmul.f32 -0.5, %v1587
    %v2116 = vadd.f32 %v2115, 1.0
    %v2117 = vmul.f32 %v2116, %v1587
    %v2118 = vand.u32 2147483647, %v1587
    %vm2119 = vcmp.lt.f32.partialorder %v2118, 0.0004427343
    %v2120 = vsel %vm2119, %v2117, %v2114
    %v2121 = vadd.f32 %v1589, 1.0
    %v2122 = vlog2.pop %v2121
    %v2123 = vmul.f32 %v2122, 0.6931472
    %v2124 = vmul.f32 -0.5, %v1589
    %v2125 = vadd.f32 %v2124, 1.0
    %v2126 = vmul.f32 %v2125, %v1589
    %v2127 = vand.u32 2147483647, %v1589
    %vm2128 = vcmp.lt.f32.partialorder %v2127, 0.0004427343
    %v2129 = vsel %vm2128, %v2126, %v2123
    %v2130 = vadd.f32 %v1591, 1.0
    %v2131 = vlog2.pop %v2130
    %v2132 = vmul.f32 %v2131, 0.6931472
    %v2133 = vmul.f32 -0.5, %v1591
    %v2134 = vadd.f32 %v2133, 1.0
    %v2135 = vmul.f32 %v2134, %v1591
    %v2136 = vand.u32 2147483647, %v1591
    %vm2137 = vcmp.lt.f32.partialorder %v2136, 0.0004427343
    %v2138 = vsel %vm2137, %v2135, %v2132
    %v2139 = vadd.f32 %v1593, 1.0
    %v2140 = vlog2.pop %v2139
    %v2141 = vmul.f32 %v2140, 0.6931472
    %v2142 = vmul.f32 -0.5, %v1593
    %v2143 = vadd.f32 %v2142, 1.0
    %v2144 = vmul.f32 %v2143, %v1593
    %v2145 = vand.u32 2147483647, %v1593
    %vm2146 = vcmp.lt.f32.partialorder %v2145, 0.0004427343
    %v2147 = vsel %vm2146, %v2144, %v2141
    %v2148 = vadd.f32 %v1595, 1.0
    %v2149 = vlog2.pop %v2148
    %v2150 = vmul.f32 %v2149, 0.6931472
    %v2151 = vmul.f32 -0.5, %v1595
    %v2152 = vadd.f32 %v2151, 1.0
    %v2153 = vmul.f32 %v2152, %v1595
    %v2154 = vand.u32 2147483647, %v1595
    %vm2155 = vcmp.lt.f32.partialorder %v2154, 0.0004427343
    %v2156 = vsel %vm2155, %v2153, %v2150
    %v2157 = vadd.f32 %v1597, 1.0
    %v2158 = vlog2.pop %v2157
    %v2159 = vmul.f32 %v2158, 0.6931472
    %v2160 = vmul.f32 -0.5, %v1597
    %v2161 = vadd.f32 %v2160, 1.0
    %v2162 = vmul.f32 %v2161, %v1597
    %v2163 = vand.u32 2147483647, %v1597
    %vm2164 = vcmp.lt.f32.partialorder %v2163, 0.0004427343
    %v2165 = vsel %vm2164, %v2162, %v2159
    %v2166 = vadd.f32 %v1599, 1.0
    %v2167 = vlog2.pop %v2166
    %v2168 = vmul.f32 %v2167, 0.6931472
    %v2169 = vmul.f32 -0.5, %v1599
    %v2170 = vadd.f32 %v2169, 1.0
    %v2171 = vmul.f32 %v2170, %v1599
    %v2172 = vand.u32 2147483647, %v1599
    %vm2173 = vcmp.lt.f32.partialorder %v2172, 0.0004427343
    %v2174 = vsel %vm2173, %v2171, %v2168
    %v2175 = vadd.f32 %v1601, 1.0
    %v2176 = vlog2.pop %v2175
    %v2177 = vmul.f32 %v2176, 0.6931472
    %v2178 = vmul.f32 -0.5, %v1601
    %v2179 = vadd.f32 %v2178, 1.0
    %v2180 = vmul.f32 %v2179, %v1601
    %v2181 = vand.u32 2147483647, %v1601
    %vm2182 = vcmp.lt.f32.partialorder %v2181, 0.0004427343
    %v2183 = vsel %vm2182, %v2180, %v2177
    %v2184 = vadd.f32 %v1603, 1.0
    %v2185 = vlog2.pop %v2184
    %v2186 = vmul.f32 %v2185, 0.6931472
    %v2187 = vmul.f32 -0.5, %v1603
    %v2188 = vadd.f32 %v2187, 1.0
    %v2189 = vmul.f32 %v2188, %v1603
    %v2190 = vand.u32 2147483647, %v1603
    %vm2191 = vcmp.lt.f32.partialorder %v2190, 0.0004427343
    %v2192 = vsel %vm2191, %v2189, %v2186
    %v2193 = vadd.f32 %v1605, 1.0
    %v2194 = vlog2.pop %v2193
    %v2195 = vmul.f32 %v2194, 0.6931472
    %v2196 = vmul.f32 -0.5, %v1605
    %v2197 = vadd.f32 %v2196, 1.0
    %v2198 = vmul.f32 %v2197, %v1605
    %v2199 = vand.u32 2147483647, %v1605
    %vm2200 = vcmp.lt.f32.partialorder %v2199, 0.0004427343
    %v2201 = vsel %vm2200, %v2198, %v2195
    %v2202 = vadd.f32 %v1607, 1.0
    %v2203 = vlog2.pop %v2202
    %v2204 = vmul.f32 %v2203, 0.6931472
    %v2205 = vmul.f32 -0.5, %v1607
    %v2206 = vadd.f32 %v2205, 1.0
    %v2207 = vmul.f32 %v2206, %v1607
    %v2208 = vand.u32 2147483647, %v1607
    %vm2209 = vcmp.lt.f32.partialorder %v2208, 0.0004427343
    %v2210 = vsel %vm2209, %v2207, %v2204
    %v2211 = vadd.f32 %v1609, 1.0
    %v2212 = vlog2.pop %v2211
    %v2213 = vmul.f32 %v2212, 0.6931472
    %v2214 = vmul.f32 -0.5, %v1609
    %v2215 = vadd.f32 %v2214, 1.0
    %v2216 = vmul.f32 %v2215, %v1609
    %v2217 = vand.u32 2147483647, %v1609
    %vm2218 = vcmp.lt.f32.partialorder %v2217, 0.0004427343
    %v2219 = vsel %vm2218, %v2216, %v2213
    %v2220 = vadd.f32 %v1611, 1.0
    %v2221 = vlog2.pop %v2220
    %v2222 = vmul.f32 %v2221, 0.6931472
    %v2223 = vmul.f32 -0.5, %v1611
    %v2224 = vadd.f32 %v2223, 1.0
    %v2225 = vmul.f32 %v2224, %v1611
    %v2226 = vand.u32 2147483647, %v1611
    %vm2227 = vcmp.lt.f32.partialorder %v2226, 0.0004427343
    %v2228 = vsel %vm2227, %v2225, %v2222
    %v2229 = vadd.f32 %v1613, 1.0
    %v2230 = vlog2.pop %v2229
    %v2231 = vmul.f32 %v2230, 0.6931472
    %v2232 = vmul.f32 -0.5, %v1613
    %v2233 = vadd.f32 %v2232, 1.0
    %v2234 = vmul.f32 %v2233, %v1613
    %v2235 = vand.u32 2147483647, %v1613
    %vm2236 = vcmp.lt.f32.partialorder %v2235, 0.0004427343
    %v2237 = vsel %vm2236, %v2234, %v2231
    %v2238 = vadd.f32 %v1615, 1.0
    %v2239 = vlog2.pop %v2238
    %v2240 = vmul.f32 %v2239, 0.6931472
    %v2241 = vmul.f32 -0.5, %v1615
    %v2242 = vadd.f32 %v2241, 1.0
    %v2243 = vmul.f32 %v2242, %v1615
    %v2244 = vand.u32 2147483647, %v1615
    %vm2245 = vcmp.lt.f32.partialorder %v2244, 0.0004427343
    %v2246 = vsel %vm2245, %v2243, %v2240
    %v2247 = vadd.f32 %v1617, 1.0
    %v2248 = vlog2.pop %v2247
    %v2249 = vmul.f32 %v2248, 0.6931472
    %v2250 = vmul.f32 -0.5, %v1617
    %v2251 = vadd.f32 %v2250, 1.0
    %v2252 = vmul.f32 %v2251, %v1617
    %v2253 = vand.u32 2147483647, %v1617
    %vm2254 = vcmp.lt.f32.partialorder %v2253, 0.0004427343
    %v2255 = vsel %vm2254, %v2252, %v2249
    %v2256 = vadd.f32 %v1619, 1.0
    %v2257 = vlog2.pop %v2256
    %v2258 = vmul.f32 %v2257, 0.6931472
    %v2259 = vmul.f32 -0.5, %v1619
    %v2260 = vadd.f32 %v2259, 1.0
    %v2261 = vmul.f32 %v2260, %v1619
    %v2262 = vand.u32 2147483647, %v1619
    %vm2263 = vcmp.lt.f32.partialorder %v2262, 0.0004427343
    %v2264 = vsel %vm2263, %v2261, %v2258
    %v2265 = vadd.f32 %v1621, 1.0
    %v2266 = vlog2.pop %v2265
    %v2267 = vmul.f32 %v2266, 0.6931472
    %v2268 = vmul.f32 -0.5, %v1621
    %v2269 = vadd.f32 %v2268, 1.0
    %v2270 = vmul.f32 %v2269, %v1621
    %v2271 = vand.u32 2147483647, %v1621
    %vm2272 = vcmp.lt.f32.partialorder %v2271, 0.0004427343
    %v2273 = vsel %vm2272, %v2270, %v2267
    %v2274 = vadd.f32 %v1623, 1.0
    %v2275 = vlog2.pop %v2274
    %v2276 = vmul.f32 %v2275, 0.6931472
    %v2277 = vmul.f32 -0.5, %v1623
    %v2278 = vadd.f32 %v2277, 1.0
    %v2279 = vmul.f32 %v2278, %v1623
    %v2280 = vand.u32 2147483647, %v1623
    %vm2281 = vcmp.lt.f32.partialorder %v2280, 0.0004427343
    %v2282 = vsel %vm2281, %v2279, %v2276
    %v2283 = vadd.f32 %v1625, 1.0
    %v2284 = vlog2.pop %v2283
    %v2285 = vmul.f32 %v2284, 0.6931472
    %v2286 = vmul.f32 -0.5, %v1625
    %v2287 = vadd.f32 %v2286, 1.0
    %v2288 = vmul.f32 %v2287, %v1625
    %v2289 = vand.u32 2147483647, %v1625
    %vm2290 = vcmp.lt.f32.partialorder %v2289, 0.0004427343
    %v2291 = vsel %vm2290, %v2288, %v2285
    %v2292 = vadd.f32 %v1627, 1.0
    %v2293 = vlog2.pop %v2292
    %v2294 = vmul.f32 %v2293, 0.6931472
    %v2295 = vmul.f32 -0.5, %v1627
    %v2296 = vadd.f32 %v2295, 1.0
    %v2297 = vmul.f32 %v2296, %v1627
    %v2298 = vand.u32 2147483647, %v1627
    %vm2299 = vcmp.lt.f32.partialorder %v2298, 0.0004427343
    %v2300 = vsel %vm2299, %v2297, %v2294
    %v2301 = vadd.f32 %v1629, 1.0
    %v2302 = vlog2.pop %v2301
    %v2303 = vmul.f32 %v2302, 0.6931472
    %v2304 = vmul.f32 -0.5, %v1629
    %v2305 = vadd.f32 %v2304, 1.0
    %v2306 = vmul.f32 %v2305, %v1629
    %v2307 = vand.u32 2147483647, %v1629
    %vm2308 = vcmp.lt.f32.partialorder %v2307, 0.0004427343
    %v2309 = vsel %vm2308, %v2306, %v2303
    %v2310 = vadd.f32 %v1631, 1.0
    %v2311 = vlog2.pop %v2310
    %v2312 = vmul.f32 %v2311, 0.6931472
    %v2313 = vmul.f32 -0.5, %v1631
    %v2314 = vadd.f32 %v2313, 1.0
    %v2315 = vmul.f32 %v2314, %v1631
    %v2316 = vand.u32 2147483647, %v1631
    %vm2317 = vcmp.lt.f32.partialorder %v2316, 0.0004427343
    %v2318 = vsel %vm2317, %v2315, %v2312
    %v2319 = vadd.f32 %v1633, 1.0
    %v2320 = vlog2.pop %v2319
    %v2321 = vmul.f32 %v2320, 0.6931472
    %v2322 = vmul.f32 -0.5, %v1633
    %v2323 = vadd.f32 %v2322, 1.0
    %v2324 = vmul.f32 %v2323, %v1633
    %v2325 = vand.u32 2147483647, %v1633
    %vm2326 = vcmp.lt.f32.partialorder %v2325, 0.0004427343
    %v2327 = vsel %vm2326, %v2324, %v2321
    %v2328 = vadd.f32 %v1635, 1.0
    %v2329 = vlog2.pop %v2328
    %v2330 = vmul.f32 %v2329, 0.6931472
    %v2331 = vmul.f32 -0.5, %v1635
    %v2332 = vadd.f32 %v2331, 1.0
    %v2333 = vmul.f32 %v2332, %v1635
    %v2334 = vand.u32 2147483647, %v1635
    %vm2335 = vcmp.lt.f32.partialorder %v2334, 0.0004427343
    %v2336 = vsel %vm2335, %v2333, %v2330
    %v2337 = vadd.f32 %v1637, 1.0
    %v2338 = vlog2.pop %v2337
    %v2339 = vmul.f32 %v2338, 0.6931472
    %v2340 = vmul.f32 -0.5, %v1637
    %v2341 = vadd.f32 %v2340, 1.0
    %v2342 = vmul.f32 %v2341, %v1637
    %v2343 = vand.u32 2147483647, %v1637
    %vm2344 = vcmp.lt.f32.partialorder %v2343, 0.0004427343
    %v2345 = vsel %vm2344, %v2342, %v2339
    %v2346 = vadd.f32 %v1639, 1.0
    %v2347 = vlog2.pop %v2346
    %v2348 = vmul.f32 %v2347, 0.6931472
    %v2349 = vmul.f32 -0.5, %v1639
    %v2350 = vadd.f32 %v2349, 1.0
    %v2351 = vmul.f32 %v2350, %v1639
    %v2352 = vand.u32 2147483647, %v1639
    %vm2353 = vcmp.lt.f32.partialorder %v2352, 0.0004427343
    %v2354 = vsel %vm2353, %v2351, %v2348
    %v2355 = vadd.f32 %v1641, 1.0
    %v2356 = vlog2.pop %v2355
    %v2357 = vmul.f32 %v2356, 0.6931472
    %v2358 = vmul.f32 -0.5, %v1641
    %v2359 = vadd.f32 %v2358, 1.0
    %v2360 = vmul.f32 %v2359, %v1641
    %v2361 = vand.u32 2147483647, %v1641
    %vm2362 = vcmp.lt.f32.partialorder %v2361, 0.0004427343
    %v2363 = vsel %vm2362, %v2360, %v2357
    %v2364 = vadd.f32 %v1643, 1.0
    %v2365 = vlog2.pop %v2364
    %v2366 = vmul.f32 %v2365, 0.6931472
    %v2367 = vmul.f32 -0.5, %v1643
    %v2368 = vadd.f32 %v2367, 1.0
    %v2369 = vmul.f32 %v2368, %v1643
    %v2370 = vand.u32 2147483647, %v1643
    %vm2371 = vcmp.lt.f32.partialorder %v2370, 0.0004427343
    %v2372 = vsel %vm2371, %v2369, %v2366
    %v2373 = vadd.f32 %v1645, 1.0
    %v2374 = vlog2.pop %v2373
    %v2375 = vmul.f32 %v2374, 0.6931472
    %v2376 = vmul.f32 -0.5, %v1645
    %v2377 = vadd.f32 %v2376, 1.0
    %v2378 = vmul.f32 %v2377, %v1645
    %v2379 = vand.u32 2147483647, %v1645
    %vm2380 = vcmp.lt.f32.partialorder %v2379, 0.0004427343
    %v2381 = vsel %vm2380, %v2378, %v2375
    %v2382 = vadd.f32 %v1647, 1.0
    %v2383 = vlog2.pop %v2382
    %v2384 = vmul.f32 %v2383, 0.6931472
    %v2385 = vmul.f32 -0.5, %v1647
    %v2386 = vadd.f32 %v2385, 1.0
    %v2387 = vmul.f32 %v2386, %v1647
    %v2388 = vand.u32 2147483647, %v1647
    %vm2389 = vcmp.lt.f32.partialorder %v2388, 0.0004427343
    %v2390 = vsel %vm2389, %v2387, %v2384
    %v2391 = vadd.f32 %v1649, 1.0
    %v2392 = vlog2.pop %v2391
    %v2393 = vmul.f32 %v2392, 0.6931472
    %v2394 = vmul.f32 -0.5, %v1649
    %v2395 = vadd.f32 %v2394, 1.0
    %v2396 = vmul.f32 %v2395, %v1649
    %v2397 = vand.u32 2147483647, %v1649
    %vm2398 = vcmp.lt.f32.partialorder %v2397, 0.0004427343
    %v2399 = vsel %vm2398, %v2396, %v2393
    %v2400 = vadd.f32 %v1651, 1.0
    %v2401 = vlog2.pop %v2400
    %v2402 = vmul.f32 %v2401, 0.6931472
    %v2403 = vmul.f32 -0.5, %v1651
    %v2404 = vadd.f32 %v2403, 1.0
    %v2405 = vmul.f32 %v2404, %v1651
    %v2406 = vand.u32 2147483647, %v1651
    %vm2407 = vcmp.lt.f32.partialorder %v2406, 0.0004427343
    %v2408 = vsel %vm2407, %v2405, %v2402
    %v2409 = vadd.f32 %v1653, 1.0
    %v2410 = vlog2.pop %v2409
    %v2411 = vmul.f32 %v2410, 0.6931472
    %v2412 = vmul.f32 -0.5, %v1653
    %v2413 = vadd.f32 %v2412, 1.0
    %v2414 = vmul.f32 %v2413, %v1653
    %v2415 = vand.u32 2147483647, %v1653
    %vm2416 = vcmp.lt.f32.partialorder %v2415, 0.0004427343
    %v2417 = vsel %vm2416, %v2414, %v2411
    %v2418 = vadd.f32 %v1655, 1.0
    %v2419 = vlog2.pop %v2418
    %v2420 = vmul.f32 %v2419, 0.6931472
    %v2421 = vmul.f32 -0.5, %v1655
    %v2422 = vadd.f32 %v2421, 1.0
    %v2423 = vmul.f32 %v2422, %v1655
    %v2424 = vand.u32 2147483647, %v1655
    %vm2425 = vcmp.lt.f32.partialorder %v2424, 0.0004427343
    %v2426 = vsel %vm2425, %v2423, %v2420
    %v2427 = vadd.f32 %v1657, 1.0
    %v2428 = vlog2.pop %v2427
    %v2429 = vmul.f32 %v2428, 0.6931472
    %v2430 = vmul.f32 -0.5, %v1657
    %v2431 = vadd.f32 %v2430, 1.0
    %v2432 = vmul.f32 %v2431, %v1657
    %v2433 = vand.u32 2147483647, %v1657
    %vm2434 = vcmp.lt.f32.partialorder %v2433, 0.0004427343
    %v2435 = vsel %vm2434, %v2432, %v2429
    %v2436 = vadd.f32 %v1659, 1.0
    %v2437 = vlog2.pop %v2436
    %v2438 = vmul.f32 %v2437, 0.6931472
    %v2439 = vmul.f32 -0.5, %v1659
    %v2440 = vadd.f32 %v2439, 1.0
    %v2441 = vmul.f32 %v2440, %v1659
    %v2442 = vand.u32 2147483647, %v1659
    %vm2443 = vcmp.lt.f32.partialorder %v2442, 0.0004427343
    %v2444 = vsel %vm2443, %v2441, %v2438
    %v2445 = vadd.f32 %v1661, 1.0
    %v2446 = vlog2.pop %v2445
    %v2447 = vmul.f32 %v2446, 0.6931472
    %v2448 = vmul.f32 -0.5, %v1661
    %v2449 = vadd.f32 %v2448, 1.0
    %v2450 = vmul.f32 %v2449, %v1661
    %v2451 = vand.u32 2147483647, %v1661
    %vm2452 = vcmp.lt.f32.partialorder %v2451, 0.0004427343
    %v2453 = vsel %vm2452, %v2450, %v2447
    %v2454 = vadd.f32 %v1663, 1.0
    %v2455 = vlog2.pop %v2454
    %v2456 = vmul.f32 %v2455, 0.6931472
    %v2457 = vmul.f32 -0.5, %v1663
    %v2458 = vadd.f32 %v2457, 1.0
    %v2459 = vmul.f32 %v2458, %v1663
    %v2460 = vand.u32 2147483647, %v1663
    %vm2461 = vcmp.lt.f32.partialorder %v2460, 0.0004427343
    %v2462 = vsel %vm2461, %v2459, %v2456
    %v2463 = vadd.f32 %v1665, 1.0
    %v2464 = vlog2.pop %v2463
    %v2465 = vmul.f32 %v2464, 0.6931472
    %v2466 = vmul.f32 -0.5, %v1665
    %v2467 = vadd.f32 %v2466, 1.0
    %v2468 = vmul.f32 %v2467, %v1665
    %v2469 = vand.u32 2147483647, %v1665
    %vm2470 = vcmp.lt.f32.partialorder %v2469, 0.0004427343
    %v2471 = vsel %vm2470, %v2468, %v2465
    %v2472 = vadd.f32 %v1667, 1.0
    %v2473 = vlog2.pop %v2472
    %v2474 = vmul.f32 %v2473, 0.6931472
    %v2475 = vmul.f32 -0.5, %v1667
    %v2476 = vadd.f32 %v2475, 1.0
    %v2477 = vmul.f32 %v2476, %v1667
    %v2478 = vand.u32 2147483647, %v1667
    %vm2479 = vcmp.lt.f32.partialorder %v2478, 0.0004427343
    %v2480 = vsel %vm2479, %v2477, %v2474
    %v2481 = vadd.f32 %v1669, 1.0
    %v2482 = vlog2.pop %v2481
    %v2483 = vmul.f32 %v2482, 0.6931472
    %v2484 = vmul.f32 -0.5, %v1669
    %v2485 = vadd.f32 %v2484, 1.0
    %v2486 = vmul.f32 %v2485, %v1669
    %v2487 = vand.u32 2147483647, %v1669
    %vm2488 = vcmp.lt.f32.partialorder %v2487, 0.0004427343
    %v2489 = vsel %vm2488, %v2486, %v2483
    %v2490 = vadd.f32 %v1671, 1.0
    %v2491 = vlog2.pop %v2490
    %v2492 = vmul.f32 %v2491, 0.6931472
    %v2493 = vmul.f32 -0.5, %v1671
    %v2494 = vadd.f32 %v2493, 1.0
    %v2495 = vmul.f32 %v2494, %v1671
    %v2496 = vand.u32 2147483647, %v1671
    %vm2497 = vcmp.lt.f32.partialorder %v2496, 0.0004427343
    %v2498 = vsel %vm2497, %v2495, %v2492
    %v2499 = vadd.f32 %v1673, 1.0
    %v2500 = vlog2.pop %v2499
    %v2501 = vmul.f32 %v2500, 0.6931472
    %v2502 = vmul.f32 -0.5, %v1673
    %v2503 = vadd.f32 %v2502, 1.0
    %v2504 = vmul.f32 %v2503, %v1673
    %v2505 = vand.u32 2147483647, %v1673
    %vm2506 = vcmp.lt.f32.partialorder %v2505, 0.0004427343
    %v2507 = vsel %vm2506, %v2504, %v2501
    %v2508 = vadd.f32 %v1675, 1.0
    %v2509 = vlog2.pop %v2508
    %v2510 = vmul.f32 %v2509, 0.6931472
    %v2511 = vmul.f32 -0.5, %v1675
    %v2512 = vadd.f32 %v2511, 1.0
    %v2513 = vmul.f32 %v2512, %v1675
    %v2514 = vand.u32 2147483647, %v1675
    %vm2515 = vcmp.lt.f32.partialorder %v2514, 0.0004427343
    %v2516 = vsel %vm2515, %v2513, %v2510
    %v2517 = vadd.f32 %v1677, 1.0
    %v2518 = vlog2.pop %v2517
    %v2519 = vmul.f32 %v2518, 0.6931472
    %v2520 = vmul.f32 -0.5, %v1677
    %v2521 = vadd.f32 %v2520, 1.0
    %v2522 = vmul.f32 %v2521, %v1677
    %v2523 = vand.u32 2147483647, %v1677
    %vm2524 = vcmp.lt.f32.partialorder %v2523, 0.0004427343
    %v2525 = vsel %vm2524, %v2522, %v2519
    %v2526 = vadd.f32 %v1679, 1.0
    %v2527 = vlog2.pop %v2526
    %v2528 = vmul.f32 %v2527, 0.6931472
    %v2529 = vmul.f32 -0.5, %v1679
    %v2530 = vadd.f32 %v2529, 1.0
    %v2531 = vmul.f32 %v2530, %v1679
    %v2532 = vand.u32 2147483647, %v1679
    %vm2533 = vcmp.lt.f32.partialorder %v2532, 0.0004427343
    %v2534 = vsel %vm2533, %v2531, %v2528
    %v2535 = vadd.f32 %v1681, 1.0
    %v2536 = vlog2.pop %v2535
    %v2537 = vmul.f32 %v2536, 0.6931472
    %v2538 = vmul.f32 -0.5, %v1681
    %v2539 = vadd.f32 %v2538, 1.0
    %v2540 = vmul.f32 %v2539, %v1681
    %v2541 = vand.u32 2147483647, %v1681
    %vm2542 = vcmp.lt.f32.partialorder %v2541, 0.0004427343
    %v2543 = vsel %vm2542, %v2540, %v2537
    %v2544 = vadd.f32 %v1683, 1.0
    %v2545 = vlog2.pop %v2544
    %v2546 = vmul.f32 %v2545, 0.6931472
    %v2547 = vmul.f32 -0.5, %v1683
    %v2548 = vadd.f32 %v2547, 1.0
    %v2549 = vmul.f32 %v2548, %v1683
    %v2550 = vand.u32 2147483647, %v1683
    %vm2551 = vcmp.lt.f32.partialorder %v2550, 0.0004427343
    %v2552 = vsel %vm2551, %v2549, %v2546
    %v2553 = vadd.f32 %v1685, 1.0
    %v2554 = vlog2.pop %v2553
    %v2555 = vmul.f32 %v2554, 0.6931472
    %v2556 = vmul.f32 -0.5, %v1685
    %v2557 = vadd.f32 %v2556, 1.0
    %v2558 = vmul.f32 %v2557, %v1685
    %v2559 = vand.u32 2147483647, %v1685
    %vm2560 = vcmp.lt.f32.partialorder %v2559, 0.0004427343
    %v2561 = vsel %vm2560, %v2558, %v2555
    %v2562 = vadd.f32 %v1687, 1.0
    %v2563 = vlog2.pop %v2562
    %v2564 = vmul.f32 %v2563, 0.6931472
    %v2565 = vmul.f32 -0.5, %v1687
    %v2566 = vadd.f32 %v2565, 1.0
    %v2567 = vmul.f32 %v2566, %v1687
    %v2568 = vand.u32 2147483647, %v1687
    %vm2569 = vcmp.lt.f32.partialorder %v2568, 0.0004427343
    %v2570 = vsel %vm2569, %v2567, %v2564
    %v2571 = vadd.f32 %v1689, 1.0
    %v2572 = vlog2.pop %v2571
    %v2573 = vmul.f32 %v2572, 0.6931472
    %v2574 = vmul.f32 -0.5, %v1689
    %v2575 = vadd.f32 %v2574, 1.0
    %v2576 = vmul.f32 %v2575, %v1689
    %v2577 = vand.u32 2147483647, %v1689
    %vm2578 = vcmp.lt.f32.partialorder %v2577, 0.0004427343
    %v2579 = vsel %vm2578, %v2576, %v2573
    %v2580 = vadd.f32 %v1691, 1.0
    %v2581 = vlog2.pop %v2580
    %v2582 = vmul.f32 %v2581, 0.6931472
    %v2583 = vmul.f32 -0.5, %v1691
    %v2584 = vadd.f32 %v2583, 1.0
    %v2585 = vmul.f32 %v2584, %v1691
    %v2586 = vand.u32 2147483647, %v1691
    %vm2587 = vcmp.lt.f32.partialorder %v2586, 0.0004427343
    %v2588 = vsel %vm2587, %v2585, %v2582
    %v2589 = vadd.f32 %v1693, 1.0
    %v2590 = vlog2.pop %v2589
    %v2591 = vmul.f32 %v2590, 0.6931472
    %v2592 = vmul.f32 -0.5, %v1693
    %v2593 = vadd.f32 %v2592, 1.0
    %v2594 = vmul.f32 %v2593, %v1693
    %v2595 = vand.u32 2147483647, %v1693
    %vm2596 = vcmp.lt.f32.partialorder %v2595, 0.0004427343
    %v2597 = vsel %vm2596, %v2594, %v2591
    %v2598 = vadd.f32 %v1695, 1.0
    %v2599 = vlog2.pop %v2598
    %v2600 = vmul.f32 %v2599, 0.6931472
    %v2601 = vmul.f32 -0.5, %v1695
    %v2602 = vadd.f32 %v2601, 1.0
    %v2603 = vmul.f32 %v2602, %v1695
    %v2604 = vand.u32 2147483647, %v1695
    %vm2605 = vcmp.lt.f32.partialorder %v2604, 0.0004427343
    %v2606 = vsel %vm2605, %v2603, %v2600
    %v2607 = vadd.f32 %v1697, 1.0
    %v2608 = vlog2.pop %v2607
    %v2609 = vmul.f32 %v2608, 0.6931472
    %v2610 = vmul.f32 -0.5, %v1697
    %v2611 = vadd.f32 %v2610, 1.0
    %v2612 = vmul.f32 %v2611, %v1697
    %v2613 = vand.u32 2147483647, %v1697
    %vm2614 = vcmp.lt.f32.partialorder %v2613, 0.0004427343
    %v2615 = vsel %vm2614, %v2612, %v2609
    %v2616 = vadd.f32 %v1699, 1.0
    %v2617 = vlog2.pop %v2616
    %v2618 = vmul.f32 %v2617, 0.6931472
    %v2619 = vmul.f32 -0.5, %v1699
    %v2620 = vadd.f32 %v2619, 1.0
    %v2621 = vmul.f32 %v2620, %v1699
    %v2622 = vand.u32 2147483647, %v1699
    %vm2623 = vcmp.lt.f32.partialorder %v2622, 0.0004427343
    %v2624 = vsel %vm2623, %v2621, %v2618
    %v2625 = vadd.f32 %v1701, 1.0
    %v2626 = vlog2.pop %v2625
    %v2627 = vmul.f32 %v2626, 0.6931472
    %v2628 = vmul.f32 -0.5, %v1701
    %v2629 = vadd.f32 %v2628, 1.0
    %v2630 = vmul.f32 %v2629, %v1701
    %v2631 = vand.u32 2147483647, %v1701
    %vm2632 = vcmp.lt.f32.partialorder %v2631, 0.0004427343
    %v2633 = vsel %vm2632, %v2630, %v2627
    %v2634 = vadd.f32 %v1703, 1.0
    %v2635 = vlog2.pop %v2634
    %v2636 = vmul.f32 %v2635, 0.6931472
    %v2637 = vmul.f32 -0.5, %v1703
    %v2638 = vadd.f32 %v2637, 1.0
    %v2639 = vmul.f32 %v2638, %v1703
    %v2640 = vand.u32 2147483647, %v1703
    %vm2641 = vcmp.lt.f32.partialorder %v2640, 0.0004427343
    %v2642 = vsel %vm2641, %v2639, %v2636
    %v2643 = vadd.f32 %v1705, 1.0
    %v2644 = vlog2.pop %v2643
    %v2645 = vmul.f32 %v2644, 0.6931472
    %v2646 = vmul.f32 -0.5, %v1705
    %v2647 = vadd.f32 %v2646, 1.0
    %v2648 = vmul.f32 %v2647, %v1705
    %v2649 = vand.u32 2147483647, %v1705
    %vm2650 = vcmp.lt.f32.partialorder %v2649, 0.0004427343
    %v2651 = vsel %vm2650, %v2648, %v2645
    %v2652 = vadd.f32 %v1707, 1.0
    %v2653 = vlog2.pop %v2652
    %v2654 = vmul.f32 %v2653, 0.6931472
    %v2655 = vmul.f32 -0.5, %v1707
    %v2656 = vadd.f32 %v2655, 1.0
    %v2657 = vmul.f32 %v2656, %v1707
    %v2658 = vand.u32 2147483647, %v1707
    %vm2659 = vcmp.lt.f32.partialorder %v2658, 0.0004427343
    %v2660 = vsel %vm2659, %v2657, %v2654
    %v2661 = vadd.f32 %v1709, 1.0
    %v2662 = vlog2.pop %v2661
    %v2663 = vmul.f32 %v2662, 0.6931472
    %v2664 = vmul.f32 -0.5, %v1709
    %v2665 = vadd.f32 %v2664, 1.0
    %v2666 = vmul.f32 %v2665, %v1709
    %v2667 = vand.u32 2147483647, %v1709
    %vm2668 = vcmp.lt.f32.partialorder %v2667, 0.0004427343
    %v2669 = vsel %vm2668, %v2666, %v2663
    %v2670 = vadd.f32 %v1711, 1.0
    %v2671 = vlog2.pop %v2670
    %v2672 = vmul.f32 %v2671, 0.6931472
    %v2673 = vmul.f32 -0.5, %v1711
    %v2674 = vadd.f32 %v2673, 1.0
    %v2675 = vmul.f32 %v2674, %v1711
    %v2676 = vand.u32 2147483647, %v1711
    %vm2677 = vcmp.lt.f32.partialorder %v2676, 0.0004427343
    %v2678 = vsel %vm2677, %v2675, %v2672
    %v2679 = vadd.f32 %v1713, 1.0
    %v2680 = vlog2.pop %v2679
    %v2681 = vmul.f32 %v2680, 0.6931472
    %v2682 = vmul.f32 -0.5, %v1713
    %v2683 = vadd.f32 %v2682, 1.0
    %v2684 = vmul.f32 %v2683, %v1713
    %v2685 = vand.u32 2147483647, %v1713
    %vm2686 = vcmp.lt.f32.partialorder %v2685, 0.0004427343
    %v2687 = vsel %vm2686, %v2684, %v2681
    %v2688 = vadd.f32 %v1715, 1.0
    %v2689 = vlog2.pop %v2688
    %v2690 = vmul.f32 %v2689, 0.6931472
    %v2691 = vmul.f32 -0.5, %v1715
    %v2692 = vadd.f32 %v2691, 1.0
    %v2693 = vmul.f32 %v2692, %v1715
    %v2694 = vand.u32 2147483647, %v1715
    %vm2695 = vcmp.lt.f32.partialorder %v2694, 0.0004427343
    %v2696 = vsel %vm2695, %v2693, %v2690
    %v2697 = vadd.f32 %v1717, 1.0
    %v2698 = vlog2.pop %v2697
    %v2699 = vmul.f32 %v2698, 0.6931472
    %v2700 = vmul.f32 -0.5, %v1717
    %v2701 = vadd.f32 %v2700, 1.0
    %v2702 = vmul.f32 %v2701, %v1717
    %v2703 = vand.u32 2147483647, %v1717
    %vm2704 = vcmp.lt.f32.partialorder %v2703, 0.0004427343
    %v2705 = vsel %vm2704, %v2702, %v2699
    %v2706 = vadd.f32 %v1719, 1.0
    %v2707 = vlog2.pop %v2706
    %v2708 = vmul.f32 %v2707, 0.6931472
    %v2709 = vmul.f32 -0.5, %v1719
    %v2710 = vadd.f32 %v2709, 1.0
    %v2711 = vmul.f32 %v2710, %v1719
    %v2712 = vand.u32 2147483647, %v1719
    %vm2713 = vcmp.lt.f32.partialorder %v2712, 0.0004427343
    %v2714 = vsel %vm2713, %v2711, %v2708
    %v2715 = vadd.f32 %v1721, 1.0
    %v2716 = vlog2.pop %v2715
    %v2717 = vmul.f32 %v2716, 0.6931472
    %v2718 = vmul.f32 -0.5, %v1721
    %v2719 = vadd.f32 %v2718, 1.0
    %v2720 = vmul.f32 %v2719, %v1721
    %v2721 = vand.u32 2147483647, %v1721
    %vm2722 = vcmp.lt.f32.partialorder %v2721, 0.0004427343
    %v2723 = vsel %vm2722, %v2720, %v2717
    %v2724 = vadd.f32 %v1723, 1.0
    %v2725 = vlog2.pop %v2724
    %v2726 = vmul.f32 %v2725, 0.6931472
    %v2727 = vmul.f32 -0.5, %v1723
    %v2728 = vadd.f32 %v2727, 1.0
    %v2729 = vmul.f32 %v2728, %v1723
    %v2730 = vand.u32 2147483647, %v1723
    %vm2731 = vcmp.lt.f32.partialorder %v2730, 0.0004427343
    %v2732 = vsel %vm2731, %v2729, %v2726
    %v2733 = vadd.f32 %v1725, 1.0
    %v2734 = vlog2.pop %v2733
    %v2735 = vmul.f32 %v2734, 0.6931472
    %v2736 = vmul.f32 -0.5, %v1725
    %v2737 = vadd.f32 %v2736, 1.0
    %v2738 = vmul.f32 %v2737, %v1725
    %v2739 = vand.u32 2147483647, %v1725
    %vm2740 = vcmp.lt.f32.partialorder %v2739, 0.0004427343
    %v2741 = vsel %vm2740, %v2738, %v2735
    %v2742 = vadd.f32 %v1727, 1.0
    %v2743 = vlog2.pop %v2742
    %v2744 = vmul.f32 %v2743, 0.6931472
    %v2745 = vmul.f32 -0.5, %v1727
    %v2746 = vadd.f32 %v2745, 1.0
    %v2747 = vmul.f32 %v2746, %v1727
    %v2748 = vand.u32 2147483647, %v1727
    %vm2749 = vcmp.lt.f32.partialorder %v2748, 0.0004427343
    %v2750 = vsel %vm2749, %v2747, %v2744
    %v2751 = vadd.f32 %v1729, 1.0
    %v2752 = vlog2.pop %v2751
    %v2753 = vmul.f32 %v2752, 0.6931472
    %v2754 = vmul.f32 -0.5, %v1729
    %v2755 = vadd.f32 %v2754, 1.0
    %v2756 = vmul.f32 %v2755, %v1729
    %v2757 = vand.u32 2147483647, %v1729
    %vm2758 = vcmp.lt.f32.partialorder %v2757, 0.0004427343
    %v2759 = vsel %vm2758, %v2756, %v2753
    %v2760 = vadd.f32 %v1731, 1.0
    %v2761 = vlog2.pop %v2760
    %v2762 = vmul.f32 %v2761, 0.6931472
    %v2763 = vmul.f32 -0.5, %v1731
    %v2764 = vadd.f32 %v2763, 1.0
    %v2765 = vmul.f32 %v2764, %v1731
    %v2766 = vand.u32 2147483647, %v1731
    %vm2767 = vcmp.lt.f32.partialorder %v2766, 0.0004427343
    %v2768 = vsel %vm2767, %v2765, %v2762
    %v2769 = vadd.f32 %v1733, 1.0
    %v2770 = vlog2.pop %v2769
    %v2771 = vmul.f32 %v2770, 0.6931472
    %v2772 = vmul.f32 -0.5, %v1733
    %v2773 = vadd.f32 %v2772, 1.0
    %v2774 = vmul.f32 %v2773, %v1733
    %v2775 = vand.u32 2147483647, %v1733
    %vm2776 = vcmp.lt.f32.partialorder %v2775, 0.0004427343
    %v2777 = vsel %vm2776, %v2774, %v2771
    %v2778 = vadd.f32 %v1735, 1.0
    %v2779 = vlog2.pop %v2778
    %v2780 = vmul.f32 %v2779, 0.6931472
    %v2781 = vmul.f32 -0.5, %v1735
    %v2782 = vadd.f32 %v2781, 1.0
    %v2783 = vmul.f32 %v2782, %v1735
    %v2784 = vand.u32 2147483647, %v1735
    %vm2785 = vcmp.lt.f32.partialorder %v2784, 0.0004427343
    %v2786 = vsel %vm2785, %v2783, %v2780
    %v2787 = vadd.f32 %v1737, 1.0
    %v2788 = vlog2.pop %v2787
    %v2789 = vmul.f32 %v2788, 0.6931472
    %v2790 = vmul.f32 -0.5, %v1737
    %v2791 = vadd.f32 %v2790, 1.0
    %v2792 = vmul.f32 %v2791, %v1737
    %v2793 = vand.u32 2147483647, %v1737
    %vm2794 = vcmp.lt.f32.partialorder %v2793, 0.0004427343
    %v2795 = vsel %vm2794, %v2792, %v2789
    %v2796 = vadd.f32 %v1739, 1.0
    %v2797 = vlog2.pop %v2796
    %v2798 = vmul.f32 %v2797, 0.6931472
    %v2799 = vmul.f32 -0.5, %v1739
    %v2800 = vadd.f32 %v2799, 1.0
    %v2801 = vmul.f32 %v2800, %v1739
    %v2802 = vand.u32 2147483647, %v1739
    %vm2803 = vcmp.lt.f32.partialorder %v2802, 0.0004427343
    %v2804 = vsel %vm2803, %v2801, %v2798
    %v2805 = vadd.f32 %v1741, 1.0
    %v2806 = vlog2.pop %v2805
    %v2807 = vmul.f32 %v2806, 0.6931472
    %v2808 = vmul.f32 -0.5, %v1741
    %v2809 = vadd.f32 %v2808, 1.0
    %v2810 = vmul.f32 %v2809, %v1741
    %v2811 = vand.u32 2147483647, %v1741
    %vm2812 = vcmp.lt.f32.partialorder %v2811, 0.0004427343
    %v2813 = vsel %vm2812, %v2810, %v2807
    %v2814 = vadd.f32 %v1743, 1.0
    %v2815 = vlog2.pop %v2814
    %v2816 = vmul.f32 %v2815, 0.6931472
    %v2817 = vmul.f32 -0.5, %v1743
    %v2818 = vadd.f32 %v2817, 1.0
    %v2819 = vmul.f32 %v2818, %v1743
    %v2820 = vand.u32 2147483647, %v1743
    %vm2821 = vcmp.lt.f32.partialorder %v2820, 0.0004427343
    %v2822 = vsel %vm2821, %v2819, %v2816
    %v2823 = vadd.f32 %v1745, 1.0
    %v2824 = vlog2.pop %v2823
    %v2825 = vmul.f32 %v2824, 0.6931472
    %v2826 = vmul.f32 -0.5, %v1745
    %v2827 = vadd.f32 %v2826, 1.0
    %v2828 = vmul.f32 %v2827, %v1745
    %v2829 = vand.u32 2147483647, %v1745
    %vm2830 = vcmp.lt.f32.partialorder %v2829, 0.0004427343
    %v2831 = vsel %vm2830, %v2828, %v2825
    %v2832 = vadd.f32 %v1747, 1.0
    %v2833 = vlog2.pop %v2832
    %v2834 = vmul.f32 %v2833, 0.6931472
    %v2835 = vmul.f32 -0.5, %v1747
    %v2836 = vadd.f32 %v2835, 1.0
    %v2837 = vmul.f32 %v2836, %v1747
    %v2838 = vand.u32 2147483647, %v1747
    %vm2839 = vcmp.lt.f32.partialorder %v2838, 0.0004427343
    %v2840 = vsel %vm2839, %v2837, %v2834
    %v2841 = vadd.f32 %v1749, 1.0
    %v2842 = vlog2.pop %v2841
    %v2843 = vmul.f32 %v2842, 0.6931472
    %v2844 = vmul.f32 -0.5, %v1749
    %v2845 = vadd.f32 %v2844, 1.0
    %v2846 = vmul.f32 %v2845, %v1749
    %v2847 = vand.u32 2147483647, %v1749
    %vm2848 = vcmp.lt.f32.partialorder %v2847, 0.0004427343
    %v2849 = vsel %vm2848, %v2846, %v2843
    %v2850 = vadd.f32 %v1751, 1.0
    %v2851 = vlog2.pop %v2850
    %v2852 = vmul.f32 %v2851, 0.6931472
    %v2853 = vmul.f32 -0.5, %v1751
    %v2854 = vadd.f32 %v2853, 1.0
    %v2855 = vmul.f32 %v2854, %v1751
    %v2856 = vand.u32 2147483647, %v1751
    %vm2857 = vcmp.lt.f32.partialorder %v2856, 0.0004427343
    %v2858 = vsel %vm2857, %v2855, %v2852
    %v2859 = vadd.f32 %v1753, 1.0
    %v2860 = vlog2.pop %v2859
    %v2861 = vmul.f32 %v2860, 0.6931472
    %v2862 = vmul.f32 -0.5, %v1753
    %v2863 = vadd.f32 %v2862, 1.0
    %v2864 = vmul.f32 %v2863, %v1753
    %v2865 = vand.u32 2147483647, %v1753
    %vm2866 = vcmp.lt.f32.partialorder %v2865, 0.0004427343
    %v2867 = vsel %vm2866, %v2864, %v2861
    %v2868 = vadd.f32 %v1755, 1.0
    %v2869 = vlog2.pop %v2868
    %v2870 = vmul.f32 %v2869, 0.6931472
    %v2871 = vmul.f32 -0.5, %v1755
    %v2872 = vadd.f32 %v2871, 1.0
    %v2873 = vmul.f32 %v2872, %v1755
    %v2874 = vand.u32 2147483647, %v1755
    %vm2875 = vcmp.lt.f32.partialorder %v2874, 0.0004427343
    %v2876 = vsel %vm2875, %v2873, %v2870
    %v2877 = vadd.f32 %v1757, 1.0
    %v2878 = vlog2.pop %v2877
    %v2879 = vmul.f32 %v2878, 0.6931472
    %v2880 = vmul.f32 -0.5, %v1757
    %v2881 = vadd.f32 %v2880, 1.0
    %v2882 = vmul.f32 %v2881, %v1757
    %v2883 = vand.u32 2147483647, %v1757
    %vm2884 = vcmp.lt.f32.partialorder %v2883, 0.0004427343
    %v2885 = vsel %vm2884, %v2882, %v2879
    %v2886 = vadd.f32 %v1759, 1.0
    %v2887 = vlog2.pop %v2886
    %v2888 = vmul.f32 %v2887, 0.6931472
    %v2889 = vmul.f32 -0.5, %v1759
    %v2890 = vadd.f32 %v2889, 1.0
    %v2891 = vmul.f32 %v2890, %v1759
    %v2892 = vand.u32 2147483647, %v1759
    %vm2893 = vcmp.lt.f32.partialorder %v2892, 0.0004427343
    %v2894 = vsel %vm2893, %v2891, %v2888
    %v2895 = vadd.f32 %v1761, 1.0
    %v2896 = vlog2.pop %v2895
    %v2897 = vmul.f32 %v2896, 0.6931472
    %v2898 = vmul.f32 -0.5, %v1761
    %v2899 = vadd.f32 %v2898, 1.0
    %v2900 = vmul.f32 %v2899, %v1761
    %v2901 = vand.u32 2147483647, %v1761
    %vm2902 = vcmp.lt.f32.partialorder %v2901, 0.0004427343
    %v2903 = vsel %vm2902, %v2900, %v2897
    %v2904 = vadd.f32 %v1763, 1.0
    %v2905 = vlog2.pop %v2904
    %v2906 = vmul.f32 %v2905, 0.6931472
    %v2907 = vmul.f32 -0.5, %v1763
    %v2908 = vadd.f32 %v2907, 1.0
    %v2909 = vmul.f32 %v2908, %v1763
    %v2910 = vand.u32 2147483647, %v1763
    %vm2911 = vcmp.lt.f32.partialorder %v2910, 0.0004427343
    %v2912 = vsel %vm2911, %v2909, %v2906
    %v2913 = vadd.f32 %v1765, 1.0
    %v2914 = vlog2.pop %v2913
    %v2915 = vmul.f32 %v2914, 0.6931472
    %v2916 = vmul.f32 -0.5, %v1765
    %v2917 = vadd.f32 %v2916, 1.0
    %v2918 = vmul.f32 %v2917, %v1765
    %v2919 = vand.u32 2147483647, %v1765
    %vm2920 = vcmp.lt.f32.partialorder %v2919, 0.0004427343
    %v2921 = vsel %vm2920, %v2918, %v2915
    %v2922 = vadd.f32 %v1767, 1.0
    %v2923 = vlog2.pop %v2922
    %v2924 = vmul.f32 %v2923, 0.6931472
    %v2925 = vmul.f32 -0.5, %v1767
    %v2926 = vadd.f32 %v2925, 1.0
    %v2927 = vmul.f32 %v2926, %v1767
    %v2928 = vand.u32 2147483647, %v1767
    %vm2929 = vcmp.lt.f32.partialorder %v2928, 0.0004427343
    %v2930 = vsel %vm2929, %v2927, %v2924
    %v2931 = vadd.f32 %v1769, 1.0
    %v2932 = vlog2.pop %v2931
    %v2933 = vmul.f32 %v2932, 0.6931472
    %v2934 = vmul.f32 -0.5, %v1769
    %v2935 = vadd.f32 %v2934, 1.0
    %v2936 = vmul.f32 %v2935, %v1769
    %v2937 = vand.u32 2147483647, %v1769
    %vm2938 = vcmp.lt.f32.partialorder %v2937, 0.0004427343
    %v2939 = vsel %vm2938, %v2936, %v2933
    %v2940 = vadd.f32 %v1771, 1.0
    %v2941 = vlog2.pop %v2940
    %v2942 = vmul.f32 %v2941, 0.6931472
    %v2943 = vmul.f32 -0.5, %v1771
    %v2944 = vadd.f32 %v2943, 1.0
    %v2945 = vmul.f32 %v2944, %v1771
    %v2946 = vand.u32 2147483647, %v1771
    %vm2947 = vcmp.lt.f32.partialorder %v2946, 0.0004427343
    %v2948 = vsel %vm2947, %v2945, %v2942
    %v2949 = vadd.f32 %v1773, 1.0
    %v2950 = vlog2.pop %v2949
    %v2951 = vmul.f32 %v2950, 0.6931472
    %v2952 = vmul.f32 -0.5, %v1773
    %v2953 = vadd.f32 %v2952, 1.0
    %v2954 = vmul.f32 %v2953, %v1773
    %v2955 = vand.u32 2147483647, %v1773
    %vm2956 = vcmp.lt.f32.partialorder %v2955, 0.0004427343
    %v2957 = vsel %vm2956, %v2954, %v2951
    %v2958 = vadd.f32 %v1775, 1.0
    %v2959 = vlog2.pop %v2958
    %v2960 = vmul.f32 %v2959, 0.6931472
    %v2961 = vmul.f32 -0.5, %v1775
    %v2962 = vadd.f32 %v2961, 1.0
    %v2963 = vmul.f32 %v2962, %v1775
    %v2964 = vand.u32 2147483647, %v1775
    %vm2965 = vcmp.lt.f32.partialorder %v2964, 0.0004427343
    %v2966 = vsel %vm2965, %v2963, %v2960
    %v2967 = vadd.f32 %v1777, 1.0
    %v2968 = vlog2.pop %v2967
    %v2969 = vmul.f32 %v2968, 0.6931472
    %v2970 = vmul.f32 -0.5, %v1777
    %v2971 = vadd.f32 %v2970, 1.0
    %v2972 = vmul.f32 %v2971, %v1777
    %v2973 = vand.u32 2147483647, %v1777
    %vm2974 = vcmp.lt.f32.partialorder %v2973, 0.0004427343
    %v2975 = vsel %vm2974, %v2972, %v2969
    %v2976 = vadd.f32 %v1779, 1.0
    %v2977 = vlog2.pop %v2976
    %v2978 = vmul.f32 %v2977, 0.6931472
    %v2979 = vmul.f32 -0.5, %v1779
    %v2980 = vadd.f32 %v2979, 1.0
    %v2981 = vmul.f32 %v2980, %v1779
    %v2982 = vand.u32 2147483647, %v1779
    %vm2983 = vcmp.lt.f32.partialorder %v2982, 0.0004427343
    %v2984 = vsel %vm2983, %v2981, %v2978
    %v2985 = vadd.f32 %v1781, 1.0
    %v2986 = vlog2.pop %v2985
    %v2987 = vmul.f32 %v2986, 0.6931472
    %v2988 = vmul.f32 -0.5, %v1781
    %v2989 = vadd.f32 %v2988, 1.0
    %v2990 = vmul.f32 %v2989, %v1781
    %v2991 = vand.u32 2147483647, %v1781
    %vm2992 = vcmp.lt.f32.partialorder %v2991, 0.0004427343
    %v2993 = vsel %vm2992, %v2990, %v2987
    %v2994 = vadd.f32 %v1783, 1.0
    %v2995 = vlog2.pop %v2994
    %v2996 = vmul.f32 %v2995, 0.6931472
    %v2997 = vmul.f32 -0.5, %v1783
    %v2998 = vadd.f32 %v2997, 1.0
    %v2999 = vmul.f32 %v2998, %v1783
    %v3000 = vand.u32 2147483647, %v1783
    %vm3001 = vcmp.lt.f32.partialorder %v3000, 0.0004427343
    %v3002 = vsel %vm3001, %v2999, %v2996
    %v3003 = vadd.f32 %v1785, 1.0
    %v3004 = vlog2.pop %v3003
    %v3005 = vmul.f32 %v3004, 0.6931472
    %v3006 = vmul.f32 -0.5, %v1785
    %v3007 = vadd.f32 %v3006, 1.0
    %v3008 = vmul.f32 %v3007, %v1785
    %v3009 = vand.u32 2147483647, %v1785
    %vm3010 = vcmp.lt.f32.partialorder %v3009, 0.0004427343
    %v3011 = vsel %vm3010, %v3008, %v3005
    %v3012 = vadd.f32 %v1787, 1.0
    %v3013 = vlog2.pop %v3012
    %v3014 = vmul.f32 %v3013, 0.6931472
    %v3015 = vmul.f32 -0.5, %v1787
    %v3016 = vadd.f32 %v3015, 1.0
    %v3017 = vmul.f32 %v3016, %v1787
    %v3018 = vand.u32 2147483647, %v1787
    %vm3019 = vcmp.lt.f32.partialorder %v3018, 0.0004427343
    %v3020 = vsel %vm3019, %v3017, %v3014
    %v3021 = vadd.f32 %v1789, 1.0
    %v3022 = vlog2.pop %v3021
    %v3023 = vmul.f32 %v3022, 0.6931472
    %v3024 = vmul.f32 -0.5, %v1789
    %v3025 = vadd.f32 %v3024, 1.0
    %v3026 = vmul.f32 %v3025, %v1789
    %v3027 = vand.u32 2147483647, %v1789
    %vm3028 = vcmp.lt.f32.partialorder %v3027, 0.0004427343
    %v3029 = vsel %vm3028, %v3026, %v3023
    %v3030 = vadd.f32 %v1791, 1.0
    %v3031 = vlog2.pop %v3030
    %v3032 = vmul.f32 %v3031, 0.6931472
    %v3033 = vmul.f32 -0.5, %v1791
    %v3034 = vadd.f32 %v3033, 1.0
    %v3035 = vmul.f32 %v3034, %v1791
    %v3036 = vand.u32 2147483647, %v1791
    %vm3037 = vcmp.lt.f32.partialorder %v3036, 0.0004427343
    %v3038 = vsel %vm3037, %v3035, %v3032
    %v3039 = vadd.f32 %v1793, 1.0
    %v3040 = vlog2.pop %v3039
    %v3041 = vmul.f32 %v3040, 0.6931472
    %v3042 = vmul.f32 -0.5, %v1793
    %v3043 = vadd.f32 %v3042, 1.0
    %v3044 = vmul.f32 %v3043, %v1793
    %v3045 = vand.u32 2147483647, %v1793
    %vm3046 = vcmp.lt.f32.partialorder %v3045, 0.0004427343
    %v3047 = vsel %vm3046, %v3044, %v3041
    %v3048 = vadd.f32 %v1795, 1.0
    %v3049 = vlog2.pop %v3048
    %v3050 = vmul.f32 %v3049, 0.6931472
    %v3051 = vmul.f32 -0.5, %v1795
    %v3052 = vadd.f32 %v3051, 1.0
    %v3053 = vmul.f32 %v3052, %v1795
    %v3054 = vand.u32 2147483647, %v1795
    %vm3055 = vcmp.lt.f32.partialorder %v3054, 0.0004427343
    %v3056 = vsel %vm3055, %v3053, %v3050
    %v3057 = vadd.f32 %v1797, 1.0
    %v3058 = vlog2.pop %v3057
    %v3059 = vmul.f32 %v3058, 0.6931472
    %v3060 = vmul.f32 -0.5, %v1797
    %v3061 = vadd.f32 %v3060, 1.0
    %v3062 = vmul.f32 %v3061, %v1797
    %v3063 = vand.u32 2147483647, %v1797
    %vm3064 = vcmp.lt.f32.partialorder %v3063, 0.0004427343
    %v3065 = vsel %vm3064, %v3062, %v3059
    %v3066 = vadd.f32 %v1799, 1.0
    %v3067 = vlog2.pop %v3066
    %v3068 = vmul.f32 %v3067, 0.6931472
    %v3069 = vmul.f32 -0.5, %v1799
    %v3070 = vadd.f32 %v3069, 1.0
    %v3071 = vmul.f32 %v3070, %v1799
    %v3072 = vand.u32 2147483647, %v1799
    %vm3073 = vcmp.lt.f32.partialorder %v3072, 0.0004427343
    %v3074 = vsel %vm3073, %v3071, %v3068
    %v3075 = vadd.f32 %v1801, 1.0
    %v3076 = vlog2.pop %v3075
    %v3077 = vmul.f32 %v3076, 0.6931472
    %v3078 = vmul.f32 -0.5, %v1801
    %v3079 = vadd.f32 %v3078, 1.0
    %v3080 = vmul.f32 %v3079, %v1801
    %v3081 = vand.u32 2147483647, %v1801
    %vm3082 = vcmp.lt.f32.partialorder %v3081, 0.0004427343
    %v3083 = vsel %vm3082, %v3080, %v3077
    %v3084 = vadd.f32 %v1803, 1.0
    %v3085 = vlog2.pop %v3084
    %v3086 = vmul.f32 %v3085, 0.6931472
    %v3087 = vmul.f32 -0.5, %v1803
    %v3088 = vadd.f32 %v3087, 1.0
    %v3089 = vmul.f32 %v3088, %v1803
    %v3090 = vand.u32 2147483647, %v1803
    %vm3091 = vcmp.lt.f32.partialorder %v3090, 0.0004427343
    %v3092 = vsel %vm3091, %v3089, %v3086
    %v3093 = vadd.f32 %v1805, 1.0
    %v3094 = vlog2.pop %v3093
    %v3095 = vmul.f32 %v3094, 0.6931472
    %v3096 = vmul.f32 -0.5, %v1805
    %v3097 = vadd.f32 %v3096, 1.0
    %v3098 = vmul.f32 %v3097, %v1805
    %v3099 = vand.u32 2147483647, %v1805
    %vm3100 = vcmp.lt.f32.partialorder %v3099, 0.0004427343
    %v3101 = vsel %vm3100, %v3098, %v3095
    %v3102 = vadd.f32 %v1807, 1.0
    %v3103 = vlog2.pop %v3102
    %v3104 = vmul.f32 %v3103, 0.6931472
    %v3105 = vmul.f32 -0.5, %v1807
    %v3106 = vadd.f32 %v3105, 1.0
    %v3107 = vmul.f32 %v3106, %v1807
    %v3108 = vand.u32 2147483647, %v1807
    %vm3109 = vcmp.lt.f32.partialorder %v3108, 0.0004427343
    %v3110 = vsel %vm3109, %v3107, %v3104
    %v3111 = vadd.f32 %v1809, 1.0
    %v3112 = vlog2.pop %v3111
    %v3113 = vmul.f32 %v3112, 0.6931472
    %v3114 = vmul.f32 -0.5, %v1809
    %v3115 = vadd.f32 %v3114, 1.0
    %v3116 = vmul.f32 %v3115, %v1809
    %v3117 = vand.u32 2147483647, %v1809
    %vm3118 = vcmp.lt.f32.partialorder %v3117, 0.0004427343
    %v3119 = vsel %vm3118, %v3116, %v3113
    %v3120 = vadd.f32 %v1811, 1.0
    %v3121 = vlog2.pop %v3120
    %v3122 = vmul.f32 %v3121, 0.6931472
    %v3123 = vmul.f32 -0.5, %v1811
    %v3124 = vadd.f32 %v3123, 1.0
    %v3125 = vmul.f32 %v3124, %v1811
    %v3126 = vand.u32 2147483647, %v1811
    %vm3127 = vcmp.lt.f32.partialorder %v3126, 0.0004427343
    %v3128 = vsel %vm3127, %v3125, %v3122
    %v3129 = vadd.f32 %v1813, 1.0
    %v3130 = vlog2.pop %v3129
    %v3131 = vmul.f32 %v3130, 0.6931472
    %v3132 = vmul.f32 -0.5, %v1813
    %v3133 = vadd.f32 %v3132, 1.0
    %v3134 = vmul.f32 %v3133, %v1813
    %v3135 = vand.u32 2147483647, %v1813
    %vm3136 = vcmp.lt.f32.partialorder %v3135, 0.0004427343
    %v3137 = vsel %vm3136, %v3134, %v3131
    %v3138 = vadd.f32 %v1815, 1.0
    %v3139 = vlog2.pop %v3138
    %v3140 = vmul.f32 %v3139, 0.6931472
    %v3141 = vmul.f32 -0.5, %v1815
    %v3142 = vadd.f32 %v3141, 1.0
    %v3143 = vmul.f32 %v3142, %v1815
    %v3144 = vand.u32 2147483647, %v1815
    %vm3145 = vcmp.lt.f32.partialorder %v3144, 0.0004427343
    %v3146 = vsel %vm3145, %v3143, %v3140
    %v3147 = vadd.f32 %v1817, 1.0
    %v3148 = vlog2.pop %v3147
    %v3149 = vmul.f32 %v3148, 0.6931472
    %v3150 = vmul.f32 -0.5, %v1817
    %v3151 = vadd.f32 %v3150, 1.0
    %v3152 = vmul.f32 %v3151, %v1817
    %v3153 = vand.u32 2147483647, %v1817
    %vm3154 = vcmp.lt.f32.partialorder %v3153, 0.0004427343
    %v3155 = vsel %vm3154, %v3152, %v3149
    %v3156 = vadd.f32 %v1819, 1.0
    %v3157 = vlog2.pop %v3156
    %v3158 = vmul.f32 %v3157, 0.6931472
    %v3159 = vmul.f32 -0.5, %v1819
    %v3160 = vadd.f32 %v3159, 1.0
    %v3161 = vmul.f32 %v3160, %v1819
    %v3162 = vand.u32 2147483647, %v1819
    %vm3163 = vcmp.lt.f32.partialorder %v3162, 0.0004427343
    %v3164 = vsel %vm3163, %v3161, %v3158
    %v3165 = vadd.f32 %v1821, 1.0
    %v3166 = vlog2.pop %v3165
    %v3167 = vmul.f32 %v3166, 0.6931472
    %v3168 = vmul.f32 -0.5, %v1821
    %v3169 = vadd.f32 %v3168, 1.0
    %v3170 = vmul.f32 %v3169, %v1821
    %v3171 = vand.u32 2147483647, %v1821
    %vm3172 = vcmp.lt.f32.partialorder %v3171, 0.0004427343
    %v3173 = vsel %vm3172, %v3170, %v3167
    %v3174 = vadd.f32 %v1823, 1.0
    %v3175 = vlog2.pop %v3174
    %v3176 = vmul.f32 %v3175, 0.6931472
    %v3177 = vmul.f32 -0.5, %v1823
    %v3178 = vadd.f32 %v3177, 1.0
    %v3179 = vmul.f32 %v3178, %v1823
    %v3180 = vand.u32 2147483647, %v1823
    %vm3181 = vcmp.lt.f32.partialorder %v3180, 0.0004427343
    %v3182 = vsel %vm3181, %v3179, %v3176
    %v3183 = vadd.f32 %v1825, 1.0
    %v3184 = vlog2.pop %v3183
    %v3185 = vmul.f32 %v3184, 0.6931472
    %v3186 = vmul.f32 -0.5, %v1825
    %v3187 = vadd.f32 %v3186, 1.0
    %v3188 = vmul.f32 %v3187, %v1825
    %v3189 = vand.u32 2147483647, %v1825
    %vm3190 = vcmp.lt.f32.partialorder %v3189, 0.0004427343
    %v3191 = vsel %vm3190, %v3188, %v3185
    %v3192 = vadd.f32 %v1827, 1.0
    %v3193 = vlog2.pop %v3192
    %v3194 = vmul.f32 %v3193, 0.6931472
    %v3195 = vmul.f32 -0.5, %v1827
    %v3196 = vadd.f32 %v3195, 1.0
    %v3197 = vmul.f32 %v3196, %v1827
    %v3198 = vand.u32 2147483647, %v1827
    %vm3199 = vcmp.lt.f32.partialorder %v3198, 0.0004427343
    %v3200 = vsel %vm3199, %v3197, %v3194
    %v3201 = vadd.f32 %v1829, 1.0
    %v3202 = vlog2.pop %v3201
    %v3203 = vmul.f32 %v3202, 0.6931472
    %v3204 = vmul.f32 -0.5, %v1829
    %v3205 = vadd.f32 %v3204, 1.0
    %v3206 = vmul.f32 %v3205, %v1829
    %v3207 = vand.u32 2147483647, %v1829
    %vm3208 = vcmp.lt.f32.partialorder %v3207, 0.0004427343
    %v3209 = vsel %vm3208, %v3206, %v3203
    %v3210 = vadd.f32 %v1831, 1.0
    %v3211 = vlog2.pop %v3210
    %v3212 = vmul.f32 %v3211, 0.6931472
    %v3213 = vmul.f32 -0.5, %v1831
    %v3214 = vadd.f32 %v3213, 1.0
    %v3215 = vmul.f32 %v3214, %v1831
    %v3216 = vand.u32 2147483647, %v1831
    %vm3217 = vcmp.lt.f32.partialorder %v3216, 0.0004427343
    %v3218 = vsel %vm3217, %v3215, %v3212
    %v3219 = vadd.f32 %v1833, 1.0
    %v3220 = vlog2.pop %v3219
    %v3221 = vmul.f32 %v3220, 0.6931472
    %v3222 = vmul.f32 -0.5, %v1833
    %v3223 = vadd.f32 %v3222, 1.0
    %v3224 = vmul.f32 %v3223, %v1833
    %v3225 = vand.u32 2147483647, %v1833
    %vm3226 = vcmp.lt.f32.partialorder %v3225, 0.0004427343
    %v3227 = vsel %vm3226, %v3224, %v3221
    %v3228 = vadd.f32 %v1835, 1.0
    %v3229 = vlog2.pop %v3228
    %v3230 = vmul.f32 %v3229, 0.6931472
    %v3231 = vmul.f32 -0.5, %v1835
    %v3232 = vadd.f32 %v3231, 1.0
    %v3233 = vmul.f32 %v3232, %v1835
    %v3234 = vand.u32 2147483647, %v1835
    %vm3235 = vcmp.lt.f32.partialorder %v3234, 0.0004427343
    %v3236 = vsel %vm3235, %v3233, %v3230
    %v3237 = vadd.f32 %v1837, 1.0
    %v3238 = vlog2.pop %v3237
    %v3239 = vmul.f32 %v3238, 0.6931472
    %v3240 = vmul.f32 -0.5, %v1837
    %v3241 = vadd.f32 %v3240, 1.0
    %v3242 = vmul.f32 %v3241, %v1837
    %v3243 = vand.u32 2147483647, %v1837
    %vm3244 = vcmp.lt.f32.partialorder %v3243, 0.0004427343
    %v3245 = vsel %vm3244, %v3242, %v3239
    %v3246 = vadd.f32 %v1839, 1.0
    %v3247 = vlog2.pop %v3246
    %v3248 = vmul.f32 %v3247, 0.6931472
    %v3249 = vmul.f32 -0.5, %v1839
    %v3250 = vadd.f32 %v3249, 1.0
    %v3251 = vmul.f32 %v3250, %v1839
    %v3252 = vand.u32 2147483647, %v1839
    %vm3253 = vcmp.lt.f32.partialorder %v3252, 0.0004427343
    %v3254 = vsel %vm3253, %v3251, %v3248
    %v3255 = vadd.f32 %v1841, 1.0
    %v3256 = vlog2.pop %v3255
    %v3257 = vmul.f32 %v3256, 0.6931472
    %v3258 = vmul.f32 -0.5, %v1841
    %v3259 = vadd.f32 %v3258, 1.0
    %v3260 = vmul.f32 %v3259, %v1841
    %v3261 = vand.u32 2147483647, %v1841
    %vm3262 = vcmp.lt.f32.partialorder %v3261, 0.0004427343
    %v3263 = vsel %vm3262, %v3260, %v3257
    %v3264 = vadd.f32 %v1843, 1.0
    %v3265 = vlog2.pop %v3264
    %v3266 = vmul.f32 %v3265, 0.6931472
    %v3267 = vmul.f32 -0.5, %v1843
    %v3268 = vadd.f32 %v3267, 1.0
    %v3269 = vmul.f32 %v3268, %v1843
    %v3270 = vand.u32 2147483647, %v1843
    %vm3271 = vcmp.lt.f32.partialorder %v3270, 0.0004427343
    %v3272 = vsel %vm3271, %v3269, %v3266
    %v3273 = vadd.f32 %v1845, 1.0
    %v3274 = vlog2.pop %v3273
    %v3275 = vmul.f32 %v3274, 0.6931472
    %v3276 = vmul.f32 -0.5, %v1845
    %v3277 = vadd.f32 %v3276, 1.0
    %v3278 = vmul.f32 %v3277, %v1845
    %v3279 = vand.u32 2147483647, %v1845
    %vm3280 = vcmp.lt.f32.partialorder %v3279, 0.0004427343
    %v3281 = vsel %vm3280, %v3278, %v3275
    %v3282 = vadd.f32 %v1847, 1.0
    %v3283 = vlog2.pop %v3282
    %v3284 = vmul.f32 %v3283, 0.6931472
    %v3285 = vmul.f32 -0.5, %v1847
    %v3286 = vadd.f32 %v3285, 1.0
    %v3287 = vmul.f32 %v3286, %v1847
    %v3288 = vand.u32 2147483647, %v1847
    %vm3289 = vcmp.lt.f32.partialorder %v3288, 0.0004427343
    %v3290 = vsel %vm3289, %v3287, %v3284
    %v3291 = vadd.f32 %v1849, 1.0
    %v3292 = vlog2.pop %v3291
    %v3293 = vmul.f32 %v3292, 0.6931472
    %v3294 = vmul.f32 -0.5, %v1849
    %v3295 = vadd.f32 %v3294, 1.0
    %v3296 = vmul.f32 %v3295, %v1849
    %v3297 = vand.u32 2147483647, %v1849
    %vm3298 = vcmp.lt.f32.partialorder %v3297, 0.0004427343
    %v3299 = vsel %vm3298, %v3296, %v3293
    %v3300 = vadd.f32 %v1851, 1.0
    %v3301 = vlog2.pop %v3300
    %v3302 = vmul.f32 %v3301, 0.6931472
    %v3303 = vmul.f32 -0.5, %v1851
    %v3304 = vadd.f32 %v3303, 1.0
    %v3305 = vmul.f32 %v3304, %v1851
    %v3306 = vand.u32 2147483647, %v1851
    %vm3307 = vcmp.lt.f32.partialorder %v3306, 0.0004427343
    %v3308 = vsel %vm3307, %v3305, %v3302
    %v3309 = vadd.f32 %v1853, 1.0
    %v3310 = vlog2.pop %v3309
    %v3311 = vmul.f32 %v3310, 0.6931472
    %v3312 = vmul.f32 -0.5, %v1853
    %v3313 = vadd.f32 %v3312, 1.0
    %v3314 = vmul.f32 %v3313, %v1853
    %v3315 = vand.u32 2147483647, %v1853
    %vm3316 = vcmp.lt.f32.partialorder %v3315, 0.0004427343
    %v3317 = vsel %vm3316, %v3314, %v3311
    %v3318 = vadd.f32 %v1855, 1.0
    %v3319 = vlog2.pop %v3318
    %v3320 = vmul.f32 %v3319, 0.6931472
    %v3321 = vmul.f32 -0.5, %v1855
    %v3322 = vadd.f32 %v3321, 1.0
    %v3323 = vmul.f32 %v3322, %v1855
    %v3324 = vand.u32 2147483647, %v1855
    %vm3325 = vcmp.lt.f32.partialorder %v3324, 0.0004427343
    %v3326 = vsel %vm3325, %v3323, %v3320
    %v3327 = vadd.f32 %v1857, 1.0
    %v3328 = vlog2.pop %v3327
    %v3329 = vmul.f32 %v3328, 0.6931472
    %v3330 = vmul.f32 -0.5, %v1857
    %v3331 = vadd.f32 %v3330, 1.0
    %v3332 = vmul.f32 %v3331, %v1857
    %v3333 = vand.u32 2147483647, %v1857
    %vm3334 = vcmp.lt.f32.partialorder %v3333, 0.0004427343
    %v3335 = vsel %vm3334, %v3332, %v3329
    %v3336 = vadd.f32 %v1859, 1.0
    %v3337 = vlog2.pop %v3336
    %v3338 = vmul.f32 %v3337, 0.6931472
    %v3339 = vmul.f32 -0.5, %v1859
    %v3340 = vadd.f32 %v3339, 1.0
    %v3341 = vmul.f32 %v3340, %v1859
    %v3342 = vand.u32 2147483647, %v1859
    %vm3343 = vcmp.lt.f32.partialorder %v3342, 0.0004427343
    %v3344 = vsel %vm3343, %v3341, %v3338
    %v3345 = vadd.f32 %v1861, 1.0
    %v3346 = vlog2.pop %v3345
    %v3347 = vmul.f32 %v3346, 0.6931472
    %v3348 = vmul.f32 -0.5, %v1861
    %v3349 = vadd.f32 %v3348, 1.0
    %v3350 = vmul.f32 %v3349, %v1861
    %v3351 = vand.u32 2147483647, %v1861
    %vm3352 = vcmp.lt.f32.partialorder %v3351, 0.0004427343
    %v3353 = vsel %vm3352, %v3350, %v3347
    %v3354 = vadd.f32 %v1863, 1.0
    %v3355 = vlog2.pop %v3354
    %v3356 = vmul.f32 %v3355, 0.6931472
    %v3357 = vmul.f32 -0.5, %v1863
    %v3358 = vadd.f32 %v3357, 1.0
    %v3359 = vmul.f32 %v3358, %v1863
    %v3360 = vand.u32 2147483647, %v1863
    %vm3361 = vcmp.lt.f32.partialorder %v3360, 0.0004427343
    %v3362 = vsel %vm3361, %v3359, %v3356
    %v3363 = vadd.f32 %v1865, 1.0
    %v3364 = vlog2.pop %v3363
    %v3365 = vmul.f32 %v3364, 0.6931472
    %v3366 = vmul.f32 -0.5, %v1865
    %v3367 = vadd.f32 %v3366, 1.0
    %v3368 = vmul.f32 %v3367, %v1865
    %v3369 = vand.u32 2147483647, %v1865
    %vm3370 = vcmp.lt.f32.partialorder %v3369, 0.0004427343
    %v3371 = vsel %vm3370, %v3368, %v3365
    %v3372 = vadd.f32 %v1867, 1.0
    %v3373 = vlog2.pop %v3372
    %v3374 = vmul.f32 %v3373, 0.6931472
    %v3375 = vmul.f32 -0.5, %v1867
    %v3376 = vadd.f32 %v3375, 1.0
    %v3377 = vmul.f32 %v3376, %v1867
    %v3378 = vand.u32 2147483647, %v1867
    %vm3379 = vcmp.lt.f32.partialorder %v3378, 0.0004427343
    %v3380 = vsel %vm3379, %v3377, %v3374
    %v3381 = vadd.f32 %v1869, 1.0
    %v3382 = vlog2.pop %v3381
    %v3383 = vmul.f32 %v3382, 0.6931472
    %v3384 = vmul.f32 -0.5, %v1869
    %v3385 = vadd.f32 %v3384, 1.0
    %v3386 = vmul.f32 %v3385, %v1869
    %v3387 = vand.u32 2147483647, %v1869
    %vm3388 = vcmp.lt.f32.partialorder %v3387, 0.0004427343
    %v3389 = vsel %vm3388, %v3386, %v3383
    %v3390 = vadd.f32 %v1871, 1.0
    %v3391 = vlog2.pop %v3390
    %v3392 = vmul.f32 %v3391, 0.6931472
    %v3393 = vmul.f32 -0.5, %v1871
    %v3394 = vadd.f32 %v3393, 1.0
    %v3395 = vmul.f32 %v3394, %v1871
    %v3396 = vand.u32 2147483647, %v1871
    %vm3397 = vcmp.lt.f32.partialorder %v3396, 0.0004427343
    %v3398 = vsel %vm3397, %v3395, %v3392
    %v3399 = vadd.f32 %v1873, 1.0
    %v3400 = vlog2.pop %v3399
    %v3401 = vmul.f32 %v3400, 0.6931472
    %v3402 = vmul.f32 -0.5, %v1873
    %v3403 = vadd.f32 %v3402, 1.0
    %v3404 = vmul.f32 %v3403, %v1873
    %v3405 = vand.u32 2147483647, %v1873
    %vm3406 = vcmp.lt.f32.partialorder %v3405, 0.0004427343
    %v3407 = vsel %vm3406, %v3404, %v3401
    %v3408 = vadd.f32 %v1875, 1.0
    %v3409 = vlog2.pop %v3408
    %v3410 = vmul.f32 %v3409, 0.6931472
    %v3411 = vmul.f32 -0.5, %v1875
    %v3412 = vadd.f32 %v3411, 1.0
    %v3413 = vmul.f32 %v3412, %v1875
    %v3414 = vand.u32 2147483647, %v1875
    %vm3415 = vcmp.lt.f32.partialorder %v3414, 0.0004427343
    %v3416 = vsel %vm3415, %v3413, %v3410
    %v3417 = vadd.f32 %v1877, 1.0
    %v3418 = vlog2.pop %v3417
    %v3419 = vmul.f32 %v3418, 0.6931472
    %v3420 = vmul.f32 -0.5, %v1877
    %v3421 = vadd.f32 %v3420, 1.0
    %v3422 = vmul.f32 %v3421, %v1877
    %v3423 = vand.u32 2147483647, %v1877
    %vm3424 = vcmp.lt.f32.partialorder %v3423, 0.0004427343
    %v3425 = vsel %vm3424, %v3422, %v3419
    %v3426 = vadd.f32 %v1879, 1.0
    %v3427 = vlog2.pop %v3426
    %v3428 = vmul.f32 %v3427, 0.6931472
    %v3429 = vmul.f32 -0.5, %v1879
    %v3430 = vadd.f32 %v3429, 1.0
    %v3431 = vmul.f32 %v3430, %v1879
    %v3432 = vand.u32 2147483647, %v1879
    %vm3433 = vcmp.lt.f32.partialorder %v3432, 0.0004427343
    %v3434 = vsel %vm3433, %v3431, %v3428
    %v3435 = vadd.f32 %v1881, 1.0
    %v3436 = vlog2.pop %v3435
    %v3437 = vmul.f32 %v3436, 0.6931472
    %v3438 = vmul.f32 -0.5, %v1881
    %v3439 = vadd.f32 %v3438, 1.0
    %v3440 = vmul.f32 %v3439, %v1881
    %v3441 = vand.u32 2147483647, %v1881
    %vm3442 = vcmp.lt.f32.partialorder %v3441, 0.0004427343
    %v3443 = vsel %vm3442, %v3440, %v3437
    %v3444 = vadd.f32 %v1883, 1.0
    %v3445 = vlog2.pop %v3444
    %v3446 = vmul.f32 %v3445, 0.6931472
    %v3447 = vmul.f32 -0.5, %v1883
    %v3448 = vadd.f32 %v3447, 1.0
    %v3449 = vmul.f32 %v3448, %v1883
    %v3450 = vand.u32 2147483647, %v1883
    %vm3451 = vcmp.lt.f32.partialorder %v3450, 0.0004427343
    %v3452 = vsel %vm3451, %v3449, %v3446
    %v3453 = vadd.f32 %v1885, 1.0
    %v3454 = vlog2.pop %v3453
    %v3455 = vmul.f32 %v3454, 0.6931472
    %v3456 = vmul.f32 -0.5, %v1885
    %v3457 = vadd.f32 %v3456, 1.0
    %v3458 = vmul.f32 %v3457, %v1885
    %v3459 = vand.u32 2147483647, %v1885
    %vm3460 = vcmp.lt.f32.partialorder %v3459, 0.0004427343
    %v3461 = vsel %vm3460, %v3458, %v3455
    %v3462 = vadd.f32 %v1887, 1.0
    %v3463 = vlog2.pop %v3462
    %v3464 = vmul.f32 %v3463, 0.6931472
    %v3465 = vmul.f32 -0.5, %v1887
    %v3466 = vadd.f32 %v3465, 1.0
    %v3467 = vmul.f32 %v3466, %v1887
    %v3468 = vand.u32 2147483647, %v1887
    %vm3469 = vcmp.lt.f32.partialorder %v3468, 0.0004427343
    %v3470 = vsel %vm3469, %v3467, %v3464
    %v3471 = vadd.f32 %v1889, 1.0
    %v3472 = vlog2.pop %v3471
    %v3473 = vmul.f32 %v3472, 0.6931472
    %v3474 = vmul.f32 -0.5, %v1889
    %v3475 = vadd.f32 %v3474, 1.0
    %v3476 = vmul.f32 %v3475, %v1889
    %v3477 = vand.u32 2147483647, %v1889
    %vm3478 = vcmp.lt.f32.partialorder %v3477, 0.0004427343
    %v3479 = vsel %vm3478, %v3476, %v3473
    %v3480 = vadd.f32 %v1891, 1.0
    %v3481 = vlog2.pop %v3480
    %v3482 = vmul.f32 %v3481, 0.6931472
    %v3483 = vmul.f32 -0.5, %v1891
    %v3484 = vadd.f32 %v3483, 1.0
    %v3485 = vmul.f32 %v3484, %v1891
    %v3486 = vand.u32 2147483647, %v1891
    %vm3487 = vcmp.lt.f32.partialorder %v3486, 0.0004427343
    %v3488 = vsel %vm3487, %v3485, %v3482
    %v3489 = vadd.f32 %v1893, 1.0
    %v3490 = vlog2.pop %v3489
    %v3491 = vmul.f32 %v3490, 0.6931472
    %v3492 = vmul.f32 -0.5, %v1893
    %v3493 = vadd.f32 %v3492, 1.0
    %v3494 = vmul.f32 %v3493, %v1893
    %v3495 = vand.u32 2147483647, %v1893
    %vm3496 = vcmp.lt.f32.partialorder %v3495, 0.0004427343
    %v3497 = vsel %vm3496, %v3494, %v3491
    %v3498 = vadd.f32 %v1895, 1.0
    %v3499 = vlog2.pop %v3498
    %v3500 = vmul.f32 %v3499, 0.6931472
    %v3501 = vmul.f32 -0.5, %v1895
    %v3502 = vadd.f32 %v3501, 1.0
    %v3503 = vmul.f32 %v3502, %v1895
    %v3504 = vand.u32 2147483647, %v1895
    %vm3505 = vcmp.lt.f32.partialorder %v3504, 0.0004427343
    %v3506 = vsel %vm3505, %v3503, %v3500
    %v3507 = vadd.f32 %v1897, 1.0
    %v3508 = vlog2.pop %v3507
    %v3509 = vmul.f32 %v3508, 0.6931472
    %v3510 = vmul.f32 -0.5, %v1897
    %v3511 = vadd.f32 %v3510, 1.0
    %v3512 = vmul.f32 %v3511, %v1897
    %v3513 = vand.u32 2147483647, %v1897
    %vm3514 = vcmp.lt.f32.partialorder %v3513, 0.0004427343
    %v3515 = vsel %vm3514, %v3512, %v3509
    %v3516 = vadd.f32 %v1899, 1.0
    %v3517 = vlog2.pop %v3516
    %v3518 = vmul.f32 %v3517, 0.6931472
    %v3519 = vmul.f32 -0.5, %v1899
    %v3520 = vadd.f32 %v3519, 1.0
    %v3521 = vmul.f32 %v3520, %v1899
    %v3522 = vand.u32 2147483647, %v1899
    %vm3523 = vcmp.lt.f32.partialorder %v3522, 0.0004427343
    %v3524 = vsel %vm3523, %v3521, %v3518
    %v3525 = vadd.f32 %v1901, 1.0
    %v3526 = vlog2.pop %v3525
    %v3527 = vmul.f32 %v3526, 0.6931472
    %v3528 = vmul.f32 -0.5, %v1901
    %v3529 = vadd.f32 %v3528, 1.0
    %v3530 = vmul.f32 %v3529, %v1901
    %v3531 = vand.u32 2147483647, %v1901
    %vm3532 = vcmp.lt.f32.partialorder %v3531, 0.0004427343
    %v3533 = vsel %vm3532, %v3530, %v3527
    %v3534 = vadd.f32 %v1903, 1.0
    %v3535 = vlog2.pop %v3534
    %v3536 = vmul.f32 %v3535, 0.6931472
    %v3537 = vmul.f32 -0.5, %v1903
    %v3538 = vadd.f32 %v3537, 1.0
    %v3539 = vmul.f32 %v3538, %v1903
    %v3540 = vand.u32 2147483647, %v1903
    %vm3541 = vcmp.lt.f32.partialorder %v3540, 0.0004427343
    %v3542 = vsel %vm3541, %v3539, %v3536
    %v3543 = vadd.f32 %v1905, 1.0
    %v3544 = vlog2.pop %v3543
    %v3545 = vmul.f32 %v3544, 0.6931472
    %v3546 = vmul.f32 -0.5, %v1905
    %v3547 = vadd.f32 %v3546, 1.0
    %v3548 = vmul.f32 %v3547, %v1905
    %v3549 = vand.u32 2147483647, %v1905
    %vm3550 = vcmp.lt.f32.partialorder %v3549, 0.0004427343
    %v3551 = vsel %vm3550, %v3548, %v3545
    %v3552 = vadd.f32 %v1907, 1.0
    %v3553 = vlog2.pop %v3552
    %v3554 = vmul.f32 %v3553, 0.6931472
    %v3555 = vmul.f32 -0.5, %v1907
    %v3556 = vadd.f32 %v3555, 1.0
    %v3557 = vmul.f32 %v3556, %v1907
    %v3558 = vand.u32 2147483647, %v1907
    %vm3559 = vcmp.lt.f32.partialorder %v3558, 0.0004427343
    %v3560 = vsel %vm3559, %v3557, %v3554
    %v3561 = vadd.f32 %v1909, 1.0
    %v3562 = vlog2.pop %v3561
    %v3563 = vmul.f32 %v3562, 0.6931472
    %v3564 = vmul.f32 -0.5, %v1909
    %v3565 = vadd.f32 %v3564, 1.0
    %v3566 = vmul.f32 %v3565, %v1909
    %v3567 = vand.u32 2147483647, %v1909
    %vm3568 = vcmp.lt.f32.partialorder %v3567, 0.0004427343
    %v3569 = vsel %vm3568, %v3566, %v3563
    %v3570 = vadd.f32 %v1911, 1.0
    %v3571 = vlog2.pop %v3570
    %v3572 = vmul.f32 %v3571, 0.6931472
    %v3573 = vmul.f32 -0.5, %v1911
    %v3574 = vadd.f32 %v3573, 1.0
    %v3575 = vmul.f32 %v3574, %v1911
    %v3576 = vand.u32 2147483647, %v1911
    %vm3577 = vcmp.lt.f32.partialorder %v3576, 0.0004427343
    %v3578 = vsel %vm3577, %v3575, %v3572
    %v3579 = vadd.f32 %v1913, 1.0
    %v3580 = vlog2.pop %v3579
    %v3581 = vmul.f32 %v3580, 0.6931472
    %v3582 = vmul.f32 -0.5, %v1913
    %v3583 = vadd.f32 %v3582, 1.0
    %v3584 = vmul.f32 %v3583, %v1913
    %v3585 = vand.u32 2147483647, %v1913
    %vm3586 = vcmp.lt.f32.partialorder %v3585, 0.0004427343
    %v3587 = vsel %vm3586, %v3584, %v3581
    %v3588 = vadd.f32 %v1915, 1.0
    %v3589 = vlog2.pop %v3588
    %v3590 = vmul.f32 %v3589, 0.6931472
    %v3591 = vmul.f32 -0.5, %v1915
    %v3592 = vadd.f32 %v3591, 1.0
    %v3593 = vmul.f32 %v3592, %v1915
    %v3594 = vand.u32 2147483647, %v1915
    %vm3595 = vcmp.lt.f32.partialorder %v3594, 0.0004427343
    %v3596 = vsel %vm3595, %v3593, %v3590
    %v3597 = vadd.f32 %v1917, 1.0
    %v3598 = vlog2.pop %v3597
    %v3599 = vmul.f32 %v3598, 0.6931472
    %v3600 = vmul.f32 -0.5, %v1917
    %v3601 = vadd.f32 %v3600, 1.0
    %v3602 = vmul.f32 %v3601, %v1917
    %v3603 = vand.u32 2147483647, %v1917
    %vm3604 = vcmp.lt.f32.partialorder %v3603, 0.0004427343
    %v3605 = vsel %vm3604, %v3602, %v3599
    %v3606 = vadd.f32 %v1919, 1.0
    %v3607 = vlog2.pop %v3606
    %v3608 = vmul.f32 %v3607, 0.6931472
    %v3609 = vmul.f32 -0.5, %v1919
    %v3610 = vadd.f32 %v3609, 1.0
    %v3611 = vmul.f32 %v3610, %v1919
    %v3612 = vand.u32 2147483647, %v1919
    %vm3613 = vcmp.lt.f32.partialorder %v3612, 0.0004427343
    %v3614 = vsel %vm3613, %v3611, %v3608
    %v3615 = vadd.f32 %v1921, 1.0
    %v3616 = vlog2.pop %v3615
    %v3617 = vmul.f32 %v3616, 0.6931472
    %v3618 = vmul.f32 -0.5, %v1921
    %v3619 = vadd.f32 %v3618, 1.0
    %v3620 = vmul.f32 %v3619, %v1921
    %v3621 = vand.u32 2147483647, %v1921
    %vm3622 = vcmp.lt.f32.partialorder %v3621, 0.0004427343
    %v3623 = vsel %vm3622, %v3620, %v3617
    %v3624 = vadd.f32 %v1923, 1.0
    %v3625 = vlog2.pop %v3624
    %v3626 = vmul.f32 %v3625, 0.6931472
    %v3627 = vmul.f32 -0.5, %v1923
    %v3628 = vadd.f32 %v3627, 1.0
    %v3629 = vmul.f32 %v3628, %v1923
    %v3630 = vand.u32 2147483647, %v1923
    %vm3631 = vcmp.lt.f32.partialorder %v3630, 0.0004427343
    %v3632 = vsel %vm3631, %v3629, %v3626
    %v3633 = vadd.f32 %v1925, 1.0
    %v3634 = vlog2.pop %v3633
    %v3635 = vmul.f32 %v3634, 0.6931472
    %v3636 = vmul.f32 -0.5, %v1925
    %v3637 = vadd.f32 %v3636, 1.0
    %v3638 = vmul.f32 %v3637, %v1925
    %v3639 = vand.u32 2147483647, %v1925
    %vm3640 = vcmp.lt.f32.partialorder %v3639, 0.0004427343
    %v3641 = vsel %vm3640, %v3638, %v3635
    %v3642 = vadd.f32 %v1927, 1.0
    %v3643 = vlog2.pop %v3642
    %v3644 = vmul.f32 %v3643, 0.6931472
    %v3645 = vmul.f32 -0.5, %v1927
    %v3646 = vadd.f32 %v3645, 1.0
    %v3647 = vmul.f32 %v3646, %v1927
    %v3648 = vand.u32 2147483647, %v1927
    %vm3649 = vcmp.lt.f32.partialorder %v3648, 0.0004427343
    %v3650 = vsel %vm3649, %v3647, %v3644
    %v3651 = vadd.f32 %v1929, 1.0
    %v3652 = vlog2.pop %v3651
    %v3653 = vmul.f32 %v3652, 0.6931472
    %v3654 = vmul.f32 -0.5, %v1929
    %v3655 = vadd.f32 %v3654, 1.0
    %v3656 = vmul.f32 %v3655, %v1929
    %v3657 = vand.u32 2147483647, %v1929
    %vm3658 = vcmp.lt.f32.partialorder %v3657, 0.0004427343
    %v3659 = vsel %vm3658, %v3656, %v3653
    %v3660 = vadd.f32 %v1931, 1.0
    %v3661 = vlog2.pop %v3660
    %v3662 = vmul.f32 %v3661, 0.6931472
    %v3663 = vmul.f32 -0.5, %v1931
    %v3664 = vadd.f32 %v3663, 1.0
    %v3665 = vmul.f32 %v3664, %v1931
    %v3666 = vand.u32 2147483647, %v1931
    %vm3667 = vcmp.lt.f32.partialorder %v3666, 0.0004427343
    %v3668 = vsel %vm3667, %v3665, %v3662
    %v3669 = vadd.f32 %v1933, 1.0
    %v3670 = vlog2.pop %v3669
    %v3671 = vmul.f32 %v3670, 0.6931472
    %v3672 = vmul.f32 -0.5, %v1933
    %v3673 = vadd.f32 %v3672, 1.0
    %v3674 = vmul.f32 %v3673, %v1933
    %v3675 = vand.u32 2147483647, %v1933
    %vm3676 = vcmp.lt.f32.partialorder %v3675, 0.0004427343
    %v3677 = vsel %vm3676, %v3674, %v3671
    %v3678 = vadd.f32 %v1935, 1.0
    %v3679 = vlog2.pop %v3678
    %v3680 = vmul.f32 %v3679, 0.6931472
    %v3681 = vmul.f32 -0.5, %v1935
    %v3682 = vadd.f32 %v3681, 1.0
    %v3683 = vmul.f32 %v3682, %v1935
    %v3684 = vand.u32 2147483647, %v1935
    %vm3685 = vcmp.lt.f32.partialorder %v3684, 0.0004427343
    %v3686 = vsel %vm3685, %v3683, %v3680
    %v3687 = vadd.f32 %v1937, 1.0
    %v3688 = vlog2.pop %v3687
    %v3689 = vmul.f32 %v3688, 0.6931472
    %v3690 = vmul.f32 -0.5, %v1937
    %v3691 = vadd.f32 %v3690, 1.0
    %v3692 = vmul.f32 %v3691, %v1937
    %v3693 = vand.u32 2147483647, %v1937
    %vm3694 = vcmp.lt.f32.partialorder %v3693, 0.0004427343
    %v3695 = vsel %vm3694, %v3692, %v3689
    %v3696 = vadd.f32 %v1939, 1.0
    %v3697 = vlog2.pop %v3696
    %v3698 = vmul.f32 %v3697, 0.6931472
    %v3699 = vmul.f32 -0.5, %v1939
    %v3700 = vadd.f32 %v3699, 1.0
    %v3701 = vmul.f32 %v3700, %v1939
    %v3702 = vand.u32 2147483647, %v1939
    %vm3703 = vcmp.lt.f32.partialorder %v3702, 0.0004427343
    %v3704 = vsel %vm3703, %v3701, %v3698
    %v3705 = vadd.f32 %v1941, 1.0
    %v3706 = vlog2.pop %v3705
    %v3707 = vmul.f32 %v3706, 0.6931472
    %v3708 = vmul.f32 -0.5, %v1941
    %v3709 = vadd.f32 %v3708, 1.0
    %v3710 = vmul.f32 %v3709, %v1941
    %v3711 = vand.u32 2147483647, %v1941
    %vm3712 = vcmp.lt.f32.partialorder %v3711, 0.0004427343
    %v3713 = vsel %vm3712, %v3710, %v3707
    %v3714 = vadd.f32 %v1943, 1.0
    %v3715 = vlog2.pop %v3714
    %v3716 = vmul.f32 %v3715, 0.6931472
    %v3717 = vmul.f32 -0.5, %v1943
    %v3718 = vadd.f32 %v3717, 1.0
    %v3719 = vmul.f32 %v3718, %v1943
    %v3720 = vand.u32 2147483647, %v1943
    %vm3721 = vcmp.lt.f32.partialorder %v3720, 0.0004427343
    %v3722 = vsel %vm3721, %v3719, %v3716
    %v3723 = vadd.f32 %v1945, 1.0
    %v3724 = vlog2.pop %v3723
    %v3725 = vmul.f32 %v3724, 0.6931472
    %v3726 = vmul.f32 -0.5, %v1945
    %v3727 = vadd.f32 %v3726, 1.0
    %v3728 = vmul.f32 %v3727, %v1945
    %v3729 = vand.u32 2147483647, %v1945
    %vm3730 = vcmp.lt.f32.partialorder %v3729, 0.0004427343
    %v3731 = vsel %vm3730, %v3728, %v3725
    %v3732 = vadd.f32 %v1947, 1.0
    %v3733 = vlog2.pop %v3732
    %v3734 = vmul.f32 %v3733, 0.6931472
    %v3735 = vmul.f32 -0.5, %v1947
    %v3736 = vadd.f32 %v3735, 1.0
    %v3737 = vmul.f32 %v3736, %v1947
    %v3738 = vand.u32 2147483647, %v1947
    %vm3739 = vcmp.lt.f32.partialorder %v3738, 0.0004427343
    %v3740 = vsel %vm3739, %v3737, %v3734
    %v3741 = vadd.f32 %v1949, 1.0
    %v3742 = vlog2.pop %v3741
    %v3743 = vmul.f32 %v3742, 0.6931472
    %v3744 = vmul.f32 -0.5, %v1949
    %v3745 = vadd.f32 %v3744, 1.0
    %v3746 = vmul.f32 %v3745, %v1949
    %v3747 = vand.u32 2147483647, %v1949
    %vm3748 = vcmp.lt.f32.partialorder %v3747, 0.0004427343
    %v3749 = vsel %vm3748, %v3746, %v3743
    %v3750 = vadd.f32 %v1951, 1.0
    %v3751 = vlog2.pop %v3750
    %v3752 = vmul.f32 %v3751, 0.6931472
    %v3753 = vmul.f32 -0.5, %v1951
    %v3754 = vadd.f32 %v3753, 1.0
    %v3755 = vmul.f32 %v3754, %v1951
    %v3756 = vand.u32 2147483647, %v1951
    %vm3757 = vcmp.lt.f32.partialorder %v3756, 0.0004427343
    %v3758 = vsel %vm3757, %v3755, %v3752
    %v3759 = vadd.f32 %v1953, 1.0
    %v3760 = vlog2.pop %v3759
    %v3761 = vmul.f32 %v3760, 0.6931472
    %v3762 = vmul.f32 -0.5, %v1953
    %v3763 = vadd.f32 %v3762, 1.0
    %v3764 = vmul.f32 %v3763, %v1953
    %v3765 = vand.u32 2147483647, %v1953
    %vm3766 = vcmp.lt.f32.partialorder %v3765, 0.0004427343
    %v3767 = vsel %vm3766, %v3764, %v3761
    %v3768 = vadd.f32 %v1955, 1.0
    %v3769 = vlog2.pop %v3768
    %v3770 = vmul.f32 %v3769, 0.6931472
    %v3771 = vmul.f32 -0.5, %v1955
    %v3772 = vadd.f32 %v3771, 1.0
    %v3773 = vmul.f32 %v3772, %v1955
    %v3774 = vand.u32 2147483647, %v1955
    %vm3775 = vcmp.lt.f32.partialorder %v3774, 0.0004427343
    %v3776 = vsel %vm3775, %v3773, %v3770
    %v3777 = vadd.f32 %v1957, 1.0
    %v3778 = vlog2.pop %v3777
    %v3779 = vmul.f32 %v3778, 0.6931472
    %v3780 = vmul.f32 -0.5, %v1957
    %v3781 = vadd.f32 %v3780, 1.0
    %v3782 = vmul.f32 %v3781, %v1957
    %v3783 = vand.u32 2147483647, %v1957
    %vm3784 = vcmp.lt.f32.partialorder %v3783, 0.0004427343
    %v3785 = vsel %vm3784, %v3782, %v3779
    %v3786 = vadd.f32 %v1959, 1.0
    %v3787 = vlog2.pop %v3786
    %v3788 = vmul.f32 %v3787, 0.6931472
    %v3789 = vmul.f32 -0.5, %v1959
    %v3790 = vadd.f32 %v3789, 1.0
    %v3791 = vmul.f32 %v3790, %v1959
    %v3792 = vand.u32 2147483647, %v1959
    %vm3793 = vcmp.lt.f32.partialorder %v3792, 0.0004427343
    %v3794 = vsel %vm3793, %v3791, %v3788
    %v3795 = vadd.f32 %v1961, 1.0
    %v3796 = vlog2.pop %v3795
    %v3797 = vmul.f32 %v3796, 0.6931472
    %v3798 = vmul.f32 -0.5, %v1961
    %v3799 = vadd.f32 %v3798, 1.0
    %v3800 = vmul.f32 %v3799, %v1961
    %v3801 = vand.u32 2147483647, %v1961
    %vm3802 = vcmp.lt.f32.partialorder %v3801, 0.0004427343
    %v3803 = vsel %vm3802, %v3800, %v3797
    %v3804 = vadd.f32 %v1963, 1.0
    %v3805 = vlog2.pop %v3804
    %v3806 = vmul.f32 %v3805, 0.6931472
    %v3807 = vmul.f32 -0.5, %v1963
    %v3808 = vadd.f32 %v3807, 1.0
    %v3809 = vmul.f32 %v3808, %v1963
    %v3810 = vand.u32 2147483647, %v1963
    %vm3811 = vcmp.lt.f32.partialorder %v3810, 0.0004427343
    %v3812 = vsel %vm3811, %v3809, %v3806
    %v3813 = vadd.f32 %v1965, 1.0
    %v3814 = vlog2.pop %v3813
    %v3815 = vmul.f32 %v3814, 0.6931472
    %v3816 = vmul.f32 -0.5, %v1965
    %v3817 = vadd.f32 %v3816, 1.0
    %v3818 = vmul.f32 %v3817, %v1965
    %v3819 = vand.u32 2147483647, %v1965
    %vm3820 = vcmp.lt.f32.partialorder %v3819, 0.0004427343
    %v3821 = vsel %vm3820, %v3818, %v3815
    %v3822 = vadd.f32 %v1967, 1.0
    %v3823 = vlog2.pop %v3822
    %v3824 = vmul.f32 %v3823, 0.6931472
    %v3825 = vmul.f32 -0.5, %v1967
    %v3826 = vadd.f32 %v3825, 1.0
    %v3827 = vmul.f32 %v3826, %v1967
    %v3828 = vand.u32 2147483647, %v1967
    %vm3829 = vcmp.lt.f32.partialorder %v3828, 0.0004427343
    %v3830 = vsel %vm3829, %v3827, %v3824
    %v3831 = vadd.f32 %v1969, 1.0
    %v3832 = vlog2.pop %v3831
    %v3833 = vmul.f32 %v3832, 0.6931472
    %v3834 = vmul.f32 -0.5, %v1969
    %v3835 = vadd.f32 %v3834, 1.0
    %v3836 = vmul.f32 %v3835, %v1969
    %v3837 = vand.u32 2147483647, %v1969
    %vm3838 = vcmp.lt.f32.partialorder %v3837, 0.0004427343
    %v3839 = vsel %vm3838, %v3836, %v3833
    %v3840 = vadd.f32 %v1971, 1.0
    %v3841 = vlog2.pop %v3840
    %v3842 = vmul.f32 %v3841, 0.6931472
    %v3843 = vmul.f32 -0.5, %v1971
    %v3844 = vadd.f32 %v3843, 1.0
    %v3845 = vmul.f32 %v3844, %v1971
    %v3846 = vand.u32 2147483647, %v1971
    %vm3847 = vcmp.lt.f32.partialorder %v3846, 0.0004427343
    %v3848 = vsel %vm3847, %v3845, %v3842
    %v3849 = vadd.f32 %v1973, 1.0
    %v3850 = vlog2.pop %v3849
    %v3851 = vmul.f32 %v3850, 0.6931472
    %v3852 = vmul.f32 -0.5, %v1973
    %v3853 = vadd.f32 %v3852, 1.0
    %v3854 = vmul.f32 %v3853, %v1973
    %v3855 = vand.u32 2147483647, %v1973
    %vm3856 = vcmp.lt.f32.partialorder %v3855, 0.0004427343
    %v3857 = vsel %vm3856, %v3854, %v3851
    %v3858 = vadd.f32 %v1975, 1.0
    %v3859 = vlog2.pop %v3858
    %v3860 = vmul.f32 %v3859, 0.6931472
    %v3861 = vmul.f32 -0.5, %v1975
    %v3862 = vadd.f32 %v3861, 1.0
    %v3863 = vmul.f32 %v3862, %v1975
    %v3864 = vand.u32 2147483647, %v1975
    %vm3865 = vcmp.lt.f32.partialorder %v3864, 0.0004427343
    %v3866 = vsel %vm3865, %v3863, %v3860
    %v3867 = vadd.f32 %v1977, 1.0
    %v3868 = vlog2.pop %v3867
    %v3869 = vmul.f32 %v3868, 0.6931472
    %v3870 = vmul.f32 -0.5, %v1977
    %v3871 = vadd.f32 %v3870, 1.0
    %v3872 = vmul.f32 %v3871, %v1977
    %v3873 = vand.u32 2147483647, %v1977
    %vm3874 = vcmp.lt.f32.partialorder %v3873, 0.0004427343
    %v3875 = vsel %vm3874, %v3872, %v3869
    %v3876 = vadd.f32 %v1979, 1.0
    %v3877 = vlog2.pop %v3876
    %v3878 = vmul.f32 %v3877, 0.6931472
    %v3879 = vmul.f32 -0.5, %v1979
    %v3880 = vadd.f32 %v3879, 1.0
    %v3881 = vmul.f32 %v3880, %v1979
    %v3882 = vand.u32 2147483647, %v1979
    %vm3883 = vcmp.lt.f32.partialorder %v3882, 0.0004427343
    %v3884 = vsel %vm3883, %v3881, %v3878
    %v3885 = vadd.f32 %v1981, 1.0
    %v3886 = vlog2.pop %v3885
    %v3887 = vmul.f32 %v3886, 0.6931472
    %v3888 = vmul.f32 -0.5, %v1981
    %v3889 = vadd.f32 %v3888, 1.0
    %v3890 = vmul.f32 %v3889, %v1981
    %v3891 = vand.u32 2147483647, %v1981
    %vm3892 = vcmp.lt.f32.partialorder %v3891, 0.0004427343
    %v3893 = vsel %vm3892, %v3890, %v3887
    %v3894 = vadd.f32 %v1983, 1.0
    %v3895 = vlog2.pop %v3894
    %v3896 = vmul.f32 %v3895, 0.6931472
    %v3897 = vmul.f32 -0.5, %v1983
    %v3898 = vadd.f32 %v3897, 1.0
    %v3899 = vmul.f32 %v3898, %v1983
    %v3900 = vand.u32 2147483647, %v1983
    %vm3901 = vcmp.lt.f32.partialorder %v3900, 0.0004427343
    %v3902 = vsel %vm3901, %v3899, %v3896
    %v3903 = vadd.f32 %v1985, 1.0
    %v3904 = vlog2.pop %v3903
    %v3905 = vmul.f32 %v3904, 0.6931472
    %v3906 = vmul.f32 -0.5, %v1985
    %v3907 = vadd.f32 %v3906, 1.0
    %v3908 = vmul.f32 %v3907, %v1985
    %v3909 = vand.u32 2147483647, %v1985
    %vm3910 = vcmp.lt.f32.partialorder %v3909, 0.0004427343
    %v3911 = vsel %vm3910, %v3908, %v3905
    %v3912 = vadd.f32 %v1987, 1.0
    %v3913 = vlog2.pop %v3912
    %v3914 = vmul.f32 %v3913, 0.6931472
    %v3915 = vmul.f32 -0.5, %v1987
    %v3916 = vadd.f32 %v3915, 1.0
    %v3917 = vmul.f32 %v3916, %v1987
    %v3918 = vand.u32 2147483647, %v1987
    %vm3919 = vcmp.lt.f32.partialorder %v3918, 0.0004427343
    %v3920 = vsel %vm3919, %v3917, %v3914
    %v3921 = vadd.f32 %v1989, 1.0
    %v3922 = vlog2.pop %v3921
    %v3923 = vmul.f32 %v3922, 0.6931472
    %v3924 = vmul.f32 -0.5, %v1989
    %v3925 = vadd.f32 %v3924, 1.0
    %v3926 = vmul.f32 %v3925, %v1989
    %v3927 = vand.u32 2147483647, %v1989
    %vm3928 = vcmp.lt.f32.partialorder %v3927, 0.0004427343
    %v3929 = vsel %vm3928, %v3926, %v3923
    %v3930 = vadd.f32 %v1991, 1.0
    %v3931 = vlog2.pop %v3930
    %v3932 = vmul.f32 %v3931, 0.6931472
    %v3933 = vmul.f32 -0.5, %v1991
    %v3934 = vadd.f32 %v3933, 1.0
    %v3935 = vmul.f32 %v3934, %v1991
    %v3936 = vand.u32 2147483647, %v1991
    %vm3937 = vcmp.lt.f32.partialorder %v3936, 0.0004427343
    %v3938 = vsel %vm3937, %v3935, %v3932
    %v3939 = vadd.f32 %v1993, 1.0
    %v3940 = vlog2.pop %v3939
    %v3941 = vmul.f32 %v3940, 0.6931472
    %v3942 = vmul.f32 -0.5, %v1993
    %v3943 = vadd.f32 %v3942, 1.0
    %v3944 = vmul.f32 %v3943, %v1993
    %v3945 = vand.u32 2147483647, %v1993
    %vm3946 = vcmp.lt.f32.partialorder %v3945, 0.0004427343
    %v3947 = vsel %vm3946, %v3944, %v3941
    %v3948 = vadd.f32 %v1995, 1.0
    %v3949 = vlog2.pop %v3948
    %v3950 = vmul.f32 %v3949, 0.6931472
    %v3951 = vmul.f32 -0.5, %v1995
    %v3952 = vadd.f32 %v3951, 1.0
    %v3953 = vmul.f32 %v3952, %v1995
    %v3954 = vand.u32 2147483647, %v1995
    %vm3955 = vcmp.lt.f32.partialorder %v3954, 0.0004427343
    %v3956 = vsel %vm3955, %v3953, %v3950
    %v3957 = vadd.f32 %v1997, 1.0
    %v3958 = vlog2.pop %v3957
    %v3959 = vmul.f32 %v3958, 0.6931472
    %v3960 = vmul.f32 -0.5, %v1997
    %v3961 = vadd.f32 %v3960, 1.0
    %v3962 = vmul.f32 %v3961, %v1997
    %v3963 = vand.u32 2147483647, %v1997
    %vm3964 = vcmp.lt.f32.partialorder %v3963, 0.0004427343
    %v3965 = vsel %vm3964, %v3962, %v3959
    %v3966 = vadd.f32 %v1999, 1.0
    %v3967 = vlog2.pop %v3966
    %v3968 = vmul.f32 %v3967, 0.6931472
    %v3969 = vmul.f32 -0.5, %v1999
    %v3970 = vadd.f32 %v3969, 1.0
    %v3971 = vmul.f32 %v3970, %v1999
    %v3972 = vand.u32 2147483647, %v1999
    %vm3973 = vcmp.lt.f32.partialorder %v3972, 0.0004427343
    %v3974 = vsel %vm3973, %v3971, %v3968
    %v3975 = vadd.f32 %v2001, 1.0
    %v3976 = vlog2.pop %v3975
    %v3977 = vmul.f32 %v3976, 0.6931472
    %v3978 = vmul.f32 -0.5, %v2001
    %v3979 = vadd.f32 %v3978, 1.0
    %v3980 = vmul.f32 %v3979, %v2001
    %v3981 = vand.u32 2147483647, %v2001
    %vm3982 = vcmp.lt.f32.partialorder %v3981, 0.0004427343
    %v3983 = vsel %vm3982, %v3980, %v3977
    %v3984 = vadd.f32 %v2003, 1.0
    %v3985 = vlog2.pop %v3984
    %v3986 = vmul.f32 %v3985, 0.6931472
    %v3987 = vmul.f32 -0.5, %v2003
    %v3988 = vadd.f32 %v3987, 1.0
    %v3989 = vmul.f32 %v3988, %v2003
    %v3990 = vand.u32 2147483647, %v2003
    %vm3991 = vcmp.lt.f32.partialorder %v3990, 0.0004427343
    %v3992 = vsel %vm3991, %v3989, %v3986
    %v3993 = vadd.f32 %v2005, 1.0
    %v3994 = vlog2.pop %v3993
    %v3995 = vmul.f32 %v3994, 0.6931472
    %v3996 = vmul.f32 -0.5, %v2005
    %v3997 = vadd.f32 %v3996, 1.0
    %v3998 = vmul.f32 %v3997, %v2005
    %v3999 = vand.u32 2147483647, %v2005
    %vm4000 = vcmp.lt.f32.partialorder %v3999, 0.0004427343
    %v4001 = vsel %vm4000, %v3998, %v3995
    %v4002 = vadd.f32 %v2007, 1.0
    %v4003 = vlog2.pop %v4002
    %v4004 = vmul.f32 %v4003, 0.6931472
    %v4005 = vmul.f32 -0.5, %v2007
    %v4006 = vadd.f32 %v4005, 1.0
    %v4007 = vmul.f32 %v4006, %v2007
    %v4008 = vand.u32 2147483647, %v2007
    %vm4009 = vcmp.lt.f32.partialorder %v4008, 0.0004427343
    %v4010 = vsel %vm4009, %v4007, %v4004
    %v4011 = vadd.f32 %v2009, 1.0
    %v4012 = vlog2.pop %v4011
    %v4013 = vmul.f32 %v4012, 0.6931472
    %v4014 = vmul.f32 -0.5, %v2009
    %v4015 = vadd.f32 %v4014, 1.0
    %v4016 = vmul.f32 %v4015, %v2009
    %v4017 = vand.u32 2147483647, %v2009
    %vm4018 = vcmp.lt.f32.partialorder %v4017, 0.0004427343
    %v4019 = vsel %vm4018, %v4016, %v4013
    %v4020 = vadd.f32 %v2011, 1.0
    %v4021 = vlog2.pop %v4020
    %v4022 = vmul.f32 %v4021, 0.6931472
    %v4023 = vmul.f32 -0.5, %v2011
    %v4024 = vadd.f32 %v4023, 1.0
    %v4025 = vmul.f32 %v4024, %v2011
    %v4026 = vand.u32 2147483647, %v2011
    %vm4027 = vcmp.lt.f32.partialorder %v4026, 0.0004427343
    %v4028 = vsel %vm4027, %v4025, %v4022
    %v4029 = vadd.f32 %v2013, 1.0
    %v4030 = vlog2.pop %v4029
    %v4031 = vmul.f32 %v4030, 0.6931472
    %v4032 = vmul.f32 -0.5, %v2013
    %v4033 = vadd.f32 %v4032, 1.0
    %v4034 = vmul.f32 %v4033, %v2013
    %v4035 = vand.u32 2147483647, %v2013
    %vm4036 = vcmp.lt.f32.partialorder %v4035, 0.0004427343
    %v4037 = vsel %vm4036, %v4034, %v4031
    %v4038 = vadd.f32 %v2015, 1.0
    %v4039 = vlog2.pop %v4038
    %v4040 = vmul.f32 %v4039, 0.6931472
    %v4041 = vmul.f32 -0.5, %v2015
    %v4042 = vadd.f32 %v4041, 1.0
    %v4043 = vmul.f32 %v4042, %v2015
    %v4044 = vand.u32 2147483647, %v2015
    %vm4045 = vcmp.lt.f32.partialorder %v4044, 0.0004427343
    %v4046 = vsel %vm4045, %v4043, %v4040
    %v4047 = vadd.f32 %v2017, 1.0
    %v4048 = vlog2.pop %v4047
    %v4049 = vmul.f32 %v4048, 0.6931472
    %v4050 = vmul.f32 -0.5, %v2017
    %v4051 = vadd.f32 %v4050, 1.0
    %v4052 = vmul.f32 %v4051, %v2017
    %v4053 = vand.u32 2147483647, %v2017
    %vm4054 = vcmp.lt.f32.partialorder %v4053, 0.0004427343
    %v4055 = vsel %vm4054, %v4052, %v4049
    %v4056 = vadd.f32 %v2019, 1.0
    %v4057 = vlog2.pop %v4056
    %v4058 = vmul.f32 %v4057, 0.6931472
    %v4059 = vmul.f32 -0.5, %v2019
    %v4060 = vadd.f32 %v4059, 1.0
    %v4061 = vmul.f32 %v4060, %v2019
    %v4062 = vand.u32 2147483647, %v2019
    %vm4063 = vcmp.lt.f32.partialorder %v4062, 0.0004427343
    %v4064 = vsel %vm4063, %v4061, %v4058
    %v4065 = vadd.f32 %v2021, 1.0
    %v4066 = vlog2.pop %v4065
    %v4067 = vmul.f32 %v4066, 0.6931472
    %v4068 = vmul.f32 -0.5, %v2021
    %v4069 = vadd.f32 %v4068, 1.0
    %v4070 = vmul.f32 %v4069, %v2021
    %v4071 = vand.u32 2147483647, %v2021
    %vm4072 = vcmp.lt.f32.partialorder %v4071, 0.0004427343
    %v4073 = vsel %vm4072, %v4070, %v4067
    %v4074 = vadd.f32 %v2023, 1.0
    %v4075 = vlog2.pop %v4074
    %v4076 = vmul.f32 %v4075, 0.6931472
    %v4077 = vmul.f32 -0.5, %v2023
    %v4078 = vadd.f32 %v4077, 1.0
    %v4079 = vmul.f32 %v4078, %v2023
    %v4080 = vand.u32 2147483647, %v2023
    %vm4081 = vcmp.lt.f32.partialorder %v4080, 0.0004427343
    %v4082 = vsel %vm4081, %v4079, %v4076
    %v4083 = vadd.f32 %v2025, 1.0
    %v4084 = vlog2.pop %v4083
    %v4085 = vmul.f32 %v4084, 0.6931472
    %v4086 = vmul.f32 -0.5, %v2025
    %v4087 = vadd.f32 %v4086, 1.0
    %v4088 = vmul.f32 %v4087, %v2025
    %v4089 = vand.u32 2147483647, %v2025
    %vm4090 = vcmp.lt.f32.partialorder %v4089, 0.0004427343
    %v4091 = vsel %vm4090, %v4088, %v4085
    %v4092 = vadd.f32 %v2027, 1.0
    %v4093 = vlog2.pop %v4092
    %v4094 = vmul.f32 %v4093, 0.6931472
    %v4095 = vmul.f32 -0.5, %v2027
    %v4096 = vadd.f32 %v4095, 1.0
    %v4097 = vmul.f32 %v4096, %v2027
    %v4098 = vand.u32 2147483647, %v2027
    %vm4099 = vcmp.lt.f32.partialorder %v4098, 0.0004427343
    %v4100 = vsel %vm4099, %v4097, %v4094
    %v4101 = vadd.f32 %v2029, 1.0
    %v4102 = vlog2.pop %v4101
    %v4103 = vmul.f32 %v4102, 0.6931472
    %v4104 = vmul.f32 -0.5, %v2029
    %v4105 = vadd.f32 %v4104, 1.0
    %v4106 = vmul.f32 %v4105, %v2029
    %v4107 = vand.u32 2147483647, %v2029
    %vm4108 = vcmp.lt.f32.partialorder %v4107, 0.0004427343
    %v4109 = vsel %vm4108, %v4106, %v4103
    %v4110 = vadd.f32 %v2031, 1.0
    %v4111 = vlog2.pop %v4110
    %v4112 = vmul.f32 %v4111, 0.6931472
    %v4113 = vmul.f32 -0.5, %v2031
    %v4114 = vadd.f32 %v4113, 1.0
    %v4115 = vmul.f32 %v4114, %v2031
    %v4116 = vand.u32 2147483647, %v2031
    %vm4117 = vcmp.lt.f32.partialorder %v4116, 0.0004427343
    %v4118 = vsel %vm4117, %v4115, %v4112
    %v4119 = vadd.f32 %v2033, 1.0
    %v4120 = vlog2.pop %v4119
    %v4121 = vmul.f32 %v4120, 0.6931472
    %v4122 = vmul.f32 -0.5, %v2033
    %v4123 = vadd.f32 %v4122, 1.0
    %v4124 = vmul.f32 %v4123, %v2033
    %v4125 = vand.u32 2147483647, %v2033
    %vm4126 = vcmp.lt.f32.partialorder %v4125, 0.0004427343
    %v4127 = vsel %vm4126, %v4124, %v4121
    %v4128 = vadd.f32 %v2035, 1.0
    %v4129 = vlog2.pop %v4128
    %v4130 = vmul.f32 %v4129, 0.6931472
    %v4131 = vmul.f32 -0.5, %v2035
    %v4132 = vadd.f32 %v4131, 1.0
    %v4133 = vmul.f32 %v4132, %v2035
    %v4134 = vand.u32 2147483647, %v2035
    %vm4135 = vcmp.lt.f32.partialorder %v4134, 0.0004427343
    %v4136 = vsel %vm4135, %v4133, %v4130
    %v4137 = vadd.f32 %v2037, 1.0
    %v4138 = vlog2.pop %v4137
    %v4139 = vmul.f32 %v4138, 0.6931472
    %v4140 = vmul.f32 -0.5, %v2037
    %v4141 = vadd.f32 %v4140, 1.0
    %v4142 = vmul.f32 %v4141, %v2037
    %v4143 = vand.u32 2147483647, %v2037
    %vm4144 = vcmp.lt.f32.partialorder %v4143, 0.0004427343
    %v4145 = vsel %vm4144, %v4142, %v4139
    %v4146 = vadd.f32 %v2039, 1.0
    %v4147 = vlog2.pop %v4146
    %v4148 = vmul.f32 %v4147, 0.6931472
    %v4149 = vmul.f32 -0.5, %v2039
    %v4150 = vadd.f32 %v4149, 1.0
    %v4151 = vmul.f32 %v4150, %v2039
    %v4152 = vand.u32 2147483647, %v2039
    %vm4153 = vcmp.lt.f32.partialorder %v4152, 0.0004427343
    %v4154 = vsel %vm4153, %v4151, %v4148
    %v4155 = vadd.f32 %v2041, 1.0
    %v4156 = vlog2.pop %v4155
    %v4157 = vmul.f32 %v4156, 0.6931472
    %v4158 = vmul.f32 -0.5, %v2041
    %v4159 = vadd.f32 %v4158, 1.0
    %v4160 = vmul.f32 %v4159, %v2041
    %v4161 = vand.u32 2147483647, %v2041
    %vm4162 = vcmp.lt.f32.partialorder %v4161, 0.0004427343
    %v4163 = vsel %vm4162, %v4160, %v4157
    %v4164 = vadd.f32 %v2043, 1.0
    %v4165 = vlog2.pop %v4164
    %v4166 = vmul.f32 %v4165, 0.6931472
    %v4167 = vmul.f32 -0.5, %v2043
    %v4168 = vadd.f32 %v4167, 1.0
    %v4169 = vmul.f32 %v4168, %v2043
    %v4170 = vand.u32 2147483647, %v2043
    %vm4171 = vcmp.lt.f32.partialorder %v4170, 0.0004427343
    %v4172 = vsel %vm4171, %v4169, %v4166
    %v4173 = vadd.f32 %v2045, 1.0
    %v4174 = vlog2.pop %v4173
    %v4175 = vmul.f32 %v4174, 0.6931472
    %v4176 = vmul.f32 -0.5, %v2045
    %v4177 = vadd.f32 %v4176, 1.0
    %v4178 = vmul.f32 %v4177, %v2045
    %v4179 = vand.u32 2147483647, %v2045
    %vm4180 = vcmp.lt.f32.partialorder %v4179, 0.0004427343
    %v4181 = vsel %vm4180, %v4178, %v4175
    %v4182 = vadd.f32 %v2047, 1.0
    %v4183 = vlog2.pop %v4182
    %v4184 = vmul.f32 %v4183, 0.6931472
    %v4185 = vmul.f32 -0.5, %v2047
    %v4186 = vadd.f32 %v4185, 1.0
    %v4187 = vmul.f32 %v4186, %v2047
    %v4188 = vand.u32 2147483647, %v2047
    %vm4189 = vcmp.lt.f32.partialorder %v4188, 0.0004427343
    %v4190 = vsel %vm4189, %v4187, %v4184
    %v4191 = vadd.f32 %v2049, 1.0
    %v4192 = vlog2.pop %v4191
    %v4193 = vmul.f32 %v4192, 0.6931472
    %v4194 = vmul.f32 -0.5, %v2049
    %v4195 = vadd.f32 %v4194, 1.0
    %v4196 = vmul.f32 %v4195, %v2049
    %v4197 = vand.u32 2147483647, %v2049
    %vm4198 = vcmp.lt.f32.partialorder %v4197, 0.0004427343
    %v4199 = vsel %vm4198, %v4196, %v4193
    %v4200 = vadd.f32 %v2051, 1.0
    %v4201 = vlog2.pop %v4200
    %v4202 = vmul.f32 %v4201, 0.6931472
    %v4203 = vmul.f32 -0.5, %v2051
    %v4204 = vadd.f32 %v4203, 1.0
    %v4205 = vmul.f32 %v4204, %v2051
    %v4206 = vand.u32 2147483647, %v2051
    %vm4207 = vcmp.lt.f32.partialorder %v4206, 0.0004427343
    %v4208 = vsel %vm4207, %v4205, %v4202
    %v4209 = vadd.f32 %v2053, 1.0
    %v4210 = vlog2.pop %v4209
    %v4211 = vmul.f32 %v4210, 0.6931472
    %v4212 = vmul.f32 -0.5, %v2053
    %v4213 = vadd.f32 %v4212, 1.0
    %v4214 = vmul.f32 %v4213, %v2053
    %v4215 = vand.u32 2147483647, %v2053
    %vm4216 = vcmp.lt.f32.partialorder %v4215, 0.0004427343
    %v4217 = vsel %vm4216, %v4214, %v4211
    %v4218 = vadd.f32 %v2055, 1.0
    %v4219 = vlog2.pop %v4218
    %v4220 = vmul.f32 %v4219, 0.6931472
    %v4221 = vmul.f32 -0.5, %v2055
    %v4222 = vadd.f32 %v4221, 1.0
    %v4223 = vmul.f32 %v4222, %v2055
    %v4224 = vand.u32 2147483647, %v2055
    %vm4225 = vcmp.lt.f32.partialorder %v4224, 0.0004427343
    %v4226 = vsel %vm4225, %v4223, %v4220
    %v4227 = vadd.f32 %v2057, 1.0
    %v4228 = vlog2.pop %v4227
    %v4229 = vmul.f32 %v4228, 0.6931472
    %v4230 = vmul.f32 -0.5, %v2057
    %v4231 = vadd.f32 %v4230, 1.0
    %v4232 = vmul.f32 %v4231, %v2057
    %v4233 = vand.u32 2147483647, %v2057
    %vm4234 = vcmp.lt.f32.partialorder %v4233, 0.0004427343
    %v4235 = vsel %vm4234, %v4232, %v4229
    %v4236 = vadd.f32 %v2059, 1.0
    %v4237 = vlog2.pop %v4236
    %v4238 = vmul.f32 %v4237, 0.6931472
    %v4239 = vmul.f32 -0.5, %v2059
    %v4240 = vadd.f32 %v4239, 1.0
    %v4241 = vmul.f32 %v4240, %v2059
    %v4242 = vand.u32 2147483647, %v2059
    %vm4243 = vcmp.lt.f32.partialorder %v4242, 0.0004427343
    %v4244 = vsel %vm4243, %v4241, %v4238
    %v4245 = vadd.f32 %v2061, 1.0
    %v4246 = vlog2.pop %v4245
    %v4247 = vmul.f32 %v4246, 0.6931472
    %v4248 = vmul.f32 -0.5, %v2061
    %v4249 = vadd.f32 %v4248, 1.0
    %v4250 = vmul.f32 %v4249, %v2061
    %v4251 = vand.u32 2147483647, %v2061
    %vm4252 = vcmp.lt.f32.partialorder %v4251, 0.0004427343
    %v4253 = vsel %vm4252, %v4250, %v4247
    %v4254 = vadd.f32 %v2063, 1.0
    %v4255 = vlog2.pop %v4254
    %v4256 = vmul.f32 %v4255, 0.6931472
    %v4257 = vmul.f32 -0.5, %v2063
    %v4258 = vadd.f32 %v4257, 1.0
    %v4259 = vmul.f32 %v4258, %v2063
    %v4260 = vand.u32 2147483647, %v2063
    %vm4261 = vcmp.lt.f32.partialorder %v4260, 0.0004427343
    %v4262 = vsel %vm4261, %v4259, %v4256
    %v4263 = vadd.f32 %v2065, 1.0
    %v4264 = vlog2.pop %v4263
    %v4265 = vmul.f32 %v4264, 0.6931472
    %v4266 = vmul.f32 -0.5, %v2065
    %v4267 = vadd.f32 %v4266, 1.0
    %v4268 = vmul.f32 %v4267, %v2065
    %v4269 = vand.u32 2147483647, %v2065
    %vm4270 = vcmp.lt.f32.partialorder %v4269, 0.0004427343
    %v4271 = vsel %vm4270, %v4268, %v4265
    %v4272 = vadd.f32 %v2067, 1.0
    %v4273 = vlog2.pop %v4272
    %v4274 = vmul.f32 %v4273, 0.6931472
    %v4275 = vmul.f32 -0.5, %v2067
    %v4276 = vadd.f32 %v4275, 1.0
    %v4277 = vmul.f32 %v4276, %v2067
    %v4278 = vand.u32 2147483647, %v2067
    %vm4279 = vcmp.lt.f32.partialorder %v4278, 0.0004427343
    %v4280 = vsel %vm4279, %v4277, %v4274
    %v4281 = vadd.f32 %v2069, 1.0
    %v4282 = vlog2.pop %v4281
    %v4283 = vmul.f32 %v4282, 0.6931472
    %v4284 = vmul.f32 -0.5, %v2069
    %v4285 = vadd.f32 %v4284, 1.0
    %v4286 = vmul.f32 %v4285, %v2069
    %v4287 = vand.u32 2147483647, %v2069
    %vm4288 = vcmp.lt.f32.partialorder %v4287, 0.0004427343
    %v4289 = vsel %vm4288, %v4286, %v4283
    %v4290 = vadd.f32 %v2071, 1.0
    %v4291 = vlog2.pop %v4290
    %v4292 = vmul.f32 %v4291, 0.6931472
    %v4293 = vmul.f32 -0.5, %v2071
    %v4294 = vadd.f32 %v4293, 1.0
    %v4295 = vmul.f32 %v4294, %v2071
    %v4296 = vand.u32 2147483647, %v2071
    %vm4297 = vcmp.lt.f32.partialorder %v4296, 0.0004427343
    %v4298 = vsel %vm4297, %v4295, %v4292
    %v4299 = vadd.f32 %v2073, 1.0
    %v4300 = vlog2.pop %v4299
    %v4301 = vmul.f32 %v4300, 0.6931472
    %v4302 = vmul.f32 -0.5, %v2073
    %v4303 = vadd.f32 %v4302, 1.0
    %v4304 = vmul.f32 %v4303, %v2073
    %v4305 = vand.u32 2147483647, %v2073
    %vm4306 = vcmp.lt.f32.partialorder %v4305, 0.0004427343
    %v4307 = vsel %vm4306, %v4304, %v4301
    %v4308 = vadd.f32 %v2075, 1.0
    %v4309 = vlog2.pop %v4308
    %v4310 = vmul.f32 %v4309, 0.6931472
    %v4311 = vmul.f32 -0.5, %v2075
    %v4312 = vadd.f32 %v4311, 1.0
    %v4313 = vmul.f32 %v4312, %v2075
    %v4314 = vand.u32 2147483647, %v2075
    %vm4315 = vcmp.lt.f32.partialorder %v4314, 0.0004427343
    %v4316 = vsel %vm4315, %v4313, %v4310
    %v4317 = vadd.f32 %v2077, 1.0
    %v4318 = vlog2.pop %v4317
    %v4319 = vmul.f32 %v4318, 0.6931472
    %v4320 = vmul.f32 -0.5, %v2077
    %v4321 = vadd.f32 %v4320, 1.0
    %v4322 = vmul.f32 %v4321, %v2077
    %v4323 = vand.u32 2147483647, %v2077
    %vm4324 = vcmp.lt.f32.partialorder %v4323, 0.0004427343
    %v4325 = vsel %vm4324, %v4322, %v4319
    %v4326 = vadd.f32 %v2079, 1.0
    %v4327 = vlog2.pop %v4326
    %v4328 = vmul.f32 %v4327, 0.6931472
    %v4329 = vmul.f32 -0.5, %v2079
    %v4330 = vadd.f32 %v4329, 1.0
    %v4331 = vmul.f32 %v4330, %v2079
    %v4332 = vand.u32 2147483647, %v2079
    %vm4333 = vcmp.lt.f32.partialorder %v4332, 0.0004427343
    %v4334 = vsel %vm4333, %v4331, %v4328
    %v4335 = vadd.f32 %v2081, 1.0
    %v4336 = vlog2.pop %v4335
    %v4337 = vmul.f32 %v4336, 0.6931472
    %v4338 = vmul.f32 -0.5, %v2081
    %v4339 = vadd.f32 %v4338, 1.0
    %v4340 = vmul.f32 %v4339, %v2081
    %v4341 = vand.u32 2147483647, %v2081
    %vm4342 = vcmp.lt.f32.partialorder %v4341, 0.0004427343
    %v4343 = vsel %vm4342, %v4340, %v4337
    %v4344 = vadd.f32 %v2083, 1.0
    %v4345 = vlog2.pop %v4344
    %v4346 = vmul.f32 %v4345, 0.6931472
    %v4347 = vmul.f32 -0.5, %v2083
    %v4348 = vadd.f32 %v4347, 1.0
    %v4349 = vmul.f32 %v4348, %v2083
    %v4350 = vand.u32 2147483647, %v2083
    %vm4351 = vcmp.lt.f32.partialorder %v4350, 0.0004427343
    %v4352 = vsel %vm4351, %v4349, %v4346
    %v4353 = vadd.f32 %v2085, 1.0
    %v4354 = vlog2.pop %v4353
    %v4355 = vmul.f32 %v4354, 0.6931472
    %v4356 = vmul.f32 -0.5, %v2085
    %v4357 = vadd.f32 %v4356, 1.0
    %v4358 = vmul.f32 %v4357, %v2085
    %v4359 = vand.u32 2147483647, %v2085
    %vm4360 = vcmp.lt.f32.partialorder %v4359, 0.0004427343
    %v4361 = vsel %vm4360, %v4358, %v4355
    %v4362 = vadd.f32 %v2087, 1.0
    %v4363 = vlog2.pop %v4362
    %v4364 = vmul.f32 %v4363, 0.6931472
    %v4365 = vmul.f32 -0.5, %v2087
    %v4366 = vadd.f32 %v4365, 1.0
    %v4367 = vmul.f32 %v4366, %v2087
    %v4368 = vand.u32 2147483647, %v2087
    %vm4369 = vcmp.lt.f32.partialorder %v4368, 0.0004427343
    %v4370 = vsel %vm4369, %v4367, %v4364
    %v4371 = vadd.f32 %v2089, 1.0
    %v4372 = vlog2.pop %v4371
    %v4373 = vmul.f32 %v4372, 0.6931472
    %v4374 = vmul.f32 -0.5, %v2089
    %v4375 = vadd.f32 %v4374, 1.0
    %v4376 = vmul.f32 %v4375, %v2089
    %v4377 = vand.u32 2147483647, %v2089
    %vm4378 = vcmp.lt.f32.partialorder %v4377, 0.0004427343
    %v4379 = vsel %vm4378, %v4376, %v4373
    %v4380 = vadd.f32 %v2091, 1.0
    %v4381 = vlog2.pop %v4380
    %v4382 = vmul.f32 %v4381, 0.6931472
    %v4383 = vmul.f32 -0.5, %v2091
    %v4384 = vadd.f32 %v4383, 1.0
    %v4385 = vmul.f32 %v4384, %v2091
    %v4386 = vand.u32 2147483647, %v2091
    %vm4387 = vcmp.lt.f32.partialorder %v4386, 0.0004427343
    %v4388 = vsel %vm4387, %v4385, %v4382
    %v4389 = vadd.f32 %v2093, 1.0
    %v4390 = vlog2.pop %v4389
    %v4391 = vmul.f32 %v4390, 0.6931472
    %v4392 = vmul.f32 -0.5, %v2093
    %v4393 = vadd.f32 %v4392, 1.0
    %v4394 = vmul.f32 %v4393, %v2093
    %v4395 = vand.u32 2147483647, %v2093
    %vm4396 = vcmp.lt.f32.partialorder %v4395, 0.0004427343
    %v4397 = vsel %vm4396, %v4394, %v4391
    %v4398 = vadd.f32 %v814, %v2102
    %v4399 = vadd.f32 %v815, %v2111
    %v4400 = vadd.f32 %v816, %v2120
    %v4401 = vadd.f32 %v817, %v2129
    %v4402 = vadd.f32 %v818, %v2138
    %v4403 = vadd.f32 %v819, %v2147
    %v4404 = vadd.f32 %v820, %v2156
    %v4405 = vadd.f32 %v821, %v2165
    %v4406 = vadd.f32 %v822, %v2174
    %v4407 = vadd.f32 %v823, %v2183
    %v4408 = vadd.f32 %v824, %v2192
    %v4409 = vadd.f32 %v825, %v2201
    %v4410 = vadd.f32 %v826, %v2210
    %v4411 = vadd.f32 %v827, %v2219
    %v4412 = vadd.f32 %v828, %v2228
    %v4413 = vadd.f32 %v829, %v2237
    %v4414 = vadd.f32 %v830, %v2246
    %v4415 = vadd.f32 %v831, %v2255
    %v4416 = vadd.f32 %v832, %v2264
    %v4417 = vadd.f32 %v833, %v2273
    %v4418 = vadd.f32 %v834, %v2282
    %v4419 = vadd.f32 %v835, %v2291
    %v4420 = vadd.f32 %v836, %v2300
    %v4421 = vadd.f32 %v837, %v2309
    %v4422 = vadd.f32 %v838, %v2318
    %v4423 = vadd.f32 %v839, %v2327
    %v4424 = vadd.f32 %v840, %v2336
    %v4425 = vadd.f32 %v841, %v2345
    %v4426 = vadd.f32 %v842, %v2354
    %v4427 = vadd.f32 %v843, %v2363
    %v4428 = vadd.f32 %v844, %v2372
    %v4429 = vadd.f32 %v845, %v2381
    %v4430 = vadd.f32 %v846, %v2390
    %v4431 = vadd.f32 %v847, %v2399
    %v4432 = vadd.f32 %v848, %v2408
    %v4433 = vadd.f32 %v849, %v2417
    %v4434 = vadd.f32 %v850, %v2426
    %v4435 = vadd.f32 %v851, %v2435
    %v4436 = vadd.f32 %v852, %v2444
    %v4437 = vadd.f32 %v853, %v2453
    %v4438 = vadd.f32 %v854, %v2462
    %v4439 = vadd.f32 %v855, %v2471
    %v4440 = vadd.f32 %v856, %v2480
    %v4441 = vadd.f32 %v857, %v2489
    %v4442 = vadd.f32 %v858, %v2498
    %v4443 = vadd.f32 %v859, %v2507
    %v4444 = vadd.f32 %v860, %v2516
    %v4445 = vadd.f32 %v861, %v2525
    %v4446 = vadd.f32 %v862, %v2534
    %v4447 = vadd.f32 %v863, %v2543
    %v4448 = vadd.f32 %v864, %v2552
    %v4449 = vadd.f32 %v865, %v2561
    %v4450 = vadd.f32 %v866, %v2570
    %v4451 = vadd.f32 %v867, %v2579
    %v4452 = vadd.f32 %v868, %v2588
    %v4453 = vadd.f32 %v869, %v2597
    %v4454 = vadd.f32 %v870, %v2606
    %v4455 = vadd.f32 %v871, %v2615
    %v4456 = vadd.f32 %v872, %v2624
    %v4457 = vadd.f32 %v873, %v2633
    %v4458 = vadd.f32 %v874, %v2642
    %v4459 = vadd.f32 %v875, %v2651
    %v4460 = vadd.f32 %v876, %v2660
    %v4461 = vadd.f32 %v877, %v2669
    %v4462 = vadd.f32 %v878, %v2678
    %v4463 = vadd.f32 %v879, %v2687
    %v4464 = vadd.f32 %v880, %v2696
    %v4465 = vadd.f32 %v881, %v2705
    %v4466 = vadd.f32 %v882, %v2714
    %v4467 = vadd.f32 %v883, %v2723
    %v4468 = vadd.f32 %v884, %v2732
    %v4469 = vadd.f32 %v885, %v2741
    %v4470 = vadd.f32 %v886, %v2750
    %v4471 = vadd.f32 %v887, %v2759
    %v4472 = vadd.f32 %v888, %v2768
    %v4473 = vadd.f32 %v889, %v2777
    %v4474 = vadd.f32 %v890, %v2786
    %v4475 = vadd.f32 %v891, %v2795
    %v4476 = vadd.f32 %v892, %v2804
    %v4477 = vadd.f32 %v893, %v2813
    %v4478 = vadd.f32 %v894, %v2822
    %v4479 = vadd.f32 %v895, %v2831
    %v4480 = vadd.f32 %v896, %v2840
    %v4481 = vadd.f32 %v897, %v2849
    %v4482 = vadd.f32 %v898, %v2858
    %v4483 = vadd.f32 %v899, %v2867
    %v4484 = vadd.f32 %v900, %v2876
    %v4485 = vadd.f32 %v901, %v2885
    %v4486 = vadd.f32 %v902, %v2894
    %v4487 = vadd.f32 %v903, %v2903
    %v4488 = vadd.f32 %v904, %v2912
    %v4489 = vadd.f32 %v905, %v2921
    %v4490 = vadd.f32 %v906, %v2930
    %v4491 = vadd.f32 %v907, %v2939
    %v4492 = vadd.f32 %v908, %v2948
    %v4493 = vadd.f32 %v909, %v2957
    %v4494 = vadd.f32 %v910, %v2966
    %v4495 = vadd.f32 %v911, %v2975
    %v4496 = vadd.f32 %v912, %v2984
    %v4497 = vadd.f32 %v913, %v2993
    %v4498 = vadd.f32 %v914, %v3002
    %v4499 = vadd.f32 %v915, %v3011
    %v4500 = vadd.f32 %v916, %v3020
    %v4501 = vadd.f32 %v917, %v3029
    %v4502 = vadd.f32 %v918, %v3038
    %v4503 = vadd.f32 %v919, %v3047
    %v4504 = vadd.f32 %v920, %v3056
    %v4505 = vadd.f32 %v921, %v3065
    %v4506 = vadd.f32 %v922, %v3074
    %v4507 = vadd.f32 %v923, %v3083
    %v4508 = vadd.f32 %v924, %v3092
    %v4509 = vadd.f32 %v925, %v3101
    %v4510 = vadd.f32 %v926, %v3110
    %v4511 = vadd.f32 %v927, %v3119
    %v4512 = vadd.f32 %v928, %v3128
    %v4513 = vadd.f32 %v929, %v3137
    %v4514 = vadd.f32 %v930, %v3146
    %v4515 = vadd.f32 %v931, %v3155
    %v4516 = vadd.f32 %v932, %v3164
    %v4517 = vadd.f32 %v933, %v3173
    %v4518 = vadd.f32 %v934, %v3182
    %v4519 = vadd.f32 %v935, %v3191
    %v4520 = vadd.f32 %v936, %v3200
    %v4521 = vadd.f32 %v937, %v3209
    %v4522 = vadd.f32 %v938, %v3218
    %v4523 = vadd.f32 %v939, %v3227
    %v4524 = vadd.f32 %v940, %v3236
    %v4525 = vadd.f32 %v941, %v3245
    %v4526 = vadd.f32 %v942, %v3254
    %v4527 = vadd.f32 %v943, %v3263
    %v4528 = vadd.f32 %v944, %v3272
    %v4529 = vadd.f32 %v945, %v3281
    %v4530 = vadd.f32 %v946, %v3290
    %v4531 = vadd.f32 %v947, %v3299
    %v4532 = vadd.f32 %v948, %v3308
    %v4533 = vadd.f32 %v949, %v3317
    %v4534 = vadd.f32 %v950, %v3326
    %v4535 = vadd.f32 %v951, %v3335
    %v4536 = vadd.f32 %v952, %v3344
    %v4537 = vadd.f32 %v953, %v3353
    %v4538 = vadd.f32 %v954, %v3362
    %v4539 = vadd.f32 %v955, %v3371
    %v4540 = vadd.f32 %v956, %v3380
    %v4541 = vadd.f32 %v957, %v3389
    %v4542 = vadd.f32 %v958, %v3398
    %v4543 = vadd.f32 %v959, %v3407
    %v4544 = vadd.f32 %v960, %v3416
    %v4545 = vadd.f32 %v961, %v3425
    %v4546 = vadd.f32 %v962, %v3434
    %v4547 = vadd.f32 %v963, %v3443
    %v4548 = vadd.f32 %v964, %v3452
    %v4549 = vadd.f32 %v965, %v3461
    %v4550 = vadd.f32 %v966, %v3470
    %v4551 = vadd.f32 %v967, %v3479
    %v4552 = vadd.f32 %v968, %v3488
    %v4553 = vadd.f32 %v969, %v3497
    %v4554 = vadd.f32 %v970, %v3506
    %v4555 = vadd.f32 %v971, %v3515
    %v4556 = vadd.f32 %v972, %v3524
    %v4557 = vadd.f32 %v973, %v3533
    %v4558 = vadd.f32 %v974, %v3542
    %v4559 = vadd.f32 %v975, %v3551
    %v4560 = vadd.f32 %v976, %v3560
    %v4561 = vadd.f32 %v977, %v3569
    %v4562 = vadd.f32 %v978, %v3578
    %v4563 = vadd.f32 %v979, %v3587
    %v4564 = vadd.f32 %v980, %v3596
    %v4565 = vadd.f32 %v981, %v3605
    %v4566 = vadd.f32 %v982, %v3614
    %v4567 = vadd.f32 %v983, %v3623
    %v4568 = vadd.f32 %v984, %v3632
    %v4569 = vadd.f32 %v985, %v3641
    %v4570 = vadd.f32 %v986, %v3650
    %v4571 = vadd.f32 %v987, %v3659
    %v4572 = vadd.f32 %v988, %v3668
    %v4573 = vadd.f32 %v989, %v3677
    %v4574 = vadd.f32 %v990, %v3686
    %v4575 = vadd.f32 %v991, %v3695
    %v4576 = vadd.f32 %v992, %v3704
    %v4577 = vadd.f32 %v993, %v3713
    %v4578 = vadd.f32 %v994, %v3722
    %v4579 = vadd.f32 %v995, %v3731
    %v4580 = vadd.f32 %v996, %v3740
    %v4581 = vadd.f32 %v997, %v3749
    %v4582 = vadd.f32 %v998, %v3758
    %v4583 = vadd.f32 %v999, %v3767
    %v4584 = vadd.f32 %v1000, %v3776
    %v4585 = vadd.f32 %v1001, %v3785
    %v4586 = vadd.f32 %v1002, %v3794
    %v4587 = vadd.f32 %v1003, %v3803
    %v4588 = vadd.f32 %v1004, %v3812
    %v4589 = vadd.f32 %v1005, %v3821
    %v4590 = vadd.f32 %v1006, %v3830
    %v4591 = vadd.f32 %v1007, %v3839
    %v4592 = vadd.f32 %v1008, %v3848
    %v4593 = vadd.f32 %v1009, %v3857
    %v4594 = vadd.f32 %v1010, %v3866
    %v4595 = vadd.f32 %v1011, %v3875
    %v4596 = vadd.f32 %v1012, %v3884
    %v4597 = vadd.f32 %v1013, %v3893
    %v4598 = vadd.f32 %v1014, %v3902
    %v4599 = vadd.f32 %v1015, %v3911
    %v4600 = vadd.f32 %v1016, %v3920
    %v4601 = vadd.f32 %v1017, %v3929
    %v4602 = vadd.f32 %v1018, %v3938
    %v4603 = vadd.f32 %v1019, %v3947
    %v4604 = vadd.f32 %v1020, %v3956
    %v4605 = vadd.f32 %v1021, %v3965
    %v4606 = vadd.f32 %v1022, %v3974
    %v4607 = vadd.f32 %v1023, %v3983
    %v4608 = vadd.f32 %v1024, %v3992
    %v4609 = vadd.f32 %v1025, %v4001
    %v4610 = vadd.f32 %v1026, %v4010
    %v4611 = vadd.f32 %v1027, %v4019
    %v4612 = vadd.f32 %v1028, %v4028
    %v4613 = vadd.f32 %v1029, %v4037
    %v4614 = vadd.f32 %v1030, %v4046
    %v4615 = vadd.f32 %v1031, %v4055
    %v4616 = vadd.f32 %v1032, %v4064
    %v4617 = vadd.f32 %v1033, %v4073
    %v4618 = vadd.f32 %v1034, %v4082
    %v4619 = vadd.f32 %v1035, %v4091
    %v4620 = vadd.f32 %v1036, %v4100
    %v4621 = vadd.f32 %v1037, %v4109
    %v4622 = vadd.f32 %v1038, %v4118
    %v4623 = vadd.f32 %v1039, %v4127
    %v4624 = vadd.f32 %v1040, %v4136
    %v4625 = vadd.f32 %v1041, %v4145
    %v4626 = vadd.f32 %v1042, %v4154
    %v4627 = vadd.f32 %v1043, %v4163
    %v4628 = vadd.f32 %v1044, %v4172
    %v4629 = vadd.f32 %v1045, %v4181
    %v4630 = vadd.f32 %v1046, %v4190
    %v4631 = vadd.f32 %v1047, %v4199
    %v4632 = vadd.f32 %v1048, %v4208
    %v4633 = vadd.f32 %v1049, %v4217
    %v4634 = vadd.f32 %v1050, %v4226
    %v4635 = vadd.f32 %v1051, %v4235
    %v4636 = vadd.f32 %v1052, %v4244
    %v4637 = vadd.f32 %v1053, %v4253
    %v4638 = vadd.f32 %v1054, %v4262
    %v4639 = vadd.f32 %v1055, %v4271
    %v4640 = vadd.f32 %v1056, %v4280
    %v4641 = vadd.f32 %v1057, %v4289
    %v4642 = vadd.f32 %v1058, %v4298
    %v4643 = vadd.f32 %v1059, %v4307
    %v4644 = vadd.f32 %v1060, %v4316
    %v4645 = vadd.f32 %v1061, %v4325
    %v4646 = vadd.f32 %v1062, %v4334
    %v4647 = vadd.f32 %v1063, %v4343
    %v4648 = vadd.f32 %v1064, %v4352
    %v4649 = vadd.f32 %v1065, %v4361
    %v4650 = vadd.f32 %v1066, %v4370
    %v4651 = vadd.f32 %v1067, %v4379
    %v4652 = vadd.f32 %v1068, %v4388
    %v4653 = vadd.f32 %v1069, %v4397
    %v4654 = vsub.f32 1.0, %v302
    %v4655 = vsub.f32 1.0, %v303
    %v4656 = vsub.f32 1.0, %v304
    %v4657 = vsub.f32 1.0, %v305
    %v4658 = vsub.f32 1.0, %v306
    %v4659 = vsub.f32 1.0, %v307
    %v4660 = vsub.f32 1.0, %v308
    %v4661 = vsub.f32 1.0, %v309
    %v4662 = vsub.f32 1.0, %v310
    %v4663 = vsub.f32 1.0, %v311
    %v4664 = vsub.f32 1.0, %v312
    %v4665 = vsub.f32 1.0, %v313
    %v4666 = vsub.f32 1.0, %v314
    %v4667 = vsub.f32 1.0, %v315
    %v4668 = vsub.f32 1.0, %v316
    %v4669 = vsub.f32 1.0, %v317
    %v4670 = vsub.f32 1.0, %v318
    %v4671 = vsub.f32 1.0, %v319
    %v4672 = vsub.f32 1.0, %v320
    %v4673 = vsub.f32 1.0, %v321
    %v4674 = vsub.f32 1.0, %v322
    %v4675 = vsub.f32 1.0, %v323
    %v4676 = vsub.f32 1.0, %v324
    %v4677 = vsub.f32 1.0, %v325
    %v4678 = vsub.f32 1.0, %v326
    %v4679 = vsub.f32 1.0, %v327
    %v4680 = vsub.f32 1.0, %v328
    %v4681 = vsub.f32 1.0, %v329
    %v4682 = vsub.f32 1.0, %v330
    %v4683 = vsub.f32 1.0, %v331
    %v4684 = vsub.f32 1.0, %v332
    %v4685 = vsub.f32 1.0, %v333
    %v4686 = vsub.f32 1.0, %v334
    %v4687 = vsub.f32 1.0, %v335
    %v4688 = vsub.f32 1.0, %v336
    %v4689 = vsub.f32 1.0, %v337
    %v4690 = vsub.f32 1.0, %v338
    %v4691 = vsub.f32 1.0, %v339
    %v4692 = vsub.f32 1.0, %v340
    %v4693 = vsub.f32 1.0, %v341
    %v4694 = vsub.f32 1.0, %v342
    %v4695 = vsub.f32 1.0, %v343
    %v4696 = vsub.f32 1.0, %v344
    %v4697 = vsub.f32 1.0, %v345
    %v4698 = vsub.f32 1.0, %v346
    %v4699 = vsub.f32 1.0, %v347
    %v4700 = vsub.f32 1.0, %v348
    %v4701 = vsub.f32 1.0, %v349
    %v4702 = vsub.f32 1.0, %v350
    %v4703 = vsub.f32 1.0, %v351
    %v4704 = vsub.f32 1.0, %v352
    %v4705 = vsub.f32 1.0, %v353
    %v4706 = vsub.f32 1.0, %v354
    %v4707 = vsub.f32 1.0, %v355
    %v4708 = vsub.f32 1.0, %v356
    %v4709 = vsub.f32 1.0, %v357
    %v4710 = vsub.f32 1.0, %v358
    %v4711 = vsub.f32 1.0, %v359
    %v4712 = vsub.f32 1.0, %v360
    %v4713 = vsub.f32 1.0, %v361
    %v4714 = vsub.f32 1.0, %v362
    %v4715 = vsub.f32 1.0, %v363
    %v4716 = vsub.f32 1.0, %v364
    %v4717 = vsub.f32 1.0, %v365
    %v4718 = vsub.f32 1.0, %v366
    %v4719 = vsub.f32 1.0, %v367
    %v4720 = vsub.f32 1.0, %v368
    %v4721 = vsub.f32 1.0, %v369
    %v4722 = vsub.f32 1.0, %v370
    %v4723 = vsub.f32 1.0, %v371
    %v4724 = vsub.f32 1.0, %v372
    %v4725 = vsub.f32 1.0, %v373
    %v4726 = vsub.f32 1.0, %v374
    %v4727 = vsub.f32 1.0, %v375
    %v4728 = vsub.f32 1.0, %v376
    %v4729 = vsub.f32 1.0, %v377
    %v4730 = vsub.f32 1.0, %v378
    %v4731 = vsub.f32 1.0, %v379
    %v4732 = vsub.f32 1.0, %v380
    %v4733 = vsub.f32 1.0, %v381
    %v4734 = vsub.f32 1.0, %v382
    %v4735 = vsub.f32 1.0, %v383
    %v4736 = vsub.f32 1.0, %v384
    %v4737 = vsub.f32 1.0, %v385
    %v4738 = vsub.f32 1.0, %v386
    %v4739 = vsub.f32 1.0, %v387
    %v4740 = vsub.f32 1.0, %v388
    %v4741 = vsub.f32 1.0, %v389
    %v4742 = vsub.f32 1.0, %v390
    %v4743 = vsub.f32 1.0, %v391
    %v4744 = vsub.f32 1.0, %v392
    %v4745 = vsub.f32 1.0, %v393
    %v4746 = vsub.f32 1.0, %v394
    %v4747 = vsub.f32 1.0, %v395
    %v4748 = vsub.f32 1.0, %v396
    %v4749 = vsub.f32 1.0, %v397
    %v4750 = vsub.f32 1.0, %v398
    %v4751 = vsub.f32 1.0, %v399
    %v4752 = vsub.f32 1.0, %v400
    %v4753 = vsub.f32 1.0, %v401
    %v4754 = vsub.f32 1.0, %v402
    %v4755 = vsub.f32 1.0, %v403
    %v4756 = vsub.f32 1.0, %v404
    %v4757 = vsub.f32 1.0, %v405
    %v4758 = vsub.f32 1.0, %v406
    %v4759 = vsub.f32 1.0, %v407
    %v4760 = vsub.f32 1.0, %v408
    %v4761 = vsub.f32 1.0, %v409
    %v4762 = vsub.f32 1.0, %v410
    %v4763 = vsub.f32 1.0, %v411
    %v4764 = vsub.f32 1.0, %v412
    %v4765 = vsub.f32 1.0, %v413
    %v4766 = vsub.f32 1.0, %v414
    %v4767 = vsub.f32 1.0, %v415
    %v4768 = vsub.f32 1.0, %v416
    %v4769 = vsub.f32 1.0, %v417
    %v4770 = vsub.f32 1.0, %v418
    %v4771 = vsub.f32 1.0, %v419
    %v4772 = vsub.f32 1.0, %v420
    %v4773 = vsub.f32 1.0, %v421
    %v4774 = vsub.f32 1.0, %v422
    %v4775 = vsub.f32 1.0, %v423
    %v4776 = vsub.f32 1.0, %v424
    %v4777 = vsub.f32 1.0, %v425
    %v4778 = vsub.f32 1.0, %v426
    %v4779 = vsub.f32 1.0, %v427
    %v4780 = vsub.f32 1.0, %v428
    %v4781 = vsub.f32 1.0, %v429
    %v4782 = vsub.f32 1.0, %v430
    %v4783 = vsub.f32 1.0, %v431
    %v4784 = vsub.f32 1.0, %v432
    %v4785 = vsub.f32 1.0, %v433
    %v4786 = vsub.f32 1.0, %v434
    %v4787 = vsub.f32 1.0, %v435
    %v4788 = vsub.f32 1.0, %v436
    %v4789 = vsub.f32 1.0, %v437
    %v4790 = vsub.f32 1.0, %v438
    %v4791 = vsub.f32 1.0, %v439
    %v4792 = vsub.f32 1.0, %v440
    %v4793 = vsub.f32 1.0, %v441
    %v4794 = vsub.f32 1.0, %v442
    %v4795 = vsub.f32 1.0, %v443
    %v4796 = vsub.f32 1.0, %v444
    %v4797 = vsub.f32 1.0, %v445
    %v4798 = vsub.f32 1.0, %v446
    %v4799 = vsub.f32 1.0, %v447
    %v4800 = vsub.f32 1.0, %v448
    %v4801 = vsub.f32 1.0, %v449
    %v4802 = vsub.f32 1.0, %v450
    %v4803 = vsub.f32 1.0, %v451
    %v4804 = vsub.f32 1.0, %v452
    %v4805 = vsub.f32 1.0, %v453
    %v4806 = vsub.f32 1.0, %v454
    %v4807 = vsub.f32 1.0, %v455
    %v4808 = vsub.f32 1.0, %v456
    %v4809 = vsub.f32 1.0, %v457
    %v4810 = vsub.f32 1.0, %v458
    %v4811 = vsub.f32 1.0, %v459
    %v4812 = vsub.f32 1.0, %v460
    %v4813 = vsub.f32 1.0, %v461
    %v4814 = vsub.f32 1.0, %v462
    %v4815 = vsub.f32 1.0, %v463
    %v4816 = vsub.f32 1.0, %v464
    %v4817 = vsub.f32 1.0, %v465
    %v4818 = vsub.f32 1.0, %v466
    %v4819 = vsub.f32 1.0, %v467
    %v4820 = vsub.f32 1.0, %v468
    %v4821 = vsub.f32 1.0, %v469
    %v4822 = vsub.f32 1.0, %v470
    %v4823 = vsub.f32 1.0, %v471
    %v4824 = vsub.f32 1.0, %v472
    %v4825 = vsub.f32 1.0, %v473
    %v4826 = vsub.f32 1.0, %v474
    %v4827 = vsub.f32 1.0, %v475
    %v4828 = vsub.f32 1.0, %v476
    %v4829 = vsub.f32 1.0, %v477
    %v4830 = vsub.f32 1.0, %v478
    %v4831 = vsub.f32 1.0, %v479
    %v4832 = vsub.f32 1.0, %v480
    %v4833 = vsub.f32 1.0, %v481
    %v4834 = vsub.f32 1.0, %v482
    %v4835 = vsub.f32 1.0, %v483
    %v4836 = vsub.f32 1.0, %v484
    %v4837 = vsub.f32 1.0, %v485
    %v4838 = vsub.f32 1.0, %v486
    %v4839 = vsub.f32 1.0, %v487
    %v4840 = vsub.f32 1.0, %v488
    %v4841 = vsub.f32 1.0, %v489
    %v4842 = vsub.f32 1.0, %v490
    %v4843 = vsub.f32 1.0, %v491
    %v4844 = vsub.f32 1.0, %v492
    %v4845 = vsub.f32 1.0, %v493
    %v4846 = vsub.f32 1.0, %v494
    %v4847 = vsub.f32 1.0, %v495
    %v4848 = vsub.f32 1.0, %v496
    %v4849 = vsub.f32 1.0, %v497
    %v4850 = vsub.f32 1.0, %v498
    %v4851 = vsub.f32 1.0, %v499
    %v4852 = vsub.f32 1.0, %v500
    %v4853 = vsub.f32 1.0, %v501
    %v4854 = vsub.f32 1.0, %v502
    %v4855 = vsub.f32 1.0, %v503
    %v4856 = vsub.f32 1.0, %v504
    %v4857 = vsub.f32 1.0, %v505
    %v4858 = vsub.f32 1.0, %v506
    %v4859 = vsub.f32 1.0, %v507
    %v4860 = vsub.f32 1.0, %v508
    %v4861 = vsub.f32 1.0, %v509
    %v4862 = vsub.f32 1.0, %v510
    %v4863 = vsub.f32 1.0, %v511
    %v4864 = vsub.f32 1.0, %v512
    %v4865 = vsub.f32 1.0, %v513
    %v4866 = vsub.f32 1.0, %v514
    %v4867 = vsub.f32 1.0, %v515
    %v4868 = vsub.f32 1.0, %v516
    %v4869 = vsub.f32 1.0, %v517
    %v4870 = vsub.f32 1.0, %v518
    %v4871 = vsub.f32 1.0, %v519
    %v4872 = vsub.f32 1.0, %v520
    %v4873 = vsub.f32 1.0, %v521
    %v4874 = vsub.f32 1.0, %v522
    %v4875 = vsub.f32 1.0, %v523
    %v4876 = vsub.f32 1.0, %v524
    %v4877 = vsub.f32 1.0, %v525
    %v4878 = vsub.f32 1.0, %v526
    %v4879 = vsub.f32 1.0, %v527
    %v4880 = vsub.f32 1.0, %v528
    %v4881 = vsub.f32 1.0, %v529
    %v4882 = vsub.f32 1.0, %v530
    %v4883 = vsub.f32 1.0, %v531
    %v4884 = vsub.f32 1.0, %v532
    %v4885 = vsub.f32 1.0, %v533
    %v4886 = vsub.f32 1.0, %v534
    %v4887 = vsub.f32 1.0, %v535
    %v4888 = vsub.f32 1.0, %v536
    %v4889 = vsub.f32 1.0, %v537
    %v4890 = vsub.f32 1.0, %v538
    %v4891 = vsub.f32 1.0, %v539
    %v4892 = vsub.f32 1.0, %v540
    %v4893 = vsub.f32 1.0, %v541
    %v4894 = vsub.f32 1.0, %v542
    %v4895 = vsub.f32 1.0, %v543
    %v4896 = vsub.f32 1.0, %v544
    %v4897 = vsub.f32 1.0, %v545
    %v4898 = vsub.f32 1.0, %v546
    %v4899 = vsub.f32 1.0, %v547
    %v4900 = vsub.f32 1.0, %v548
    %v4901 = vsub.f32 1.0, %v549
    %v4902 = vsub.f32 1.0, %v550
    %v4903 = vsub.f32 1.0, %v551
    %v4904 = vsub.f32 1.0, %v552
    %v4905 = vsub.f32 1.0, %v553
    %v4906 = vsub.f32 1.0, %v554
    %v4907 = vsub.f32 1.0, %v555
    %v4908 = vsub.f32 1.0, %v556
    %v4909 = vsub.f32 1.0, %v557
    %v4910 = vmul.f32 %v4654, %v46
    %v4911 = vmul.f32 %v4655, %v47
    %v4912 = vmul.f32 %v4656, %v48
    %v4913 = vmul.f32 %v4657, %v49
    %v4914 = vmul.f32 %v4658, %v50
    %v4915 = vmul.f32 %v4659, %v51
    %v4916 = vmul.f32 %v4660, %v52
    %v4917 = vmul.f32 %v4661, %v53
    %v4918 = vmul.f32 %v4662, %v54
    %v4919 = vmul.f32 %v4663, %v55
    %v4920 = vmul.f32 %v4664, %v56
    %v4921 = vmul.f32 %v4665, %v57
    %v4922 = vmul.f32 %v4666, %v58
    %v4923 = vmul.f32 %v4667, %v59
    %v4924 = vmul.f32 %v4668, %v60
    %v4925 = vmul.f32 %v4669, %v61
    %v4926 = vmul.f32 %v4670, %v62
    %v4927 = vmul.f32 %v4671, %v63
    %v4928 = vmul.f32 %v4672, %v64
    %v4929 = vmul.f32 %v4673, %v65
    %v4930 = vmul.f32 %v4674, %v66
    %v4931 = vmul.f32 %v4675, %v67
    %v4932 = vmul.f32 %v4676, %v68
    %v4933 = vmul.f32 %v4677, %v69
    %v4934 = vmul.f32 %v4678, %v70
    %v4935 = vmul.f32 %v4679, %v71
    %v4936 = vmul.f32 %v4680, %v72
    %v4937 = vmul.f32 %v4681, %v73
    %v4938 = vmul.f32 %v4682, %v74
    %v4939 = vmul.f32 %v4683, %v75
    %v4940 = vmul.f32 %v4684, %v76
    %v4941 = vmul.f32 %v4685, %v77
    %v4942 = vmul.f32 %v4686, %v78
    %v4943 = vmul.f32 %v4687, %v79
    %v4944 = vmul.f32 %v4688, %v80
    %v4945 = vmul.f32 %v4689, %v81
    %v4946 = vmul.f32 %v4690, %v82
    %v4947 = vmul.f32 %v4691, %v83
    %v4948 = vmul.f32 %v4692, %v84
    %v4949 = vmul.f32 %v4693, %v85
    %v4950 = vmul.f32 %v4694, %v86
    %v4951 = vmul.f32 %v4695, %v87
    %v4952 = vmul.f32 %v4696, %v88
    %v4953 = vmul.f32 %v4697, %v89
    %v4954 = vmul.f32 %v4698, %v90
    %v4955 = vmul.f32 %v4699, %v91
    %v4956 = vmul.f32 %v4700, %v92
    %v4957 = vmul.f32 %v4701, %v93
    %v4958 = vmul.f32 %v4702, %v94
    %v4959 = vmul.f32 %v4703, %v95
    %v4960 = vmul.f32 %v4704, %v96
    %v4961 = vmul.f32 %v4705, %v97
    %v4962 = vmul.f32 %v4706, %v98
    %v4963 = vmul.f32 %v4707, %v99
    %v4964 = vmul.f32 %v4708, %v100
    %v4965 = vmul.f32 %v4709, %v101
    %v4966 = vmul.f32 %v4710, %v102
    %v4967 = vmul.f32 %v4711, %v103
    %v4968 = vmul.f32 %v4712, %v104
    %v4969 = vmul.f32 %v4713, %v105
    %v4970 = vmul.f32 %v4714, %v106
    %v4971 = vmul.f32 %v4715, %v107
    %v4972 = vmul.f32 %v4716, %v108
    %v4973 = vmul.f32 %v4717, %v109
    %v4974 = vmul.f32 %v4718, %v110
    %v4975 = vmul.f32 %v4719, %v111
    %v4976 = vmul.f32 %v4720, %v112
    %v4977 = vmul.f32 %v4721, %v113
    %v4978 = vmul.f32 %v4722, %v114
    %v4979 = vmul.f32 %v4723, %v115
    %v4980 = vmul.f32 %v4724, %v116
    %v4981 = vmul.f32 %v4725, %v117
    %v4982 = vmul.f32 %v4726, %v118
    %v4983 = vmul.f32 %v4727, %v119
    %v4984 = vmul.f32 %v4728, %v120
    %v4985 = vmul.f32 %v4729, %v121
    %v4986 = vmul.f32 %v4730, %v122
    %v4987 = vmul.f32 %v4731, %v123
    %v4988 = vmul.f32 %v4732, %v124
    %v4989 = vmul.f32 %v4733, %v125
    %v4990 = vmul.f32 %v4734, %v126
    %v4991 = vmul.f32 %v4735, %v127
    %v4992 = vmul.f32 %v4736, %v128
    %v4993 = vmul.f32 %v4737, %v129
    %v4994 = vmul.f32 %v4738, %v130
    %v4995 = vmul.f32 %v4739, %v131
    %v4996 = vmul.f32 %v4740, %v132
    %v4997 = vmul.f32 %v4741, %v133
    %v4998 = vmul.f32 %v4742, %v134
    %v4999 = vmul.f32 %v4743, %v135
    %v5000 = vmul.f32 %v4744, %v136
    %v5001 = vmul.f32 %v4745, %v137
    %v5002 = vmul.f32 %v4746, %v138
    %v5003 = vmul.f32 %v4747, %v139
    %v5004 = vmul.f32 %v4748, %v140
    %v5005 = vmul.f32 %v4749, %v141
    %v5006 = vmul.f32 %v4750, %v142
    %v5007 = vmul.f32 %v4751, %v143
    %v5008 = vmul.f32 %v4752, %v144
    %v5009 = vmul.f32 %v4753, %v145
    %v5010 = vmul.f32 %v4754, %v146
    %v5011 = vmul.f32 %v4755, %v147
    %v5012 = vmul.f32 %v4756, %v148
    %v5013 = vmul.f32 %v4757, %v149
    %v5014 = vmul.f32 %v4758, %v150
    %v5015 = vmul.f32 %v4759, %v151
    %v5016 = vmul.f32 %v4760, %v152
    %v5017 = vmul.f32 %v4761, %v153
    %v5018 = vmul.f32 %v4762, %v154
    %v5019 = vmul.f32 %v4763, %v155
    %v5020 = vmul.f32 %v4764, %v156
    %v5021 = vmul.f32 %v4765, %v157
    %v5022 = vmul.f32 %v4766, %v158
    %v5023 = vmul.f32 %v4767, %v159
    %v5024 = vmul.f32 %v4768, %v160
    %v5025 = vmul.f32 %v4769, %v161
    %v5026 = vmul.f32 %v4770, %v162
    %v5027 = vmul.f32 %v4771, %v163
    %v5028 = vmul.f32 %v4772, %v164
    %v5029 = vmul.f32 %v4773, %v165
    %v5030 = vmul.f32 %v4774, %v166
    %v5031 = vmul.f32 %v4775, %v167
    %v5032 = vmul.f32 %v4776, %v168
    %v5033 = vmul.f32 %v4777, %v169
    %v5034 = vmul.f32 %v4778, %v170
    %v5035 = vmul.f32 %v4779, %v171
    %v5036 = vmul.f32 %v4780, %v172
    %v5037 = vmul.f32 %v4781, %v173
    %v5038 = vmul.f32 %v4782, %v174
    %v5039 = vmul.f32 %v4783, %v175
    %v5040 = vmul.f32 %v4784, %v176
    %v5041 = vmul.f32 %v4785, %v177
    %v5042 = vmul.f32 %v4786, %v178
    %v5043 = vmul.f32 %v4787, %v179
    %v5044 = vmul.f32 %v4788, %v180
    %v5045 = vmul.f32 %v4789, %v181
    %v5046 = vmul.f32 %v4790, %v182
    %v5047 = vmul.f32 %v4791, %v183
    %v5048 = vmul.f32 %v4792, %v184
    %v5049 = vmul.f32 %v4793, %v185
    %v5050 = vmul.f32 %v4794, %v186
    %v5051 = vmul.f32 %v4795, %v187
    %v5052 = vmul.f32 %v4796, %v188
    %v5053 = vmul.f32 %v4797, %v189
    %v5054 = vmul.f32 %v4798, %v190
    %v5055 = vmul.f32 %v4799, %v191
    %v5056 = vmul.f32 %v4800, %v192
    %v5057 = vmul.f32 %v4801, %v193
    %v5058 = vmul.f32 %v4802, %v194
    %v5059 = vmul.f32 %v4803, %v195
    %v5060 = vmul.f32 %v4804, %v196
    %v5061 = vmul.f32 %v4805, %v197
    %v5062 = vmul.f32 %v4806, %v198
    %v5063 = vmul.f32 %v4807, %v199
    %v5064 = vmul.f32 %v4808, %v200
    %v5065 = vmul.f32 %v4809, %v201
    %v5066 = vmul.f32 %v4810, %v202
    %v5067 = vmul.f32 %v4811, %v203
    %v5068 = vmul.f32 %v4812, %v204
    %v5069 = vmul.f32 %v4813, %v205
    %v5070 = vmul.f32 %v4814, %v206
    %v5071 = vmul.f32 %v4815, %v207
    %v5072 = vmul.f32 %v4816, %v208
    %v5073 = vmul.f32 %v4817, %v209
    %v5074 = vmul.f32 %v4818, %v210
    %v5075 = vmul.f32 %v4819, %v211
    %v5076 = vmul.f32 %v4820, %v212
    %v5077 = vmul.f32 %v4821, %v213
    %v5078 = vmul.f32 %v4822, %v214
    %v5079 = vmul.f32 %v4823, %v215
    %v5080 = vmul.f32 %v4824, %v216
    %v5081 = vmul.f32 %v4825, %v217
    %v5082 = vmul.f32 %v4826, %v218
    %v5083 = vmul.f32 %v4827, %v219
    %v5084 = vmul.f32 %v4828, %v220
    %v5085 = vmul.f32 %v4829, %v221
    %v5086 = vmul.f32 %v4830, %v222
    %v5087 = vmul.f32 %v4831, %v223
    %v5088 = vmul.f32 %v4832, %v224
    %v5089 = vmul.f32 %v4833, %v225
    %v5090 = vmul.f32 %v4834, %v226
    %v5091 = vmul.f32 %v4835, %v227
    %v5092 = vmul.f32 %v4836, %v228
    %v5093 = vmul.f32 %v4837, %v229
    %v5094 = vmul.f32 %v4838, %v230
    %v5095 = vmul.f32 %v4839, %v231
    %v5096 = vmul.f32 %v4840, %v232
    %v5097 = vmul.f32 %v4841, %v233
    %v5098 = vmul.f32 %v4842, %v234
    %v5099 = vmul.f32 %v4843, %v235
    %v5100 = vmul.f32 %v4844, %v236
    %v5101 = vmul.f32 %v4845, %v237
    %v5102 = vmul.f32 %v4846, %v238
    %v5103 = vmul.f32 %v4847, %v239
    %v5104 = vmul.f32 %v4848, %v240
    %v5105 = vmul.f32 %v4849, %v241
    %v5106 = vmul.f32 %v4850, %v242
    %v5107 = vmul.f32 %v4851, %v243
    %v5108 = vmul.f32 %v4852, %v244
    %v5109 = vmul.f32 %v4853, %v245
    %v5110 = vmul.f32 %v4854, %v246
    %v5111 = vmul.f32 %v4855, %v247
    %v5112 = vmul.f32 %v4856, %v248
    %v5113 = vmul.f32 %v4857, %v249
    %v5114 = vmul.f32 %v4858, %v250
    %v5115 = vmul.f32 %v4859, %v251
    %v5116 = vmul.f32 %v4860, %v252
    %v5117 = vmul.f32 %v4861, %v253
    %v5118 = vmul.f32 %v4862, %v254
    %v5119 = vmul.f32 %v4863, %v255
    %v5120 = vmul.f32 %v4864, %v256
    %v5121 = vmul.f32 %v4865, %v257
    %v5122 = vmul.f32 %v4866, %v258
    %v5123 = vmul.f32 %v4867, %v259
    %v5124 = vmul.f32 %v4868, %v260
    %v5125 = vmul.f32 %v4869, %v261
    %v5126 = vmul.f32 %v4870, %v262
    %v5127 = vmul.f32 %v4871, %v263
    %v5128 = vmul.f32 %v4872, %v264
    %v5129 = vmul.f32 %v4873, %v265
    %v5130 = vmul.f32 %v4874, %v266
    %v5131 = vmul.f32 %v4875, %v267
    %v5132 = vmul.f32 %v4876, %v268
    %v5133 = vmul.f32 %v4877, %v269
    %v5134 = vmul.f32 %v4878, %v270
    %v5135 = vmul.f32 %v4879, %v271
    %v5136 = vmul.f32 %v4880, %v272
    %v5137 = vmul.f32 %v4881, %v273
    %v5138 = vmul.f32 %v4882, %v274
    %v5139 = vmul.f32 %v4883, %v275
    %v5140 = vmul.f32 %v4884, %v276
    %v5141 = vmul.f32 %v4885, %v277
    %v5142 = vmul.f32 %v4886, %v278
    %v5143 = vmul.f32 %v4887, %v279
    %v5144 = vmul.f32 %v4888, %v280
    %v5145 = vmul.f32 %v4889, %v281
    %v5146 = vmul.f32 %v4890, %v282
    %v5147 = vmul.f32 %v4891, %v283
    %v5148 = vmul.f32 %v4892, %v284
    %v5149 = vmul.f32 %v4893, %v285
    %v5150 = vmul.f32 %v4894, %v286
    %v5151 = vmul.f32 %v4895, %v287
    %v5152 = vmul.f32 %v4896, %v288
    %v5153 = vmul.f32 %v4897, %v289
    %v5154 = vmul.f32 %v4898, %v290
    %v5155 = vmul.f32 %v4899, %v291
    %v5156 = vmul.f32 %v4900, %v292
    %v5157 = vmul.f32 %v4901, %v293
    %v5158 = vmul.f32 %v4902, %v294
    %v5159 = vmul.f32 %v4903, %v295
    %v5160 = vmul.f32 %v4904, %v296
    %v5161 = vmul.f32 %v4905, %v297
    %v5162 = vmul.f32 %v4906, %v298
    %v5163 = vmul.f32 %v4907, %v299
    %v5164 = vmul.f32 %v4908, %v300
    %v5165 = vmul.f32 %v4909, %v301
    %v5166 = vadd.f32 %v4910, %v4398
    %v5167 = vadd.f32 %v4911, %v4399
    %v5168 = vadd.f32 %v4912, %v4400
    %v5169 = vadd.f32 %v4913, %v4401
    %v5170 = vadd.f32 %v4914, %v4402
    %v5171 = vadd.f32 %v4915, %v4403
    %v5172 = vadd.f32 %v4916, %v4404
    %v5173 = vadd.f32 %v4917, %v4405
    %v5174 = vadd.f32 %v4918, %v4406
    %v5175 = vadd.f32 %v4919, %v4407
    %v5176 = vadd.f32 %v4920, %v4408
    %v5177 = vadd.f32 %v4921, %v4409
    %v5178 = vadd.f32 %v4922, %v4410
    %v5179 = vadd.f32 %v4923, %v4411
    %v5180 = vadd.f32 %v4924, %v4412
    %v5181 = vadd.f32 %v4925, %v4413
    %v5182 = vadd.f32 %v4926, %v4414
    %v5183 = vadd.f32 %v4927, %v4415
    %v5184 = vadd.f32 %v4928, %v4416
    %v5185 = vadd.f32 %v4929, %v4417
    %v5186 = vadd.f32 %v4930, %v4418
    %v5187 = vadd.f32 %v4931, %v4419
    %v5188 = vadd.f32 %v4932, %v4420
    %v5189 = vadd.f32 %v4933, %v4421
    %v5190 = vadd.f32 %v4934, %v4422
    %v5191 = vadd.f32 %v4935, %v4423
    %v5192 = vadd.f32 %v4936, %v4424
    %v5193 = vadd.f32 %v4937, %v4425
    %v5194 = vadd.f32 %v4938, %v4426
    %v5195 = vadd.f32 %v4939, %v4427
    %v5196 = vadd.f32 %v4940, %v4428
    %v5197 = vadd.f32 %v4941, %v4429
    %v5198 = vadd.f32 %v4942, %v4430
    %v5199 = vadd.f32 %v4943, %v4431
    %v5200 = vadd.f32 %v4944, %v4432
    %v5201 = vadd.f32 %v4945, %v4433
    %v5202 = vadd.f32 %v4946, %v4434
    %v5203 = vadd.f32 %v4947, %v4435
    %v5204 = vadd.f32 %v4948, %v4436
    %v5205 = vadd.f32 %v4949, %v4437
    %v5206 = vadd.f32 %v4950, %v4438
    %v5207 = vadd.f32 %v4951, %v4439
    %v5208 = vadd.f32 %v4952, %v4440
    %v5209 = vadd.f32 %v4953, %v4441
    %v5210 = vadd.f32 %v4954, %v4442
    %v5211 = vadd.f32 %v4955, %v4443
    %v5212 = vadd.f32 %v4956, %v4444
    %v5213 = vadd.f32 %v4957, %v4445
    %v5214 = vadd.f32 %v4958, %v4446
    %v5215 = vadd.f32 %v4959, %v4447
    %v5216 = vadd.f32 %v4960, %v4448
    %v5217 = vadd.f32 %v4961, %v4449
    %v5218 = vadd.f32 %v4962, %v4450
    %v5219 = vadd.f32 %v4963, %v4451
    %v5220 = vadd.f32 %v4964, %v4452
    %v5221 = vadd.f32 %v4965, %v4453
    %v5222 = vadd.f32 %v4966, %v4454
    %v5223 = vadd.f32 %v4967, %v4455
    %v5224 = vadd.f32 %v4968, %v4456
    %v5225 = vadd.f32 %v4969, %v4457
    %v5226 = vadd.f32 %v4970, %v4458
    %v5227 = vadd.f32 %v4971, %v4459
    %v5228 = vadd.f32 %v4972, %v4460
    %v5229 = vadd.f32 %v4973, %v4461
    %v5230 = vadd.f32 %v4974, %v4462
    %v5231 = vadd.f32 %v4975, %v4463
    %v5232 = vadd.f32 %v4976, %v4464
    %v5233 = vadd.f32 %v4977, %v4465
    %v5234 = vadd.f32 %v4978, %v4466
    %v5235 = vadd.f32 %v4979, %v4467
    %v5236 = vadd.f32 %v4980, %v4468
    %v5237 = vadd.f32 %v4981, %v4469
    %v5238 = vadd.f32 %v4982, %v4470
    %v5239 = vadd.f32 %v4983, %v4471
    %v5240 = vadd.f32 %v4984, %v4472
    %v5241 = vadd.f32 %v4985, %v4473
    %v5242 = vadd.f32 %v4986, %v4474
    %v5243 = vadd.f32 %v4987, %v4475
    %v5244 = vadd.f32 %v4988, %v4476
    %v5245 = vadd.f32 %v4989, %v4477
    %v5246 = vadd.f32 %v4990, %v4478
    %v5247 = vadd.f32 %v4991, %v4479
    %v5248 = vadd.f32 %v4992, %v4480
    %v5249 = vadd.f32 %v4993, %v4481
    %v5250 = vadd.f32 %v4994, %v4482
    %v5251 = vadd.f32 %v4995, %v4483
    %v5252 = vadd.f32 %v4996, %v4484
    %v5253 = vadd.f32 %v4997, %v4485
    %v5254 = vadd.f32 %v4998, %v4486
    %v5255 = vadd.f32 %v4999, %v4487
    %v5256 = vadd.f32 %v5000, %v4488
    %v5257 = vadd.f32 %v5001, %v4489
    %v5258 = vadd.f32 %v5002, %v4490
    %v5259 = vadd.f32 %v5003, %v4491
    %v5260 = vadd.f32 %v5004, %v4492
    %v5261 = vadd.f32 %v5005, %v4493
    %v5262 = vadd.f32 %v5006, %v4494
    %v5263 = vadd.f32 %v5007, %v4495
    %v5264 = vadd.f32 %v5008, %v4496
    %v5265 = vadd.f32 %v5009, %v4497
    %v5266 = vadd.f32 %v5010, %v4498
    %v5267 = vadd.f32 %v5011, %v4499
    %v5268 = vadd.f32 %v5012, %v4500
    %v5269 = vadd.f32 %v5013, %v4501
    %v5270 = vadd.f32 %v5014, %v4502
    %v5271 = vadd.f32 %v5015, %v4503
    %v5272 = vadd.f32 %v5016, %v4504
    %v5273 = vadd.f32 %v5017, %v4505
    %v5274 = vadd.f32 %v5018, %v4506
    %v5275 = vadd.f32 %v5019, %v4507
    %v5276 = vadd.f32 %v5020, %v4508
    %v5277 = vadd.f32 %v5021, %v4509
    %v5278 = vadd.f32 %v5022, %v4510
    %v5279 = vadd.f32 %v5023, %v4511
    %v5280 = vadd.f32 %v5024, %v4512
    %v5281 = vadd.f32 %v5025, %v4513
    %v5282 = vadd.f32 %v5026, %v4514
    %v5283 = vadd.f32 %v5027, %v4515
    %v5284 = vadd.f32 %v5028, %v4516
    %v5285 = vadd.f32 %v5029, %v4517
    %v5286 = vadd.f32 %v5030, %v4518
    %v5287 = vadd.f32 %v5031, %v4519
    %v5288 = vadd.f32 %v5032, %v4520
    %v5289 = vadd.f32 %v5033, %v4521
    %v5290 = vadd.f32 %v5034, %v4522
    %v5291 = vadd.f32 %v5035, %v4523
    %v5292 = vadd.f32 %v5036, %v4524
    %v5293 = vadd.f32 %v5037, %v4525
    %v5294 = vadd.f32 %v5038, %v4526
    %v5295 = vadd.f32 %v5039, %v4527
    %v5296 = vadd.f32 %v5040, %v4528
    %v5297 = vadd.f32 %v5041, %v4529
    %v5298 = vadd.f32 %v5042, %v4530
    %v5299 = vadd.f32 %v5043, %v4531
    %v5300 = vadd.f32 %v5044, %v4532
    %v5301 = vadd.f32 %v5045, %v4533
    %v5302 = vadd.f32 %v5046, %v4534
    %v5303 = vadd.f32 %v5047, %v4535
    %v5304 = vadd.f32 %v5048, %v4536
    %v5305 = vadd.f32 %v5049, %v4537
    %v5306 = vadd.f32 %v5050, %v4538
    %v5307 = vadd.f32 %v5051, %v4539
    %v5308 = vadd.f32 %v5052, %v4540
    %v5309 = vadd.f32 %v5053, %v4541
    %v5310 = vadd.f32 %v5054, %v4542
    %v5311 = vadd.f32 %v5055, %v4543
    %v5312 = vadd.f32 %v5056, %v4544
    %v5313 = vadd.f32 %v5057, %v4545
    %v5314 = vadd.f32 %v5058, %v4546
    %v5315 = vadd.f32 %v5059, %v4547
    %v5316 = vadd.f32 %v5060, %v4548
    %v5317 = vadd.f32 %v5061, %v4549
    %v5318 = vadd.f32 %v5062, %v4550
    %v5319 = vadd.f32 %v5063, %v4551
    %v5320 = vadd.f32 %v5064, %v4552
    %v5321 = vadd.f32 %v5065, %v4553
    %v5322 = vadd.f32 %v5066, %v4554
    %v5323 = vadd.f32 %v5067, %v4555
    %v5324 = vadd.f32 %v5068, %v4556
    %v5325 = vadd.f32 %v5069, %v4557
    %v5326 = vadd.f32 %v5070, %v4558
    %v5327 = vadd.f32 %v5071, %v4559
    %v5328 = vadd.f32 %v5072, %v4560
    %v5329 = vadd.f32 %v5073, %v4561
    %v5330 = vadd.f32 %v5074, %v4562
    %v5331 = vadd.f32 %v5075, %v4563
    %v5332 = vadd.f32 %v5076, %v4564
    %v5333 = vadd.f32 %v5077, %v4565
    %v5334 = vadd.f32 %v5078, %v4566
    %v5335 = vadd.f32 %v5079, %v4567
    %v5336 = vadd.f32 %v5080, %v4568
    %v5337 = vadd.f32 %v5081, %v4569
    %v5338 = vadd.f32 %v5082, %v4570
    %v5339 = vadd.f32 %v5083, %v4571
    %v5340 = vadd.f32 %v5084, %v4572
    %v5341 = vadd.f32 %v5085, %v4573
    %v5342 = vadd.f32 %v5086, %v4574
    %v5343 = vadd.f32 %v5087, %v4575
    %v5344 = vadd.f32 %v5088, %v4576
    %v5345 = vadd.f32 %v5089, %v4577
    %v5346 = vadd.f32 %v5090, %v4578
    %v5347 = vadd.f32 %v5091, %v4579
    %v5348 = vadd.f32 %v5092, %v4580
    %v5349 = vadd.f32 %v5093, %v4581
    %v5350 = vadd.f32 %v5094, %v4582
    %v5351 = vadd.f32 %v5095, %v4583
    %v5352 = vadd.f32 %v5096, %v4584
    %v5353 = vadd.f32 %v5097, %v4585
    %v5354 = vadd.f32 %v5098, %v4586
    %v5355 = vadd.f32 %v5099, %v4587
    %v5356 = vadd.f32 %v5100, %v4588
    %v5357 = vadd.f32 %v5101, %v4589
    %v5358 = vadd.f32 %v5102, %v4590
    %v5359 = vadd.f32 %v5103, %v4591
    %v5360 = vadd.f32 %v5104, %v4592
    %v5361 = vadd.f32 %v5105, %v4593
    %v5362 = vadd.f32 %v5106, %v4594
    %v5363 = vadd.f32 %v5107, %v4595
    %v5364 = vadd.f32 %v5108, %v4596
    %v5365 = vadd.f32 %v5109, %v4597
    %v5366 = vadd.f32 %v5110, %v4598
    %v5367 = vadd.f32 %v5111, %v4599
    %v5368 = vadd.f32 %v5112, %v4600
    %v5369 = vadd.f32 %v5113, %v4601
    %v5370 = vadd.f32 %v5114, %v4602
    %v5371 = vadd.f32 %v5115, %v4603
    %v5372 = vadd.f32 %v5116, %v4604
    %v5373 = vadd.f32 %v5117, %v4605
    %v5374 = vadd.f32 %v5118, %v4606
    %v5375 = vadd.f32 %v5119, %v4607
    %v5376 = vadd.f32 %v5120, %v4608
    %v5377 = vadd.f32 %v5121, %v4609
    %v5378 = vadd.f32 %v5122, %v4610
    %v5379 = vadd.f32 %v5123, %v4611
    %v5380 = vadd.f32 %v5124, %v4612
    %v5381 = vadd.f32 %v5125, %v4613
    %v5382 = vadd.f32 %v5126, %v4614
    %v5383 = vadd.f32 %v5127, %v4615
    %v5384 = vadd.f32 %v5128, %v4616
    %v5385 = vadd.f32 %v5129, %v4617
    %v5386 = vadd.f32 %v5130, %v4618
    %v5387 = vadd.f32 %v5131, %v4619
    %v5388 = vadd.f32 %v5132, %v4620
    %v5389 = vadd.f32 %v5133, %v4621
    %v5390 = vadd.f32 %v5134, %v4622
    %v5391 = vadd.f32 %v5135, %v4623
    %v5392 = vadd.f32 %v5136, %v4624
    %v5393 = vadd.f32 %v5137, %v4625
    %v5394 = vadd.f32 %v5138, %v4626
    %v5395 = vadd.f32 %v5139, %v4627
    %v5396 = vadd.f32 %v5140, %v4628
    %v5397 = vadd.f32 %v5141, %v4629
    %v5398 = vadd.f32 %v5142, %v4630
    %v5399 = vadd.f32 %v5143, %v4631
    %v5400 = vadd.f32 %v5144, %v4632
    %v5401 = vadd.f32 %v5145, %v4633
    %v5402 = vadd.f32 %v5146, %v4634
    %v5403 = vadd.f32 %v5147, %v4635
    %v5404 = vadd.f32 %v5148, %v4636
    %v5405 = vadd.f32 %v5149, %v4637
    %v5406 = vadd.f32 %v5150, %v4638
    %v5407 = vadd.f32 %v5151, %v4639
    %v5408 = vadd.f32 %v5152, %v4640
    %v5409 = vadd.f32 %v5153, %v4641
    %v5410 = vadd.f32 %v5154, %v4642
    %v5411 = vadd.f32 %v5155, %v4643
    %v5412 = vadd.f32 %v5156, %v4644
    %v5413 = vadd.f32 %v5157, %v4645
    %v5414 = vadd.f32 %v5158, %v4646
    %v5415 = vadd.f32 %v5159, %v4647
    %v5416 = vadd.f32 %v5160, %v4648
    %v5417 = vadd.f32 %v5161, %v4649
    %v5418 = vadd.f32 %v5162, %v4650
    %v5419 = vadd.f32 %v5163, %v4651
    %v5420 = vadd.f32 %v5164, %v4652
    %v5421 = vadd.f32 %v5165, %v4653
    %v5422 = vsub.f32 0.0, %v5166
    %v5423 = vsub.f32 0.0, %v5167
    %v5424 = vsub.f32 0.0, %v5168
    %v5425 = vsub.f32 0.0, %v5169
    %v5426 = vsub.f32 0.0, %v5170
    %v5427 = vsub.f32 0.0, %v5171
    %v5428 = vsub.f32 0.0, %v5172
    %v5429 = vsub.f32 0.0, %v5173
    %v5430 = vsub.f32 0.0, %v5174
    %v5431 = vsub.f32 0.0, %v5175
    %v5432 = vsub.f32 0.0, %v5176
    %v5433 = vsub.f32 0.0, %v5177
    %v5434 = vsub.f32 0.0, %v5178
    %v5435 = vsub.f32 0.0, %v5179
    %v5436 = vsub.f32 0.0, %v5180
    %v5437 = vsub.f32 0.0, %v5181
    %v5438 = vsub.f32 0.0, %v5182
    %v5439 = vsub.f32 0.0, %v5183
    %v5440 = vsub.f32 0.0, %v5184
    %v5441 = vsub.f32 0.0, %v5185
    %v5442 = vsub.f32 0.0, %v5186
    %v5443 = vsub.f32 0.0, %v5187
    %v5444 = vsub.f32 0.0, %v5188
    %v5445 = vsub.f32 0.0, %v5189
    %v5446 = vsub.f32 0.0, %v5190
    %v5447 = vsub.f32 0.0, %v5191
    %v5448 = vsub.f32 0.0, %v5192
    %v5449 = vsub.f32 0.0, %v5193
    %v5450 = vsub.f32 0.0, %v5194
    %v5451 = vsub.f32 0.0, %v5195
    %v5452 = vsub.f32 0.0, %v5196
    %v5453 = vsub.f32 0.0, %v5197
    %v5454 = vsub.f32 0.0, %v5198
    %v5455 = vsub.f32 0.0, %v5199
    %v5456 = vsub.f32 0.0, %v5200
    %v5457 = vsub.f32 0.0, %v5201
    %v5458 = vsub.f32 0.0, %v5202
    %v5459 = vsub.f32 0.0, %v5203
    %v5460 = vsub.f32 0.0, %v5204
    %v5461 = vsub.f32 0.0, %v5205
    %v5462 = vsub.f32 0.0, %v5206
    %v5463 = vsub.f32 0.0, %v5207
    %v5464 = vsub.f32 0.0, %v5208
    %v5465 = vsub.f32 0.0, %v5209
    %v5466 = vsub.f32 0.0, %v5210
    %v5467 = vsub.f32 0.0, %v5211
    %v5468 = vsub.f32 0.0, %v5212
    %v5469 = vsub.f32 0.0, %v5213
    %v5470 = vsub.f32 0.0, %v5214
    %v5471 = vsub.f32 0.0, %v5215
    %v5472 = vsub.f32 0.0, %v5216
    %v5473 = vsub.f32 0.0, %v5217
    %v5474 = vsub.f32 0.0, %v5218
    %v5475 = vsub.f32 0.0, %v5219
    %v5476 = vsub.f32 0.0, %v5220
    %v5477 = vsub.f32 0.0, %v5221
    %v5478 = vsub.f32 0.0, %v5222
    %v5479 = vsub.f32 0.0, %v5223
    %v5480 = vsub.f32 0.0, %v5224
    %v5481 = vsub.f32 0.0, %v5225
    %v5482 = vsub.f32 0.0, %v5226
    %v5483 = vsub.f32 0.0, %v5227
    %v5484 = vsub.f32 0.0, %v5228
    %v5485 = vsub.f32 0.0, %v5229
    %v5486 = vsub.f32 0.0, %v5230
    %v5487 = vsub.f32 0.0, %v5231
    %v5488 = vsub.f32 0.0, %v5232
    %v5489 = vsub.f32 0.0, %v5233
    %v5490 = vsub.f32 0.0, %v5234
    %v5491 = vsub.f32 0.0, %v5235
    %v5492 = vsub.f32 0.0, %v5236
    %v5493 = vsub.f32 0.0, %v5237
    %v5494 = vsub.f32 0.0, %v5238
    %v5495 = vsub.f32 0.0, %v5239
    %v5496 = vsub.f32 0.0, %v5240
    %v5497 = vsub.f32 0.0, %v5241
    %v5498 = vsub.f32 0.0, %v5242
    %v5499 = vsub.f32 0.0, %v5243
    %v5500 = vsub.f32 0.0, %v5244
    %v5501 = vsub.f32 0.0, %v5245
    %v5502 = vsub.f32 0.0, %v5246
    %v5503 = vsub.f32 0.0, %v5247
    %v5504 = vsub.f32 0.0, %v5248
    %v5505 = vsub.f32 0.0, %v5249
    %v5506 = vsub.f32 0.0, %v5250
    %v5507 = vsub.f32 0.0, %v5251
    %v5508 = vsub.f32 0.0, %v5252
    %v5509 = vsub.f32 0.0, %v5253
    %v5510 = vsub.f32 0.0, %v5254
    %v5511 = vsub.f32 0.0, %v5255
    %v5512 = vsub.f32 0.0, %v5256
    %v5513 = vsub.f32 0.0, %v5257
    %v5514 = vsub.f32 0.0, %v5258
    %v5515 = vsub.f32 0.0, %v5259
    %v5516 = vsub.f32 0.0, %v5260
    %v5517 = vsub.f32 0.0, %v5261
    %v5518 = vsub.f32 0.0, %v5262
    %v5519 = vsub.f32 0.0, %v5263
    %v5520 = vsub.f32 0.0, %v5264
    %v5521 = vsub.f32 0.0, %v5265
    %v5522 = vsub.f32 0.0, %v5266
    %v5523 = vsub.f32 0.0, %v5267
    %v5524 = vsub.f32 0.0, %v5268
    %v5525 = vsub.f32 0.0, %v5269
    %v5526 = vsub.f32 0.0, %v5270
    %v5527 = vsub.f32 0.0, %v5271
    %v5528 = vsub.f32 0.0, %v5272
    %v5529 = vsub.f32 0.0, %v5273
    %v5530 = vsub.f32 0.0, %v5274
    %v5531 = vsub.f32 0.0, %v5275
    %v5532 = vsub.f32 0.0, %v5276
    %v5533 = vsub.f32 0.0, %v5277
    %v5534 = vsub.f32 0.0, %v5278
    %v5535 = vsub.f32 0.0, %v5279
    %v5536 = vsub.f32 0.0, %v5280
    %v5537 = vsub.f32 0.0, %v5281
    %v5538 = vsub.f32 0.0, %v5282
    %v5539 = vsub.f32 0.0, %v5283
    %v5540 = vsub.f32 0.0, %v5284
    %v5541 = vsub.f32 0.0, %v5285
    %v5542 = vsub.f32 0.0, %v5286
    %v5543 = vsub.f32 0.0, %v5287
    %v5544 = vsub.f32 0.0, %v5288
    %v5545 = vsub.f32 0.0, %v5289
    %v5546 = vsub.f32 0.0, %v5290
    %v5547 = vsub.f32 0.0, %v5291
    %v5548 = vsub.f32 0.0, %v5292
    %v5549 = vsub.f32 0.0, %v5293
    %v5550 = vsub.f32 0.0, %v5294
    %v5551 = vsub.f32 0.0, %v5295
    %v5552 = vsub.f32 0.0, %v5296
    %v5553 = vsub.f32 0.0, %v5297
    %v5554 = vsub.f32 0.0, %v5298
    %v5555 = vsub.f32 0.0, %v5299
    %v5556 = vsub.f32 0.0, %v5300
    %v5557 = vsub.f32 0.0, %v5301
    %v5558 = vsub.f32 0.0, %v5302
    %v5559 = vsub.f32 0.0, %v5303
    %v5560 = vsub.f32 0.0, %v5304
    %v5561 = vsub.f32 0.0, %v5305
    %v5562 = vsub.f32 0.0, %v5306
    %v5563 = vsub.f32 0.0, %v5307
    %v5564 = vsub.f32 0.0, %v5308
    %v5565 = vsub.f32 0.0, %v5309
    %v5566 = vsub.f32 0.0, %v5310
    %v5567 = vsub.f32 0.0, %v5311
    %v5568 = vsub.f32 0.0, %v5312
    %v5569 = vsub.f32 0.0, %v5313
    %v5570 = vsub.f32 0.0, %v5314
    %v5571 = vsub.f32 0.0, %v5315
    %v5572 = vsub.f32 0.0, %v5316
    %v5573 = vsub.f32 0.0, %v5317
    %v5574 = vsub.f32 0.0, %v5318
    %v5575 = vsub.f32 0.0, %v5319
    %v5576 = vsub.f32 0.0, %v5320
    %v5577 = vsub.f32 0.0, %v5321
    %v5578 = vsub.f32 0.0, %v5322
    %v5579 = vsub.f32 0.0, %v5323
    %v5580 = vsub.f32 0.0, %v5324
    %v5581 = vsub.f32 0.0, %v5325
    %v5582 = vsub.f32 0.0, %v5326
    %v5583 = vsub.f32 0.0, %v5327
    %v5584 = vsub.f32 0.0, %v5328
    %v5585 = vsub.f32 0.0, %v5329
    %v5586 = vsub.f32 0.0, %v5330
    %v5587 = vsub.f32 0.0, %v5331
    %v5588 = vsub.f32 0.0, %v5332
    %v5589 = vsub.f32 0.0, %v5333
    %v5590 = vsub.f32 0.0, %v5334
    %v5591 = vsub.f32 0.0, %v5335
    %v5592 = vsub.f32 0.0, %v5336
    %v5593 = vsub.f32 0.0, %v5337
    %v5594 = vsub.f32 0.0, %v5338
    %v5595 = vsub.f32 0.0, %v5339
    %v5596 = vsub.f32 0.0, %v5340
    %v5597 = vsub.f32 0.0, %v5341
    %v5598 = vsub.f32 0.0, %v5342
    %v5599 = vsub.f32 0.0, %v5343
    %v5600 = vsub.f32 0.0, %v5344
    %v5601 = vsub.f32 0.0, %v5345
    %v5602 = vsub.f32 0.0, %v5346
    %v5603 = vsub.f32 0.0, %v5347
    %v5604 = vsub.f32 0.0, %v5348
    %v5605 = vsub.f32 0.0, %v5349
    %v5606 = vsub.f32 0.0, %v5350
    %v5607 = vsub.f32 0.0, %v5351
    %v5608 = vsub.f32 0.0, %v5352
    %v5609 = vsub.f32 0.0, %v5353
    %v5610 = vsub.f32 0.0, %v5354
    %v5611 = vsub.f32 0.0, %v5355
    %v5612 = vsub.f32 0.0, %v5356
    %v5613 = vsub.f32 0.0, %v5357
    %v5614 = vsub.f32 0.0, %v5358
    %v5615 = vsub.f32 0.0, %v5359
    %v5616 = vsub.f32 0.0, %v5360
    %v5617 = vsub.f32 0.0, %v5361
    %v5618 = vsub.f32 0.0, %v5362
    %v5619 = vsub.f32 0.0, %v5363
    %v5620 = vsub.f32 0.0, %v5364
    %v5621 = vsub.f32 0.0, %v5365
    %v5622 = vsub.f32 0.0, %v5366
    %v5623 = vsub.f32 0.0, %v5367
    %v5624 = vsub.f32 0.0, %v5368
    %v5625 = vsub.f32 0.0, %v5369
    %v5626 = vsub.f32 0.0, %v5370
    %v5627 = vsub.f32 0.0, %v5371
    %v5628 = vsub.f32 0.0, %v5372
    %v5629 = vsub.f32 0.0, %v5373
    %v5630 = vsub.f32 0.0, %v5374
    %v5631 = vsub.f32 0.0, %v5375
    %v5632 = vsub.f32 0.0, %v5376
    %v5633 = vsub.f32 0.0, %v5377
    %v5634 = vsub.f32 0.0, %v5378
    %v5635 = vsub.f32 0.0, %v5379
    %v5636 = vsub.f32 0.0, %v5380
    %v5637 = vsub.f32 0.0, %v5381
    %v5638 = vsub.f32 0.0, %v5382
    %v5639 = vsub.f32 0.0, %v5383
    %v5640 = vsub.f32 0.0, %v5384
    %v5641 = vsub.f32 0.0, %v5385
    %v5642 = vsub.f32 0.0, %v5386
    %v5643 = vsub.f32 0.0, %v5387
    %v5644 = vsub.f32 0.0, %v5388
    %v5645 = vsub.f32 0.0, %v5389
    %v5646 = vsub.f32 0.0, %v5390
    %v5647 = vsub.f32 0.0, %v5391
    %v5648 = vsub.f32 0.0, %v5392
    %v5649 = vsub.f32 0.0, %v5393
    %v5650 = vsub.f32 0.0, %v5394
    %v5651 = vsub.f32 0.0, %v5395
    %v5652 = vsub.f32 0.0, %v5396
    %v5653 = vsub.f32 0.0, %v5397
    %v5654 = vsub.f32 0.0, %v5398
    %v5655 = vsub.f32 0.0, %v5399
    %v5656 = vsub.f32 0.0, %v5400
    %v5657 = vsub.f32 0.0, %v5401
    %v5658 = vsub.f32 0.0, %v5402
    %v5659 = vsub.f32 0.0, %v5403
    %v5660 = vsub.f32 0.0, %v5404
    %v5661 = vsub.f32 0.0, %v5405
    %v5662 = vsub.f32 0.0, %v5406
    %v5663 = vsub.f32 0.0, %v5407
    %v5664 = vsub.f32 0.0, %v5408
    %v5665 = vsub.f32 0.0, %v5409
    %v5666 = vsub.f32 0.0, %v5410
    %v5667 = vsub.f32 0.0, %v5411
    %v5668 = vsub.f32 0.0, %v5412
    %v5669 = vsub.f32 0.0, %v5413
    %v5670 = vsub.f32 0.0, %v5414
    %v5671 = vsub.f32 0.0, %v5415
    %v5672 = vsub.f32 0.0, %v5416
    %v5673 = vsub.f32 0.0, %v5417
    %v5674 = vsub.f32 0.0, %v5418
    %v5675 = vsub.f32 0.0, %v5419
    %v5676 = vsub.f32 0.0, %v5420
    %v5677 = vsub.f32 0.0, %v5421
    %v5678 = vmul.f32 %v5422, 1.442695
    %v5679 = vpow.pop %v5678
    %v5680 = vmul.f32 %v5423, 1.442695
    %v5681 = vpow.pop %v5680
    %v5682 = vmul.f32 %v5424, 1.442695
    %v5683 = vpow.pop %v5682
    %v5684 = vmul.f32 %v5425, 1.442695
    %v5685 = vpow.pop %v5684
    %v5686 = vmul.f32 %v5426, 1.442695
    %v5687 = vpow.pop %v5686
    %v5688 = vmul.f32 %v5427, 1.442695
    %v5689 = vpow.pop %v5688
    %v5690 = vmul.f32 %v5428, 1.442695
    %v5691 = vpow.pop %v5690
    %v5692 = vmul.f32 %v5429, 1.442695
    %v5693 = vpow.pop %v5692
    %v5694 = vmul.f32 %v5430, 1.442695
    %v5695 = vpow.pop %v5694
    %v5696 = vmul.f32 %v5431, 1.442695
    %v5697 = vpow.pop %v5696
    %v5698 = vmul.f32 %v5432, 1.442695
    %v5699 = vpow.pop %v5698
    %v5700 = vmul.f32 %v5433, 1.442695
    %v5701 = vpow.pop %v5700
    %v5702 = vmul.f32 %v5434, 1.442695
    %v5703 = vpow.pop %v5702
    %v5704 = vmul.f32 %v5435, 1.442695
    %v5705 = vpow.pop %v5704
    %v5706 = vmul.f32 %v5436, 1.442695
    %v5707 = vpow.pop %v5706
    %v5708 = vmul.f32 %v5437, 1.442695
    %v5709 = vpow.pop %v5708
    %v5710 = vmul.f32 %v5438, 1.442695
    %v5711 = vpow.pop %v5710
    %v5712 = vmul.f32 %v5439, 1.442695
    %v5713 = vpow.pop %v5712
    %v5714 = vmul.f32 %v5440, 1.442695
    %v5715 = vpow.pop %v5714
    %v5716 = vmul.f32 %v5441, 1.442695
    %v5717 = vpow.pop %v5716
    %v5718 = vmul.f32 %v5442, 1.442695
    %v5719 = vpow.pop %v5718
    %v5720 = vmul.f32 %v5443, 1.442695
    %v5721 = vpow.pop %v5720
    %v5722 = vmul.f32 %v5444, 1.442695
    %v5723 = vpow.pop %v5722
    %v5724 = vmul.f32 %v5445, 1.442695
    %v5725 = vpow.pop %v5724
    %v5726 = vmul.f32 %v5446, 1.442695
    %v5727 = vpow.pop %v5726
    %v5728 = vmul.f32 %v5447, 1.442695
    %v5729 = vpow.pop %v5728
    %v5730 = vmul.f32 %v5448, 1.442695
    %v5731 = vpow.pop %v5730
    %v5732 = vmul.f32 %v5449, 1.442695
    %v5733 = vpow.pop %v5732
    %v5734 = vmul.f32 %v5450, 1.442695
    %v5735 = vpow.pop %v5734
    %v5736 = vmul.f32 %v5451, 1.442695
    %v5737 = vpow.pop %v5736
    %v5738 = vmul.f32 %v5452, 1.442695
    %v5739 = vpow.pop %v5738
    %v5740 = vmul.f32 %v5453, 1.442695
    %v5741 = vpow.pop %v5740
    %v5742 = vmul.f32 %v5454, 1.442695
    %v5743 = vpow.pop %v5742
    %v5744 = vmul.f32 %v5455, 1.442695
    %v5745 = vpow.pop %v5744
    %v5746 = vmul.f32 %v5456, 1.442695
    %v5747 = vpow.pop %v5746
    %v5748 = vmul.f32 %v5457, 1.442695
    %v5749 = vpow.pop %v5748
    %v5750 = vmul.f32 %v5458, 1.442695
    %v5751 = vpow.pop %v5750
    %v5752 = vmul.f32 %v5459, 1.442695
    %v5753 = vpow.pop %v5752
    %v5754 = vmul.f32 %v5460, 1.442695
    %v5755 = vpow.pop %v5754
    %v5756 = vmul.f32 %v5461, 1.442695
    %v5757 = vpow.pop %v5756
    %v5758 = vmul.f32 %v5462, 1.442695
    %v5759 = vpow.pop %v5758
    %v5760 = vmul.f32 %v5463, 1.442695
    %v5761 = vpow.pop %v5760
    %v5762 = vmul.f32 %v5464, 1.442695
    %v5763 = vpow.pop %v5762
    %v5764 = vmul.f32 %v5465, 1.442695
    %v5765 = vpow.pop %v5764
    %v5766 = vmul.f32 %v5466, 1.442695
    %v5767 = vpow.pop %v5766
    %v5768 = vmul.f32 %v5467, 1.442695
    %v5769 = vpow.pop %v5768
    %v5770 = vmul.f32 %v5468, 1.442695
    %v5771 = vpow.pop %v5770
    %v5772 = vmul.f32 %v5469, 1.442695
    %v5773 = vpow.pop %v5772
    %v5774 = vmul.f32 %v5470, 1.442695
    %v5775 = vpow.pop %v5774
    %v5776 = vmul.f32 %v5471, 1.442695
    %v5777 = vpow.pop %v5776
    %v5778 = vmul.f32 %v5472, 1.442695
    %v5779 = vpow.pop %v5778
    %v5780 = vmul.f32 %v5473, 1.442695
    %v5781 = vpow.pop %v5780
    %v5782 = vmul.f32 %v5474, 1.442695
    %v5783 = vpow.pop %v5782
    %v5784 = vmul.f32 %v5475, 1.442695
    %v5785 = vpow.pop %v5784
    %v5786 = vmul.f32 %v5476, 1.442695
    %v5787 = vpow.pop %v5786
    %v5788 = vmul.f32 %v5477, 1.442695
    %v5789 = vpow.pop %v5788
    %v5790 = vmul.f32 %v5478, 1.442695
    %v5791 = vpow.pop %v5790
    %v5792 = vmul.f32 %v5479, 1.442695
    %v5793 = vpow.pop %v5792
    %v5794 = vmul.f32 %v5480, 1.442695
    %v5795 = vpow.pop %v5794
    %v5796 = vmul.f32 %v5481, 1.442695
    %v5797 = vpow.pop %v5796
    %v5798 = vmul.f32 %v5482, 1.442695
    %v5799 = vpow.pop %v5798
    %v5800 = vmul.f32 %v5483, 1.442695
    %v5801 = vpow.pop %v5800
    %v5802 = vmul.f32 %v5484, 1.442695
    %v5803 = vpow.pop %v5802
    %v5804 = vmul.f32 %v5485, 1.442695
    %v5805 = vpow.pop %v5804
    %v5806 = vmul.f32 %v5486, 1.442695
    %v5807 = vpow.pop %v5806
    %v5808 = vmul.f32 %v5487, 1.442695
    %v5809 = vpow.pop %v5808
    %v5810 = vmul.f32 %v5488, 1.442695
    %v5811 = vpow.pop %v5810
    %v5812 = vmul.f32 %v5489, 1.442695
    %v5813 = vpow.pop %v5812
    %v5814 = vmul.f32 %v5490, 1.442695
    %v5815 = vpow.pop %v5814
    %v5816 = vmul.f32 %v5491, 1.442695
    %v5817 = vpow.pop %v5816
    %v5818 = vmul.f32 %v5492, 1.442695
    %v5819 = vpow.pop %v5818
    %v5820 = vmul.f32 %v5493, 1.442695
    %v5821 = vpow.pop %v5820
    %v5822 = vmul.f32 %v5494, 1.442695
    %v5823 = vpow.pop %v5822
    %v5824 = vmul.f32 %v5495, 1.442695
    %v5825 = vpow.pop %v5824
    %v5826 = vmul.f32 %v5496, 1.442695
    %v5827 = vpow.pop %v5826
    %v5828 = vmul.f32 %v5497, 1.442695
    %v5829 = vpow.pop %v5828
    %v5830 = vmul.f32 %v5498, 1.442695
    %v5831 = vpow.pop %v5830
    %v5832 = vmul.f32 %v5499, 1.442695
    %v5833 = vpow.pop %v5832
    %v5834 = vmul.f32 %v5500, 1.442695
    %v5835 = vpow.pop %v5834
    %v5836 = vmul.f32 %v5501, 1.442695
    %v5837 = vpow.pop %v5836
    %v5838 = vmul.f32 %v5502, 1.442695
    %v5839 = vpow.pop %v5838
    %v5840 = vmul.f32 %v5503, 1.442695
    %v5841 = vpow.pop %v5840
    %v5842 = vmul.f32 %v5504, 1.442695
    %v5843 = vpow.pop %v5842
    %v5844 = vmul.f32 %v5505, 1.442695
    %v5845 = vpow.pop %v5844
    %v5846 = vmul.f32 %v5506, 1.442695
    %v5847 = vpow.pop %v5846
    %v5848 = vmul.f32 %v5507, 1.442695
    %v5849 = vpow.pop %v5848
    %v5850 = vmul.f32 %v5508, 1.442695
    %v5851 = vpow.pop %v5850
    %v5852 = vmul.f32 %v5509, 1.442695
    %v5853 = vpow.pop %v5852
    %v5854 = vmul.f32 %v5510, 1.442695
    %v5855 = vpow.pop %v5854
    %v5856 = vmul.f32 %v5511, 1.442695
    %v5857 = vpow.pop %v5856
    %v5858 = vmul.f32 %v5512, 1.442695
    %v5859 = vpow.pop %v5858
    %v5860 = vmul.f32 %v5513, 1.442695
    %v5861 = vpow.pop %v5860
    %v5862 = vmul.f32 %v5514, 1.442695
    %v5863 = vpow.pop %v5862
    %v5864 = vmul.f32 %v5515, 1.442695
    %v5865 = vpow.pop %v5864
    %v5866 = vmul.f32 %v5516, 1.442695
    %v5867 = vpow.pop %v5866
    %v5868 = vmul.f32 %v5517, 1.442695
    %v5869 = vpow.pop %v5868
    %v5870 = vmul.f32 %v5518, 1.442695
    %v5871 = vpow.pop %v5870
    %v5872 = vmul.f32 %v5519, 1.442695
    %v5873 = vpow.pop %v5872
    %v5874 = vmul.f32 %v5520, 1.442695
    %v5875 = vpow.pop %v5874
    %v5876 = vmul.f32 %v5521, 1.442695
    %v5877 = vpow.pop %v5876
    %v5878 = vmul.f32 %v5522, 1.442695
    %v5879 = vpow.pop %v5878
    %v5880 = vmul.f32 %v5523, 1.442695
    %v5881 = vpow.pop %v5880
    %v5882 = vmul.f32 %v5524, 1.442695
    %v5883 = vpow.pop %v5882
    %v5884 = vmul.f32 %v5525, 1.442695
    %v5885 = vpow.pop %v5884
    %v5886 = vmul.f32 %v5526, 1.442695
    %v5887 = vpow.pop %v5886
    %v5888 = vmul.f32 %v5527, 1.442695
    %v5889 = vpow.pop %v5888
    %v5890 = vmul.f32 %v5528, 1.442695
    %v5891 = vpow.pop %v5890
    %v5892 = vmul.f32 %v5529, 1.442695
    %v5893 = vpow.pop %v5892
    %v5894 = vmul.f32 %v5530, 1.442695
    %v5895 = vpow.pop %v5894
    %v5896 = vmul.f32 %v5531, 1.442695
    %v5897 = vpow.pop %v5896
    %v5898 = vmul.f32 %v5532, 1.442695
    %v5899 = vpow.pop %v5898
    %v5900 = vmul.f32 %v5533, 1.442695
    %v5901 = vpow.pop %v5900
    %v5902 = vmul.f32 %v5534, 1.442695
    %v5903 = vpow.pop %v5902
    %v5904 = vmul.f32 %v5535, 1.442695
    %v5905 = vpow.pop %v5904
    %v5906 = vmul.f32 %v5536, 1.442695
    %v5907 = vpow.pop %v5906
    %v5908 = vmul.f32 %v5537, 1.442695
    %v5909 = vpow.pop %v5908
    %v5910 = vmul.f32 %v5538, 1.442695
    %v5911 = vpow.pop %v5910
    %v5912 = vmul.f32 %v5539, 1.442695
    %v5913 = vpow.pop %v5912
    %v5914 = vmul.f32 %v5540, 1.442695
    %v5915 = vpow.pop %v5914
    %v5916 = vmul.f32 %v5541, 1.442695
    %v5917 = vpow.pop %v5916
    %v5918 = vmul.f32 %v5542, 1.442695
    %v5919 = vpow.pop %v5918
    %v5920 = vmul.f32 %v5543, 1.442695
    %v5921 = vpow.pop %v5920
    %v5922 = vmul.f32 %v5544, 1.442695
    %v5923 = vpow.pop %v5922
    %v5924 = vmul.f32 %v5545, 1.442695
    %v5925 = vpow.pop %v5924
    %v5926 = vmul.f32 %v5546, 1.442695
    %v5927 = vpow.pop %v5926
    %v5928 = vmul.f32 %v5547, 1.442695
    %v5929 = vpow.pop %v5928
    %v5930 = vmul.f32 %v5548, 1.442695
    %v5931 = vpow.pop %v5930
    %v5932 = vmul.f32 %v5549, 1.442695
    %v5933 = vpow.pop %v5932
    %v5934 = vmul.f32 %v5550, 1.442695
    %v5935 = vpow.pop %v5934
    %v5936 = vmul.f32 %v5551, 1.442695
    %v5937 = vpow.pop %v5936
    %v5938 = vmul.f32 %v5552, 1.442695
    %v5939 = vpow.pop %v5938
    %v5940 = vmul.f32 %v5553, 1.442695
    %v5941 = vpow.pop %v5940
    %v5942 = vmul.f32 %v5554, 1.442695
    %v5943 = vpow.pop %v5942
    %v5944 = vmul.f32 %v5555, 1.442695
    %v5945 = vpow.pop %v5944
    %v5946 = vmul.f32 %v5556, 1.442695
    %v5947 = vpow.pop %v5946
    %v5948 = vmul.f32 %v5557, 1.442695
    %v5949 = vpow.pop %v5948
    %v5950 = vmul.f32 %v5558, 1.442695
    %v5951 = vpow.pop %v5950
    %v5952 = vmul.f32 %v5559, 1.442695
    %v5953 = vpow.pop %v5952
    %v5954 = vmul.f32 %v5560, 1.442695
    %v5955 = vpow.pop %v5954
    %v5956 = vmul.f32 %v5561, 1.442695
    %v5957 = vpow.pop %v5956
    %v5958 = vmul.f32 %v5562, 1.442695
    %v5959 = vpow.pop %v5958
    %v5960 = vmul.f32 %v5563, 1.442695
    %v5961 = vpow.pop %v5960
    %v5962 = vmul.f32 %v5564, 1.442695
    %v5963 = vpow.pop %v5962
    %v5964 = vmul.f32 %v5565, 1.442695
    %v5965 = vpow.pop %v5964
    %v5966 = vmul.f32 %v5566, 1.442695
    %v5967 = vpow.pop %v5966
    %v5968 = vmul.f32 %v5567, 1.442695
    %v5969 = vpow.pop %v5968
    %v5970 = vmul.f32 %v5568, 1.442695
    %v5971 = vpow.pop %v5970
    %v5972 = vmul.f32 %v5569, 1.442695
    %v5973 = vpow.pop %v5972
    %v5974 = vmul.f32 %v5570, 1.442695
    %v5975 = vpow.pop %v5974
    %v5976 = vmul.f32 %v5571, 1.442695
    %v5977 = vpow.pop %v5976
    %v5978 = vmul.f32 %v5572, 1.442695
    %v5979 = vpow.pop %v5978
    %v5980 = vmul.f32 %v5573, 1.442695
    %v5981 = vpow.pop %v5980
    %v5982 = vmul.f32 %v5574, 1.442695
    %v5983 = vpow.pop %v5982
    %v5984 = vmul.f32 %v5575, 1.442695
    %v5985 = vpow.pop %v5984
    %v5986 = vmul.f32 %v5576, 1.442695
    %v5987 = vpow.pop %v5986
    %v5988 = vmul.f32 %v5577, 1.442695
    %v5989 = vpow.pop %v5988
    %v5990 = vmul.f32 %v5578, 1.442695
    %v5991 = vpow.pop %v5990
    %v5992 = vmul.f32 %v5579, 1.442695
    %v5993 = vpow.pop %v5992
    %v5994 = vmul.f32 %v5580, 1.442695
    %v5995 = vpow.pop %v5994
    %v5996 = vmul.f32 %v5581, 1.442695
    %v5997 = vpow.pop %v5996
    %v5998 = vmul.f32 %v5582, 1.442695
    %v5999 = vpow.pop %v5998
    %v6000 = vmul.f32 %v5583, 1.442695
    %v6001 = vpow.pop %v6000
    %v6002 = vmul.f32 %v5584, 1.442695
    %v6003 = vpow.pop %v6002
    %v6004 = vmul.f32 %v5585, 1.442695
    %v6005 = vpow.pop %v6004
    %v6006 = vmul.f32 %v5586, 1.442695
    %v6007 = vpow.pop %v6006
    %v6008 = vmul.f32 %v5587, 1.442695
    %v6009 = vpow.pop %v6008
    %v6010 = vmul.f32 %v5588, 1.442695
    %v6011 = vpow.pop %v6010
    %v6012 = vmul.f32 %v5589, 1.442695
    %v6013 = vpow.pop %v6012
    %v6014 = vmul.f32 %v5590, 1.442695
    %v6015 = vpow.pop %v6014
    %v6016 = vmul.f32 %v5591, 1.442695
    %v6017 = vpow.pop %v6016
    %v6018 = vmul.f32 %v5592, 1.442695
    %v6019 = vpow.pop %v6018
    %v6020 = vmul.f32 %v5593, 1.442695
    %v6021 = vpow.pop %v6020
    %v6022 = vmul.f32 %v5594, 1.442695
    %v6023 = vpow.pop %v6022
    %v6024 = vmul.f32 %v5595, 1.442695
    %v6025 = vpow.pop %v6024
    %v6026 = vmul.f32 %v5596, 1.442695
    %v6027 = vpow.pop %v6026
    %v6028 = vmul.f32 %v5597, 1.442695
    %v6029 = vpow.pop %v6028
    %v6030 = vmul.f32 %v5598, 1.442695
    %v6031 = vpow.pop %v6030
    %v6032 = vmul.f32 %v5599, 1.442695
    %v6033 = vpow.pop %v6032
    %v6034 = vmul.f32 %v5600, 1.442695
    %v6035 = vpow.pop %v6034
    %v6036 = vmul.f32 %v5601, 1.442695
    %v6037 = vpow.pop %v6036
    %v6038 = vmul.f32 %v5602, 1.442695
    %v6039 = vpow.pop %v6038
    %v6040 = vmul.f32 %v5603, 1.442695
    %v6041 = vpow.pop %v6040
    %v6042 = vmul.f32 %v5604, 1.442695
    %v6043 = vpow.pop %v6042
    %v6044 = vmul.f32 %v5605, 1.442695
    %v6045 = vpow.pop %v6044
    %v6046 = vmul.f32 %v5606, 1.442695
    %v6047 = vpow.pop %v6046
    %v6048 = vmul.f32 %v5607, 1.442695
    %v6049 = vpow.pop %v6048
    %v6050 = vmul.f32 %v5608, 1.442695
    %v6051 = vpow.pop %v6050
    %v6052 = vmul.f32 %v5609, 1.442695
    %v6053 = vpow.pop %v6052
    %v6054 = vmul.f32 %v5610, 1.442695
    %v6055 = vpow.pop %v6054
    %v6056 = vmul.f32 %v5611, 1.442695
    %v6057 = vpow.pop %v6056
    %v6058 = vmul.f32 %v5612, 1.442695
    %v6059 = vpow.pop %v6058
    %v6060 = vmul.f32 %v5613, 1.442695
    %v6061 = vpow.pop %v6060
    %v6062 = vmul.f32 %v5614, 1.442695
    %v6063 = vpow.pop %v6062
    %v6064 = vmul.f32 %v5615, 1.442695
    %v6065 = vpow.pop %v6064
    %v6066 = vmul.f32 %v5616, 1.442695
    %v6067 = vpow.pop %v6066
    %v6068 = vmul.f32 %v5617, 1.442695
    %v6069 = vpow.pop %v6068
    %v6070 = vmul.f32 %v5618, 1.442695
    %v6071 = vpow.pop %v6070
    %v6072 = vmul.f32 %v5619, 1.442695
    %v6073 = vpow.pop %v6072
    %v6074 = vmul.f32 %v5620, 1.442695
    %v6075 = vpow.pop %v6074
    %v6076 = vmul.f32 %v5621, 1.442695
    %v6077 = vpow.pop %v6076
    %v6078 = vmul.f32 %v5622, 1.442695
    %v6079 = vpow.pop %v6078
    %v6080 = vmul.f32 %v5623, 1.442695
    %v6081 = vpow.pop %v6080
    %v6082 = vmul.f32 %v5624, 1.442695
    %v6083 = vpow.pop %v6082
    %v6084 = vmul.f32 %v5625, 1.442695
    %v6085 = vpow.pop %v6084
    %v6086 = vmul.f32 %v5626, 1.442695
    %v6087 = vpow.pop %v6086
    %v6088 = vmul.f32 %v5627, 1.442695
    %v6089 = vpow.pop %v6088
    %v6090 = vmul.f32 %v5628, 1.442695
    %v6091 = vpow.pop %v6090
    %v6092 = vmul.f32 %v5629, 1.442695
    %v6093 = vpow.pop %v6092
    %v6094 = vmul.f32 %v5630, 1.442695
    %v6095 = vpow.pop %v6094
    %v6096 = vmul.f32 %v5631, 1.442695
    %v6097 = vpow.pop %v6096
    %v6098 = vmul.f32 %v5632, 1.442695
    %v6099 = vpow.pop %v6098
    %v6100 = vmul.f32 %v5633, 1.442695
    %v6101 = vpow.pop %v6100
    %v6102 = vmul.f32 %v5634, 1.442695
    %v6103 = vpow.pop %v6102
    %v6104 = vmul.f32 %v5635, 1.442695
    %v6105 = vpow.pop %v6104
    %v6106 = vmul.f32 %v5636, 1.442695
    %v6107 = vpow.pop %v6106
    %v6108 = vmul.f32 %v5637, 1.442695
    %v6109 = vpow.pop %v6108
    %v6110 = vmul.f32 %v5638, 1.442695
    %v6111 = vpow.pop %v6110
    %v6112 = vmul.f32 %v5639, 1.442695
    %v6113 = vpow.pop %v6112
    %v6114 = vmul.f32 %v5640, 1.442695
    %v6115 = vpow.pop %v6114
    %v6116 = vmul.f32 %v5641, 1.442695
    %v6117 = vpow.pop %v6116
    %v6118 = vmul.f32 %v5642, 1.442695
    %v6119 = vpow.pop %v6118
    %v6120 = vmul.f32 %v5643, 1.442695
    %v6121 = vpow.pop %v6120
    %v6122 = vmul.f32 %v5644, 1.442695
    %v6123 = vpow.pop %v6122
    %v6124 = vmul.f32 %v5645, 1.442695
    %v6125 = vpow.pop %v6124
    %v6126 = vmul.f32 %v5646, 1.442695
    %v6127 = vpow.pop %v6126
    %v6128 = vmul.f32 %v5647, 1.442695
    %v6129 = vpow.pop %v6128
    %v6130 = vmul.f32 %v5648, 1.442695
    %v6131 = vpow.pop %v6130
    %v6132 = vmul.f32 %v5649, 1.442695
    %v6133 = vpow.pop %v6132
    %v6134 = vmul.f32 %v5650, 1.442695
    %v6135 = vpow.pop %v6134
    %v6136 = vmul.f32 %v5651, 1.442695
    %v6137 = vpow.pop %v6136
    %v6138 = vmul.f32 %v5652, 1.442695
    %v6139 = vpow.pop %v6138
    %v6140 = vmul.f32 %v5653, 1.442695
    %v6141 = vpow.pop %v6140
    %v6142 = vmul.f32 %v5654, 1.442695
    %v6143 = vpow.pop %v6142
    %v6144 = vmul.f32 %v5655, 1.442695
    %v6145 = vpow.pop %v6144
    %v6146 = vmul.f32 %v5656, 1.442695
    %v6147 = vpow.pop %v6146
    %v6148 = vmul.f32 %v5657, 1.442695
    %v6149 = vpow.pop %v6148
    %v6150 = vmul.f32 %v5658, 1.442695
    %v6151 = vpow.pop %v6150
    %v6152 = vmul.f32 %v5659, 1.442695
    %v6153 = vpow.pop %v6152
    %v6154 = vmul.f32 %v5660, 1.442695
    %v6155 = vpow.pop %v6154
    %v6156 = vmul.f32 %v5661, 1.442695
    %v6157 = vpow.pop %v6156
    %v6158 = vmul.f32 %v5662, 1.442695
    %v6159 = vpow.pop %v6158
    %v6160 = vmul.f32 %v5663, 1.442695
    %v6161 = vpow.pop %v6160
    %v6162 = vmul.f32 %v5664, 1.442695
    %v6163 = vpow.pop %v6162
    %v6164 = vmul.f32 %v5665, 1.442695
    %v6165 = vpow.pop %v6164
    %v6166 = vmul.f32 %v5666, 1.442695
    %v6167 = vpow.pop %v6166
    %v6168 = vmul.f32 %v5667, 1.442695
    %v6169 = vpow.pop %v6168
    %v6170 = vmul.f32 %v5668, 1.442695
    %v6171 = vpow.pop %v6170
    %v6172 = vmul.f32 %v5669, 1.442695
    %v6173 = vpow.pop %v6172
    %v6174 = vmul.f32 %v5670, 1.442695
    %v6175 = vpow.pop %v6174
    %v6176 = vmul.f32 %v5671, 1.442695
    %v6177 = vpow.pop %v6176
    %v6178 = vmul.f32 %v5672, 1.442695
    %v6179 = vpow.pop %v6178
    %v6180 = vmul.f32 %v5673, 1.442695
    %v6181 = vpow.pop %v6180
    %v6182 = vmul.f32 %v5674, 1.442695
    %v6183 = vpow.pop %v6182
    %v6184 = vmul.f32 %v5675, 1.442695
    %v6185 = vpow.pop %v6184
    %v6186 = vmul.f32 %v5676, 1.442695
    %v6187 = vpow.pop %v6186
    %v6188 = vmul.f32 %v5677, 1.442695
    %v6189 = vpow.pop %v6188
    %v6190 = vsub.f32 1.0, %v5679
    %v6191 = vsub.f32 1.0, %v5681
    %v6192 = vsub.f32 1.0, %v5683
    %v6193 = vsub.f32 1.0, %v5685
    %v6194 = vsub.f32 1.0, %v5687
    %v6195 = vsub.f32 1.0, %v5689
    %v6196 = vsub.f32 1.0, %v5691
    %v6197 = vsub.f32 1.0, %v5693
    %v6198 = vsub.f32 1.0, %v5695
    %v6199 = vsub.f32 1.0, %v5697
    %v6200 = vsub.f32 1.0, %v5699
    %v6201 = vsub.f32 1.0, %v5701
    %v6202 = vsub.f32 1.0, %v5703
    %v6203 = vsub.f32 1.0, %v5705
    %v6204 = vsub.f32 1.0, %v5707
    %v6205 = vsub.f32 1.0, %v5709
    %v6206 = vsub.f32 1.0, %v5711
    %v6207 = vsub.f32 1.0, %v5713
    %v6208 = vsub.f32 1.0, %v5715
    %v6209 = vsub.f32 1.0, %v5717
    %v6210 = vsub.f32 1.0, %v5719
    %v6211 = vsub.f32 1.0, %v5721
    %v6212 = vsub.f32 1.0, %v5723
    %v6213 = vsub.f32 1.0, %v5725
    %v6214 = vsub.f32 1.0, %v5727
    %v6215 = vsub.f32 1.0, %v5729
    %v6216 = vsub.f32 1.0, %v5731
    %v6217 = vsub.f32 1.0, %v5733
    %v6218 = vsub.f32 1.0, %v5735
    %v6219 = vsub.f32 1.0, %v5737
    %v6220 = vsub.f32 1.0, %v5739
    %v6221 = vsub.f32 1.0, %v5741
    %v6222 = vsub.f32 1.0, %v5743
    %v6223 = vsub.f32 1.0, %v5745
    %v6224 = vsub.f32 1.0, %v5747
    %v6225 = vsub.f32 1.0, %v5749
    %v6226 = vsub.f32 1.0, %v5751
    %v6227 = vsub.f32 1.0, %v5753
    %v6228 = vsub.f32 1.0, %v5755
    %v6229 = vsub.f32 1.0, %v5757
    %v6230 = vsub.f32 1.0, %v5759
    %v6231 = vsub.f32 1.0, %v5761
    %v6232 = vsub.f32 1.0, %v5763
    %v6233 = vsub.f32 1.0, %v5765
    %v6234 = vsub.f32 1.0, %v5767
    %v6235 = vsub.f32 1.0, %v5769
    %v6236 = vsub.f32 1.0, %v5771
    %v6237 = vsub.f32 1.0, %v5773
    %v6238 = vsub.f32 1.0, %v5775
    %v6239 = vsub.f32 1.0, %v5777
    %v6240 = vsub.f32 1.0, %v5779
    %v6241 = vsub.f32 1.0, %v5781
    %v6242 = vsub.f32 1.0, %v5783
    %v6243 = vsub.f32 1.0, %v5785
    %v6244 = vsub.f32 1.0, %v5787
    %v6245 = vsub.f32 1.0, %v5789
    %v6246 = vsub.f32 1.0, %v5791
    %v6247 = vsub.f32 1.0, %v5793
    %v6248 = vsub.f32 1.0, %v5795
    %v6249 = vsub.f32 1.0, %v5797
    %v6250 = vsub.f32 1.0, %v5799
    %v6251 = vsub.f32 1.0, %v5801
    %v6252 = vsub.f32 1.0, %v5803
    %v6253 = vsub.f32 1.0, %v5805
    %v6254 = vsub.f32 1.0, %v5807
    %v6255 = vsub.f32 1.0, %v5809
    %v6256 = vsub.f32 1.0, %v5811
    %v6257 = vsub.f32 1.0, %v5813
    %v6258 = vsub.f32 1.0, %v5815
    %v6259 = vsub.f32 1.0, %v5817
    %v6260 = vsub.f32 1.0, %v5819
    %v6261 = vsub.f32 1.0, %v5821
    %v6262 = vsub.f32 1.0, %v5823
    %v6263 = vsub.f32 1.0, %v5825
    %v6264 = vsub.f32 1.0, %v5827
    %v6265 = vsub.f32 1.0, %v5829
    %v6266 = vsub.f32 1.0, %v5831
    %v6267 = vsub.f32 1.0, %v5833
    %v6268 = vsub.f32 1.0, %v5835
    %v6269 = vsub.f32 1.0, %v5837
    %v6270 = vsub.f32 1.0, %v5839
    %v6271 = vsub.f32 1.0, %v5841
    %v6272 = vsub.f32 1.0, %v5843
    %v6273 = vsub.f32 1.0, %v5845
    %v6274 = vsub.f32 1.0, %v5847
    %v6275 = vsub.f32 1.0, %v5849
    %v6276 = vsub.f32 1.0, %v5851
    %v6277 = vsub.f32 1.0, %v5853
    %v6278 = vsub.f32 1.0, %v5855
    %v6279 = vsub.f32 1.0, %v5857
    %v6280 = vsub.f32 1.0, %v5859
    %v6281 = vsub.f32 1.0, %v5861
    %v6282 = vsub.f32 1.0, %v5863
    %v6283 = vsub.f32 1.0, %v5865
    %v6284 = vsub.f32 1.0, %v5867
    %v6285 = vsub.f32 1.0, %v5869
    %v6286 = vsub.f32 1.0, %v5871
    %v6287 = vsub.f32 1.0, %v5873
    %v6288 = vsub.f32 1.0, %v5875
    %v6289 = vsub.f32 1.0, %v5877
    %v6290 = vsub.f32 1.0, %v5879
    %v6291 = vsub.f32 1.0, %v5881
    %v6292 = vsub.f32 1.0, %v5883
    %v6293 = vsub.f32 1.0, %v5885
    %v6294 = vsub.f32 1.0, %v5887
    %v6295 = vsub.f32 1.0, %v5889
    %v6296 = vsub.f32 1.0, %v5891
    %v6297 = vsub.f32 1.0, %v5893
    %v6298 = vsub.f32 1.0, %v5895
    %v6299 = vsub.f32 1.0, %v5897
    %v6300 = vsub.f32 1.0, %v5899
    %v6301 = vsub.f32 1.0, %v5901
    %v6302 = vsub.f32 1.0, %v5903
    %v6303 = vsub.f32 1.0, %v5905
    %v6304 = vsub.f32 1.0, %v5907
    %v6305 = vsub.f32 1.0, %v5909
    %v6306 = vsub.f32 1.0, %v5911
    %v6307 = vsub.f32 1.0, %v5913
    %v6308 = vsub.f32 1.0, %v5915
    %v6309 = vsub.f32 1.0, %v5917
    %v6310 = vsub.f32 1.0, %v5919
    %v6311 = vsub.f32 1.0, %v5921
    %v6312 = vsub.f32 1.0, %v5923
    %v6313 = vsub.f32 1.0, %v5925
    %v6314 = vsub.f32 1.0, %v5927
    %v6315 = vsub.f32 1.0, %v5929
    %v6316 = vsub.f32 1.0, %v5931
    %v6317 = vsub.f32 1.0, %v5933
    %v6318 = vsub.f32 1.0, %v5935
    %v6319 = vsub.f32 1.0, %v5937
    %v6320 = vsub.f32 1.0, %v5939
    %v6321 = vsub.f32 1.0, %v5941
    %v6322 = vsub.f32 1.0, %v5943
    %v6323 = vsub.f32 1.0, %v5945
    %v6324 = vsub.f32 1.0, %v5947
    %v6325 = vsub.f32 1.0, %v5949
    %v6326 = vsub.f32 1.0, %v5951
    %v6327 = vsub.f32 1.0, %v5953
    %v6328 = vsub.f32 1.0, %v5955
    %v6329 = vsub.f32 1.0, %v5957
    %v6330 = vsub.f32 1.0, %v5959
    %v6331 = vsub.f32 1.0, %v5961
    %v6332 = vsub.f32 1.0, %v5963
    %v6333 = vsub.f32 1.0, %v5965
    %v6334 = vsub.f32 1.0, %v5967
    %v6335 = vsub.f32 1.0, %v5969
    %v6336 = vsub.f32 1.0, %v5971
    %v6337 = vsub.f32 1.0, %v5973
    %v6338 = vsub.f32 1.0, %v5975
    %v6339 = vsub.f32 1.0, %v5977
    %v6340 = vsub.f32 1.0, %v5979
    %v6341 = vsub.f32 1.0, %v5981
    %v6342 = vsub.f32 1.0, %v5983
    %v6343 = vsub.f32 1.0, %v5985
    %v6344 = vsub.f32 1.0, %v5987
    %v6345 = vsub.f32 1.0, %v5989
    %v6346 = vsub.f32 1.0, %v5991
    %v6347 = vsub.f32 1.0, %v5993
    %v6348 = vsub.f32 1.0, %v5995
    %v6349 = vsub.f32 1.0, %v5997
    %v6350 = vsub.f32 1.0, %v5999
    %v6351 = vsub.f32 1.0, %v6001
    %v6352 = vsub.f32 1.0, %v6003
    %v6353 = vsub.f32 1.0, %v6005
    %v6354 = vsub.f32 1.0, %v6007
    %v6355 = vsub.f32 1.0, %v6009
    %v6356 = vsub.f32 1.0, %v6011
    %v6357 = vsub.f32 1.0, %v6013
    %v6358 = vsub.f32 1.0, %v6015
    %v6359 = vsub.f32 1.0, %v6017
    %v6360 = vsub.f32 1.0, %v6019
    %v6361 = vsub.f32 1.0, %v6021
    %v6362 = vsub.f32 1.0, %v6023
    %v6363 = vsub.f32 1.0, %v6025
    %v6364 = vsub.f32 1.0, %v6027
    %v6365 = vsub.f32 1.0, %v6029
    %v6366 = vsub.f32 1.0, %v6031
    %v6367 = vsub.f32 1.0, %v6033
    %v6368 = vsub.f32 1.0, %v6035
    %v6369 = vsub.f32 1.0, %v6037
    %v6370 = vsub.f32 1.0, %v6039
    %v6371 = vsub.f32 1.0, %v6041
    %v6372 = vsub.f32 1.0, %v6043
    %v6373 = vsub.f32 1.0, %v6045
    %v6374 = vsub.f32 1.0, %v6047
    %v6375 = vsub.f32 1.0, %v6049
    %v6376 = vsub.f32 1.0, %v6051
    %v6377 = vsub.f32 1.0, %v6053
    %v6378 = vsub.f32 1.0, %v6055
    %v6379 = vsub.f32 1.0, %v6057
    %v6380 = vsub.f32 1.0, %v6059
    %v6381 = vsub.f32 1.0, %v6061
    %v6382 = vsub.f32 1.0, %v6063
    %v6383 = vsub.f32 1.0, %v6065
    %v6384 = vsub.f32 1.0, %v6067
    %v6385 = vsub.f32 1.0, %v6069
    %v6386 = vsub.f32 1.0, %v6071
    %v6387 = vsub.f32 1.0, %v6073
    %v6388 = vsub.f32 1.0, %v6075
    %v6389 = vsub.f32 1.0, %v6077
    %v6390 = vsub.f32 1.0, %v6079
    %v6391 = vsub.f32 1.0, %v6081
    %v6392 = vsub.f32 1.0, %v6083
    %v6393 = vsub.f32 1.0, %v6085
    %v6394 = vsub.f32 1.0, %v6087
    %v6395 = vsub.f32 1.0, %v6089
    %v6396 = vsub.f32 1.0, %v6091
    %v6397 = vsub.f32 1.0, %v6093
    %v6398 = vsub.f32 1.0, %v6095
    %v6399 = vsub.f32 1.0, %v6097
    %v6400 = vsub.f32 1.0, %v6099
    %v6401 = vsub.f32 1.0, %v6101
    %v6402 = vsub.f32 1.0, %v6103
    %v6403 = vsub.f32 1.0, %v6105
    %v6404 = vsub.f32 1.0, %v6107
    %v6405 = vsub.f32 1.0, %v6109
    %v6406 = vsub.f32 1.0, %v6111
    %v6407 = vsub.f32 1.0, %v6113
    %v6408 = vsub.f32 1.0, %v6115
    %v6409 = vsub.f32 1.0, %v6117
    %v6410 = vsub.f32 1.0, %v6119
    %v6411 = vsub.f32 1.0, %v6121
    %v6412 = vsub.f32 1.0, %v6123
    %v6413 = vsub.f32 1.0, %v6125
    %v6414 = vsub.f32 1.0, %v6127
    %v6415 = vsub.f32 1.0, %v6129
    %v6416 = vsub.f32 1.0, %v6131
    %v6417 = vsub.f32 1.0, %v6133
    %v6418 = vsub.f32 1.0, %v6135
    %v6419 = vsub.f32 1.0, %v6137
    %v6420 = vsub.f32 1.0, %v6139
    %v6421 = vsub.f32 1.0, %v6141
    %v6422 = vsub.f32 1.0, %v6143
    %v6423 = vsub.f32 1.0, %v6145
    %v6424 = vsub.f32 1.0, %v6147
    %v6425 = vsub.f32 1.0, %v6149
    %v6426 = vsub.f32 1.0, %v6151
    %v6427 = vsub.f32 1.0, %v6153
    %v6428 = vsub.f32 1.0, %v6155
    %v6429 = vsub.f32 1.0, %v6157
    %v6430 = vsub.f32 1.0, %v6159
    %v6431 = vsub.f32 1.0, %v6161
    %v6432 = vsub.f32 1.0, %v6163
    %v6433 = vsub.f32 1.0, %v6165
    %v6434 = vsub.f32 1.0, %v6167
    %v6435 = vsub.f32 1.0, %v6169
    %v6436 = vsub.f32 1.0, %v6171
    %v6437 = vsub.f32 1.0, %v6173
    %v6438 = vsub.f32 1.0, %v6175
    %v6439 = vsub.f32 1.0, %v6177
    %v6440 = vsub.f32 1.0, %v6179
    %v6441 = vsub.f32 1.0, %v6181
    %v6442 = vsub.f32 1.0, %v6183
    %v6443 = vsub.f32 1.0, %v6185
    %v6444 = vsub.f32 1.0, %v6187
    %v6445 = vsub.f32 1.0, %v6189
    %v6446 = vmul.f32 %v6190, %v6190
    %v6447 = vmul.f32 %v6191, %v6191
    %v6448 = vmul.f32 %v6192, %v6192
    %v6449 = vmul.f32 %v6193, %v6193
    %v6450 = vmul.f32 %v6194, %v6194
    %v6451 = vmul.f32 %v6195, %v6195
    %v6452 = vmul.f32 %v6196, %v6196
    %v6453 = vmul.f32 %v6197, %v6197
    %v6454 = vmul.f32 %v6198, %v6198
    %v6455 = vmul.f32 %v6199, %v6199
    %v6456 = vmul.f32 %v6200, %v6200
    %v6457 = vmul.f32 %v6201, %v6201
    %v6458 = vmul.f32 %v6202, %v6202
    %v6459 = vmul.f32 %v6203, %v6203
    %v6460 = vmul.f32 %v6204, %v6204
    %v6461 = vmul.f32 %v6205, %v6205
    %v6462 = vmul.f32 %v6206, %v6206
    %v6463 = vmul.f32 %v6207, %v6207
    %v6464 = vmul.f32 %v6208, %v6208
    %v6465 = vmul.f32 %v6209, %v6209
    %v6466 = vmul.f32 %v6210, %v6210
    %v6467 = vmul.f32 %v6211, %v6211
    %v6468 = vmul.f32 %v6212, %v6212
    %v6469 = vmul.f32 %v6213, %v6213
    %v6470 = vmul.f32 %v6214, %v6214
    %v6471 = vmul.f32 %v6215, %v6215
    %v6472 = vmul.f32 %v6216, %v6216
    %v6473 = vmul.f32 %v6217, %v6217
    %v6474 = vmul.f32 %v6218, %v6218
    %v6475 = vmul.f32 %v6219, %v6219
    %v6476 = vmul.f32 %v6220, %v6220
    %v6477 = vmul.f32 %v6221, %v6221
    %v6478 = vmul.f32 %v6222, %v6222
    %v6479 = vmul.f32 %v6223, %v6223
    %v6480 = vmul.f32 %v6224, %v6224
    %v6481 = vmul.f32 %v6225, %v6225
    %v6482 = vmul.f32 %v6226, %v6226
    %v6483 = vmul.f32 %v6227, %v6227
    %v6484 = vmul.f32 %v6228, %v6228
    %v6485 = vmul.f32 %v6229, %v6229
    %v6486 = vmul.f32 %v6230, %v6230
    %v6487 = vmul.f32 %v6231, %v6231
    %v6488 = vmul.f32 %v6232, %v6232
    %v6489 = vmul.f32 %v6233, %v6233
    %v6490 = vmul.f32 %v6234, %v6234
    %v6491 = vmul.f32 %v6235, %v6235
    %v6492 = vmul.f32 %v6236, %v6236
    %v6493 = vmul.f32 %v6237, %v6237
    %v6494 = vmul.f32 %v6238, %v6238
    %v6495 = vmul.f32 %v6239, %v6239
    %v6496 = vmul.f32 %v6240, %v6240
    %v6497 = vmul.f32 %v6241, %v6241
    %v6498 = vmul.f32 %v6242, %v6242
    %v6499 = vmul.f32 %v6243, %v6243
    %v6500 = vmul.f32 %v6244, %v6244
    %v6501 = vmul.f32 %v6245, %v6245
    %v6502 = vmul.f32 %v6246, %v6246
    %v6503 = vmul.f32 %v6247, %v6247
    %v6504 = vmul.f32 %v6248, %v6248
    %v6505 = vmul.f32 %v6249, %v6249
    %v6506 = vmul.f32 %v6250, %v6250
    %v6507 = vmul.f32 %v6251, %v6251
    %v6508 = vmul.f32 %v6252, %v6252
    %v6509 = vmul.f32 %v6253, %v6253
    %v6510 = vmul.f32 %v6254, %v6254
    %v6511 = vmul.f32 %v6255, %v6255
    %v6512 = vmul.f32 %v6256, %v6256
    %v6513 = vmul.f32 %v6257, %v6257
    %v6514 = vmul.f32 %v6258, %v6258
    %v6515 = vmul.f32 %v6259, %v6259
    %v6516 = vmul.f32 %v6260, %v6260
    %v6517 = vmul.f32 %v6261, %v6261
    %v6518 = vmul.f32 %v6262, %v6262
    %v6519 = vmul.f32 %v6263, %v6263
    %v6520 = vmul.f32 %v6264, %v6264
    %v6521 = vmul.f32 %v6265, %v6265
    %v6522 = vmul.f32 %v6266, %v6266
    %v6523 = vmul.f32 %v6267, %v6267
    %v6524 = vmul.f32 %v6268, %v6268
    %v6525 = vmul.f32 %v6269, %v6269
    %v6526 = vmul.f32 %v6270, %v6270
    %v6527 = vmul.f32 %v6271, %v6271
    %v6528 = vmul.f32 %v6272, %v6272
    %v6529 = vmul.f32 %v6273, %v6273
    %v6530 = vmul.f32 %v6274, %v6274
    %v6531 = vmul.f32 %v6275, %v6275
    %v6532 = vmul.f32 %v6276, %v6276
    %v6533 = vmul.f32 %v6277, %v6277
    %v6534 = vmul.f32 %v6278, %v6278
    %v6535 = vmul.f32 %v6279, %v6279
    %v6536 = vmul.f32 %v6280, %v6280
    %v6537 = vmul.f32 %v6281, %v6281
    %v6538 = vmul.f32 %v6282, %v6282
    %v6539 = vmul.f32 %v6283, %v6283
    %v6540 = vmul.f32 %v6284, %v6284
    %v6541 = vmul.f32 %v6285, %v6285
    %v6542 = vmul.f32 %v6286, %v6286
    %v6543 = vmul.f32 %v6287, %v6287
    %v6544 = vmul.f32 %v6288, %v6288
    %v6545 = vmul.f32 %v6289, %v6289
    %v6546 = vmul.f32 %v6290, %v6290
    %v6547 = vmul.f32 %v6291, %v6291
    %v6548 = vmul.f32 %v6292, %v6292
    %v6549 = vmul.f32 %v6293, %v6293
    %v6550 = vmul.f32 %v6294, %v6294
    %v6551 = vmul.f32 %v6295, %v6295
    %v6552 = vmul.f32 %v6296, %v6296
    %v6553 = vmul.f32 %v6297, %v6297
    %v6554 = vmul.f32 %v6298, %v6298
    %v6555 = vmul.f32 %v6299, %v6299
    %v6556 = vmul.f32 %v6300, %v6300
    %v6557 = vmul.f32 %v6301, %v6301
    %v6558 = vmul.f32 %v6302, %v6302
    %v6559 = vmul.f32 %v6303, %v6303
    %v6560 = vmul.f32 %v6304, %v6304
    %v6561 = vmul.f32 %v6305, %v6305
    %v6562 = vmul.f32 %v6306, %v6306
    %v6563 = vmul.f32 %v6307, %v6307
    %v6564 = vmul.f32 %v6308, %v6308
    %v6565 = vmul.f32 %v6309, %v6309
    %v6566 = vmul.f32 %v6310, %v6310
    %v6567 = vmul.f32 %v6311, %v6311
    %v6568 = vmul.f32 %v6312, %v6312
    %v6569 = vmul.f32 %v6313, %v6313
    %v6570 = vmul.f32 %v6314, %v6314
    %v6571 = vmul.f32 %v6315, %v6315
    %v6572 = vmul.f32 %v6316, %v6316
    %v6573 = vmul.f32 %v6317, %v6317
    %v6574 = vmul.f32 %v6318, %v6318
    %v6575 = vmul.f32 %v6319, %v6319
    %v6576 = vmul.f32 %v6320, %v6320
    %v6577 = vmul.f32 %v6321, %v6321
    %v6578 = vmul.f32 %v6322, %v6322
    %v6579 = vmul.f32 %v6323, %v6323
    %v6580 = vmul.f32 %v6324, %v6324
    %v6581 = vmul.f32 %v6325, %v6325
    %v6582 = vmul.f32 %v6326, %v6326
    %v6583 = vmul.f32 %v6327, %v6327
    %v6584 = vmul.f32 %v6328, %v6328
    %v6585 = vmul.f32 %v6329, %v6329
    %v6586 = vmul.f32 %v6330, %v6330
    %v6587 = vmul.f32 %v6331, %v6331
    %v6588 = vmul.f32 %v6332, %v6332
    %v6589 = vmul.f32 %v6333, %v6333
    %v6590 = vmul.f32 %v6334, %v6334
    %v6591 = vmul.f32 %v6335, %v6335
    %v6592 = vmul.f32 %v6336, %v6336
    %v6593 = vmul.f32 %v6337, %v6337
    %v6594 = vmul.f32 %v6338, %v6338
    %v6595 = vmul.f32 %v6339, %v6339
    %v6596 = vmul.f32 %v6340, %v6340
    %v6597 = vmul.f32 %v6341, %v6341
    %v6598 = vmul.f32 %v6342, %v6342
    %v6599 = vmul.f32 %v6343, %v6343
    %v6600 = vmul.f32 %v6344, %v6344
    %v6601 = vmul.f32 %v6345, %v6345
    %v6602 = vmul.f32 %v6346, %v6346
    %v6603 = vmul.f32 %v6347, %v6347
    %v6604 = vmul.f32 %v6348, %v6348
    %v6605 = vmul.f32 %v6349, %v6349
    %v6606 = vmul.f32 %v6350, %v6350
    %v6607 = vmul.f32 %v6351, %v6351
    %v6608 = vmul.f32 %v6352, %v6352
    %v6609 = vmul.f32 %v6353, %v6353
    %v6610 = vmul.f32 %v6354, %v6354
    %v6611 = vmul.f32 %v6355, %v6355
    %v6612 = vmul.f32 %v6356, %v6356
    %v6613 = vmul.f32 %v6357, %v6357
    %v6614 = vmul.f32 %v6358, %v6358
    %v6615 = vmul.f32 %v6359, %v6359
    %v6616 = vmul.f32 %v6360, %v6360
    %v6617 = vmul.f32 %v6361, %v6361
    %v6618 = vmul.f32 %v6362, %v6362
    %v6619 = vmul.f32 %v6363, %v6363
    %v6620 = vmul.f32 %v6364, %v6364
    %v6621 = vmul.f32 %v6365, %v6365
    %v6622 = vmul.f32 %v6366, %v6366
    %v6623 = vmul.f32 %v6367, %v6367
    %v6624 = vmul.f32 %v6368, %v6368
    %v6625 = vmul.f32 %v6369, %v6369
    %v6626 = vmul.f32 %v6370, %v6370
    %v6627 = vmul.f32 %v6371, %v6371
    %v6628 = vmul.f32 %v6372, %v6372
    %v6629 = vmul.f32 %v6373, %v6373
    %v6630 = vmul.f32 %v6374, %v6374
    %v6631 = vmul.f32 %v6375, %v6375
    %v6632 = vmul.f32 %v6376, %v6376
    %v6633 = vmul.f32 %v6377, %v6377
    %v6634 = vmul.f32 %v6378, %v6378
    %v6635 = vmul.f32 %v6379, %v6379
    %v6636 = vmul.f32 %v6380, %v6380
    %v6637 = vmul.f32 %v6381, %v6381
    %v6638 = vmul.f32 %v6382, %v6382
    %v6639 = vmul.f32 %v6383, %v6383
    %v6640 = vmul.f32 %v6384, %v6384
    %v6641 = vmul.f32 %v6385, %v6385
    %v6642 = vmul.f32 %v6386, %v6386
    %v6643 = vmul.f32 %v6387, %v6387
    %v6644 = vmul.f32 %v6388, %v6388
    %v6645 = vmul.f32 %v6389, %v6389
    %v6646 = vmul.f32 %v6390, %v6390
    %v6647 = vmul.f32 %v6391, %v6391
    %v6648 = vmul.f32 %v6392, %v6392
    %v6649 = vmul.f32 %v6393, %v6393
    %v6650 = vmul.f32 %v6394, %v6394
    %v6651 = vmul.f32 %v6395, %v6395
    %v6652 = vmul.f32 %v6396, %v6396
    %v6653 = vmul.f32 %v6397, %v6397
    %v6654 = vmul.f32 %v6398, %v6398
    %v6655 = vmul.f32 %v6399, %v6399
    %v6656 = vmul.f32 %v6400, %v6400
    %v6657 = vmul.f32 %v6401, %v6401
    %v6658 = vmul.f32 %v6402, %v6402
    %v6659 = vmul.f32 %v6403, %v6403
    %v6660 = vmul.f32 %v6404, %v6404
    %v6661 = vmul.f32 %v6405, %v6405
    %v6662 = vmul.f32 %v6406, %v6406
    %v6663 = vmul.f32 %v6407, %v6407
    %v6664 = vmul.f32 %v6408, %v6408
    %v6665 = vmul.f32 %v6409, %v6409
    %v6666 = vmul.f32 %v6410, %v6410
    %v6667 = vmul.f32 %v6411, %v6411
    %v6668 = vmul.f32 %v6412, %v6412
    %v6669 = vmul.f32 %v6413, %v6413
    %v6670 = vmul.f32 %v6414, %v6414
    %v6671 = vmul.f32 %v6415, %v6415
    %v6672 = vmul.f32 %v6416, %v6416
    %v6673 = vmul.f32 %v6417, %v6417
    %v6674 = vmul.f32 %v6418, %v6418
    %v6675 = vmul.f32 %v6419, %v6419
    %v6676 = vmul.f32 %v6420, %v6420
    %v6677 = vmul.f32 %v6421, %v6421
    %v6678 = vmul.f32 %v6422, %v6422
    %v6679 = vmul.f32 %v6423, %v6423
    %v6680 = vmul.f32 %v6424, %v6424
    %v6681 = vmul.f32 %v6425, %v6425
    %v6682 = vmul.f32 %v6426, %v6426
    %v6683 = vmul.f32 %v6427, %v6427
    %v6684 = vmul.f32 %v6428, %v6428
    %v6685 = vmul.f32 %v6429, %v6429
    %v6686 = vmul.f32 %v6430, %v6430
    %v6687 = vmul.f32 %v6431, %v6431
    %v6688 = vmul.f32 %v6432, %v6432
    %v6689 = vmul.f32 %v6433, %v6433
    %v6690 = vmul.f32 %v6434, %v6434
    %v6691 = vmul.f32 %v6435, %v6435
    %v6692 = vmul.f32 %v6436, %v6436
    %v6693 = vmul.f32 %v6437, %v6437
    %v6694 = vmul.f32 %v6438, %v6438
    %v6695 = vmul.f32 %v6439, %v6439
    %v6696 = vmul.f32 %v6440, %v6440
    %v6697 = vmul.f32 %v6441, %v6441
    %v6698 = vmul.f32 %v6442, %v6442
    %v6699 = vmul.f32 %v6443, %v6443
    %v6700 = vmul.f32 %v6444, %v6444
    %v6701 = vmul.f32 %v6445, %v6445
    %v6702 = vmul.f32 %v6446, %v5166
    %v6703 = vmul.f32 %v6447, %v5167
    %v6704 = vmul.f32 %v6448, %v5168
    %v6705 = vmul.f32 %v6449, %v5169
    %v6706 = vmul.f32 %v6450, %v5170
    %v6707 = vmul.f32 %v6451, %v5171
    %v6708 = vmul.f32 %v6452, %v5172
    %v6709 = vmul.f32 %v6453, %v5173
    %v6710 = vmul.f32 %v6454, %v5174
    %v6711 = vmul.f32 %v6455, %v5175
    %v6712 = vmul.f32 %v6456, %v5176
    %v6713 = vmul.f32 %v6457, %v5177
    %v6714 = vmul.f32 %v6458, %v5178
    %v6715 = vmul.f32 %v6459, %v5179
    %v6716 = vmul.f32 %v6460, %v5180
    %v6717 = vmul.f32 %v6461, %v5181
    %v6718 = vmul.f32 %v6462, %v5182
    %v6719 = vmul.f32 %v6463, %v5183
    %v6720 = vmul.f32 %v6464, %v5184
    %v6721 = vmul.f32 %v6465, %v5185
    %v6722 = vmul.f32 %v6466, %v5186
    %v6723 = vmul.f32 %v6467, %v5187
    %v6724 = vmul.f32 %v6468, %v5188
    %v6725 = vmul.f32 %v6469, %v5189
    %v6726 = vmul.f32 %v6470, %v5190
    %v6727 = vmul.f32 %v6471, %v5191
    %v6728 = vmul.f32 %v6472, %v5192
    %v6729 = vmul.f32 %v6473, %v5193
    %v6730 = vmul.f32 %v6474, %v5194
    %v6731 = vmul.f32 %v6475, %v5195
    %v6732 = vmul.f32 %v6476, %v5196
    %v6733 = vmul.f32 %v6477, %v5197
    %v6734 = vmul.f32 %v6478, %v5198
    %v6735 = vmul.f32 %v6479, %v5199
    %v6736 = vmul.f32 %v6480, %v5200
    %v6737 = vmul.f32 %v6481, %v5201
    %v6738 = vmul.f32 %v6482, %v5202
    %v6739 = vmul.f32 %v6483, %v5203
    %v6740 = vmul.f32 %v6484, %v5204
    %v6741 = vmul.f32 %v6485, %v5205
    %v6742 = vmul.f32 %v6486, %v5206
    %v6743 = vmul.f32 %v6487, %v5207
    %v6744 = vmul.f32 %v6488, %v5208
    %v6745 = vmul.f32 %v6489, %v5209
    %v6746 = vmul.f32 %v6490, %v5210
    %v6747 = vmul.f32 %v6491, %v5211
    %v6748 = vmul.f32 %v6492, %v5212
    %v6749 = vmul.f32 %v6493, %v5213
    %v6750 = vmul.f32 %v6494, %v5214
    %v6751 = vmul.f32 %v6495, %v5215
    %v6752 = vmul.f32 %v6496, %v5216
    %v6753 = vmul.f32 %v6497, %v5217
    %v6754 = vmul.f32 %v6498, %v5218
    %v6755 = vmul.f32 %v6499, %v5219
    %v6756 = vmul.f32 %v6500, %v5220
    %v6757 = vmul.f32 %v6501, %v5221
    %v6758 = vmul.f32 %v6502, %v5222
    %v6759 = vmul.f32 %v6503, %v5223
    %v6760 = vmul.f32 %v6504, %v5224
    %v6761 = vmul.f32 %v6505, %v5225
    %v6762 = vmul.f32 %v6506, %v5226
    %v6763 = vmul.f32 %v6507, %v5227
    %v6764 = vmul.f32 %v6508, %v5228
    %v6765 = vmul.f32 %v6509, %v5229
    %v6766 = vmul.f32 %v6510, %v5230
    %v6767 = vmul.f32 %v6511, %v5231
    %v6768 = vmul.f32 %v6512, %v5232
    %v6769 = vmul.f32 %v6513, %v5233
    %v6770 = vmul.f32 %v6514, %v5234
    %v6771 = vmul.f32 %v6515, %v5235
    %v6772 = vmul.f32 %v6516, %v5236
    %v6773 = vmul.f32 %v6517, %v5237
    %v6774 = vmul.f32 %v6518, %v5238
    %v6775 = vmul.f32 %v6519, %v5239
    %v6776 = vmul.f32 %v6520, %v5240
    %v6777 = vmul.f32 %v6521, %v5241
    %v6778 = vmul.f32 %v6522, %v5242
    %v6779 = vmul.f32 %v6523, %v5243
    %v6780 = vmul.f32 %v6524, %v5244
    %v6781 = vmul.f32 %v6525, %v5245
    %v6782 = vmul.f32 %v6526, %v5246
    %v6783 = vmul.f32 %v6527, %v5247
    %v6784 = vmul.f32 %v6528, %v5248
    %v6785 = vmul.f32 %v6529, %v5249
    %v6786 = vmul.f32 %v6530, %v5250
    %v6787 = vmul.f32 %v6531, %v5251
    %v6788 = vmul.f32 %v6532, %v5252
    %v6789 = vmul.f32 %v6533, %v5253
    %v6790 = vmul.f32 %v6534, %v5254
    %v6791 = vmul.f32 %v6535, %v5255
    %v6792 = vmul.f32 %v6536, %v5256
    %v6793 = vmul.f32 %v6537, %v5257
    %v6794 = vmul.f32 %v6538, %v5258
    %v6795 = vmul.f32 %v6539, %v5259
    %v6796 = vmul.f32 %v6540, %v5260
    %v6797 = vmul.f32 %v6541, %v5261
    %v6798 = vmul.f32 %v6542, %v5262
    %v6799 = vmul.f32 %v6543, %v5263
    %v6800 = vmul.f32 %v6544, %v5264
    %v6801 = vmul.f32 %v6545, %v5265
    %v6802 = vmul.f32 %v6546, %v5266
    %v6803 = vmul.f32 %v6547, %v5267
    %v6804 = vmul.f32 %v6548, %v5268
    %v6805 = vmul.f32 %v6549, %v5269
    %v6806 = vmul.f32 %v6550, %v5270
    %v6807 = vmul.f32 %v6551, %v5271
    %v6808 = vmul.f32 %v6552, %v5272
    %v6809 = vmul.f32 %v6553, %v5273
    %v6810 = vmul.f32 %v6554, %v5274
    %v6811 = vmul.f32 %v6555, %v5275
    %v6812 = vmul.f32 %v6556, %v5276
    %v6813 = vmul.f32 %v6557, %v5277
    %v6814 = vmul.f32 %v6558, %v5278
    %v6815 = vmul.f32 %v6559, %v5279
    %v6816 = vmul.f32 %v6560, %v5280
    %v6817 = vmul.f32 %v6561, %v5281
    %v6818 = vmul.f32 %v6562, %v5282
    %v6819 = vmul.f32 %v6563, %v5283
    %v6820 = vmul.f32 %v6564, %v5284
    %v6821 = vmul.f32 %v6565, %v5285
    %v6822 = vmul.f32 %v6566, %v5286
    %v6823 = vmul.f32 %v6567, %v5287
    %v6824 = vmul.f32 %v6568, %v5288
    %v6825 = vmul.f32 %v6569, %v5289
    %v6826 = vmul.f32 %v6570, %v5290
    %v6827 = vmul.f32 %v6571, %v5291
    %v6828 = vmul.f32 %v6572, %v5292
    %v6829 = vmul.f32 %v6573, %v5293
    %v6830 = vmul.f32 %v6574, %v5294
    %v6831 = vmul.f32 %v6575, %v5295
    %v6832 = vmul.f32 %v6576, %v5296
    %v6833 = vmul.f32 %v6577, %v5297
    %v6834 = vmul.f32 %v6578, %v5298
    %v6835 = vmul.f32 %v6579, %v5299
    %v6836 = vmul.f32 %v6580, %v5300
    %v6837 = vmul.f32 %v6581, %v5301
    %v6838 = vmul.f32 %v6582, %v5302
    %v6839 = vmul.f32 %v6583, %v5303
    %v6840 = vmul.f32 %v6584, %v5304
    %v6841 = vmul.f32 %v6585, %v5305
    %v6842 = vmul.f32 %v6586, %v5306
    %v6843 = vmul.f32 %v6587, %v5307
    %v6844 = vmul.f32 %v6588, %v5308
    %v6845 = vmul.f32 %v6589, %v5309
    %v6846 = vmul.f32 %v6590, %v5310
    %v6847 = vmul.f32 %v6591, %v5311
    %v6848 = vmul.f32 %v6592, %v5312
    %v6849 = vmul.f32 %v6593, %v5313
    %v6850 = vmul.f32 %v6594, %v5314
    %v6851 = vmul.f32 %v6595, %v5315
    %v6852 = vmul.f32 %v6596, %v5316
    %v6853 = vmul.f32 %v6597, %v5317
    %v6854 = vmul.f32 %v6598, %v5318
    %v6855 = vmul.f32 %v6599, %v5319
    %v6856 = vmul.f32 %v6600, %v5320
    %v6857 = vmul.f32 %v6601, %v5321
    %v6858 = vmul.f32 %v6602, %v5322
    %v6859 = vmul.f32 %v6603, %v5323
    %v6860 = vmul.f32 %v6604, %v5324
    %v6861 = vmul.f32 %v6605, %v5325
    %v6862 = vmul.f32 %v6606, %v5326
    %v6863 = vmul.f32 %v6607, %v5327
    %v6864 = vmul.f32 %v6608, %v5328
    %v6865 = vmul.f32 %v6609, %v5329
    %v6866 = vmul.f32 %v6610, %v5330
    %v6867 = vmul.f32 %v6611, %v5331
    %v6868 = vmul.f32 %v6612, %v5332
    %v6869 = vmul.f32 %v6613, %v5333
    %v6870 = vmul.f32 %v6614, %v5334
    %v6871 = vmul.f32 %v6615, %v5335
    %v6872 = vmul.f32 %v6616, %v5336
    %v6873 = vmul.f32 %v6617, %v5337
    %v6874 = vmul.f32 %v6618, %v5338
    %v6875 = vmul.f32 %v6619, %v5339
    %v6876 = vmul.f32 %v6620, %v5340
    %v6877 = vmul.f32 %v6621, %v5341
    %v6878 = vmul.f32 %v6622, %v5342
    %v6879 = vmul.f32 %v6623, %v5343
    %v6880 = vmul.f32 %v6624, %v5344
    %v6881 = vmul.f32 %v6625, %v5345
    %v6882 = vmul.f32 %v6626, %v5346
    %v6883 = vmul.f32 %v6627, %v5347
    %v6884 = vmul.f32 %v6628, %v5348
    %v6885 = vmul.f32 %v6629, %v5349
    %v6886 = vmul.f32 %v6630, %v5350
    %v6887 = vmul.f32 %v6631, %v5351
    %v6888 = vmul.f32 %v6632, %v5352
    %v6889 = vmul.f32 %v6633, %v5353
    %v6890 = vmul.f32 %v6634, %v5354
    %v6891 = vmul.f32 %v6635, %v5355
    %v6892 = vmul.f32 %v6636, %v5356
    %v6893 = vmul.f32 %v6637, %v5357
    %v6894 = vmul.f32 %v6638, %v5358
    %v6895 = vmul.f32 %v6639, %v5359
    %v6896 = vmul.f32 %v6640, %v5360
    %v6897 = vmul.f32 %v6641, %v5361
    %v6898 = vmul.f32 %v6642, %v5362
    %v6899 = vmul.f32 %v6643, %v5363
    %v6900 = vmul.f32 %v6644, %v5364
    %v6901 = vmul.f32 %v6645, %v5365
    %v6902 = vmul.f32 %v6646, %v5366
    %v6903 = vmul.f32 %v6647, %v5367
    %v6904 = vmul.f32 %v6648, %v5368
    %v6905 = vmul.f32 %v6649, %v5369
    %v6906 = vmul.f32 %v6650, %v5370
    %v6907 = vmul.f32 %v6651, %v5371
    %v6908 = vmul.f32 %v6652, %v5372
    %v6909 = vmul.f32 %v6653, %v5373
    %v6910 = vmul.f32 %v6654, %v5374
    %v6911 = vmul.f32 %v6655, %v5375
    %v6912 = vmul.f32 %v6656, %v5376
    %v6913 = vmul.f32 %v6657, %v5377
    %v6914 = vmul.f32 %v6658, %v5378
    %v6915 = vmul.f32 %v6659, %v5379
    %v6916 = vmul.f32 %v6660, %v5380
    %v6917 = vmul.f32 %v6661, %v5381
    %v6918 = vmul.f32 %v6662, %v5382
    %v6919 = vmul.f32 %v6663, %v5383
    %v6920 = vmul.f32 %v6664, %v5384
    %v6921 = vmul.f32 %v6665, %v5385
    %v6922 = vmul.f32 %v6666, %v5386
    %v6923 = vmul.f32 %v6667, %v5387
    %v6924 = vmul.f32 %v6668, %v5388
    %v6925 = vmul.f32 %v6669, %v5389
    %v6926 = vmul.f32 %v6670, %v5390
    %v6927 = vmul.f32 %v6671, %v5391
    %v6928 = vmul.f32 %v6672, %v5392
    %v6929 = vmul.f32 %v6673, %v5393
    %v6930 = vmul.f32 %v6674, %v5394
    %v6931 = vmul.f32 %v6675, %v5395
    %v6932 = vmul.f32 %v6676, %v5396
    %v6933 = vmul.f32 %v6677, %v5397
    %v6934 = vmul.f32 %v6678, %v5398
    %v6935 = vmul.f32 %v6679, %v5399
    %v6936 = vmul.f32 %v6680, %v5400
    %v6937 = vmul.f32 %v6681, %v5401
    %v6938 = vmul.f32 %v6682, %v5402
    %v6939 = vmul.f32 %v6683, %v5403
    %v6940 = vmul.f32 %v6684, %v5404
    %v6941 = vmul.f32 %v6685, %v5405
    %v6942 = vmul.f32 %v6686, %v5406
    %v6943 = vmul.f32 %v6687, %v5407
    %v6944 = vmul.f32 %v6688, %v5408
    %v6945 = vmul.f32 %v6689, %v5409
    %v6946 = vmul.f32 %v6690, %v5410
    %v6947 = vmul.f32 %v6691, %v5411
    %v6948 = vmul.f32 %v6692, %v5412
    %v6949 = vmul.f32 %v6693, %v5413
    %v6950 = vmul.f32 %v6694, %v5414
    %v6951 = vmul.f32 %v6695, %v5415
    %v6952 = vmul.f32 %v6696, %v5416
    %v6953 = vmul.f32 %v6697, %v5417
    %v6954 = vmul.f32 %v6698, %v5418
    %v6955 = vmul.f32 %v6699, %v5419
    %v6956 = vmul.f32 %v6700, %v5420
    %v6957 = vmul.f32 %v6701, %v5421
    %v6958 = vlaneseq
    %v6959 = vshrl.u32 %v6958, 7
    %v6960 = vadd.s32 %v6959, 8
    %v6961 = vadd.s32 %v6959, 16
    %v6962 = vadd.s32 %v6959, 24
    %v6963 = vadd.s32 %v6959, 32
    %v6964 = vadd.s32 %v6959, 40
    %v6965 = vadd.s32 %v6959, 48
    %v6966 = vadd.s32 %v6959, 56
    %v6967 = vadd.s32 %v6959, 64
    %v6968 = vadd.s32 %v6959, 72
    %v6969 = vadd.s32 %v6959, 80
    %v6970 = vadd.s32 %v6959, 88
    %v6971 = vadd.s32 %v6959, 96
    %v6972 = vadd.s32 %v6959, 104
    %v6973 = vadd.s32 %v6959, 112
    %v6974 = vadd.s32 %v6959, 120
    %v6975 = vadd.s32 %v6959, 128
    %v6976 = vadd.s32 %v6959, 136
    %v6977 = vadd.s32 %v6959, 144
    %v6978 = vadd.s32 %v6959, 152
    %v6979 = vadd.s32 %v6959, 160
    %v6980 = vadd.s32 %v6959, 168
    %v6981 = vadd.s32 %v6959, 176
    %v6982 = vadd.s32 %v6959, 184
    %v6983 = vadd.s32 %v6959, 192
    %v6984 = vadd.s32 %v6959, 200
    %v6985 = vadd.s32 %v6959, 208
    %v6986 = vadd.s32 %v6959, 216
    %v6987 = vadd.s32 %v6959, 224
    %v6988 = vadd.s32 %v6959, 232
    %v6989 = vadd.s32 %v6959, 240
    %v6990 = vadd.s32 %v6959, 248
    %v6991 = vadd.s32 %v6959, 256
    %v6992 = vadd.s32 %v6959, 264
    %v6993 = vadd.s32 %v6959, 272
    %v6994 = vadd.s32 %v6959, 280
    %v6995 = vadd.s32 %v6959, 288
    %v6996 = vadd.s32 %v6959, 296
    %v6997 = vadd.s32 %v6959, 304
    %v6998 = vadd.s32 %v6959, 312
    %v6999 = vadd.s32 %v6959, 320
    %v7000 = vadd.s32 %v6959, 328
    %v7001 = vadd.s32 %v6959, 336
    %v7002 = vadd.s32 %v6959, 344
    %v7003 = vadd.s32 %v6959, 352
    %v7004 = vadd.s32 %v6959, 360
    %v7005 = vadd.s32 %v6959, 368
    %v7006 = vadd.s32 %v6959, 376
    %v7007 = vadd.s32 %v6959, 384
    %v7008 = vadd.s32 %v6959, 392
    %v7009 = vadd.s32 %v6959, 400
    %v7010 = vadd.s32 %v6959, 408
    %v7011 = vadd.s32 %v6959, 416
    %v7012 = vadd.s32 %v6959, 424
    %v7013 = vadd.s32 %v6959, 432
    %v7014 = vadd.s32 %v6959, 440
    %v7015 = vadd.s32 %v6959, 448
    %v7016 = vadd.s32 %v6959, 456
    %v7017 = vadd.s32 %v6959, 464
    %v7018 = vadd.s32 %v6959, 472
    %v7019 = vadd.s32 %v6959, 480
    %v7020 = vadd.s32 %v6959, 488
    %v7021 = vadd.s32 %v6959, 496
    %v7022 = vadd.s32 %v6959, 504
    %s7023 = smul.u32 0, 512
    %v7024 = vstv %s7023
    %v7025 = vadd.s32 %v6959, %v7024
    %v7026 = vadd.s32 %v6960, %v7024
    %v7027 = vadd.s32 %v6961, %v7024
    %v7028 = vadd.s32 %v6962, %v7024
    %v7029 = vadd.s32 %v6963, %v7024
    %v7030 = vadd.s32 %v6964, %v7024
    %v7031 = vadd.s32 %v6965, %v7024
    %v7032 = vadd.s32 %v6966, %v7024
    %v7033 = vadd.s32 %v6967, %v7024
    %v7034 = vadd.s32 %v6968, %v7024
    %v7035 = vadd.s32 %v6969, %v7024
    %v7036 = vadd.s32 %v6970, %v7024
    %v7037 = vadd.s32 %v6971, %v7024
    %v7038 = vadd.s32 %v6972, %v7024
    %v7039 = vadd.s32 %v6973, %v7024
    %v7040 = vadd.s32 %v6974, %v7024
    %v7041 = vadd.s32 %v6975, %v7024
    %v7042 = vadd.s32 %v6976, %v7024
    %v7043 = vadd.s32 %v6977, %v7024
    %v7044 = vadd.s32 %v6978, %v7024
    %v7045 = vadd.s32 %v6979, %v7024
    %v7046 = vadd.s32 %v6980, %v7024
    %v7047 = vadd.s32 %v6981, %v7024
    %v7048 = vadd.s32 %v6982, %v7024
    %v7049 = vadd.s32 %v6983, %v7024
    %v7050 = vadd.s32 %v6984, %v7024
    %v7051 = vadd.s32 %v6985, %v7024
    %v7052 = vadd.s32 %v6986, %v7024
    %v7053 = vadd.s32 %v6987, %v7024
    %v7054 = vadd.s32 %v6988, %v7024
    %v7055 = vadd.s32 %v6989, %v7024
    %v7056 = vadd.s32 %v6990, %v7024
    %v7057 = vadd.s32 %v6991, %v7024
    %v7058 = vadd.s32 %v6992, %v7024
    %v7059 = vadd.s32 %v6993, %v7024
    %v7060 = vadd.s32 %v6994, %v7024
    %v7061 = vadd.s32 %v6995, %v7024
    %v7062 = vadd.s32 %v6996, %v7024
    %v7063 = vadd.s32 %v6997, %v7024
    %v7064 = vadd.s32 %v6998, %v7024
    %v7065 = vadd.s32 %v6999, %v7024
    %v7066 = vadd.s32 %v7000, %v7024
    %v7067 = vadd.s32 %v7001, %v7024
    %v7068 = vadd.s32 %v7002, %v7024
    %v7069 = vadd.s32 %v7003, %v7024
    %v7070 = vadd.s32 %v7004, %v7024
    %v7071 = vadd.s32 %v7005, %v7024
    %v7072 = vadd.s32 %v7006, %v7024
    %v7073 = vadd.s32 %v7007, %v7024
    %v7074 = vadd.s32 %v7008, %v7024
    %v7075 = vadd.s32 %v7009, %v7024
    %v7076 = vadd.s32 %v7010, %v7024
    %v7077 = vadd.s32 %v7011, %v7024
    %v7078 = vadd.s32 %v7012, %v7024
    %v7079 = vadd.s32 %v7013, %v7024
    %v7080 = vadd.s32 %v7014, %v7024
    %v7081 = vadd.s32 %v7015, %v7024
    %v7082 = vadd.s32 %v7016, %v7024
    %v7083 = vadd.s32 %v7017, %v7024
    %v7084 = vadd.s32 %v7018, %v7024
    %v7085 = vadd.s32 %v7019, %v7024
    %v7086 = vadd.s32 %v7020, %v7024
    %v7087 = vadd.s32 %v7021, %v7024
    %v7088 = vadd.s32 %v7022, %v7024
    %v7089 = vlaneseq
    %v7090 = vand.u32 %v7089, 127
    %v7091 = vadd.s32 %v7090, 128
    %v7092 = vadd.s32 %v7090, 256
    %v7093 = vadd.s32 %v7090, 384
    %v7094 = vmul.u32 %v7025, 512
    %v7095 = vmul.u32 %v7026, 512
    %v7096 = vmul.u32 %v7027, 512
    %v7097 = vmul.u32 %v7028, 512
    %v7098 = vmul.u32 %v7029, 512
    %v7099 = vmul.u32 %v7030, 512
    %v7100 = vmul.u32 %v7031, 512
    %v7101 = vmul.u32 %v7032, 512
    %v7102 = vmul.u32 %v7033, 512
    %v7103 = vmul.u32 %v7034, 512
    %v7104 = vmul.u32 %v7035, 512
    %v7105 = vmul.u32 %v7036, 512
    %v7106 = vmul.u32 %v7037, 512
    %v7107 = vmul.u32 %v7038, 512
    %v7108 = vmul.u32 %v7039, 512
    %v7109 = vmul.u32 %v7040, 512
    %v7110 = vmul.u32 %v7041, 512
    %v7111 = vmul.u32 %v7042, 512
    %v7112 = vmul.u32 %v7043, 512
    %v7113 = vmul.u32 %v7044, 512
    %v7114 = vmul.u32 %v7045, 512
    %v7115 = vmul.u32 %v7046, 512
    %v7116 = vmul.u32 %v7047, 512
    %v7117 = vmul.u32 %v7048, 512
    %v7118 = vmul.u32 %v7049, 512
    %v7119 = vmul.u32 %v7050, 512
    %v7120 = vmul.u32 %v7051, 512
    %v7121 = vmul.u32 %v7052, 512
    %v7122 = vmul.u32 %v7053, 512
    %v7123 = vmul.u32 %v7054, 512
    %v7124 = vmul.u32 %v7055, 512
    %v7125 = vmul.u32 %v7056, 512
    %v7126 = vmul.u32 %v7057, 512
    %v7127 = vmul.u32 %v7058, 512
    %v7128 = vmul.u32 %v7059, 512
    %v7129 = vmul.u32 %v7060, 512
    %v7130 = vmul.u32 %v7061, 512
    %v7131 = vmul.u32 %v7062, 512
    %v7132 = vmul.u32 %v7063, 512
    %v7133 = vmul.u32 %v7064, 512
    %v7134 = vmul.u32 %v7065, 512
    %v7135 = vmul.u32 %v7066, 512
    %v7136 = vmul.u32 %v7067, 512
    %v7137 = vmul.u32 %v7068, 512
    %v7138 = vmul.u32 %v7069, 512
    %v7139 = vmul.u32 %v7070, 512
    %v7140 = vmul.u32 %v7071, 512
    %v7141 = vmul.u32 %v7072, 512
    %v7142 = vmul.u32 %v7073, 512
    %v7143 = vmul.u32 %v7074, 512
    %v7144 = vmul.u32 %v7075, 512
    %v7145 = vmul.u32 %v7076, 512
    %v7146 = vmul.u32 %v7077, 512
    %v7147 = vmul.u32 %v7078, 512
    %v7148 = vmul.u32 %v7079, 512
    %v7149 = vmul.u32 %v7080, 512
    %v7150 = vmul.u32 %v7081, 512
    %v7151 = vmul.u32 %v7082, 512
    %v7152 = vmul.u32 %v7083, 512
    %v7153 = vmul.u32 %v7084, 512
    %v7154 = vmul.u32 %v7085, 512
    %v7155 = vmul.u32 %v7086, 512
    %v7156 = vmul.u32 %v7087, 512
    %v7157 = vmul.u32 %v7088, 512
    %v7158 = vadd.s32 %v7094, %v7090
    %v7159 = vadd.s32 %v7094, %v7091
    %v7160 = vadd.s32 %v7094, %v7092
    %v7161 = vadd.s32 %v7094, %v7093
    %v7162 = vadd.s32 %v7095, %v7090
    %v7163 = vadd.s32 %v7095, %v7091
    %v7164 = vadd.s32 %v7095, %v7092
    %v7165 = vadd.s32 %v7095, %v7093
    %v7166 = vadd.s32 %v7096, %v7090
    %v7167 = vadd.s32 %v7096, %v7091
    %v7168 = vadd.s32 %v7096, %v7092
    %v7169 = vadd.s32 %v7096, %v7093
    %v7170 = vadd.s32 %v7097, %v7090
    %v7171 = vadd.s32 %v7097, %v7091
    %v7172 = vadd.s32 %v7097, %v7092
    %v7173 = vadd.s32 %v7097, %v7093
    %v7174 = vadd.s32 %v7098, %v7090
    %v7175 = vadd.s32 %v7098, %v7091
    %v7176 = vadd.s32 %v7098, %v7092
    %v7177 = vadd.s32 %v7098, %v7093
    %v7178 = vadd.s32 %v7099, %v7090
    %v7179 = vadd.s32 %v7099, %v7091
    %v7180 = vadd.s32 %v7099, %v7092
    %v7181 = vadd.s32 %v7099, %v7093
    %v7182 = vadd.s32 %v7100, %v7090
    %v7183 = vadd.s32 %v7100, %v7091
    %v7184 = vadd.s32 %v7100, %v7092
    %v7185 = vadd.s32 %v7100, %v7093
    %v7186 = vadd.s32 %v7101, %v7090
    %v7187 = vadd.s32 %v7101, %v7091
    %v7188 = vadd.s32 %v7101, %v7092
    %v7189 = vadd.s32 %v7101, %v7093
    %v7190 = vadd.s32 %v7102, %v7090
    %v7191 = vadd.s32 %v7102, %v7091
    %v7192 = vadd.s32 %v7102, %v7092
    %v7193 = vadd.s32 %v7102, %v7093
    %v7194 = vadd.s32 %v7103, %v7090
    %v7195 = vadd.s32 %v7103, %v7091
    %v7196 = vadd.s32 %v7103, %v7092
    %v7197 = vadd.s32 %v7103, %v7093
    %v7198 = vadd.s32 %v7104, %v7090
    %v7199 = vadd.s32 %v7104, %v7091
    %v7200 = vadd.s32 %v7104, %v7092
    %v7201 = vadd.s32 %v7104, %v7093
    %v7202 = vadd.s32 %v7105, %v7090
    %v7203 = vadd.s32 %v7105, %v7091
    %v7204 = vadd.s32 %v7105, %v7092
    %v7205 = vadd.s32 %v7105, %v7093
    %v7206 = vadd.s32 %v7106, %v7090
    %v7207 = vadd.s32 %v7106, %v7091
    %v7208 = vadd.s32 %v7106, %v7092
    %v7209 = vadd.s32 %v7106, %v7093
    %v7210 = vadd.s32 %v7107, %v7090
    %v7211 = vadd.s32 %v7107, %v7091
    %v7212 = vadd.s32 %v7107, %v7092
    %v7213 = vadd.s32 %v7107, %v7093
    %v7214 = vadd.s32 %v7108, %v7090
    %v7215 = vadd.s32 %v7108, %v7091
    %v7216 = vadd.s32 %v7108, %v7092
    %v7217 = vadd.s32 %v7108, %v7093
    %v7218 = vadd.s32 %v7109, %v7090
    %v7219 = vadd.s32 %v7109, %v7091
    %v7220 = vadd.s32 %v7109, %v7092
    %v7221 = vadd.s32 %v7109, %v7093
    %v7222 = vadd.s32 %v7110, %v7090
    %v7223 = vadd.s32 %v7110, %v7091
    %v7224 = vadd.s32 %v7110, %v7092
    %v7225 = vadd.s32 %v7110, %v7093
    %v7226 = vadd.s32 %v7111, %v7090
    %v7227 = vadd.s32 %v7111, %v7091
    %v7228 = vadd.s32 %v7111, %v7092
    %v7229 = vadd.s32 %v7111, %v7093
    %v7230 = vadd.s32 %v7112, %v7090
    %v7231 = vadd.s32 %v7112, %v7091
    %v7232 = vadd.s32 %v7112, %v7092
    %v7233 = vadd.s32 %v7112, %v7093
    %v7234 = vadd.s32 %v7113, %v7090
    %v7235 = vadd.s32 %v7113, %v7091
    %v7236 = vadd.s32 %v7113, %v7092
    %v7237 = vadd.s32 %v7113, %v7093
    %v7238 = vadd.s32 %v7114, %v7090
    %v7239 = vadd.s32 %v7114, %v7091
    %v7240 = vadd.s32 %v7114, %v7092
    %v7241 = vadd.s32 %v7114, %v7093
    %v7242 = vadd.s32 %v7115, %v7090
    %v7243 = vadd.s32 %v7115, %v7091
    %v7244 = vadd.s32 %v7115, %v7092
    %v7245 = vadd.s32 %v7115, %v7093
    %v7246 = vadd.s32 %v7116, %v7090
    %v7247 = vadd.s32 %v7116, %v7091
    %v7248 = vadd.s32 %v7116, %v7092
    %v7249 = vadd.s32 %v7116, %v7093
    %v7250 = vadd.s32 %v7117, %v7090
    %v7251 = vadd.s32 %v7117, %v7091
    %v7252 = vadd.s32 %v7117, %v7092
    %v7253 = vadd.s32 %v7117, %v7093
    %v7254 = vadd.s32 %v7118, %v7090
    %v7255 = vadd.s32 %v7118, %v7091
    %v7256 = vadd.s32 %v7118, %v7092
    %v7257 = vadd.s32 %v7118, %v7093
    %v7258 = vadd.s32 %v7119, %v7090
    %v7259 = vadd.s32 %v7119, %v7091
    %v7260 = vadd.s32 %v7119, %v7092
    %v7261 = vadd.s32 %v7119, %v7093
    %v7262 = vadd.s32 %v7120, %v7090
    %v7263 = vadd.s32 %v7120, %v7091
    %v7264 = vadd.s32 %v7120, %v7092
    %v7265 = vadd.s32 %v7120, %v7093
    %v7266 = vadd.s32 %v7121, %v7090
    %v7267 = vadd.s32 %v7121, %v7091
    %v7268 = vadd.s32 %v7121, %v7092
    %v7269 = vadd.s32 %v7121, %v7093
    %v7270 = vadd.s32 %v7122, %v7090
    %v7271 = vadd.s32 %v7122, %v7091
    %v7272 = vadd.s32 %v7122, %v7092
    %v7273 = vadd.s32 %v7122, %v7093
    %v7274 = vadd.s32 %v7123, %v7090
    %v7275 = vadd.s32 %v7123, %v7091
    %v7276 = vadd.s32 %v7123, %v7092
    %v7277 = vadd.s32 %v7123, %v7093
    %v7278 = vadd.s32 %v7124, %v7090
    %v7279 = vadd.s32 %v7124, %v7091
    %v7280 = vadd.s32 %v7124, %v7092
    %v7281 = vadd.s32 %v7124, %v7093
    %v7282 = vadd.s32 %v7125, %v7090
    %v7283 = vadd.s32 %v7125, %v7091
    %v7284 = vadd.s32 %v7125, %v7092
    %v7285 = vadd.s32 %v7125, %v7093
    %v7286 = vadd.s32 %v7126, %v7090
    %v7287 = vadd.s32 %v7126, %v7091
    %v7288 = vadd.s32 %v7126, %v7092
    %v7289 = vadd.s32 %v7126, %v7093
    %v7290 = vadd.s32 %v7127, %v7090
    %v7291 = vadd.s32 %v7127, %v7091
    %v7292 = vadd.s32 %v7127, %v7092
    %v7293 = vadd.s32 %v7127, %v7093
    %v7294 = vadd.s32 %v7128, %v7090
    %v7295 = vadd.s32 %v7128, %v7091
    %v7296 = vadd.s32 %v7128, %v7092
    %v7297 = vadd.s32 %v7128, %v7093
    %v7298 = vadd.s32 %v7129, %v7090
    %v7299 = vadd.s32 %v7129, %v7091
    %v7300 = vadd.s32 %v7129, %v7092
    %v7301 = vadd.s32 %v7129, %v7093
    %v7302 = vadd.s32 %v7130, %v7090
    %v7303 = vadd.s32 %v7130, %v7091
    %v7304 = vadd.s32 %v7130, %v7092
    %v7305 = vadd.s32 %v7130, %v7093
    %v7306 = vadd.s32 %v7131, %v7090
    %v7307 = vadd.s32 %v7131, %v7091
    %v7308 = vadd.s32 %v7131, %v7092
    %v7309 = vadd.s32 %v7131, %v7093
    %v7310 = vadd.s32 %v7132, %v7090
    %v7311 = vadd.s32 %v7132, %v7091
    %v7312 = vadd.s32 %v7132, %v7092
    %v7313 = vadd.s32 %v7132, %v7093
    %v7314 = vadd.s32 %v7133, %v7090
    %v7315 = vadd.s32 %v7133, %v7091
    %v7316 = vadd.s32 %v7133, %v7092
    %v7317 = vadd.s32 %v7133, %v7093
    %v7318 = vadd.s32 %v7134, %v7090
    %v7319 = vadd.s32 %v7134, %v7091
    %v7320 = vadd.s32 %v7134, %v7092
    %v7321 = vadd.s32 %v7134, %v7093
    %v7322 = vadd.s32 %v7135, %v7090
    %v7323 = vadd.s32 %v7135, %v7091
    %v7324 = vadd.s32 %v7135, %v7092
    %v7325 = vadd.s32 %v7135, %v7093
    %v7326 = vadd.s32 %v7136, %v7090
    %v7327 = vadd.s32 %v7136, %v7091
    %v7328 = vadd.s32 %v7136, %v7092
    %v7329 = vadd.s32 %v7136, %v7093
    %v7330 = vadd.s32 %v7137, %v7090
    %v7331 = vadd.s32 %v7137, %v7091
    %v7332 = vadd.s32 %v7137, %v7092
    %v7333 = vadd.s32 %v7137, %v7093
    %v7334 = vadd.s32 %v7138, %v7090
    %v7335 = vadd.s32 %v7138, %v7091
    %v7336 = vadd.s32 %v7138, %v7092
    %v7337 = vadd.s32 %v7138, %v7093
    %v7338 = vadd.s32 %v7139, %v7090
    %v7339 = vadd.s32 %v7139, %v7091
    %v7340 = vadd.s32 %v7139, %v7092
    %v7341 = vadd.s32 %v7139, %v7093
    %v7342 = vadd.s32 %v7140, %v7090
    %v7343 = vadd.s32 %v7140, %v7091
    %v7344 = vadd.s32 %v7140, %v7092
    %v7345 = vadd.s32 %v7140, %v7093
    %v7346 = vadd.s32 %v7141, %v7090
    %v7347 = vadd.s32 %v7141, %v7091
    %v7348 = vadd.s32 %v7141, %v7092
    %v7349 = vadd.s32 %v7141, %v7093
    %v7350 = vadd.s32 %v7142, %v7090
    %v7351 = vadd.s32 %v7142, %v7091
    %v7352 = vadd.s32 %v7142, %v7092
    %v7353 = vadd.s32 %v7142, %v7093
    %v7354 = vadd.s32 %v7143, %v7090
    %v7355 = vadd.s32 %v7143, %v7091
    %v7356 = vadd.s32 %v7143, %v7092
    %v7357 = vadd.s32 %v7143, %v7093
    %v7358 = vadd.s32 %v7144, %v7090
    %v7359 = vadd.s32 %v7144, %v7091
    %v7360 = vadd.s32 %v7144, %v7092
    %v7361 = vadd.s32 %v7144, %v7093
    %v7362 = vadd.s32 %v7145, %v7090
    %v7363 = vadd.s32 %v7145, %v7091
    %v7364 = vadd.s32 %v7145, %v7092
    %v7365 = vadd.s32 %v7145, %v7093
    %v7366 = vadd.s32 %v7146, %v7090
    %v7367 = vadd.s32 %v7146, %v7091
    %v7368 = vadd.s32 %v7146, %v7092
    %v7369 = vadd.s32 %v7146, %v7093
    %v7370 = vadd.s32 %v7147, %v7090
    %v7371 = vadd.s32 %v7147, %v7091
    %v7372 = vadd.s32 %v7147, %v7092
    %v7373 = vadd.s32 %v7147, %v7093
    %v7374 = vadd.s32 %v7148, %v7090
    %v7375 = vadd.s32 %v7148, %v7091
    %v7376 = vadd.s32 %v7148, %v7092
    %v7377 = vadd.s32 %v7148, %v7093
    %v7378 = vadd.s32 %v7149, %v7090
    %v7379 = vadd.s32 %v7149, %v7091
    %v7380 = vadd.s32 %v7149, %v7092
    %v7381 = vadd.s32 %v7149, %v7093
    %v7382 = vadd.s32 %v7150, %v7090
    %v7383 = vadd.s32 %v7150, %v7091
    %v7384 = vadd.s32 %v7150, %v7092
    %v7385 = vadd.s32 %v7150, %v7093
    %v7386 = vadd.s32 %v7151, %v7090
    %v7387 = vadd.s32 %v7151, %v7091
    %v7388 = vadd.s32 %v7151, %v7092
    %v7389 = vadd.s32 %v7151, %v7093
    %v7390 = vadd.s32 %v7152, %v7090
    %v7391 = vadd.s32 %v7152, %v7091
    %v7392 = vadd.s32 %v7152, %v7092
    %v7393 = vadd.s32 %v7152, %v7093
    %v7394 = vadd.s32 %v7153, %v7090
    %v7395 = vadd.s32 %v7153, %v7091
    %v7396 = vadd.s32 %v7153, %v7092
    %v7397 = vadd.s32 %v7153, %v7093
    %v7398 = vadd.s32 %v7154, %v7090
    %v7399 = vadd.s32 %v7154, %v7091
    %v7400 = vadd.s32 %v7154, %v7092
    %v7401 = vadd.s32 %v7154, %v7093
    %v7402 = vadd.s32 %v7155, %v7090
    %v7403 = vadd.s32 %v7155, %v7091
    %v7404 = vadd.s32 %v7155, %v7092
    %v7405 = vadd.s32 %v7155, %v7093
    %v7406 = vadd.s32 %v7156, %v7090
    %v7407 = vadd.s32 %v7156, %v7091
    %v7408 = vadd.s32 %v7156, %v7092
    %v7409 = vadd.s32 %v7156, %v7093
    %v7410 = vadd.s32 %v7157, %v7090
    %v7411 = vadd.s32 %v7157, %v7091
    %v7412 = vadd.s32 %v7157, %v7092
    %v7413 = vadd.s32 %v7157, %v7093
    %vm7414 = vcmp.lt.s32.totalorder %v7158, 2048
    %vm7415 = vcmp.lt.s32.totalorder %v7159, 2048
    %vm7416 = vcmp.lt.s32.totalorder %v7160, 2048
    %vm7417 = vcmp.lt.s32.totalorder %v7161, 2048
    %vm7418 = vcmp.lt.s32.totalorder %v7162, 2048
    %vm7419 = vcmp.lt.s32.totalorder %v7163, 2048
    %vm7420 = vcmp.lt.s32.totalorder %v7164, 2048
    %vm7421 = vcmp.lt.s32.totalorder %v7165, 2048
    %vm7422 = vcmp.lt.s32.totalorder %v7166, 2048
    %vm7423 = vcmp.lt.s32.totalorder %v7167, 2048
    %vm7424 = vcmp.lt.s32.totalorder %v7168, 2048
    %vm7425 = vcmp.lt.s32.totalorder %v7169, 2048
    %vm7426 = vcmp.lt.s32.totalorder %v7170, 2048
    %vm7427 = vcmp.lt.s32.totalorder %v7171, 2048
    %vm7428 = vcmp.lt.s32.totalorder %v7172, 2048
    %vm7429 = vcmp.lt.s32.totalorder %v7173, 2048
    %vm7430 = vcmp.lt.s32.totalorder %v7174, 2048
    %vm7431 = vcmp.lt.s32.totalorder %v7175, 2048
    %vm7432 = vcmp.lt.s32.totalorder %v7176, 2048
    %vm7433 = vcmp.lt.s32.totalorder %v7177, 2048
    %vm7434 = vcmp.lt.s32.totalorder %v7178, 2048
    %vm7435 = vcmp.lt.s32.totalorder %v7179, 2048
    %vm7436 = vcmp.lt.s32.totalorder %v7180, 2048
    %vm7437 = vcmp.lt.s32.totalorder %v7181, 2048
    %vm7438 = vcmp.lt.s32.totalorder %v7182, 2048
    %vm7439 = vcmp.lt.s32.totalorder %v7183, 2048
    %vm7440 = vcmp.lt.s32.totalorder %v7184, 2048
    %vm7441 = vcmp.lt.s32.totalorder %v7185, 2048
    %vm7442 = vcmp.lt.s32.totalorder %v7186, 2048
    %vm7443 = vcmp.lt.s32.totalorder %v7187, 2048
    %vm7444 = vcmp.lt.s32.totalorder %v7188, 2048
    %vm7445 = vcmp.lt.s32.totalorder %v7189, 2048
    %vm7446 = vcmp.lt.s32.totalorder %v7190, 2048
    %vm7447 = vcmp.lt.s32.totalorder %v7191, 2048
    %vm7448 = vcmp.lt.s32.totalorder %v7192, 2048
    %vm7449 = vcmp.lt.s32.totalorder %v7193, 2048
    %vm7450 = vcmp.lt.s32.totalorder %v7194, 2048
    %vm7451 = vcmp.lt.s32.totalorder %v7195, 2048
    %vm7452 = vcmp.lt.s32.totalorder %v7196, 2048
    %vm7453 = vcmp.lt.s32.totalorder %v7197, 2048
    %vm7454 = vcmp.lt.s32.totalorder %v7198, 2048
    %vm7455 = vcmp.lt.s32.totalorder %v7199, 2048
    %vm7456 = vcmp.lt.s32.totalorder %v7200, 2048
    %vm7457 = vcmp.lt.s32.totalorder %v7201, 2048
    %vm7458 = vcmp.lt.s32.totalorder %v7202, 2048
    %vm7459 = vcmp.lt.s32.totalorder %v7203, 2048
    %vm7460 = vcmp.lt.s32.totalorder %v7204, 2048
    %vm7461 = vcmp.lt.s32.totalorder %v7205, 2048
    %vm7462 = vcmp.lt.s32.totalorder %v7206, 2048
    %vm7463 = vcmp.lt.s32.totalorder %v7207, 2048
    %vm7464 = vcmp.lt.s32.totalorder %v7208, 2048
    %vm7465 = vcmp.lt.s32.totalorder %v7209, 2048
    %vm7466 = vcmp.lt.s32.totalorder %v7210, 2048
    %vm7467 = vcmp.lt.s32.totalorder %v7211, 2048
    %vm7468 = vcmp.lt.s32.totalorder %v7212, 2048
    %vm7469 = vcmp.lt.s32.totalorder %v7213, 2048
    %vm7470 = vcmp.lt.s32.totalorder %v7214, 2048
    %vm7471 = vcmp.lt.s32.totalorder %v7215, 2048
    %vm7472 = vcmp.lt.s32.totalorder %v7216, 2048
    %vm7473 = vcmp.lt.s32.totalorder %v7217, 2048
    %vm7474 = vcmp.lt.s32.totalorder %v7218, 2048
    %vm7475 = vcmp.lt.s32.totalorder %v7219, 2048
    %vm7476 = vcmp.lt.s32.totalorder %v7220, 2048
    %vm7477 = vcmp.lt.s32.totalorder %v7221, 2048
    %vm7478 = vcmp.lt.s32.totalorder %v7222, 2048
    %vm7479 = vcmp.lt.s32.totalorder %v7223, 2048
    %vm7480 = vcmp.lt.s32.totalorder %v7224, 2048
    %vm7481 = vcmp.lt.s32.totalorder %v7225, 2048
    %vm7482 = vcmp.lt.s32.totalorder %v7226, 2048
    %vm7483 = vcmp.lt.s32.totalorder %v7227, 2048
    %vm7484 = vcmp.lt.s32.totalorder %v7228, 2048
    %vm7485 = vcmp.lt.s32.totalorder %v7229, 2048
    %vm7486 = vcmp.lt.s32.totalorder %v7230, 2048
    %vm7487 = vcmp.lt.s32.totalorder %v7231, 2048
    %vm7488 = vcmp.lt.s32.totalorder %v7232, 2048
    %vm7489 = vcmp.lt.s32.totalorder %v7233, 2048
    %vm7490 = vcmp.lt.s32.totalorder %v7234, 2048
    %vm7491 = vcmp.lt.s32.totalorder %v7235, 2048
    %vm7492 = vcmp.lt.s32.totalorder %v7236, 2048
    %vm7493 = vcmp.lt.s32.totalorder %v7237, 2048
    %vm7494 = vcmp.lt.s32.totalorder %v7238, 2048
    %vm7495 = vcmp.lt.s32.totalorder %v7239, 2048
    %vm7496 = vcmp.lt.s32.totalorder %v7240, 2048
    %vm7497 = vcmp.lt.s32.totalorder %v7241, 2048
    %vm7498 = vcmp.lt.s32.totalorder %v7242, 2048
    %vm7499 = vcmp.lt.s32.totalorder %v7243, 2048
    %vm7500 = vcmp.lt.s32.totalorder %v7244, 2048
    %vm7501 = vcmp.lt.s32.totalorder %v7245, 2048
    %vm7502 = vcmp.lt.s32.totalorder %v7246, 2048
    %vm7503 = vcmp.lt.s32.totalorder %v7247, 2048
    %vm7504 = vcmp.lt.s32.totalorder %v7248, 2048
    %vm7505 = vcmp.lt.s32.totalorder %v7249, 2048
    %vm7506 = vcmp.lt.s32.totalorder %v7250, 2048
    %vm7507 = vcmp.lt.s32.totalorder %v7251, 2048
    %vm7508 = vcmp.lt.s32.totalorder %v7252, 2048
    %vm7509 = vcmp.lt.s32.totalorder %v7253, 2048
    %vm7510 = vcmp.lt.s32.totalorder %v7254, 2048
    %vm7511 = vcmp.lt.s32.totalorder %v7255, 2048
    %vm7512 = vcmp.lt.s32.totalorder %v7256, 2048
    %vm7513 = vcmp.lt.s32.totalorder %v7257, 2048
    %vm7514 = vcmp.lt.s32.totalorder %v7258, 2048
    %vm7515 = vcmp.lt.s32.totalorder %v7259, 2048
    %vm7516 = vcmp.lt.s32.totalorder %v7260, 2048
    %vm7517 = vcmp.lt.s32.totalorder %v7261, 2048
    %vm7518 = vcmp.lt.s32.totalorder %v7262, 2048
    %vm7519 = vcmp.lt.s32.totalorder %v7263, 2048
    %vm7520 = vcmp.lt.s32.totalorder %v7264, 2048
    %vm7521 = vcmp.lt.s32.totalorder %v7265, 2048
    %vm7522 = vcmp.lt.s32.totalorder %v7266, 2048
    %vm7523 = vcmp.lt.s32.totalorder %v7267, 2048
    %vm7524 = vcmp.lt.s32.totalorder %v7268, 2048
    %vm7525 = vcmp.lt.s32.totalorder %v7269, 2048
    %vm7526 = vcmp.lt.s32.totalorder %v7270, 2048
    %vm7527 = vcmp.lt.s32.totalorder %v7271, 2048
    %vm7528 = vcmp.lt.s32.totalorder %v7272, 2048
    %vm7529 = vcmp.lt.s32.totalorder %v7273, 2048
    %vm7530 = vcmp.lt.s32.totalorder %v7274, 2048
    %vm7531 = vcmp.lt.s32.totalorder %v7275, 2048
    %vm7532 = vcmp.lt.s32.totalorder %v7276, 2048
    %vm7533 = vcmp.lt.s32.totalorder %v7277, 2048
    %vm7534 = vcmp.lt.s32.totalorder %v7278, 2048
    %vm7535 = vcmp.lt.s32.totalorder %v7279, 2048
    %vm7536 = vcmp.lt.s32.totalorder %v7280, 2048
    %vm7537 = vcmp.lt.s32.totalorder %v7281, 2048
    %vm7538 = vcmp.lt.s32.totalorder %v7282, 2048
    %vm7539 = vcmp.lt.s32.totalorder %v7283, 2048
    %vm7540 = vcmp.lt.s32.totalorder %v7284, 2048
    %vm7541 = vcmp.lt.s32.totalorder %v7285, 2048
    %vm7542 = vcmp.lt.s32.totalorder %v7286, 2048
    %vm7543 = vcmp.lt.s32.totalorder %v7287, 2048
    %vm7544 = vcmp.lt.s32.totalorder %v7288, 2048
    %vm7545 = vcmp.lt.s32.totalorder %v7289, 2048
    %vm7546 = vcmp.lt.s32.totalorder %v7290, 2048
    %vm7547 = vcmp.lt.s32.totalorder %v7291, 2048
    %vm7548 = vcmp.lt.s32.totalorder %v7292, 2048
    %vm7549 = vcmp.lt.s32.totalorder %v7293, 2048
    %vm7550 = vcmp.lt.s32.totalorder %v7294, 2048
    %vm7551 = vcmp.lt.s32.totalorder %v7295, 2048
    %vm7552 = vcmp.lt.s32.totalorder %v7296, 2048
    %vm7553 = vcmp.lt.s32.totalorder %v7297, 2048
    %vm7554 = vcmp.lt.s32.totalorder %v7298, 2048
    %vm7555 = vcmp.lt.s32.totalorder %v7299, 2048
    %vm7556 = vcmp.lt.s32.totalorder %v7300, 2048
    %vm7557 = vcmp.lt.s32.totalorder %v7301, 2048
    %vm7558 = vcmp.lt.s32.totalorder %v7302, 2048
    %vm7559 = vcmp.lt.s32.totalorder %v7303, 2048
    %vm7560 = vcmp.lt.s32.totalorder %v7304, 2048
    %vm7561 = vcmp.lt.s32.totalorder %v7305, 2048
    %vm7562 = vcmp.lt.s32.totalorder %v7306, 2048
    %vm7563 = vcmp.lt.s32.totalorder %v7307, 2048
    %vm7564 = vcmp.lt.s32.totalorder %v7308, 2048
    %vm7565 = vcmp.lt.s32.totalorder %v7309, 2048
    %vm7566 = vcmp.lt.s32.totalorder %v7310, 2048
    %vm7567 = vcmp.lt.s32.totalorder %v7311, 2048
    %vm7568 = vcmp.lt.s32.totalorder %v7312, 2048
    %vm7569 = vcmp.lt.s32.totalorder %v7313, 2048
    %vm7570 = vcmp.lt.s32.totalorder %v7314, 2048
    %vm7571 = vcmp.lt.s32.totalorder %v7315, 2048
    %vm7572 = vcmp.lt.s32.totalorder %v7316, 2048
    %vm7573 = vcmp.lt.s32.totalorder %v7317, 2048
    %vm7574 = vcmp.lt.s32.totalorder %v7318, 2048
    %vm7575 = vcmp.lt.s32.totalorder %v7319, 2048
    %vm7576 = vcmp.lt.s32.totalorder %v7320, 2048
    %vm7577 = vcmp.lt.s32.totalorder %v7321, 2048
    %vm7578 = vcmp.lt.s32.totalorder %v7322, 2048
    %vm7579 = vcmp.lt.s32.totalorder %v7323, 2048
    %vm7580 = vcmp.lt.s32.totalorder %v7324, 2048
    %vm7581 = vcmp.lt.s32.totalorder %v7325, 2048
    %vm7582 = vcmp.lt.s32.totalorder %v7326, 2048
    %vm7583 = vcmp.lt.s32.totalorder %v7327, 2048
    %vm7584 = vcmp.lt.s32.totalorder %v7328, 2048
    %vm7585 = vcmp.lt.s32.totalorder %v7329, 2048
    %vm7586 = vcmp.lt.s32.totalorder %v7330, 2048
    %vm7587 = vcmp.lt.s32.totalorder %v7331, 2048
    %vm7588 = vcmp.lt.s32.totalorder %v7332, 2048
    %vm7589 = vcmp.lt.s32.totalorder %v7333, 2048
    %vm7590 = vcmp.lt.s32.totalorder %v7334, 2048
    %vm7591 = vcmp.lt.s32.totalorder %v7335, 2048
    %vm7592 = vcmp.lt.s32.totalorder %v7336, 2048
    %vm7593 = vcmp.lt.s32.totalorder %v7337, 2048
    %vm7594 = vcmp.lt.s32.totalorder %v7338, 2048
    %vm7595 = vcmp.lt.s32.totalorder %v7339, 2048
    %vm7596 = vcmp.lt.s32.totalorder %v7340, 2048
    %vm7597 = vcmp.lt.s32.totalorder %v7341, 2048
    %vm7598 = vcmp.lt.s32.totalorder %v7342, 2048
    %vm7599 = vcmp.lt.s32.totalorder %v7343, 2048
    %vm7600 = vcmp.lt.s32.totalorder %v7344, 2048
    %vm7601 = vcmp.lt.s32.totalorder %v7345, 2048
    %vm7602 = vcmp.lt.s32.totalorder %v7346, 2048
    %vm7603 = vcmp.lt.s32.totalorder %v7347, 2048
    %vm7604 = vcmp.lt.s32.totalorder %v7348, 2048
    %vm7605 = vcmp.lt.s32.totalorder %v7349, 2048
    %vm7606 = vcmp.lt.s32.totalorder %v7350, 2048
    %vm7607 = vcmp.lt.s32.totalorder %v7351, 2048
    %vm7608 = vcmp.lt.s32.totalorder %v7352, 2048
    %vm7609 = vcmp.lt.s32.totalorder %v7353, 2048
    %vm7610 = vcmp.lt.s32.totalorder %v7354, 2048
    %vm7611 = vcmp.lt.s32.totalorder %v7355, 2048
    %vm7612 = vcmp.lt.s32.totalorder %v7356, 2048
    %vm7613 = vcmp.lt.s32.totalorder %v7357, 2048
    %vm7614 = vcmp.lt.s32.totalorder %v7358, 2048
    %vm7615 = vcmp.lt.s32.totalorder %v7359, 2048
    %vm7616 = vcmp.lt.s32.totalorder %v7360, 2048
    %vm7617 = vcmp.lt.s32.totalorder %v7361, 2048
    %vm7618 = vcmp.lt.s32.totalorder %v7362, 2048
    %vm7619 = vcmp.lt.s32.totalorder %v7363, 2048
    %vm7620 = vcmp.lt.s32.totalorder %v7364, 2048
    %vm7621 = vcmp.lt.s32.totalorder %v7365, 2048
    %vm7622 = vcmp.lt.s32.totalorder %v7366, 2048
    %vm7623 = vcmp.lt.s32.totalorder %v7367, 2048
    %vm7624 = vcmp.lt.s32.totalorder %v7368, 2048
    %vm7625 = vcmp.lt.s32.totalorder %v7369, 2048
    %vm7626 = vcmp.lt.s32.totalorder %v7370, 2048
    %vm7627 = vcmp.lt.s32.totalorder %v7371, 2048
    %vm7628 = vcmp.lt.s32.totalorder %v7372, 2048
    %vm7629 = vcmp.lt.s32.totalorder %v7373, 2048
    %vm7630 = vcmp.lt.s32.totalorder %v7374, 2048
    %vm7631 = vcmp.lt.s32.totalorder %v7375, 2048
    %vm7632 = vcmp.lt.s32.totalorder %v7376, 2048
    %vm7633 = vcmp.lt.s32.totalorder %v7377, 2048
    %vm7634 = vcmp.lt.s32.totalorder %v7378, 2048
    %vm7635 = vcmp.lt.s32.totalorder %v7379, 2048
    %vm7636 = vcmp.lt.s32.totalorder %v7380, 2048
    %vm7637 = vcmp.lt.s32.totalorder %v7381, 2048
    %vm7638 = vcmp.lt.s32.totalorder %v7382, 2048
    %vm7639 = vcmp.lt.s32.totalorder %v7383, 2048
    %vm7640 = vcmp.lt.s32.totalorder %v7384, 2048
    %vm7641 = vcmp.lt.s32.totalorder %v7385, 2048
    %vm7642 = vcmp.lt.s32.totalorder %v7386, 2048
    %vm7643 = vcmp.lt.s32.totalorder %v7387, 2048
    %vm7644 = vcmp.lt.s32.totalorder %v7388, 2048
    %vm7645 = vcmp.lt.s32.totalorder %v7389, 2048
    %vm7646 = vcmp.lt.s32.totalorder %v7390, 2048
    %vm7647 = vcmp.lt.s32.totalorder %v7391, 2048
    %vm7648 = vcmp.lt.s32.totalorder %v7392, 2048
    %vm7649 = vcmp.lt.s32.totalorder %v7393, 2048
    %vm7650 = vcmp.lt.s32.totalorder %v7394, 2048
    %vm7651 = vcmp.lt.s32.totalorder %v7395, 2048
    %vm7652 = vcmp.lt.s32.totalorder %v7396, 2048
    %vm7653 = vcmp.lt.s32.totalorder %v7397, 2048
    %vm7654 = vcmp.lt.s32.totalorder %v7398, 2048
    %vm7655 = vcmp.lt.s32.totalorder %v7399, 2048
    %vm7656 = vcmp.lt.s32.totalorder %v7400, 2048
    %vm7657 = vcmp.lt.s32.totalorder %v7401, 2048
    %vm7658 = vcmp.lt.s32.totalorder %v7402, 2048
    %vm7659 = vcmp.lt.s32.totalorder %v7403, 2048
    %vm7660 = vcmp.lt.s32.totalorder %v7404, 2048
    %vm7661 = vcmp.lt.s32.totalorder %v7405, 2048
    %vm7662 = vcmp.lt.s32.totalorder %v7406, 2048
    %vm7663 = vcmp.lt.s32.totalorder %v7407, 2048
    %vm7664 = vcmp.lt.s32.totalorder %v7408, 2048
    %vm7665 = vcmp.lt.s32.totalorder %v7409, 2048
    %vm7666 = vcmp.lt.s32.totalorder %v7410, 2048
    %vm7667 = vcmp.lt.s32.totalorder %v7411, 2048
    %vm7668 = vcmp.lt.s32.totalorder %v7412, 2048
    %vm7669 = vcmp.lt.s32.totalorder %v7413, 2048
    %v7670 = vsel %vm7414, %v6702, 0.0
    %v7671 = vsel %vm7415, %v6703, 0.0
    %v7672 = vsel %vm7416, %v6704, 0.0
    %v7673 = vsel %vm7417, %v6705, 0.0
    %v7674 = vsel %vm7418, %v6706, 0.0
    %v7675 = vsel %vm7419, %v6707, 0.0
    %v7676 = vsel %vm7420, %v6708, 0.0
    %v7677 = vsel %vm7421, %v6709, 0.0
    %v7678 = vsel %vm7422, %v6710, 0.0
    %v7679 = vsel %vm7423, %v6711, 0.0
    %v7680 = vsel %vm7424, %v6712, 0.0
    %v7681 = vsel %vm7425, %v6713, 0.0
    %v7682 = vsel %vm7426, %v6714, 0.0
    %v7683 = vsel %vm7427, %v6715, 0.0
    %v7684 = vsel %vm7428, %v6716, 0.0
    %v7685 = vsel %vm7429, %v6717, 0.0
    %v7686 = vsel %vm7430, %v6718, 0.0
    %v7687 = vsel %vm7431, %v6719, 0.0
    %v7688 = vsel %vm7432, %v6720, 0.0
    %v7689 = vsel %vm7433, %v6721, 0.0
    %v7690 = vsel %vm7434, %v6722, 0.0
    %v7691 = vsel %vm7435, %v6723, 0.0
    %v7692 = vsel %vm7436, %v6724, 0.0
    %v7693 = vsel %vm7437, %v6725, 0.0
    %v7694 = vsel %vm7438, %v6726, 0.0
    %v7695 = vsel %vm7439, %v6727, 0.0
    %v7696 = vsel %vm7440, %v6728, 0.0
    %v7697 = vsel %vm7441, %v6729, 0.0
    %v7698 = vsel %vm7442, %v6730, 0.0
    %v7699 = vsel %vm7443, %v6731, 0.0
    %v7700 = vsel %vm7444, %v6732, 0.0
    %v7701 = vsel %vm7445, %v6733, 0.0
    %v7702 = vsel %vm7446, %v6734, 0.0
    %v7703 = vsel %vm7447, %v6735, 0.0
    %v7704 = vsel %vm7448, %v6736, 0.0
    %v7705 = vsel %vm7449, %v6737, 0.0
    %v7706 = vsel %vm7450, %v6738, 0.0
    %v7707 = vsel %vm7451, %v6739, 0.0
    %v7708 = vsel %vm7452, %v6740, 0.0
    %v7709 = vsel %vm7453, %v6741, 0.0
    %v7710 = vsel %vm7454, %v6742, 0.0
    %v7711 = vsel %vm7455, %v6743, 0.0
    %v7712 = vsel %vm7456, %v6744, 0.0
    %v7713 = vsel %vm7457, %v6745, 0.0
    %v7714 = vsel %vm7458, %v6746, 0.0
    %v7715 = vsel %vm7459, %v6747, 0.0
    %v7716 = vsel %vm7460, %v6748, 0.0
    %v7717 = vsel %vm7461, %v6749, 0.0
    %v7718 = vsel %vm7462, %v6750, 0.0
    %v7719 = vsel %vm7463, %v6751, 0.0
    %v7720 = vsel %vm7464, %v6752, 0.0
    %v7721 = vsel %vm7465, %v6753, 0.0
    %v7722 = vsel %vm7466, %v6754, 0.0
    %v7723 = vsel %vm7467, %v6755, 0.0
    %v7724 = vsel %vm7468, %v6756, 0.0
    %v7725 = vsel %vm7469, %v6757, 0.0
    %v7726 = vsel %vm7470, %v6758, 0.0
    %v7727 = vsel %vm7471, %v6759, 0.0
    %v7728 = vsel %vm7472, %v6760, 0.0
    %v7729 = vsel %vm7473, %v6761, 0.0
    %v7730 = vsel %vm7474, %v6762, 0.0
    %v7731 = vsel %vm7475, %v6763, 0.0
    %v7732 = vsel %vm7476, %v6764, 0.0
    %v7733 = vsel %vm7477, %v6765, 0.0
    %v7734 = vsel %vm7478, %v6766, 0.0
    %v7735 = vsel %vm7479, %v6767, 0.0
    %v7736 = vsel %vm7480, %v6768, 0.0
    %v7737 = vsel %vm7481, %v6769, 0.0
    %v7738 = vsel %vm7482, %v6770, 0.0
    %v7739 = vsel %vm7483, %v6771, 0.0
    %v7740 = vsel %vm7484, %v6772, 0.0
    %v7741 = vsel %vm7485, %v6773, 0.0
    %v7742 = vsel %vm7486, %v6774, 0.0
    %v7743 = vsel %vm7487, %v6775, 0.0
    %v7744 = vsel %vm7488, %v6776, 0.0
    %v7745 = vsel %vm7489, %v6777, 0.0
    %v7746 = vsel %vm7490, %v6778, 0.0
    %v7747 = vsel %vm7491, %v6779, 0.0
    %v7748 = vsel %vm7492, %v6780, 0.0
    %v7749 = vsel %vm7493, %v6781, 0.0
    %v7750 = vsel %vm7494, %v6782, 0.0
    %v7751 = vsel %vm7495, %v6783, 0.0
    %v7752 = vsel %vm7496, %v6784, 0.0
    %v7753 = vsel %vm7497, %v6785, 0.0
    %v7754 = vsel %vm7498, %v6786, 0.0
    %v7755 = vsel %vm7499, %v6787, 0.0
    %v7756 = vsel %vm7500, %v6788, 0.0
    %v7757 = vsel %vm7501, %v6789, 0.0
    %v7758 = vsel %vm7502, %v6790, 0.0
    %v7759 = vsel %vm7503, %v6791, 0.0
    %v7760 = vsel %vm7504, %v6792, 0.0
    %v7761 = vsel %vm7505, %v6793, 0.0
    %v7762 = vsel %vm7506, %v6794, 0.0
    %v7763 = vsel %vm7507, %v6795, 0.0
    %v7764 = vsel %vm7508, %v6796, 0.0
    %v7765 = vsel %vm7509, %v6797, 0.0
    %v7766 = vsel %vm7510, %v6798, 0.0
    %v7767 = vsel %vm7511, %v6799, 0.0
    %v7768 = vsel %vm7512, %v6800, 0.0
    %v7769 = vsel %vm7513, %v6801, 0.0
    %v7770 = vsel %vm7514, %v6802, 0.0
    %v7771 = vsel %vm7515, %v6803, 0.0
    %v7772 = vsel %vm7516, %v6804, 0.0
    %v7773 = vsel %vm7517, %v6805, 0.0
    %v7774 = vsel %vm7518, %v6806, 0.0
    %v7775 = vsel %vm7519, %v6807, 0.0
    %v7776 = vsel %vm7520, %v6808, 0.0
    %v7777 = vsel %vm7521, %v6809, 0.0
    %v7778 = vsel %vm7522, %v6810, 0.0
    %v7779 = vsel %vm7523, %v6811, 0.0
    %v7780 = vsel %vm7524, %v6812, 0.0
    %v7781 = vsel %vm7525, %v6813, 0.0
    %v7782 = vsel %vm7526, %v6814, 0.0
    %v7783 = vsel %vm7527, %v6815, 0.0
    %v7784 = vsel %vm7528, %v6816, 0.0
    %v7785 = vsel %vm7529, %v6817, 0.0
    %v7786 = vsel %vm7530, %v6818, 0.0
    %v7787 = vsel %vm7531, %v6819, 0.0
    %v7788 = vsel %vm7532, %v6820, 0.0
    %v7789 = vsel %vm7533, %v6821, 0.0
    %v7790 = vsel %vm7534, %v6822, 0.0
    %v7791 = vsel %vm7535, %v6823, 0.0
    %v7792 = vsel %vm7536, %v6824, 0.0
    %v7793 = vsel %vm7537, %v6825, 0.0
    %v7794 = vsel %vm7538, %v6826, 0.0
    %v7795 = vsel %vm7539, %v6827, 0.0
    %v7796 = vsel %vm7540, %v6828, 0.0
    %v7797 = vsel %vm7541, %v6829, 0.0
    %v7798 = vsel %vm7542, %v6830, 0.0
    %v7799 = vsel %vm7543, %v6831, 0.0
    %v7800 = vsel %vm7544, %v6832, 0.0
    %v7801 = vsel %vm7545, %v6833, 0.0
    %v7802 = vsel %vm7546, %v6834, 0.0
    %v7803 = vsel %vm7547, %v6835, 0.0
    %v7804 = vsel %vm7548, %v6836, 0.0
    %v7805 = vsel %vm7549, %v6837, 0.0
    %v7806 = vsel %vm7550, %v6838, 0.0
    %v7807 = vsel %vm7551, %v6839, 0.0
    %v7808 = vsel %vm7552, %v6840, 0.0
    %v7809 = vsel %vm7553, %v6841, 0.0
    %v7810 = vsel %vm7554, %v6842, 0.0
    %v7811 = vsel %vm7555, %v6843, 0.0
    %v7812 = vsel %vm7556, %v6844, 0.0
    %v7813 = vsel %vm7557, %v6845, 0.0
    %v7814 = vsel %vm7558, %v6846, 0.0
    %v7815 = vsel %vm7559, %v6847, 0.0
    %v7816 = vsel %vm7560, %v6848, 0.0
    %v7817 = vsel %vm7561, %v6849, 0.0
    %v7818 = vsel %vm7562, %v6850, 0.0
    %v7819 = vsel %vm7563, %v6851, 0.0
    %v7820 = vsel %vm7564, %v6852, 0.0
    %v7821 = vsel %vm7565, %v6853, 0.0
    %v7822 = vsel %vm7566, %v6854, 0.0
    %v7823 = vsel %vm7567, %v6855, 0.0
    %v7824 = vsel %vm7568, %v6856, 0.0
    %v7825 = vsel %vm7569, %v6857, 0.0
    %v7826 = vsel %vm7570, %v6858, 0.0
    %v7827 = vsel %vm7571, %v6859, 0.0
    %v7828 = vsel %vm7572, %v6860, 0.0
    %v7829 = vsel %vm7573, %v6861, 0.0
    %v7830 = vsel %vm7574, %v6862, 0.0
    %v7831 = vsel %vm7575, %v6863, 0.0
    %v7832 = vsel %vm7576, %v6864, 0.0
    %v7833 = vsel %vm7577, %v6865, 0.0
    %v7834 = vsel %vm7578, %v6866, 0.0
    %v7835 = vsel %vm7579, %v6867, 0.0
    %v7836 = vsel %vm7580, %v6868, 0.0
    %v7837 = vsel %vm7581, %v6869, 0.0
    %v7838 = vsel %vm7582, %v6870, 0.0
    %v7839 = vsel %vm7583, %v6871, 0.0
    %v7840 = vsel %vm7584, %v6872, 0.0
    %v7841 = vsel %vm7585, %v6873, 0.0
    %v7842 = vsel %vm7586, %v6874, 0.0
    %v7843 = vsel %vm7587, %v6875, 0.0
    %v7844 = vsel %vm7588, %v6876, 0.0
    %v7845 = vsel %vm7589, %v6877, 0.0
    %v7846 = vsel %vm7590, %v6878, 0.0
    %v7847 = vsel %vm7591, %v6879, 0.0
    %v7848 = vsel %vm7592, %v6880, 0.0
    %v7849 = vsel %vm7593, %v6881, 0.0
    %v7850 = vsel %vm7594, %v6882, 0.0
    %v7851 = vsel %vm7595, %v6883, 0.0
    %v7852 = vsel %vm7596, %v6884, 0.0
    %v7853 = vsel %vm7597, %v6885, 0.0
    %v7854 = vsel %vm7598, %v6886, 0.0
    %v7855 = vsel %vm7599, %v6887, 0.0
    %v7856 = vsel %vm7600, %v6888, 0.0
    %v7857 = vsel %vm7601, %v6889, 0.0
    %v7858 = vsel %vm7602, %v6890, 0.0
    %v7859 = vsel %vm7603, %v6891, 0.0
    %v7860 = vsel %vm7604, %v6892, 0.0
    %v7861 = vsel %vm7605, %v6893, 0.0
    %v7862 = vsel %vm7606, %v6894, 0.0
    %v7863 = vsel %vm7607, %v6895, 0.0
    %v7864 = vsel %vm7608, %v6896, 0.0
    %v7865 = vsel %vm7609, %v6897, 0.0
    %v7866 = vsel %vm7610, %v6898, 0.0
    %v7867 = vsel %vm7611, %v6899, 0.0
    %v7868 = vsel %vm7612, %v6900, 0.0
    %v7869 = vsel %vm7613, %v6901, 0.0
    %v7870 = vsel %vm7614, %v6902, 0.0
    %v7871 = vsel %vm7615, %v6903, 0.0
    %v7872 = vsel %vm7616, %v6904, 0.0
    %v7873 = vsel %vm7617, %v6905, 0.0
    %v7874 = vsel %vm7618, %v6906, 0.0
    %v7875 = vsel %vm7619, %v6907, 0.0
    %v7876 = vsel %vm7620, %v6908, 0.0
    %v7877 = vsel %vm7621, %v6909, 0.0
    %v7878 = vsel %vm7622, %v6910, 0.0
    %v7879 = vsel %vm7623, %v6911, 0.0
    %v7880 = vsel %vm7624, %v6912, 0.0
    %v7881 = vsel %vm7625, %v6913, 0.0
    %v7882 = vsel %vm7626, %v6914, 0.0
    %v7883 = vsel %vm7627, %v6915, 0.0
    %v7884 = vsel %vm7628, %v6916, 0.0
    %v7885 = vsel %vm7629, %v6917, 0.0
    %v7886 = vsel %vm7630, %v6918, 0.0
    %v7887 = vsel %vm7631, %v6919, 0.0
    %v7888 = vsel %vm7632, %v6920, 0.0
    %v7889 = vsel %vm7633, %v6921, 0.0
    %v7890 = vsel %vm7634, %v6922, 0.0
    %v7891 = vsel %vm7635, %v6923, 0.0
    %v7892 = vsel %vm7636, %v6924, 0.0
    %v7893 = vsel %vm7637, %v6925, 0.0
    %v7894 = vsel %vm7638, %v6926, 0.0
    %v7895 = vsel %vm7639, %v6927, 0.0
    %v7896 = vsel %vm7640, %v6928, 0.0
    %v7897 = vsel %vm7641, %v6929, 0.0
    %v7898 = vsel %vm7642, %v6930, 0.0
    %v7899 = vsel %vm7643, %v6931, 0.0
    %v7900 = vsel %vm7644, %v6932, 0.0
    %v7901 = vsel %vm7645, %v6933, 0.0
    %v7902 = vsel %vm7646, %v6934, 0.0
    %v7903 = vsel %vm7647, %v6935, 0.0
    %v7904 = vsel %vm7648, %v6936, 0.0
    %v7905 = vsel %vm7649, %v6937, 0.0
    %v7906 = vsel %vm7650, %v6938, 0.0
    %v7907 = vsel %vm7651, %v6939, 0.0
    %v7908 = vsel %vm7652, %v6940, 0.0
    %v7909 = vsel %vm7653, %v6941, 0.0
    %v7910 = vsel %vm7654, %v6942, 0.0
    %v7911 = vsel %vm7655, %v6943, 0.0
    %v7912 = vsel %vm7656, %v6944, 0.0
    %v7913 = vsel %vm7657, %v6945, 0.0
    %v7914 = vsel %vm7658, %v6946, 0.0
    %v7915 = vsel %vm7659, %v6947, 0.0
    %v7916 = vsel %vm7660, %v6948, 0.0
    %v7917 = vsel %vm7661, %v6949, 0.0
    %v7918 = vsel %vm7662, %v6950, 0.0
    %v7919 = vsel %vm7663, %v6951, 0.0
    %v7920 = vsel %vm7664, %v6952, 0.0
    %v7921 = vsel %vm7665, %v6953, 0.0
    %v7922 = vsel %vm7666, %v6954, 0.0
    %v7923 = vsel %vm7667, %v6955, 0.0
    %v7924 = vsel %vm7668, %v6956, 0.0
    %v7925 = vsel %vm7669, %v6957, 0.0
    %s7926 = sld [smem:[#allocation2]]
    %v7927 = vadd.f32 %v7670, %v7671
    %v7928 = vadd.f32 %v7927, %v7672
    %v7929 = vadd.f32 %v7928, %v7673
    %v7930 = vadd.f32 %v7929, %v7674
    %v7931 = vadd.f32 %v7930, %v7675
    %v7932 = vadd.f32 %v7931, %v7676
    %v7933 = vadd.f32 %v7932, %v7677
    %v7934 = vadd.f32 %v7933, %v7678
    %v7935 = vadd.f32 %v7934, %v7679
    %v7936 = vadd.f32 %v7935, %v7680
    %v7937 = vadd.f32 %v7936, %v7681
    %v7938 = vadd.f32 %v7937, %v7682
    %v7939 = vadd.f32 %v7938, %v7683
    %v7940 = vadd.f32 %v7939, %v7684
    %v7941 = vadd.f32 %v7940, %v7685
    %v7942 = vadd.f32 %v7941, %v7686
    %v7943 = vadd.f32 %v7942, %v7687
    %v7944 = vadd.f32 %v7943, %v7688
    %v7945 = vadd.f32 %v7944, %v7689
    %v7946 = vadd.f32 %v7945, %v7690
    %v7947 = vadd.f32 %v7946, %v7691
    %v7948 = vadd.f32 %v7947, %v7692
    %v7949 = vadd.f32 %v7948, %v7693
    %v7950 = vadd.f32 %v7949, %v7694
    %v7951 = vadd.f32 %v7950, %v7695
    %v7952 = vadd.f32 %v7951, %v7696
    %v7953 = vadd.f32 %v7952, %v7697
    %v7954 = vadd.f32 %v7953, %v7698
    %v7955 = vadd.f32 %v7954, %v7699
    %v7956 = vadd.f32 %v7955, %v7700
    %v7957 = vadd.f32 %v7956, %v7701
    %v7958 = vadd.f32 %v7957, %v7702
    %v7959 = vadd.f32 %v7958, %v7703
    %v7960 = vadd.f32 %v7959, %v7704
    %v7961 = vadd.f32 %v7960, %v7705
    %v7962 = vadd.f32 %v7961, %v7706
    %v7963 = vadd.f32 %v7962, %v7707
    %v7964 = vadd.f32 %v7963, %v7708
    %v7965 = vadd.f32 %v7964, %v7709
    %v7966 = vadd.f32 %v7965, %v7710
    %v7967 = vadd.f32 %v7966, %v7711
    %v7968 = vadd.f32 %v7967, %v7712
    %v7969 = vadd.f32 %v7968, %v7713
    %v7970 = vadd.f32 %v7969, %v7714
    %v7971 = vadd.f32 %v7970, %v7715
    %v7972 = vadd.f32 %v7971, %v7716
    %v7973 = vadd.f32 %v7972, %v7717
    %v7974 = vadd.f32 %v7973, %v7718
    %v7975 = vadd.f32 %v7974, %v7719
    %v7976 = vadd.f32 %v7975, %v7720
    %v7977 = vadd.f32 %v7976, %v7721
    %v7978 = vadd.f32 %v7977, %v7722
    %v7979 = vadd.f32 %v7978, %v7723
    %v7980 = vadd.f32 %v7979, %v7724
    %v7981 = vadd.f32 %v7980, %v7725
    %v7982 = vadd.f32 %v7981, %v7726
    %v7983 = vadd.f32 %v7982, %v7727
    %v7984 = vadd.f32 %v7983, %v7728
    %v7985 = vadd.f32 %v7984, %v7729
    %v7986 = vadd.f32 %v7985, %v7730
    %v7987 = vadd.f32 %v7986, %v7731
    %v7988 = vadd.f32 %v7987, %v7732
    %v7989 = vadd.f32 %v7988, %v7733
    %v7990 = vadd.f32 %v7989, %v7734
    %v7991 = vadd.f32 %v7990, %v7735
    %v7992 = vadd.f32 %v7991, %v7736
    %v7993 = vadd.f32 %v7992, %v7737
    %v7994 = vadd.f32 %v7993, %v7738
    %v7995 = vadd.f32 %v7994, %v7739
    %v7996 = vadd.f32 %v7995, %v7740
    %v7997 = vadd.f32 %v7996, %v7741
    %v7998 = vadd.f32 %v7997, %v7742
    %v7999 = vadd.f32 %v7998, %v7743
    %v8000 = vadd.f32 %v7999, %v7744
    %v8001 = vadd.f32 %v8000, %v7745
    %v8002 = vadd.f32 %v8001, %v7746
    %v8003 = vadd.f32 %v8002, %v7747
    %v8004 = vadd.f32 %v8003, %v7748
    %v8005 = vadd.f32 %v8004, %v7749
    %v8006 = vadd.f32 %v8005, %v7750
    %v8007 = vadd.f32 %v8006, %v7751
    %v8008 = vadd.f32 %v8007, %v7752
    %v8009 = vadd.f32 %v8008, %v7753
    %v8010 = vadd.f32 %v8009, %v7754
    %v8011 = vadd.f32 %v8010, %v7755
    %v8012 = vadd.f32 %v8011, %v7756
    %v8013 = vadd.f32 %v8012, %v7757
    %v8014 = vadd.f32 %v8013, %v7758
    %v8015 = vadd.f32 %v8014, %v7759
    %v8016 = vadd.f32 %v8015, %v7760
    %v8017 = vadd.f32 %v8016, %v7761
    %v8018 = vadd.f32 %v8017, %v7762
    %v8019 = vadd.f32 %v8018, %v7763
    %v8020 = vadd.f32 %v8019, %v7764
    %v8021 = vadd.f32 %v8020, %v7765
    %v8022 = vadd.f32 %v8021, %v7766
    %v8023 = vadd.f32 %v8022, %v7767
    %v8024 = vadd.f32 %v8023, %v7768
    %v8025 = vadd.f32 %v8024, %v7769
    %v8026 = vadd.f32 %v8025, %v7770
    %v8027 = vadd.f32 %v8026, %v7771
    %v8028 = vadd.f32 %v8027, %v7772
    %v8029 = vadd.f32 %v8028, %v7773
    %v8030 = vadd.f32 %v8029, %v7774
    %v8031 = vadd.f32 %v8030, %v7775
    %v8032 = vadd.f32 %v8031, %v7776
    %v8033 = vadd.f32 %v8032, %v7777
    %v8034 = vadd.f32 %v8033, %v7778
    %v8035 = vadd.f32 %v8034, %v7779
    %v8036 = vadd.f32 %v8035, %v7780
    %v8037 = vadd.f32 %v8036, %v7781
    %v8038 = vadd.f32 %v8037, %v7782
    %v8039 = vadd.f32 %v8038, %v7783
    %v8040 = vadd.f32 %v8039, %v7784
    %v8041 = vadd.f32 %v8040, %v7785
    %v8042 = vadd.f32 %v8041, %v7786
    %v8043 = vadd.f32 %v8042, %v7787
    %v8044 = vadd.f32 %v8043, %v7788
    %v8045 = vadd.f32 %v8044, %v7789
    %v8046 = vadd.f32 %v8045, %v7790
    %v8047 = vadd.f32 %v8046, %v7791
    %v8048 = vadd.f32 %v8047, %v7792
    %v8049 = vadd.f32 %v8048, %v7793
    %v8050 = vadd.f32 %v8049, %v7794
    %v8051 = vadd.f32 %v8050, %v7795
    %v8052 = vadd.f32 %v8051, %v7796
    %v8053 = vadd.f32 %v8052, %v7797
    %v8054 = vadd.f32 %v8053, %v7798
    %v8055 = vadd.f32 %v8054, %v7799
    %v8056 = vadd.f32 %v8055, %v7800
    %v8057 = vadd.f32 %v8056, %v7801
    %v8058 = vadd.f32 %v8057, %v7802
    %v8059 = vadd.f32 %v8058, %v7803
    %v8060 = vadd.f32 %v8059, %v7804
    %v8061 = vadd.f32 %v8060, %v7805
    %v8062 = vadd.f32 %v8061, %v7806
    %v8063 = vadd.f32 %v8062, %v7807
    %v8064 = vadd.f32 %v8063, %v7808
    %v8065 = vadd.f32 %v8064, %v7809
    %v8066 = vadd.f32 %v8065, %v7810
    %v8067 = vadd.f32 %v8066, %v7811
    %v8068 = vadd.f32 %v8067, %v7812
    %v8069 = vadd.f32 %v8068, %v7813
    %v8070 = vadd.f32 %v8069, %v7814
    %v8071 = vadd.f32 %v8070, %v7815
    %v8072 = vadd.f32 %v8071, %v7816
    %v8073 = vadd.f32 %v8072, %v7817
    %v8074 = vadd.f32 %v8073, %v7818
    %v8075 = vadd.f32 %v8074, %v7819
    %v8076 = vadd.f32 %v8075, %v7820
    %v8077 = vadd.f32 %v8076, %v7821
    %v8078 = vadd.f32 %v8077, %v7822
    %v8079 = vadd.f32 %v8078, %v7823
    %v8080 = vadd.f32 %v8079, %v7824
    %v8081 = vadd.f32 %v8080, %v7825
    %v8082 = vadd.f32 %v8081, %v7826
    %v8083 = vadd.f32 %v8082, %v7827
    %v8084 = vadd.f32 %v8083, %v7828
    %v8085 = vadd.f32 %v8084, %v7829
    %v8086 = vadd.f32 %v8085, %v7830
    %v8087 = vadd.f32 %v8086, %v7831
    %v8088 = vadd.f32 %v8087, %v7832
    %v8089 = vadd.f32 %v8088, %v7833
    %v8090 = vadd.f32 %v8089, %v7834
    %v8091 = vadd.f32 %v8090, %v7835
    %v8092 = vadd.f32 %v8091, %v7836
    %v8093 = vadd.f32 %v8092, %v7837
    %v8094 = vadd.f32 %v8093, %v7838
    %v8095 = vadd.f32 %v8094, %v7839
    %v8096 = vadd.f32 %v8095, %v7840
    %v8097 = vadd.f32 %v8096, %v7841
    %v8098 = vadd.f32 %v8097, %v7842
    %v8099 = vadd.f32 %v8098, %v7843
    %v8100 = vadd.f32 %v8099, %v7844
    %v8101 = vadd.f32 %v8100, %v7845
    %v8102 = vadd.f32 %v8101, %v7846
    %v8103 = vadd.f32 %v8102, %v7847
    %v8104 = vadd.f32 %v8103, %v7848
    %v8105 = vadd.f32 %v8104, %v7849
    %v8106 = vadd.f32 %v8105, %v7850
    %v8107 = vadd.f32 %v8106, %v7851
    %v8108 = vadd.f32 %v8107, %v7852
    %v8109 = vadd.f32 %v8108, %v7853
    %v8110 = vadd.f32 %v8109, %v7854
    %v8111 = vadd.f32 %v8110, %v7855
    %v8112 = vadd.f32 %v8111, %v7856
    %v8113 = vadd.f32 %v8112, %v7857
    %v8114 = vadd.f32 %v8113, %v7858
    %v8115 = vadd.f32 %v8114, %v7859
    %v8116 = vadd.f32 %v8115, %v7860
    %v8117 = vadd.f32 %v8116, %v7861
    %v8118 = vadd.f32 %v8117, %v7862
    %v8119 = vadd.f32 %v8118, %v7863
    %v8120 = vadd.f32 %v8119, %v7864
    %v8121 = vadd.f32 %v8120, %v7865
    %v8122 = vadd.f32 %v8121, %v7866
    %v8123 = vadd.f32 %v8122, %v7867
    %v8124 = vadd.f32 %v8123, %v7868
    %v8125 = vadd.f32 %v8124, %v7869
    %v8126 = vadd.f32 %v8125, %v7870
    %v8127 = vadd.f32 %v8126, %v7871
    %v8128 = vadd.f32 %v8127, %v7872
    %v8129 = vadd.f32 %v8128, %v7873
    %v8130 = vadd.f32 %v8129, %v7874
    %v8131 = vadd.f32 %v8130, %v7875
    %v8132 = vadd.f32 %v8131, %v7876
    %v8133 = vadd.f32 %v8132, %v7877
    %v8134 = vadd.f32 %v8133, %v7878
    %v8135 = vadd.f32 %v8134, %v7879
    %v8136 = vadd.f32 %v8135, %v7880
    %v8137 = vadd.f32 %v8136, %v7881
    %v8138 = vadd.f32 %v8137, %v7882
    %v8139 = vadd.f32 %v8138, %v7883
    %v8140 = vadd.f32 %v8139, %v7884
    %v8141 = vadd.f32 %v8140, %v7885
    %v8142 = vadd.f32 %v8141, %v7886
    %v8143 = vadd.f32 %v8142, %v7887
    %v8144 = vadd.f32 %v8143, %v7888
    %v8145 = vadd.f32 %v8144, %v7889
    %v8146 = vadd.f32 %v8145, %v7890
    %v8147 = vadd.f32 %v8146, %v7891
    %v8148 = vadd.f32 %v8147, %v7892
    %v8149 = vadd.f32 %v8148, %v7893
    %v8150 = vadd.f32 %v8149, %v7894
    %v8151 = vadd.f32 %v8150, %v7895
    %v8152 = vadd.f32 %v8151, %v7896
    %v8153 = vadd.f32 %v8152, %v7897
    %v8154 = vadd.f32 %v8153, %v7898
    %v8155 = vadd.f32 %v8154, %v7899
    %v8156 = vadd.f32 %v8155, %v7900
    %v8157 = vadd.f32 %v8156, %v7901
    %v8158 = vadd.f32 %v8157, %v7902
    %v8159 = vadd.f32 %v8158, %v7903
    %v8160 = vadd.f32 %v8159, %v7904
    %v8161 = vadd.f32 %v8160, %v7905
    %v8162 = vadd.f32 %v8161, %v7906
    %v8163 = vadd.f32 %v8162, %v7907
    %v8164 = vadd.f32 %v8163, %v7908
    %v8165 = vadd.f32 %v8164, %v7909
    %v8166 = vadd.f32 %v8165, %v7910
    %v8167 = vadd.f32 %v8166, %v7911
    %v8168 = vadd.f32 %v8167, %v7912
    %v8169 = vadd.f32 %v8168, %v7913
    %v8170 = vadd.f32 %v8169, %v7914
    %v8171 = vadd.f32 %v8170, %v7915
    %v8172 = vadd.f32 %v8171, %v7916
    %v8173 = vadd.f32 %v8172, %v7917
    %v8174 = vadd.f32 %v8173, %v7918
    %v8175 = vadd.f32 %v8174, %v7919
    %v8176 = vadd.f32 %v8175, %v7920
    %v8177 = vadd.f32 %v8176, %v7921
    %v8178 = vadd.f32 %v8177, %v7922
    %v8179 = vadd.f32 %v8178, %v7923
    %v8180 = vadd.f32 %v8179, %v7924
    %v8181 = vadd.f32 %v8180, %v7925
    %8182 = vadd.xlane.f32.xlu0 %v8181
    %v8183 = vpop.xlane.xlu0 %8182
    %v8184 = vrot.slane %v8183, 4
    %v8185 = vadd.f32 %v8183, %v8184
    %v8186 = vrot.slane %v8185, 2
    %v8187 = vadd.f32 %v8185, %v8186
    %v8188 = vrot.slane %v8187, 1
    %v8189 = vadd.f32 %v8187, %v8188
    %s8190 = vtos %v8189
    %s8191 = sadd.f32 %s7926, %s8190
    %s8192 = scalar_lea.smem [#allocation2], 0
    %8193 = sst [smem:[%s8192]] %s8191
    %s8194 = sld [smem:[#allocation2]]
    %s8195 = scalar_lea.smem [#allocation8], 0
    %8196 = sst [smem:[%s8195]] %s8194
    // Predicated region
    $region22: #{tpu_custom_call.1} parent=1 // pred_check
      _
    $region23: #{tpu_custom_call.1} parent=1 // pred_check_branch
      %8198 = sbr.rel (0) target = $region25
    $region24: #{tpu_custom_call.1} parent=1 // pred_region
      %s8200 = ssub.s32 16, 16
      %8201 = vsyncadd [#allocation5], %s8200
      %8204 = dma.smem_to_hbm [#allocation8], 16, %s2, [#allocation5]
    $region25: #{tpu_custom_call.1} parent=1 // pred_fallthru
      _
    // Predicated region
    $region26: #{tpu_custom_call.1} parent=1 // pred_check
      _
    $region27: #{tpu_custom_call.1} parent=1 // pred_check_branch
      %8206 = sbr.rel (0) target = $region29
    $region28: #{tpu_custom_call.1} parent=1 // pred_region
      %8207 = dma.done [#allocation5], 16
    $region29: #{tpu_custom_call.1} parent=1 // pred_fallthru
      _
    %8208 = sfence
    %8209 = vsyncpa [#allocation4], 1
    %8210 = vsyncpa [#allocation7], 1
    %8211 = vsyncpa [#allocation5], 1

</llo_original>
